<compile_context>
chip_gen: v5e
topology: v5e:2x2
jax: 0.10.0
libtpu: 0.0.40
codegen_flags: <defaults>
</compile_context>

<pallas_src>
import jax
import jax.numpy as jnp
from jax.experimental import pallas as pl
from jax.experimental.pallas import tpu as pltpu


BP = 8       # padded batch  -> full (8, 128) sublane occupancy
VPAD = 128   # padded decoder vocab -> lane-dense fc output (unmasked vst)


# ----------------------------------------------------------------------------- params
class Params:
    def __init__(self, word_vocab_size):
        self.word_vocab_size = word_vocab_size
        self.word_embed_size = 16
        self.char_vocab_size = 20
        self.char_embed_size = 8
        self.max_word_len = 6
        self.kernels = [(1, 4), (2, 4), (3, 4)]      # (kernel_width, out_dim)
        self.sum_depth = sum(d for _, d in self.kernels)
        self.encoder_rnn_size = 32
        self.encoder_num_layers = 1
        self.latent_variable_size = 16
        self.decoder_rnn_size = 32
        self.decoder_num_layers = 2                  # = 2 * encoder_num_layers (bi-dir state reuse)


# ----------------------------------------------------------------------------- LSTM cell math (2 EUP passes)
def _lstm_gates(gates, c, H):
    """gates: (B, 4H) pre-activation in order i,f,g,o.
    One whole-vreg sigmoid + one tanh of the g slice (the sigmoid of the
    g lanes is discarded)."""
    s = jax.nn.sigmoid(gates)
    i = s[:, 0:H]
    f = s[:, H:2 * H]
    o = s[:, 3 * H:4 * H]
    g = jnp.tanh(gates[:, 2 * H:3 * H])
    c_new = f * c + i * g
    h_new = o * jnp.tanh(c_new)
    return h_new, c_new


# ----------------------------------------------------------------------------- kernel 1: fused char TDNN (both langs)
def make_tdnn_kernel(N, Ps):
    def kernel(p1_ref, p2_ref, w1_ref, w2_ref, o1_ref, o2_ref):
        for p_ref, w_ref, o_ref in ((p1_ref, w1_ref, o1_ref),
                                    (p2_ref, w2_ref, o2_ref)):
            # one block-diagonal matmul covering all kernel widths of this language
            y = jnp.maximum(
                jnp.dot(p_ref[...], w_ref[...], preferred_element_type=jnp.float32), 0.0)
            total = None
            r0 = 0
            for P in Ps:
                acc = y[r0:r0 + N]
                for p in range(1, P):                       # max over positions (static, aligned)
                    acc = jnp.maximum(acc, y[r0 + p * N:r0 + (p + 1) * N])
                # off-band output columns are exactly zero (block-diag weights, relu),
                # so summing the per-width maxima reconstructs the concatenation.
                total = acc if total is None else total + acc
                r0 += P * N
            o_ref[...] = total
    return kernel


def embed_both(weights, params, params_2,
               word_input_1, char_input_1, word_input_2, char_input_2):
    """Word embeddings + fused char-TDNN for BOTH languages (one pallas_call)."""
    def build_patches(char_emb, char_input, p):
        ce = jnp.take(char_emb, char_input, axis=0)                          # (B, T, Lw, Ce)
        Bq, Tq, Lw, Ce = ce.shape
        N = Bq * Tq
        x = ce.reshape(N, Lw, Ce)
        R = sum((Lw - kW + 1) * N for kW, _ in p.kernels)
        K = sum(kW * Ce for kW, _ in p.kernels)
        big = jnp.zeros((R, K), jnp.bfloat16)
        r0 = c0 = 0
        for kW, _D in p.kernels:
            P = Lw - kW + 1
            idx = jnp.arange(P)[:, None] + jnp.arange(kW)[None, :]           # (P, kW)
            win = jnp.take(x, idx, axis=1)                                   # (N, P, kW, Ce)
            blk = jnp.transpose(win, (1, 0, 2, 3)).reshape(P * N, kW * Ce)   # position-major rows
            big = big.at[r0:r0 + P * N, c0:c0 + kW * Ce].set(blk.astype(jnp.bfloat16))
            r0 += P * N
            c0 += kW * Ce
        return big, N

    p1, N = build_patches(weights['char1'], char_input_1, params)
    p2, _ = build_patches(weights['char2'], char_input_2, params_2)
    B, T = word_input_1.shape
    Ps = tuple(params.max_word_len - kW + 1 for kW, _ in params.kernels)

    feat1, feat2 = pl.pallas_call(
        make_tdnn_kernel(N, Ps),
        out_shape=(jax.ShapeDtypeStruct((N, params.sum_depth), jnp.float32),
                   jax.ShapeDtypeStruct((N, params_2.sum_depth), jnp.float32)),
    )(p1, p2, weights['tdnn1_w'], weights['tdnn2_w'])

    we1 = jnp.take(weights['word1'], word_input_1, axis=0)
    we2 = jnp.take(weights['word2'], word_input_2, axis=0)
    enc_in = jnp.concatenate([we1, feat1.reshape(B, T, -1)], axis=2)         # (B, T, 28)
    enc_in_2 = jnp.concatenate([we2, feat2.reshape(B, T, -1)], axis=2)
    return enc_in, enc_in_2


# ----------------------------------------------------------------------------- kernel 2: enc1+enc3 / enc2 / latent
def make_encoder_side_kernel(T, B, H, L, b_real):
    G = 4 * H

    def kernel(x1_ref, x2_ref, wih13_ref, b13_ref, whh13_ref,
               wih2_ref, b2_ref, whh2_ref, wlat_ref, blat_ref, eps_ref,
               state3_ref, z_ref, kld_ref):
        # ---- enc1 + enc3 fused as a 4-direction recurrence [f1, f3, b1, b3] ----
        x1 = x1_ref[...].astype(jnp.bfloat16)
        gx13 = jnp.dot(x1, wih13_ref[...], preferred_element_type=jnp.float32) + b13_ref[...]
        whh13 = whh13_ref[...]
        h = [jnp.zeros((B, H), jnp.float32) for _ in range(4)]
        c = [jnp.zeros((B, H), jnp.float32) for _ in range(4)]
        for t in range(T):
            rf = t * B
            rb = (T - 1 - t) * B
            inp = jnp.concatenate([gx13[rf:rf + B, 0:2 * G],
                                   gx13[rb:rb + B, 2 * G:4 * G]], axis=1)
            hcat = jnp.concatenate(h, axis=1).astype(jnp.bfloat16)           # (B, 4H)
            gates = inp + jnp.dot(hcat, whh13, preferred_element_type=jnp.float32)
            for d in range(4):
                h[d], c[d] = _lstm_gates(gates[:, d * G:(d + 1) * G], c[d], H)
        h1f, h3f, h1b, h3b = h
        c1f, c3f, c1b, c3b = c
        # enc3 final state, packed lane-dense for the decoder: [h_l0|h_l1|c_l0|c_l1]
        state3_ref[...] = jnp.concatenate([h3f, h3b, c3f, c3b], axis=1)

        # ---- enc2 (2 directions), initialised from enc1's final state ----
        x2 = x2_ref[...].astype(jnp.bfloat16)
        gx2 = jnp.dot(x2, wih2_ref[...], preferred_element_type=jnp.float32) + b2_ref[...]
        whh2 = whh2_ref[...]
        h2 = [h1f, h1b]
        c2 = [c1f, c1b]
        for t in range(T):
            rf = t * B
            rb = (T - 1 - t) * B
            inp2 = jnp.concatenate([gx2[rf:rf + B, 0:G],
                                    gx2[rb:rb + B, G:2 * G]], axis=1)
            hcat2 = jnp.concatenate(h2, axis=1).astype(jnp.bfloat16)         # (B, 2H)
            gates2 = inp2 + jnp.dot(hcat2, whh2, preferred_element_type=jnp.float32)
            for d in range(2):
                h2[d], c2[d] = _lstm_gates(gates2[:, d * G:(d + 1) * G], c2[d], H)

        # ---- latent: mu / logvar / reparameterize / KLD (fused tail) ----
        context2 = jnp.concatenate([h2[0], h2[1]], axis=1)                   # (B, 2H)
        proj = jnp.dot(context2, wlat_ref[...],
                       preferred_element_type=jnp.float32) + blat_ref[...]
        mu = proj[:, 0:L]
        lv = proj[:, L:2 * L]
        std = jnp.exp(0.5 * lv)
        z_ref[...] = eps_ref[...] * std + mu
        per = jnp.sum(lv - mu * mu - jnp.exp(lv) + 1.0, axis=1, keepdims=True)   # (B, 1)
        row = jax.lax.broadcasted_iota(jnp.int32, per.shape, 0)
        per = jnp.where(row < b_real, per, 0.0)                              # mask padded rows
        kld_ref[...] = (-0.5 / b_real) * jnp.sum(per, axis=0, keepdims=True)

    return kernel


# ----------------------------------------------------------------------------- kernel 3: decoder LSTM x2 + fc
def make_decoder_kernel(T, B, H):
    def kernel(emb_ref, z_ref, state_ref,
               wih0e_ref, wih0z_ref, b0_ref, whh0_ref,
               w1s_ref, b1_ref, fcw_ref, fcb_ref,
               logits_ref, state_out_ref, h1buf):
        emb = emb_ref[...].astype(jnp.bfloat16)
        gx0 = jnp.dot(emb, wih0e_ref[...], preferred_element_type=jnp.float32)
        # z projected ONCE -> loop-invariant bias (replaces broadcasting z over T)
        zb = jnp.dot(z_ref[...].astype(jnp.bfloat16), wih0z_ref[...],
                     preferred_element_type=jnp.float32) + b0_ref[...]
        st = state_ref[...]
        h0l = st[:, 0:H]
        h1l = st[:, H:2 * H]
        c0l = st[:, 2 * H:3 * H]
        c1l = st[:, 3 * H:4 * H]
        whh0 = whh0_ref[...]
        w1s = w1s_ref[...]
        b1 = b1_ref[...]
        for t in range(T):
            r = t * B
            g0 = gx0[r:r + B] + zb + jnp.dot(h0l.astype(jnp.bfloat16), whh0,
                                             preferred_element_type=jnp.float32)
            h0l, c0l = _lstm_gates(g0, c0l, H)
            # layer-1: both matmuls fused into one (B, 2H) @ (2H, 4H)
            hcat = jnp.concatenate([h0l, h1l], axis=1).astype(jnp.bfloat16)
            g1 = jnp.dot(hcat, w1s, preferred_element_type=jnp.float32) + b1
            h1l, c1l = _lstm_gates(g1, c1l, H)
            h1buf[r:r + B, :] = h1l
        # output fc hoisted out of the recurrence: one lane-dense matmul + store
        logits_ref[...] = jnp.dot(h1buf[...].astype(jnp.bfloat16), fcw_ref[...],
                                  preferred_element_type=jnp.float32) + fcb_ref[...]
        state_out_ref[...] = jnp.concatenate([h0l, h1l, c0l, c1l], axis=1)

    return kernel


# ----------------------------------------------------------------------------- host glue
def to_time_major(x_bte):
    """(B, T, E) real batch -> (T*BP, E) time-major, batch zero-padded to BP."""
    B, T, E = x_bte.shape
    xp = jnp.zeros((T, BP, E), jnp.float32).at[:, :B].set(
        jnp.transpose(x_bte, (1, 0, 2)).astype(jnp.float32))
    return xp.reshape(T * BP, E)


def decoder_fwd(w, dec_emb, z_pad, drop_prob, state3_packed, params_2, dropout_key):
    B, T, _We = dec_emb.shape
    H = params_2.decoder_rnn_size
    V2 = params_2.word_vocab_size
    if drop_prob > 0.0:
        keep = 1.0 - drop_prob
        mask = jax.random.bernoulli(dropout_key, keep, dec_emb.shape).astype(jnp.float32)
        dec_emb = dec_emb * mask / keep
    emb2d = to_time_major(dec_emb)                                           # (T*BP, We)
    logits2d, state_out = pl.pallas_call(
        make_decoder_kernel(T, BP, H),
        out_shape=(jax.ShapeDtypeStruct((T * BP, VPAD), jnp.float32),
                   jax.ShapeDtypeStruct((BP, 4 * H), jnp.float32)),
        scratch_shapes=[pltpu.VMEM((T * BP, H), jnp.float32)],
    )(emb2d, z_pad, state3_packed,
      w['wih0_e'], w['wih0_z'], w['b0'], w['whh0'],
      w['w1s'], w['b1'], w['fcw'], w['fcb'])
    logits = logits2d.reshape(T, BP, VPAD)[:, :B, :V2]
    out = jnp.transpose(logits, (1, 0, 2))                                   # (B, T, V2)
    hn = jnp.stack([state_out[:B, 0:H], state_out[:B, H:2 * H]], axis=0)     # (2, B, H)
    cn = jnp.stack([state_out[:B, 2 * H:3 * H], state_out[:B, 3 * H:4 * H]], axis=0)
    return out, (hn, cn)


# ----------------------------------------------------------------------------- RVAE forward
def rvae_forward(weights, params, params_2, drop_prob,
                 encoder_word_input, encoder_character_input,
                 encoder_word_input_2, encoder_character_input_2,
                 decoder_word_input_2, eps, dropout_key):
    H = params.encoder_rnn_size
    L = params.latent_variable_size
    B, T = encoder_word_input.shape

    # embeddings + fused char-TDNN (one launch for both languages)
    enc_in, enc_in_2 = embed_both(weights, params, params_2,
                                  encoder_word_input, encoder_character_input,
                                  encoder_word_input_2, encoder_character_input_2)

    # encoder side: enc1 + enc3 (fused), enc2 (seeded from enc1), latent — one launch
    x1 = to_time_major(enc_in)
    x2 = to_time_major(enc_in_2)
    eps_pad = jnp.zeros((BP, L), jnp.float32).at[:B].set(eps)
    state3_packed, z_pad, kld = pl.pallas_call(
        make_encoder_side_kernel(T, BP, H, L, B),
        out_shape=(jax.ShapeDtypeStruct((BP, 4 * H), jnp.float32),
                   jax.ShapeDtypeStruct((BP, L), jnp.float32),
                   jax.ShapeDtypeStruct((1, 1), jnp.float32)),
    )(x1, x2, weights['wih13'], weights['b13'], weights['whh13'],
      weights['wih2'], weights['b2'], weights['whh2'],
      weights['wlat'], weights['blat'], eps_pad)
    kld = kld[0, 0]

    # decoder: uses embedding-1's word table, as in the reference module
    # (indices are guaranteed < params.word_vocab_size by construction in main).
    dec_emb = jnp.take(weights['word1'], decoder_word_input_2, axis=0)
    out, final_state = decoder_fwd(weights['dec'], dec_emb, z_pad, drop_prob,
                                   state3_packed, params_2, dropout_key)
    return out, final_state, kld


# ----------------------------------------------------------------------------- parameter init (kernel-ready forms)
def init_weights(params, params_2, key):
    ks = iter(jax.random.split(key, 64))

    def n(shape, s=0.1):
        return (s * jax.random.normal(next(ks), shape)).astype(jnp.float32)

    H = params.encoder_rnn_size
    G = 4 * H
    L = params.latent_variable_size
    Hd = params_2.decoder_rnn_size
    Gd = 4 * Hd
    We = params_2.word_embed_size
    V2 = params_2.word_vocab_size
    E1 = params.word_embed_size + params.sum_depth
    E2 = params_2.word_embed_size + params_2.sum_depth
    assert H == Hd, "decoder reuses the bi-encoder final state as its layer states"

    def tdnn_blockdiag(p):
        K = sum(kW * p.char_embed_size for kW, _ in p.kernels)
        Dt = sum(D for _, D in p.kernels)
        w = jnp.zeros((K, Dt), jnp.float32)
        r0 = c0 = 0
        for kW, D in p.kernels:
            w = w.at[r0:r0 + kW * p.char_embed_size, c0:c0 + D].set(
                n((kW * p.char_embed_size, D), 0.05))
            r0 += kW * p.char_embed_size
            c0 += D
        return w.astype(jnp.bfloat16)

    def bilstm_stack(e_in, ndirs):
        # column-stacked input weights/biases + block-diagonal hidden weights
        wih = jnp.concatenate([n((e_in, G)) for _ in range(ndirs)], axis=1)
        b = jnp.concatenate([n((1, G)) for _ in range(ndirs)], axis=1)
        whh = jnp.zeros((ndirs * H, ndirs * G), jnp.float32)
        for d in range(ndirs):
            whh = whh.at[d * H:(d + 1) * H, d * G:(d + 1) * G].set(n((H, G)))
        return wih.astype(jnp.bfloat16), b, whh.astype(jnp.bfloat16)

    wih13, b13, whh13 = bilstm_stack(E1, 4)   # dirs: [enc1 fwd, enc3 fwd, enc1 bwd, enc3 bwd]
    wih2, b2, whh2 = bilstm_stack(E2, 2)      # dirs: [enc2 fwd, enc2 bwd]

    wih0 = n((We + L, Gd))
    weights = {
        'word1': n((params.word_vocab_size, params.word_embed_size), 1.0),
        'char1': n((params.char_vocab_size, params.char_embed_size), 1.0),
        'tdnn1_w': tdnn_blockdiag(params),
        'word2': n((params_2.word_vocab_size, params_2.word_embed_size), 1.0),
        'char2': n((params_2.char_vocab_size, params_2.char_embed_size), 1.0),
        'tdnn2_w': tdnn_blockdiag(params_2),
        'wih13': wih13, 'b13': b13, 'whh13': whh13,
        'wih2': wih2, 'b2': b2, 'whh2': whh2,
        'wlat': jnp.concatenate([n((2 * H, L)), n((2 * H, L))], axis=1),    # [mu | logvar]
        'blat': jnp.concatenate([n((1, L)), n((1, L))], axis=1),
        'dec': {
            'wih0_e': wih0[:We].astype(jnp.bfloat16),
            'wih0_z': wih0[We:].astype(jnp.bfloat16),
            'b0': n((1, Gd)),
            'whh0': n((Hd, Gd)).astype(jnp.bfloat16),
            'w1s': jnp.concatenate([n((Hd, Gd)), n((Hd, Gd))], axis=0).astype(jnp.bfloat16),
            'b1': n((1, Gd)),
            'fcw': jnp.zeros((Hd, VPAD), jnp.float32).at[:, :V2].set(
                n((Hd, V2))).astype(jnp.bfloat16),
            'fcb': jnp.zeros((1, VPAD), jnp.float32).at[:, :V2].set(n((1, V2))),
        },
    }
    return weights


# ----------------------------------------------------------------------------- main
if __name__ == "__main__":
    params = Params(word_vocab_size=40)
    params_2 = Params(word_vocab_size=48)

    B, T_enc, T_dec = 2, 8, 8
    Lw = params.max_word_len

    key = jax.random.PRNGKey(0)
    k_w, k_c, k_w2, k_c2, k_dw, k_eps, k_drop, k_param = jax.random.split(key, 8)

    encoder_word_input = jax.random.randint(k_w, (B, T_enc), 0, params.word_vocab_size, jnp.int32)
    encoder_character_input = jax.random.randint(k_c, (B, T_enc, Lw), 0, params.char_vocab_size, jnp.int32)
    encoder_word_input_2 = jax.random.randint(k_w2, (B, T_enc), 0, params_2.word_vocab_size, jnp.int32)
    encoder_character_input_2 = jax.random.randint(k_c2, (B, T_enc, Lw), 0, params_2.char_vocab_size, jnp.int32)
    # Reference indexes self.embedding.word_embed (language-1 table) with this input,
    # so keep indices strictly below params.word_vocab_size.
    decoder_word_input_2 = jax.random.randint(k_dw, (B, T_dec), 0, params.word_vocab_size, jnp.int32)
    # eps plays the role of torch.randn([batch, latent]) in the reparameterization
    eps = jax.random.normal(k_eps, (B, params.latent_variable_size), jnp.float32)

    weights = init_weights(params, params_2, k_param)

    drop_prob = 0.0  # validation / sampling setting

    @jax.jit
    def fwd(weights, ew, ec, ew2, ec2, dw, eps, dkey):
        return rvae_forward(weights, params, params_2, drop_prob,
                            ew, ec, ew2, ec2, dw, eps, dkey)

    out, final_state, kld = fwd(weights, encoder_word_input, encoder_character_input,
                                encoder_word_input_2, encoder_character_input_2,
                                decoder_word_input_2, eps, k_drop)
    out, final_state, kld = jax.block_until_ready((out, final_state, kld))

    assert out.shape == (B, T_dec, params_2.word_vocab_size)
    assert final_state[0].shape == (params_2.decoder_num_layers, B, params_2.decoder_rnn_size)
    assert final_state[1].shape == (params_2.decoder_num_layers, B, params_2.decoder_rnn_size)
    assert kld.shape == ()
    assert bool(jnp.isfinite(kld))
    print("KERNEL_OK")
</pallas_src>

<mosaic_0001>
module attributes {stable_mosaic.version = 11 : i64} {
  func.func @kernel(%arg0: memref<240x48xbf16, #tpu.memory_space<vmem>>, %arg1: memref<240x48xbf16, #tpu.memory_space<vmem>>, %arg2: memref<48x12xbf16, #tpu.memory_space<vmem>>, %arg3: memref<48x12xbf16, #tpu.memory_space<vmem>>, %arg4: memref<16x12xf32, #tpu.memory_space<vmem>>, %arg5: memref<16x12xf32, #tpu.memory_space<vmem>>) attributes {dimension_semantics = [], scalar_prefetch = 0 : i64, scratch_operands = 0 : i64, tpu.core_type = #tpu.core_type<tc>} {
    %c0 = arith.constant 0 : index
    %c0_0 = arith.constant 0 : index
    %0 = vector.load %arg0[%c0, %c0_0] : memref<240x48xbf16, #tpu.memory_space<vmem>>, vector<240x48xbf16>
    %c0_1 = arith.constant 0 : index
    %c0_2 = arith.constant 0 : index
    %1 = vector.load %arg2[%c0_1, %c0_2] : memref<48x12xbf16, #tpu.memory_space<vmem>>, vector<48x12xbf16>
    %cst = arith.constant dense<0.000000e+00> : vector<240x12xf32>
    %2 = tpu.matmul %0, %1, %cst {dimension_numbers = #tpu.dot_dimension_numbers<[1], [0], [0], [1], [0, 0, 1, 1], [], []>} : vector<240x48xbf16>, vector<48x12xbf16>, vector<240x12xf32> -> vector<240x12xf32>
    %cst_3 = arith.constant 0.000000e+00 : f32
    %3 = vector.broadcast %cst_3 : f32 to vector<240x12xf32>
    %4 = arith.maximumf %2, %3 : vector<240x12xf32>
    %5 = vector.extract_strided_slice %4 {offsets = [0, 0], sizes = [16, 12], strides = [1, 1]} : vector<240x12xf32> to vector<16x12xf32>
    %6 = vector.extract_strided_slice %4 {offsets = [16, 0], sizes = [16, 12], strides = [1, 1]} : vector<240x12xf32> to vector<16x12xf32>
    %7 = arith.maximumf %5, %6 : vector<16x12xf32>
    %8 = vector.extract_strided_slice %4 {offsets = [32, 0], sizes = [16, 12], strides = [1, 1]} : vector<240x12xf32> to vector<16x12xf32>
    %9 = arith.maximumf %7, %8 : vector<16x12xf32>
    %10 = vector.extract_strided_slice %4 {offsets = [48, 0], sizes = [16, 12], strides = [1, 1]} : vector<240x12xf32> to vector<16x12xf32>
    %11 = arith.maximumf %9, %10 : vector<16x12xf32>
    %12 = vector.extract_strided_slice %4 {offsets = [64, 0], sizes = [16, 12], strides = [1, 1]} : vector<240x12xf32> to vector<16x12xf32>
    %13 = arith.maximumf %11, %12 : vector<16x12xf32>
    %14 = vector.extract_strided_slice %4 {offsets = [80, 0], sizes = [16, 12], strides = [1, 1]} : vector<240x12xf32> to vector<16x12xf32>
    %15 = arith.maximumf %13, %14 : vector<16x12xf32>
    %16 = vector.extract_strided_slice %4 {offsets = [96, 0], sizes = [16, 12], strides = [1, 1]} : vector<240x12xf32> to vector<16x12xf32>
    %17 = vector.extract_strided_slice %4 {offsets = [112, 0], sizes = [16, 12], strides = [1, 1]} : vector<240x12xf32> to vector<16x12xf32>
    %18 = arith.maximumf %16, %17 : vector<16x12xf32>
    %19 = vector.extract_strided_slice %4 {offsets = [128, 0], sizes = [16, 12], strides = [1, 1]} : vector<240x12xf32> to vector<16x12xf32>
    %20 = arith.maximumf %18, %19 : vector<16x12xf32>
    %21 = vector.extract_strided_slice %4 {offsets = [144, 0], sizes = [16, 12], strides = [1, 1]} : vector<240x12xf32> to vector<16x12xf32>
    %22 = arith.maximumf %20, %21 : vector<16x12xf32>
    %23 = vector.extract_strided_slice %4 {offsets = [160, 0], sizes = [16, 12], strides = [1, 1]} : vector<240x12xf32> to vector<16x12xf32>
    %24 = arith.maximumf %22, %23 : vector<16x12xf32>
    %25 = arith.addf %15, %24 : vector<16x12xf32>
    %26 = vector.extract_strided_slice %4 {offsets = [176, 0], sizes = [16, 12], strides = [1, 1]} : vector<240x12xf32> to vector<16x12xf32>
    %27 = vector.extract_strided_slice %4 {offsets = [192, 0], sizes = [16, 12], strides = [1, 1]} : vector<240x12xf32> to vector<16x12xf32>
    %28 = arith.maximumf %26, %27 : vector<16x12xf32>
    %29 = vector.extract_strided_slice %4 {offsets = [208, 0], sizes = [16, 12], strides = [1, 1]} : vector<240x12xf32> to vector<16x12xf32>
    %30 = arith.maximumf %28, %29 : vector<16x12xf32>
    %31 = vector.extract_strided_slice %4 {offsets = [224, 0], sizes = [16, 12], strides = [1, 1]} : vector<240x12xf32> to vector<16x12xf32>
    %32 = arith.maximumf %30, %31 : vector<16x12xf32>
    %33 = arith.addf %25, %32 : vector<16x12xf32>
    %c0_4 = arith.constant 0 : index
    %c0_5 = arith.constant 0 : index
    %34 = vector.load %arg4[%c0_4, %c0_5] : memref<16x12xf32, #tpu.memory_space<vmem>>, vector<16x12xf32>
    tpu.vector_store %arg4[%c0_4, %c0_5], %33 {strides = array<i32>} : memref<16x12xf32, #tpu.memory_space<vmem>>, vector<16x12xf32>,
    %c0_6 = arith.constant 0 : index
    %c0_7 = arith.constant 0 : index
    %35 = vector.load %arg1[%c0_6, %c0_7] : memref<240x48xbf16, #tpu.memory_space<vmem>>, vector<240x48xbf16>
    %c0_8 = arith.constant 0 : index
    %c0_9 = arith.constant 0 : index
    %36 = vector.load %arg3[%c0_8, %c0_9] : memref<48x12xbf16, #tpu.memory_space<vmem>>, vector<48x12xbf16>
    %cst_10 = arith.constant dense<0.000000e+00> : vector<240x12xf32>
    %37 = tpu.matmul %35, %36, %cst_10 {dimension_numbers = #tpu.dot_dimension_numbers<[1], [0], [0], [1], [0, 0, 1, 1], [], []>} : vector<240x48xbf16>, vector<48x12xbf16>, vector<240x12xf32> -> vector<240x12xf32>
    %cst_11 = arith.constant 0.000000e+00 : f32
    %38 = vector.broadcast %cst_11 : f32 to vector<240x12xf32>
    %39 = arith.maximumf %37, %38 : vector<240x12xf32>
    %40 = vector.extract_strided_slice %39 {offsets = [0, 0], sizes = [16, 12], strides = [1, 1]} : vector<240x12xf32> to vector<16x12xf32>
    %41 = vector.extract_strided_slice %39 {offsets = [16, 0], sizes = [16, 12], strides = [1, 1]} : vector<240x12xf32> to vector<16x12xf32>
    %42 = arith.maximumf %40, %41 : vector<16x12xf32>
    %43 = vector.extract_strided_slice %39 {offsets = [32, 0], sizes = [16, 12], strides = [1, 1]} : vector<240x12xf32> to vector<16x12xf32>
    %44 = arith.maximumf %42, %43 : vector<16x12xf32>
    %45 = vector.extract_strided_slice %39 {offsets = [48, 0], sizes = [16, 12], strides = [1, 1]} : vector<240x12xf32> to vector<16x12xf32>
    %46 = arith.maximumf %44, %45 : vector<16x12xf32>
    %47 = vector.extract_strided_slice %39 {offsets = [64, 0], sizes = [16, 12], strides = [1, 1]} : vector<240x12xf32> to vector<16x12xf32>
    %48 = arith.maximumf %46, %47 : vector<16x12xf32>
    %49 = vector.extract_strided_slice %39 {offsets = [80, 0], sizes = [16, 12], strides = [1, 1]} : vector<240x12xf32> to vector<16x12xf32>
    %50 = arith.maximumf %48, %49 : vector<16x12xf32>
    %51 = vector.extract_strided_slice %39 {offsets = [96, 0], sizes = [16, 12], strides = [1, 1]} : vector<240x12xf32> to vector<16x12xf32>
    %52 = vector.extract_strided_slice %39 {offsets = [112, 0], sizes = [16, 12], strides = [1, 1]} : vector<240x12xf32> to vector<16x12xf32>
    %53 = arith.maximumf %51, %52 : vector<16x12xf32>
    %54 = vector.extract_strided_slice %39 {offsets = [128, 0], sizes = [16, 12], strides = [1, 1]} : vector<240x12xf32> to vector<16x12xf32>
    %55 = arith.maximumf %53, %54 : vector<16x12xf32>
    %56 = vector.extract_strided_slice %39 {offsets = [144, 0], sizes = [16, 12], strides = [1, 1]} : vector<240x12xf32> to vector<16x12xf32>
    %57 = arith.maximumf %55, %56 : vector<16x12xf32>
    %58 = vector.extract_strided_slice %39 {offsets = [160, 0], sizes = [16, 12], strides = [1, 1]} : vector<240x12xf32> to vector<16x12xf32>
    %59 = arith.maximumf %57, %58 : vector<16x12xf32>
    %60 = arith.addf %50, %59 : vector<16x12xf32>
    %61 = vector.extract_strided_slice %39 {offsets = [176, 0], sizes = [16, 12], strides = [1, 1]} : vector<240x12xf32> to vector<16x12xf32>
    %62 = vector.extract_strided_slice %39 {offsets = [192, 0], sizes = [16, 12], strides = [1, 1]} : vector<240x12xf32> to vector<16x12xf32>
    %63 = arith.maximumf %61, %62 : vector<16x12xf32>
    %64 = vector.extract_strided_slice %39 {offsets = [208, 0], sizes = [16, 12], strides = [1, 1]} : vector<240x12xf32> to vector<16x12xf32>
    %65 = arith.maximumf %63, %64 : vector<16x12xf32>
    %66 = vector.extract_strided_slice %39 {offsets = [224, 0], sizes = [16, 12], strides = [1, 1]} : vector<240x12xf32> to vector<16x12xf32>
    %67 = arith.maximumf %65, %66 : vector<16x12xf32>
    %68 = arith.addf %60, %67 : vector<16x12xf32>
    %c0_12 = arith.constant 0 : index
    %c0_13 = arith.constant 0 : index
    %69 = vector.load %arg5[%c0_12, %c0_13] : memref<16x12xf32, #tpu.memory_space<vmem>>, vector<16x12xf32>
    tpu.vector_store %arg5[%c0_12, %c0_13], %68 {strides = array<i32>} : memref<16x12xf32, #tpu.memory_space<vmem>>, vector<16x12xf32>,
    return
  }
}

module attributes {stable_mosaic.version = 11 : i64} {
  func.func @kernel(%arg0: memref<64x28xf32, #tpu.memory_space<vmem>>, %arg1: memref<64x28xf32, #tpu.memory_space<vmem>>, %arg2: memref<28x512xbf16, #tpu.memory_space<vmem>>, %arg3: memref<1x512xf32, #tpu.memory_space<vmem>>, %arg4: memref<128x512xbf16, #tpu.memory_space<vmem>>, %arg5: memref<28x256xbf16, #tpu.memory_space<vmem>>, %arg6: memref<1x256xf32, #tpu.memory_space<vmem>>, %arg7: memref<64x256xbf16, #tpu.memory_space<vmem>>, %arg8: memref<64x32xf32, #tpu.memory_space<vmem>>, %arg9: memref<1x32xf32, #tpu.memory_space<vmem>>, %arg10: memref<8x16xf32, #tpu.memory_space<vmem>>, %arg11: memref<8x128xf32, #tpu.memory_space<vmem>>, %arg12: memref<8x16xf32, #tpu.memory_space<vmem>>, %arg13: memref<1x1xf32, #tpu.memory_space<vmem>>) attributes {dimension_semantics = [], scalar_prefetch = 0 : i64, scratch_operands = 0 : i64, tpu.core_type = #tpu.core_type<tc>} {
    %c0 = arith.constant 0 : index
    %c0_0 = arith.constant 0 : index
    %0 = vector.load %arg0[%c0, %c0_0] : memref<64x28xf32, #tpu.memory_space<vmem>>, vector<64x28xf32>
    %1 = arith.truncf %0 : vector<64x28xf32> to vector<64x28xbf16>
    %c0_1 = arith.constant 0 : index
    %c0_2 = arith.constant 0 : index
    %2 = vector.load %arg2[%c0_1, %c0_2] : memref<28x512xbf16, #tpu.memory_space<vmem>>, vector<28x512xbf16>
    %cst = arith.constant dense<0.000000e+00> : vector<64x512xf32>
    %3 = tpu.matmul %1, %2, %cst {dimension_numbers = #tpu.dot_dimension_numbers<[1], [0], [0], [1], [0, 0, 1, 1], [], []>} : vector<64x28xbf16>, vector<28x512xbf16>, vector<64x512xf32> -> vector<64x512xf32>
    %c0_3 = arith.constant 0 : index
    %c0_4 = arith.constant 0 : index
    %4 = vector.load %arg3[%c0_3, %c0_4] : memref<1x512xf32, #tpu.memory_space<vmem>>, vector<1x512xf32>
    %5 = vector.broadcast %4 : vector<1x512xf32> to vector<64x512xf32>
    %6 = arith.addf %3, %5 : vector<64x512xf32>
    %c0_5 = arith.constant 0 : index
    %c0_6 = arith.constant 0 : index
    %7 = vector.load %arg4[%c0_5, %c0_6] : memref<128x512xbf16, #tpu.memory_space<vmem>>, vector<128x512xbf16>
    %cst_7 = arith.constant 0.000000e+00 : f32
    %8 = vector.broadcast %cst_7 : f32 to vector<8x32xf32>
    %cst_8 = arith.constant 0.000000e+00 : f32
    %9 = vector.broadcast %cst_8 : f32 to vector<8x32xf32>
    %cst_9 = arith.constant 0.000000e+00 : f32
    %10 = vector.broadcast %cst_9 : f32 to vector<8x32xf32>
    %cst_10 = arith.constant 0.000000e+00 : f32
    %11 = vector.broadcast %cst_10 : f32 to vector<8x32xf32>
    %cst_11 = arith.constant 0.000000e+00 : f32
    %12 = vector.broadcast %cst_11 : f32 to vector<8x32xf32>
    %cst_12 = arith.constant 0.000000e+00 : f32
    %13 = vector.broadcast %cst_12 : f32 to vector<8x32xf32>
    %cst_13 = arith.constant 0.000000e+00 : f32
    %14 = vector.broadcast %cst_13 : f32 to vector<8x32xf32>
    %cst_14 = arith.constant 0.000000e+00 : f32
    %15 = vector.broadcast %cst_14 : f32 to vector<8x32xf32>
    %16 = vector.extract_strided_slice %6 {offsets = [0, 0], sizes = [8, 256], strides = [1, 1]} : vector<64x512xf32> to vector<8x256xf32>
    %17 = vector.extract_strided_slice %6 {offsets = [56, 256], sizes = [8, 256], strides = [1, 1]} : vector<64x512xf32> to vector<8x256xf32>
    %18 = tpu.concatenate %16, %17 in 1 : vector<8x256xf32>, vector<8x256xf32> -> vector<8x512xf32>
    %19 = tpu.concatenate %8, %9, %10, %11 in 1 : vector<8x32xf32>, vector<8x32xf32>, vector<8x32xf32>, vector<8x32xf32> -> vector<8x128xf32>
    %20 = arith.truncf %19 : vector<8x128xf32> to vector<8x128xbf16>
    %cst_15 = arith.constant dense<0.000000e+00> : vector<8x512xf32>
    %21 = tpu.matmul %20, %7, %cst_15 {dimension_numbers = #tpu.dot_dimension_numbers<[1], [0], [0], [1], [0, 0, 1, 1], [], []>} : vector<8x128xbf16>, vector<128x512xbf16>, vector<8x512xf32> -> vector<8x512xf32>
    %22 = arith.addf %18, %21 : vector<8x512xf32>
    %23 = vector.extract_strided_slice %22 {offsets = [0, 0], sizes = [8, 128], strides = [1, 1]} : vector<8x512xf32> to vector<8x128xf32>
    %24 = arith.negf %23 : vector<8x128xf32>
    %25 = math.exp %24 : vector<8x128xf32>
    %cst_16 = arith.constant 1.000000e+00 : f32
    %26 = vector.broadcast %cst_16 : f32 to vector<8x128xf32>
    %27 = arith.addf %26, %25 : vector<8x128xf32>
    %28 = arith.divf %26, %27 : vector<8x128xf32>
    %29 = vector.extract_strided_slice %28 {offsets = [0, 0], sizes = [8, 32], strides = [1, 1]} : vector<8x128xf32> to vector<8x32xf32>
    %30 = vector.extract_strided_slice %28 {offsets = [0, 32], sizes = [8, 32], strides = [1, 1]} : vector<8x128xf32> to vector<8x32xf32>
    %31 = vector.extract_strided_slice %28 {offsets = [0, 96], sizes = [8, 32], strides = [1, 1]} : vector<8x128xf32> to vector<8x32xf32>
    %32 = vector.extract_strided_slice %23 {offsets = [0, 64], sizes = [8, 32], strides = [1, 1]} : vector<8x128xf32> to vector<8x32xf32>
    %33 = math.tanh %32 : vector<8x32xf32>
    %34 = arith.mulf %30, %12 : vector<8x32xf32>
    %35 = arith.mulf %29, %33 : vector<8x32xf32>
    %36 = arith.addf %34, %35 : vector<8x32xf32>
    %37 = math.tanh %36 : vector<8x32xf32>
    %38 = arith.mulf %31, %37 : vector<8x32xf32>
    %39 = vector.extract_strided_slice %22 {offsets = [0, 128], sizes = [8, 128], strides = [1, 1]} : vector<8x512xf32> to vector<8x128xf32>
    %40 = arith.negf %39 : vector<8x128xf32>
    %41 = math.exp %40 : vector<8x128xf32>
    %cst_17 = arith.constant 1.000000e+00 : f32
    %42 = vector.broadcast %cst_17 : f32 to vector<8x128xf32>
    %43 = arith.addf %42, %41 : vector<8x128xf32>
    %44 = arith.divf %42, %43 : vector<8x128xf32>
    %45 = vector.extract_strided_slice %44 {offsets = [0, 0], sizes = [8, 32], strides = [1, 1]} : vector<8x128xf32> to vector<8x32xf32>
    %46 = vector.extract_strided_slice %44 {offsets = [0, 32], sizes = [8, 32], strides = [1, 1]} : vector<8x128xf32> to vector<8x32xf32>
    %47 = vector.extract_strided_slice %44 {offsets = [0, 96], sizes = [8, 32], strides = [1, 1]} : vector<8x128xf32> to vector<8x32xf32>
    %48 = vector.extract_strided_slice %39 {offsets = [0, 64], sizes = [8, 32], strides = [1, 1]} : vector<8x128xf32> to vector<8x32xf32>
    %49 = math.tanh %48 : vector<8x32xf32>
    %50 = arith.mulf %46, %13 : vector<8x32xf32>
    %51 = arith.mulf %45, %49 : vector<8x32xf32>
    %52 = arith.addf %50, %51 : vector<8x32xf32>
    %53 = math.tanh %52 : vector<8x32xf32>
    %54 = arith.mulf %47, %53 : vector<8x32xf32>
    %55 = vector.extract_strided_slice %22 {offsets = [0, 256], sizes = [8, 128], strides = [1, 1]} : vector<8x512xf32> to vector<8x128xf32>
    %56 = arith.negf %55 : vector<8x128xf32>
    %57 = math.exp %56 : vector<8x128xf32>
    %cst_18 = arith.constant 1.000000e+00 : f32
    %58 = vector.broadcast %cst_18 : f32 to vector<8x128xf32>
    %59 = arith.addf %58, %57 : vector<8x128xf32>
    %60 = arith.divf %58, %59 : vector<8x128xf32>
    %61 = vector.extract_strided_slice %60 {offsets = [0, 0], sizes = [8, 32], strides = [1, 1]} : vector<8x128xf32> to vector<8x32xf32>
    %62 = vector.extract_strided_slice %60 {offsets = [0, 32], sizes = [8, 32], strides = [1, 1]} : vector<8x128xf32> to vector<8x32xf32>
    %63 = vector.extract_strided_slice %60 {offsets = [0, 96], sizes = [8, 32], strides = [1, 1]} : vector<8x128xf32> to vector<8x32xf32>
    %64 = vector.extract_strided_slice %55 {offsets = [0, 64], sizes = [8, 32], strides = [1, 1]} : vector<8x128xf32> to vector<8x32xf32>
    %65 = math.tanh %64 : vector<8x32xf32>
    %66 = arith.mulf %62, %14 : vector<8x32xf32>
    %67 = arith.mulf %61, %65 : vector<8x32xf32>
    %68 = arith.addf %66, %67 : vector<8x32xf32>
    %69 = math.tanh %68 : vector<8x32xf32>
    %70 = arith.mulf %63, %69 : vector<8x32xf32>
    %71 = vector.extract_strided_slice %22 {offsets = [0, 384], sizes = [8, 128], strides = [1, 1]} : vector<8x512xf32> to vector<8x128xf32>
    %72 = arith.negf %71 : vector<8x128xf32>
    %73 = math.exp %72 : vector<8x128xf32>
    %cst_19 = arith.constant 1.000000e+00 : f32
    %74 = vector.broadcast %cst_19 : f32 to vector<8x128xf32>
    %75 = arith.addf %74, %73 : vector<8x128xf32>
    %76 = arith.divf %74, %75 : vector<8x128xf32>
    %77 = vector.extract_strided_slice %76 {offsets = [0, 0], sizes = [8, 32], strides = [1, 1]} : vector<8x128xf32> to vector<8x32xf32>
    %78 = vector.extract_strided_slice %76 {offsets = [0, 32], sizes = [8, 32], strides = [1, 1]} : vector<8x128xf32> to vector<8x32xf32>
    %79 = vector.extract_strided_slice %76 {offsets = [0, 96], sizes = [8, 32], strides = [1, 1]} : vector<8x128xf32> to vector<8x32xf32>
    %80 = vector.extract_strided_slice %71 {offsets = [0, 64], sizes = [8, 32], strides = [1, 1]} : vector<8x128xf32> to vector<8x32xf32>
    %81 = math.tanh %80 : vector<8x32xf32>
    %82 = arith.mulf %78, %15 : vector<8x32xf32>
    %83 = arith.mulf %77, %81 : vector<8x32xf32>
    %84 = arith.addf %82, %83 : vector<8x32xf32>
    %85 = math.tanh %84 : vector<8x32xf32>
    %86 = arith.mulf %79, %85 : vector<8x32xf32>
    %87 = vector.extract_strided_slice %6 {offsets = [8, 0], sizes = [8, 256], strides = [1, 1]} : vector<64x512xf32> to vector<8x256xf32>
    %88 = vector.extract_strided_slice %6 {offsets = [48, 256], sizes = [8, 256], strides = [1, 1]} : vector<64x512xf32> to vector<8x256xf32>
    %89 = tpu.concatenate %87, %88 in 1 : vector<8x256xf32>, vector<8x256xf32> -> vector<8x512xf32>
    %90 = tpu.concatenate %38, %54, %70, %86 in 1 : vector<8x32xf32>, vector<8x32xf32>, vector<8x32xf32>, vector<8x32xf32> -> vector<8x128xf32>
    %91 = arith.truncf %90 : vector<8x128xf32> to vector<8x128xbf16>
    %cst_20 = arith.constant dense<0.000000e+00> : vector<8x512xf32>
    %92 = tpu.matmul %91, %7, %cst_20 {dimension_numbers = #tpu.dot_dimension_numbers<[1], [0], [0], [1], [0, 0, 1, 1], [], []>} : vector<8x128xbf16>, vector<128x512xbf16>, vector<8x512xf32> -> vector<8x512xf32>
    %93 = arith.addf %89, %92 : vector<8x512xf32>
    %94 = vector.extract_strided_slice %93 {offsets = [0, 0], sizes = [8, 128], strides = [1, 1]} : vector<8x512xf32> to vector<8x128xf32>
    %95 = arith.negf %94 : vector<8x128xf32>
    %96 = math.exp %95 : vector<8x128xf32>
    %cst_21 = arith.constant 1.000000e+00 : f32
    %97 = vector.broadcast %cst_21 : f32 to vector<8x128xf32>
    %98 = arith.addf %97, %96 : vector<8x128xf32>
    %99 = arith.divf %97, %98 : vector<8x128xf32>
    %100 = vector.extract_strided_slice %99 {offsets = [0, 0], sizes = [8, 32], strides = [1, 1]} : vector<8x128xf32> to vector<8x32xf32>
    %101 = vector.extract_strided_slice %99 {offsets = [0, 32], sizes = [8, 32], strides = [1, 1]} : vector<8x128xf32> to vector<8x32xf32>
    %102 = vector.extract_strided_slice %99 {offsets = [0, 96], sizes = [8, 32], strides = [1, 1]} : vector<8x128xf32> to vector<8x32xf32>
    %103 = vector.extract_strided_slice %94 {offsets = [0, 64], sizes = [8, 32], strides = [1, 1]} : vector<8x128xf32> to vector<8x32xf32>
    %104 = math.tanh %103 : vector<8x32xf32>
    %105 = arith.mulf %101, %36 : vector<8x32xf32>
    %106 = arith.mulf %100, %104 : vector<8x32xf32>
    %107 = arith.addf %105, %106 : vector<8x32xf32>
    %108 = math.tanh %107 : vector<8x32xf32>
    %109 = arith.mulf %102, %108 : vector<8x32xf32>
    %110 = vector.extract_strided_slice %93 {offsets = [0, 128], sizes = [8, 128], strides = [1, 1]} : vector<8x512xf32> to vector<8x128xf32>
    %111 = arith.negf %110 : vector<8x128xf32>
    %112 = math.exp %111 : vector<8x128xf32>
    %cst_22 = arith.constant 1.000000e+00 : f32
    %113 = vector.broadcast %cst_22 : f32 to vector<8x128xf32>
    %114 = arith.addf %113, %112 : vector<8x128xf32>
    %115 = arith.divf %113, %114 : vector<8x128xf32>
    %116 = vector.extract_strided_slice %115 {offsets = [0, 0], sizes = [8, 32], strides = [1, 1]} : vector<8x128xf32> to vector<8x32xf32>
    %117 = vector.extract_strided_slice %115 {offsets = [0, 32], sizes = [8, 32], strides = [1, 1]} : vector<8x128xf32> to vector<8x32xf32>
    %118 = vector.extract_strided_slice %115 {offsets = [0, 96], sizes = [8, 32], strides = [1, 1]} : vector<8x128xf32> to vector<8x32xf32>
    %119 = vector.extract_strided_slice %110 {offsets = [0, 64], sizes = [8, 32], strides = [1, 1]} : vector<8x128xf32> to vector<8x32xf32>
    %120 = math.tanh %119 : vector<8x32xf32>
    %121 = arith.mulf %117, %52 : vector<8x32xf32>
    %122 = arith.mulf %116, %120 : vector<8x32xf32>
    %123 = arith.addf %121, %122 : vector<8x32xf32>
    %124 = math.tanh %123 : vector<8x32xf32>
    %125 = arith.mulf %118, %124 : vector<8x32xf32>
    %126 = vector.extract_strided_slice %93 {offsets = [0, 256], sizes = [8, 128], strides = [1, 1]} : vector<8x512xf32> to vector<8x128xf32>
    %127 = arith.negf %126 : vector<8x128xf32>
    %128 = math.exp %127 : vector<8x128xf32>
    %cst_23 = arith.constant 1.000000e+00 : f32
    %129 = vector.broadcast %cst_23 : f32 to vector<8x128xf32>
    %130 = arith.addf %129, %128 : vector<8x128xf32>
    %131 = arith.divf %129, %130 : vector<8x128xf32>
    %132 = vector.extract_strided_slice %131 {offsets = [0, 0], sizes = [8, 32], strides = [1, 1]} : vector<8x128xf32> to vector<8x32xf32>
    %133 = vector.extract_strided_slice %131 {offsets = [0, 32], sizes = [8, 32], strides = [1, 1]} : vector<8x128xf32> to vector<8x32xf32>
    %134 = vector.extract_strided_slice %131 {offsets = [0, 96], sizes = [8, 32], strides = [1, 1]} : vector<8x128xf32> to vector<8x32xf32>
    %135 = vector.extract_strided_slice %126 {offsets = [0, 64], sizes = [8, 32], strides = [1, 1]} : vector<8x128xf32> to vector<8x32xf32>
    %136 = math.tanh %135 : vector<8x32xf32>
    %137 = arith.mulf %133, %68 : vector<8x32xf32>
    %138 = arith.mulf %132, %136 : vector<8x32xf32>
    %139 = arith.addf %137, %138 : vector<8x32xf32>
    %140 = math.tanh %139 : vector<8x32xf32>
    %141 = arith.mulf %134, %140 : vector<8x32xf32>
    %142 = vector.extract_strided_slice %93 {offsets = [0, 384], sizes = [8, 128], strides = [1, 1]} : vector<8x512xf32> to vector<8x128xf32>
    %143 = arith.negf %142 : vector<8x128xf32>
    %144 = math.exp %143 : vector<8x128xf32>
    %cst_24 = arith.constant 1.000000e+00 : f32
    %145 = vector.broadcast %cst_24 : f32 to vector<8x128xf32>
    %146 = arith.addf %145, %144 : vector<8x128xf32>
    %147 = arith.divf %145, %146 : vector<8x128xf32>
    %148 = vector.extract_strided_slice %147 {offsets = [0, 0], sizes = [8, 32], strides = [1, 1]} : vector<8x128xf32> to vector<8x32xf32>
    %149 = vector.extract_strided_slice %147 {offsets = [0, 32], sizes = [8, 32], strides = [1, 1]} : vector<8x128xf32> to vector<8x32xf32>
    %150 = vector.extract_strided_slice %147 {offsets = [0, 96], sizes = [8, 32], strides = [1, 1]} : vector<8x128xf32> to vector<8x32xf32>
    %151 = vector.extract_strided_slice %142 {offsets = [0, 64], sizes = [8, 32], strides = [1, 1]} : vector<8x128xf32> to vector<8x32xf32>
    %152 = math.tanh %151 : vector<8x32xf32>
    %153 = arith.mulf %149, %84 : vector<8x32xf32>
    %154 = arith.mulf %148, %152 : vector<8x32xf32>
    %155 = arith.addf %153, %154 : vector<8x32xf32>
    %156 = math.tanh %155 : vector<8x32xf32>
    %157 = arith.mulf %150, %156 : vector<8x32xf32>
    %158 = vector.extract_strided_slice %6 {offsets = [16, 0], sizes = [8, 256], strides = [1, 1]} : vector<64x512xf32> to vector<8x256xf32>
    %159 = vector.extract_strided_slice %6 {offsets = [40, 256], sizes = [8, 256], strides = [1, 1]} : vector<64x512xf32> to vector<8x256xf32>
    %160 = tpu.concatenate %158, %159 in 1 : vector<8x256xf32>, vector<8x256xf32> -> vector<8x512xf32>
    %161 = tpu.concatenate %109, %125, %141, %157 in 1 : vector<8x32xf32>, vector<8x32xf32>, vector<8x32xf32>, vector<8x32xf32> -> vector<8x128xf32>
    %162 = arith.truncf %161 : vector<8x128xf32> to vector<8x128xbf16>
    %cst_25 = arith.constant dense<0.000000e+00> : vector<8x512xf32>
    %163 = tpu.matmul %162, %7, %cst_25 {dimension_numbers = #tpu.dot_dimension_numbers<[1], [0], [0], [1], [0, 0, 1, 1], [], []>} : vector<8x128xbf16>, vector<128x512xbf16>, vector<8x512xf32> -> vector<8x512xf32>
    %164 = arith.addf %160, %163 : vector<8x512xf32>
    %165 = vector.extract_strided_slice %164 {offsets = [0, 0], sizes = [8, 128], strides = [1, 1]} : vector<8x512xf32> to vector<8x128xf32>
    %166 = arith.negf %165 : vector<8x128xf32>
    %167 = math.exp %166 : vector<8x128xf32>
    %cst_26 = arith.constant 1.000000e+00 : f32
    %168 = vector.broadcast %cst_26 : f32 to vector<8x128xf32>
    %169 = arith.addf %168, %167 : vector<8x128xf32>
    %170 = arith.divf %168, %169 : vector<8x128xf32>
    %171 = vector.extract_strided_slice %170 {offsets = [0, 0], sizes = [8, 32], strides = [1, 1]} : vector<8x128xf32> to vector<8x32xf32>
    %172 = vector.extract_strided_slice %170 {offsets = [0, 32], sizes = [8, 32], strides = [1, 1]} : vector<8x128xf32> to vector<8x32xf32>
    %173 = vector.extract_strided_slice %170 {offsets = [0, 96], sizes = [8, 32], strides = [1, 1]} : vector<8x128xf32> to vector<8x32xf32>
    %174 = vector.extract_strided_slice %165 {offsets = [0, 64], sizes = [8, 32], strides = [1, 1]} : vector<8x128xf32> to vector<8x32xf32>
    %175 = math.tanh %174 : vector<8x32xf32>
    %176 = arith.mulf %172, %107 : vector<8x32xf32>
    %177 = arith.mulf %171, %175 : vector<8x32xf32>
    %178 = arith.addf %176, %177 : vector<8x32xf32>
    %179 = math.tanh %178 : vector<8x32xf32>
    %180 = arith.mulf %173, %179 : vector<8x32xf32>
    %181 = vector.extract_strided_slice %164 {offsets = [0, 128], sizes = [8, 128], strides = [1, 1]} : vector<8x512xf32> to vector<8x128xf32>
    %182 = arith.negf %181 : vector<8x128xf32>
    %183 = math.exp %182 : vector<8x128xf32>
    %cst_27 = arith.constant 1.000000e+00 : f32
    %184 = vector.broadcast %cst_27 : f32 to vector<8x128xf32>
    %185 = arith.addf %184, %183 : vector<8x128xf32>
    %186 = arith.divf %184, %185 : vector<8x128xf32>
    %187 = vector.extract_strided_slice %186 {offsets = [0, 0], sizes = [8, 32], strides = [1, 1]} : vector<8x128xf32> to vector<8x32xf32>
    %188 = vector.extract_strided_slice %186 {offsets = [0, 32], sizes = [8, 32], strides = [1, 1]} : vector<8x128xf32> to vector<8x32xf32>
    %189 = vector.extract_strided_slice %186 {offsets = [0, 96], sizes = [8, 32], strides = [1, 1]} : vector<8x128xf32> to vector<8x32xf32>
    %190 = vector.extract_strided_slice %181 {offsets = [0, 64], sizes = [8, 32], strides = [1, 1]} : vector<8x128xf32> to vector<8x32xf32>
    %191 = math.tanh %190 : vector<8x32xf32>
    %192 = arith.mulf %188, %123 : vector<8x32xf32>
    %193 = arith.mulf %187, %191 : vector<8x32xf32>
    %194 = arith.addf %192, %193 : vector<8x32xf32>
    %195 = math.tanh %194 : vector<8x32xf32>
    %196 = arith.mulf %189, %195 : vector<8x32xf32>
    %197 = vector.extract_strided_slice %164 {offsets = [0, 256], sizes = [8, 128], strides = [1, 1]} : vector<8x512xf32> to vector<8x128xf32>
    %198 = arith.negf %197 : vector<8x128xf32>
    %199 = math.exp %198 : vector<8x128xf32>
    %cst_28 = arith.constant 1.000000e+00 : f32
    %200 = vector.broadcast %cst_28 : f32 to vector<8x128xf32>
    %201 = arith.addf %200, %199 : vector<8x128xf32>
    %202 = arith.divf %200, %201 : vector<8x128xf32>
    %203 = vector.extract_strided_slice %202 {offsets = [0, 0], sizes = [8, 32], strides = [1, 1]} : vector<8x128xf32> to vector<8x32xf32>
    %204 = vector.extract_strided_slice %202 {offsets = [0, 32], sizes = [8, 32], strides = [1, 1]} : vector<8x128xf32> to vector<8x32xf32>
    %205 = vector.extract_strided_slice %202 {offsets = [0, 96], sizes = [8, 32], strides = [1, 1]} : vector<8x128xf32> to vector<8x32xf32>
    %206 = vector.extract_strided_slice %197 {offsets = [0, 64], sizes = [8, 32], strides = [1, 1]} : vector<8x128xf32> to vector<8x32xf32>
    %207 = math.tanh %206 : vector<8x32xf32>
    %208 = arith.mulf %204, %139 : vector<8x32xf32>
    %209 = arith.mulf %203, %207 : vector<8x32xf32>
    %210 = arith.addf %208, %209 : vector<8x32xf32>
    %211 = math.tanh %210 : vector<8x32xf32>
    %212 = arith.mulf %205, %211 : vector<8x32xf32>
    %213 = vector.extract_strided_slice %164 {offsets = [0, 384], sizes = [8, 128], strides = [1, 1]} : vector<8x512xf32> to vector<8x128xf32>
    %214 = arith.negf %213 : vector<8x128xf32>
    %215 = math.exp %214 : vector<8x128xf32>
    %cst_29 = arith.constant 1.000000e+00 : f32
    %216 = vector.broadcast %cst_29 : f32 to vector<8x128xf32>
    %217 = arith.addf %216, %215 : vector<8x128xf32>
    %218 = arith.divf %216, %217 : vector<8x128xf32>
    %219 = vector.extract_strided_slice %218 {offsets = [0, 0], sizes = [8, 32], strides = [1, 1]} : vector<8x128xf32> to vector<8x32xf32>
    %220 = vector.extract_strided_slice %218 {offsets = [0, 32], sizes = [8, 32], strides = [1, 1]} : vector<8x128xf32> to vector<8x32xf32>
    %221 = vector.extract_strided_slice %218 {offsets = [0, 96], sizes = [8, 32], strides = [1, 1]} : vector<8x128xf32> to vector<8x32xf32>
    %222 = vector.extract_strided_slice %213 {offsets = [0, 64], sizes = [8, 32], strides = [1, 1]} : vector<8x128xf32> to vector<8x32xf32>
    %223 = math.tanh %222 : vector<8x32xf32>
    %224 = arith.mulf %220, %155 : vector<8x32xf32>
    %225 = arith.mulf %219, %223 : vector<8x32xf32>
    %226 = arith.addf %224, %225 : vector<8x32xf32>
    %227 = math.tanh %226 : vector<8x32xf32>
    %228 = arith.mulf %221, %227 : vector<8x32xf32>
    %229 = vector.extract_strided_slice %6 {offsets = [24, 0], sizes = [8, 256], strides = [1, 1]} : vector<64x512xf32> to vector<8x256xf32>
    %230 = vector.extract_strided_slice %6 {offsets = [32, 256], sizes = [8, 256], strides = [1, 1]} : vector<64x512xf32> to vector<8x256xf32>
    %231 = tpu.concatenate %229, %230 in 1 : vector<8x256xf32>, vector<8x256xf32> -> vector<8x512xf32>
    %232 = tpu.concatenate %180, %196, %212, %228 in 1 : vector<8x32xf32>, vector<8x32xf32>, vector<8x32xf32>, vector<8x32xf32> -> vector<8x128xf32>
    %233 = arith.truncf %232 : vector<8x128xf32> to vector<8x128xbf16>
    %cst_30 = arith.constant dense<0.000000e+00> : vector<8x512xf32>
    %234 = tpu.matmul %233, %7, %cst_30 {dimension_numbers = #tpu.dot_dimension_numbers<[1], [0], [0], [1], [0, 0, 1, 1], [], []>} : vector<8x128xbf16>, vector<128x512xbf16>, vector<8x512xf32> -> vector<8x512xf32>
    %235 = arith.addf %231, %234 : vector<8x512xf32>
    %236 = vector.extract_strided_slice %235 {offsets = [0, 0], sizes = [8, 128], strides = [1, 1]} : vector<8x512xf32> to vector<8x128xf32>
    %237 = arith.negf %236 : vector<8x128xf32>
    %238 = math.exp %237 : vector<8x128xf32>
    %cst_31 = arith.constant 1.000000e+00 : f32
    %239 = vector.broadcast %cst_31 : f32 to vector<8x128xf32>
    %240 = arith.addf %239, %238 : vector<8x128xf32>
    %241 = arith.divf %239, %240 : vector<8x128xf32>
    %242 = vector.extract_strided_slice %241 {offsets = [0, 0], sizes = [8, 32], strides = [1, 1]} : vector<8x128xf32> to vector<8x32xf32>
    %243 = vector.extract_strided_slice %241 {offsets = [0, 32], sizes = [8, 32], strides = [1, 1]} : vector<8x128xf32> to vector<8x32xf32>
    %244 = vector.extract_strided_slice %241 {offsets = [0, 96], sizes = [8, 32], strides = [1, 1]} : vector<8x128xf32> to vector<8x32xf32>
    %245 = vector.extract_strided_slice %236 {offsets = [0, 64], sizes = [8, 32], strides = [1, 1]} : vector<8x128xf32> to vector<8x32xf32>
    %246 = math.tanh %245 : vector<8x32xf32>
    %247 = arith.mulf %243, %178 : vector<8x32xf32>
    %248 = arith.mulf %242, %246 : vector<8x32xf32>
    %249 = arith.addf %247, %248 : vector<8x32xf32>
    %250 = math.tanh %249 : vector<8x32xf32>
    %251 = arith.mulf %244, %250 : vector<8x32xf32>
    %252 = vector.extract_strided_slice %235 {offsets = [0, 128], sizes = [8, 128], strides = [1, 1]} : vector<8x512xf32> to vector<8x128xf32>
    %253 = arith.negf %252 : vector<8x128xf32>
    %254 = math.exp %253 : vector<8x128xf32>
    %cst_32 = arith.constant 1.000000e+00 : f32
    %255 = vector.broadcast %cst_32 : f32 to vector<8x128xf32>
    %256 = arith.addf %255, %254 : vector<8x128xf32>
    %257 = arith.divf %255, %256 : vector<8x128xf32>
    %258 = vector.extract_strided_slice %257 {offsets = [0, 0], sizes = [8, 32], strides = [1, 1]} : vector<8x128xf32> to vector<8x32xf32>
    %259 = vector.extract_strided_slice %257 {offsets = [0, 32], sizes = [8, 32], strides = [1, 1]} : vector<8x128xf32> to vector<8x32xf32>
    %260 = vector.extract_strided_slice %257 {offsets = [0, 96], sizes = [8, 32], strides = [1, 1]} : vector<8x128xf32> to vector<8x32xf32>
    %261 = vector.extract_strided_slice %252 {offsets = [0, 64], sizes = [8, 32], strides = [1, 1]} : vector<8x128xf32> to vector<8x32xf32>
    %262 = math.tanh %261 : vector<8x32xf32>
    %263 = arith.mulf %259, %194 : vector<8x32xf32>
    %264 = arith.mulf %258, %262 : vector<8x32xf32>
    %265 = arith.addf %263, %264 : vector<8x32xf32>
    %266 = math.tanh %265 : vector<8x32xf32>
    %267 = arith.mulf %260, %266 : vector<8x32xf32>
    %268 = vector.extract_strided_slice %235 {offsets = [0, 256], sizes = [8, 128], strides = [1, 1]} : vector<8x512xf32> to vector<8x128xf32>
    %269 = arith.negf %268 : vector<8x128xf32>
    %270 = math.exp %269 : vector<8x128xf32>
    %cst_33 = arith.constant 1.000000e+00 : f32
    %271 = vector.broadcast %cst_33 : f32 to vector<8x128xf32>
    %272 = arith.addf %271, %270 : vector<8x128xf32>
    %273 = arith.divf %271, %272 : vector<8x128xf32>
    %274 = vector.extract_strided_slice %273 {offsets = [0, 0], sizes = [8, 32], strides = [1, 1]} : vector<8x128xf32> to vector<8x32xf32>
    %275 = vector.extract_strided_slice %273 {offsets = [0, 32], sizes = [8, 32], strides = [1, 1]} : vector<8x128xf32> to vector<8x32xf32>
    %276 = vector.extract_strided_slice %273 {offsets = [0, 96], sizes = [8, 32], strides = [1, 1]} : vector<8x128xf32> to vector<8x32xf32>
    %277 = vector.extract_strided_slice %268 {offsets = [0, 64], sizes = [8, 32], strides = [1, 1]} : vector<8x128xf32> to vector<8x32xf32>
    %278 = math.tanh %277 : vector<8x32xf32>
    %279 = arith.mulf %275, %210 : vector<8x32xf32>
    %280 = arith.mulf %274, %278 : vector<8x32xf32>
    %281 = arith.addf %279, %280 : vector<8x32xf32>
    %282 = math.tanh %281 : vector<8x32xf32>
    %283 = arith.mulf %276, %282 : vector<8x32xf32>
    %284 = vector.extract_strided_slice %235 {offsets = [0, 384], sizes = [8, 128], strides = [1, 1]} : vector<8x512xf32> to vector<8x128xf32>
    %285 = arith.negf %284 : vector<8x128xf32>
    %286 = math.exp %285 : vector<8x128xf32>
    %cst_34 = arith.constant 1.000000e+00 : f32
    %287 = vector.broadcast %cst_34 : f32 to vector<8x128xf32>
    %288 = arith.addf %287, %286 : vector<8x128xf32>
    %289 = arith.divf %287, %288 : vector<8x128xf32>
    %290 = vector.extract_strided_slice %289 {offsets = [0, 0], sizes = [8, 32], strides = [1, 1]} : vector<8x128xf32> to vector<8x32xf32>
    %291 = vector.extract_strided_slice %289 {offsets = [0, 32], sizes = [8, 32], strides = [1, 1]} : vector<8x128xf32> to vector<8x32xf32>
    %292 = vector.extract_strided_slice %289 {offsets = [0, 96], sizes = [8, 32], strides = [1, 1]} : vector<8x128xf32> to vector<8x32xf32>
    %293 = vector.extract_strided_slice %284 {offsets = [0, 64], sizes = [8, 32], strides = [1, 1]} : vector<8x128xf32> to vector<8x32xf32>
    %294 = math.tanh %293 : vector<8x32xf32>
    %295 = arith.mulf %291, %226 : vector<8x32xf32>
    %296 = arith.mulf %290, %294 : vector<8x32xf32>
    %297 = arith.addf %295, %296 : vector<8x32xf32>
    %298 = math.tanh %297 : vector<8x32xf32>
    %299 = arith.mulf %292, %298 : vector<8x32xf32>
    %300 = vector.extract_strided_slice %6 {offsets = [32, 0], sizes = [8, 256], strides = [1, 1]} : vector<64x512xf32> to vector<8x256xf32>
    %301 = vector.extract_strided_slice %6 {offsets = [24, 256], sizes = [8, 256], strides = [1, 1]} : vector<64x512xf32> to vector<8x256xf32>
    %302 = tpu.concatenate %300, %301 in 1 : vector<8x256xf32>, vector<8x256xf32> -> vector<8x512xf32>
    %303 = tpu.concatenate %251, %267, %283, %299 in 1 : vector<8x32xf32>, vector<8x32xf32>, vector<8x32xf32>, vector<8x32xf32> -> vector<8x128xf32>
    %304 = arith.truncf %303 : vector<8x128xf32> to vector<8x128xbf16>
    %cst_35 = arith.constant dense<0.000000e+00> : vector<8x512xf32>
    %305 = tpu.matmul %304, %7, %cst_35 {dimension_numbers = #tpu.dot_dimension_numbers<[1], [0], [0], [1], [0, 0, 1, 1], [], []>} : vector<8x128xbf16>, vector<128x512xbf16>, vector<8x512xf32> -> vector<8x512xf32>
    %306 = arith.addf %302, %305 : vector<8x512xf32>
    %307 = vector.extract_strided_slice %306 {offsets = [0, 0], sizes = [8, 128], strides = [1, 1]} : vector<8x512xf32> to vector<8x128xf32>
    %308 = arith.negf %307 : vector<8x128xf32>
    %309 = math.exp %308 : vector<8x128xf32>
    %cst_36 = arith.constant 1.000000e+00 : f32
    %310 = vector.broadcast %cst_36 : f32 to vector<8x128xf32>
    %311 = arith.addf %310, %309 : vector<8x128xf32>
    %312 = arith.divf %310, %311 : vector<8x128xf32>
    %313 = vector.extract_strided_slice %312 {offsets = [0, 0], sizes = [8, 32], strides = [1, 1]} : vector<8x128xf32> to vector<8x32xf32>
    %314 = vector.extract_strided_slice %312 {offsets = [0, 32], sizes = [8, 32], strides = [1, 1]} : vector<8x128xf32> to vector<8x32xf32>
    %315 = vector.extract_strided_slice %312 {offsets = [0, 96], sizes = [8, 32], strides = [1, 1]} : vector<8x128xf32> to vector<8x32xf32>
    %316 = vector.extract_strided_slice %307 {offsets = [0, 64], sizes = [8, 32], strides = [1, 1]} : vector<8x128xf32> to vector<8x32xf32>
    %317 = math.tanh %316 : vector<8x32xf32>
    %318 = arith.mulf %314, %249 : vector<8x32xf32>
    %319 = arith.mulf %313, %317 : vector<8x32xf32>
    %320 = arith.addf %318, %319 : vector<8x32xf32>
    %321 = math.tanh %320 : vector<8x32xf32>
    %322 = arith.mulf %315, %321 : vector<8x32xf32>
    %323 = vector.extract_strided_slice %306 {offsets = [0, 128], sizes = [8, 128], strides = [1, 1]} : vector<8x512xf32> to vector<8x128xf32>
    %324 = arith.negf %323 : vector<8x128xf32>
    %325 = math.exp %324 : vector<8x128xf32>
    %cst_37 = arith.constant 1.000000e+00 : f32
    %326 = vector.broadcast %cst_37 : f32 to vector<8x128xf32>
    %327 = arith.addf %326, %325 : vector<8x128xf32>
    %328 = arith.divf %326, %327 : vector<8x128xf32>
    %329 = vector.extract_strided_slice %328 {offsets = [0, 0], sizes = [8, 32], strides = [1, 1]} : vector<8x128xf32> to vector<8x32xf32>
    %330 = vector.extract_strided_slice %328 {offsets = [0, 32], sizes = [8, 32], strides = [1, 1]} : vector<8x128xf32> to vector<8x32xf32>
    %331 = vector.extract_strided_slice %328 {offsets = [0, 96], sizes = [8, 32], strides = [1, 1]} : vector<8x128xf32> to vector<8x32xf32>
    %332 = vector.extract_strided_slice %323 {offsets = [0, 64], sizes = [8, 32], strides = [1, 1]} : vector<8x128xf32> to vector<8x32xf32>
    %333 = math.tanh %332 : vector<8x32xf32>
    %334 = arith.mulf %330, %265 : vector<8x32xf32>
    %335 = arith.mulf %329, %333 : vector<8x32xf32>
    %336 = arith.addf %334, %335 : vector<8x32xf32>
    %337 = math.tanh %336 : vector<8x32xf32>
    %338 = arith.mulf %331, %337 : vector<8x32xf32>
    %339 = vector.extract_strided_slice %306 {offsets = [0, 256], sizes = [8, 128], strides = [1, 1]} : vector<8x512xf32> to vector<8x128xf32>
    %340 = arith.negf %339 : vector<8x128xf32>
    %341 = math.exp %340 : vector<8x128xf32>
    %cst_38 = arith.constant 1.000000e+00 : f32
    %342 = vector.broadcast %cst_38 : f32 to vector<8x128xf32>
    %343 = arith.addf %342, %341 : vector<8x128xf32>
    %344 = arith.divf %342, %343 : vector<8x128xf32>
    %345 = vector.extract_strided_slice %344 {offsets = [0, 0], sizes = [8, 32], strides = [1, 1]} : vector<8x128xf32> to vector<8x32xf32>
    %346 = vector.extract_strided_slice %344 {offsets = [0, 32], sizes = [8, 32], strides = [1, 1]} : vector<8x128xf32> to vector<8x32xf32>
    %347 = vector.extract_strided_slice %344 {offsets = [0, 96], sizes = [8, 32], strides = [1, 1]} : vector<8x128xf32> to vector<8x32xf32>
    %348 = vector.extract_strided_slice %339 {offsets = [0, 64], sizes = [8, 32], strides = [1, 1]} : vector<8x128xf32> to vector<8x32xf32>
    %349 = math.tanh %348 : vector<8x32xf32>
    %350 = arith.mulf %346, %281 : vector<8x32xf32>
    %351 = arith.mulf %345, %349 : vector<8x32xf32>
    %352 = arith.addf %350, %351 : vector<8x32xf32>
    %353 = math.tanh %352 : vector<8x32xf32>
    %354 = arith.mulf %347, %353 : vector<8x32xf32>
    %355 = vector.extract_strided_slice %306 {offsets = [0, 384], sizes = [8, 128], strides = [1, 1]} : vector<8x512xf32> to vector<8x128xf32>
    %356 = arith.negf %355 : vector<8x128xf32>
    %357 = math.exp %356 : vector<8x128xf32>
    %cst_39 = arith.constant 1.000000e+00 : f32
    %358 = vector.broadcast %cst_39 : f32 to vector<8x128xf32>
    %359 = arith.addf %358, %357 : vector<8x128xf32>
    %360 = arith.divf %358, %359 : vector<8x128xf32>
    %361 = vector.extract_strided_slice %360 {offsets = [0, 0], sizes = [8, 32], strides = [1, 1]} : vector<8x128xf32> to vector<8x32xf32>
    %362 = vector.extract_strided_slice %360 {offsets = [0, 32], sizes = [8, 32], strides = [1, 1]} : vector<8x128xf32> to vector<8x32xf32>
    %363 = vector.extract_strided_slice %360 {offsets = [0, 96], sizes = [8, 32], strides = [1, 1]} : vector<8x128xf32> to vector<8x32xf32>
    %364 = vector.extract_strided_slice %355 {offsets = [0, 64], sizes = [8, 32], strides = [1, 1]} : vector<8x128xf32> to vector<8x32xf32>
    %365 = math.tanh %364 : vector<8x32xf32>
    %366 = arith.mulf %362, %297 : vector<8x32xf32>
    %367 = arith.mulf %361, %365 : vector<8x32xf32>
    %368 = arith.addf %366, %367 : vector<8x32xf32>
    %369 = math.tanh %368 : vector<8x32xf32>
    %370 = arith.mulf %363, %369 : vector<8x32xf32>
    %371 = vector.extract_strided_slice %6 {offsets = [40, 0], sizes = [8, 256], strides = [1, 1]} : vector<64x512xf32> to vector<8x256xf32>
    %372 = vector.extract_strided_slice %6 {offsets = [16, 256], sizes = [8, 256], strides = [1, 1]} : vector<64x512xf32> to vector<8x256xf32>
    %373 = tpu.concatenate %371, %372 in 1 : vector<8x256xf32>, vector<8x256xf32> -> vector<8x512xf32>
    %374 = tpu.concatenate %322, %338, %354, %370 in 1 : vector<8x32xf32>, vector<8x32xf32>, vector<8x32xf32>, vector<8x32xf32> -> vector<8x128xf32>
    %375 = arith.truncf %374 : vector<8x128xf32> to vector<8x128xbf16>
    %cst_40 = arith.constant dense<0.000000e+00> : vector<8x512xf32>
    %376 = tpu.matmul %375, %7, %cst_40 {dimension_numbers = #tpu.dot_dimension_numbers<[1], [0], [0], [1], [0, 0, 1, 1], [], []>} : vector<8x128xbf16>, vector<128x512xbf16>, vector<8x512xf32> -> vector<8x512xf32>
    %377 = arith.addf %373, %376 : vector<8x512xf32>
    %378 = vector.extract_strided_slice %377 {offsets = [0, 0], sizes = [8, 128], strides = [1, 1]} : vector<8x512xf32> to vector<8x128xf32>
    %379 = arith.negf %378 : vector<8x128xf32>
    %380 = math.exp %379 : vector<8x128xf32>
    %cst_41 = arith.constant 1.000000e+00 : f32
    %381 = vector.broadcast %cst_41 : f32 to vector<8x128xf32>
    %382 = arith.addf %381, %380 : vector<8x128xf32>
    %383 = arith.divf %381, %382 : vector<8x128xf32>
    %384 = vector.extract_strided_slice %383 {offsets = [0, 0], sizes = [8, 32], strides = [1, 1]} : vector<8x128xf32> to vector<8x32xf32>
    %385 = vector.extract_strided_slice %383 {offsets = [0, 32], sizes = [8, 32], strides = [1, 1]} : vector<8x128xf32> to vector<8x32xf32>
    %386 = vector.extract_strided_slice %383 {offsets = [0, 96], sizes = [8, 32], strides = [1, 1]} : vector<8x128xf32> to vector<8x32xf32>
    %387 = vector.extract_strided_slice %378 {offsets = [0, 64], sizes = [8, 32], strides = [1, 1]} : vector<8x128xf32> to vector<8x32xf32>
    %388 = math.tanh %387 : vector<8x32xf32>
    %389 = arith.mulf %385, %320 : vector<8x32xf32>
    %390 = arith.mulf %384, %388 : vector<8x32xf32>
    %391 = arith.addf %389, %390 : vector<8x32xf32>
    %392 = math.tanh %391 : vector<8x32xf32>
    %393 = arith.mulf %386, %392 : vector<8x32xf32>
    %394 = vector.extract_strided_slice %377 {offsets = [0, 128], sizes = [8, 128], strides = [1, 1]} : vector<8x512xf32> to vector<8x128xf32>
    %395 = arith.negf %394 : vector<8x128xf32>
    %396 = math.exp %395 : vector<8x128xf32>
    %cst_42 = arith.constant 1.000000e+00 : f32
    %397 = vector.broadcast %cst_42 : f32 to vector<8x128xf32>
    %398 = arith.addf %397, %396 : vector<8x128xf32>
    %399 = arith.divf %397, %398 : vector<8x128xf32>
    %400 = vector.extract_strided_slice %399 {offsets = [0, 0], sizes = [8, 32], strides = [1, 1]} : vector<8x128xf32> to vector<8x32xf32>
    %401 = vector.extract_strided_slice %399 {offsets = [0, 32], sizes = [8, 32], strides = [1, 1]} : vector<8x128xf32> to vector<8x32xf32>
    %402 = vector.extract_strided_slice %399 {offsets = [0, 96], sizes = [8, 32], strides = [1, 1]} : vector<8x128xf32> to vector<8x32xf32>
    %403 = vector.extract_strided_slice %394 {offsets = [0, 64], sizes = [8, 32], strides = [1, 1]} : vector<8x128xf32> to vector<8x32xf32>
    %404 = math.tanh %403 : vector<8x32xf32>
    %405 = arith.mulf %401, %336 : vector<8x32xf32>
    %406 = arith.mulf %400, %404 : vector<8x32xf32>
    %407 = arith.addf %405, %406 : vector<8x32xf32>
    %408 = math.tanh %407 : vector<8x32xf32>
    %409 = arith.mulf %402, %408 : vector<8x32xf32>
    %410 = vector.extract_strided_slice %377 {offsets = [0, 256], sizes = [8, 128], strides = [1, 1]} : vector<8x512xf32> to vector<8x128xf32>
    %411 = arith.negf %410 : vector<8x128xf32>
    %412 = math.exp %411 : vector<8x128xf32>
    %cst_43 = arith.constant 1.000000e+00 : f32
    %413 = vector.broadcast %cst_43 : f32 to vector<8x128xf32>
    %414 = arith.addf %413, %412 : vector<8x128xf32>
    %415 = arith.divf %413, %414 : vector<8x128xf32>
    %416 = vector.extract_strided_slice %415 {offsets = [0, 0], sizes = [8, 32], strides = [1, 1]} : vector<8x128xf32> to vector<8x32xf32>
    %417 = vector.extract_strided_slice %415 {offsets = [0, 32], sizes = [8, 32], strides = [1, 1]} : vector<8x128xf32> to vector<8x32xf32>
    %418 = vector.extract_strided_slice %415 {offsets = [0, 96], sizes = [8, 32], strides = [1, 1]} : vector<8x128xf32> to vector<8x32xf32>
    %419 = vector.extract_strided_slice %410 {offsets = [0, 64], sizes = [8, 32], strides = [1, 1]} : vector<8x128xf32> to vector<8x32xf32>
    %420 = math.tanh %419 : vector<8x32xf32>
    %421 = arith.mulf %417, %352 : vector<8x32xf32>
    %422 = arith.mulf %416, %420 : vector<8x32xf32>
    %423 = arith.addf %421, %422 : vector<8x32xf32>
    %424 = math.tanh %423 : vector<8x32xf32>
    %425 = arith.mulf %418, %424 : vector<8x32xf32>
    %426 = vector.extract_strided_slice %377 {offsets = [0, 384], sizes = [8, 128], strides = [1, 1]} : vector<8x512xf32> to vector<8x128xf32>
    %427 = arith.negf %426 : vector<8x128xf32>
    %428 = math.exp %427 : vector<8x128xf32>
    %cst_44 = arith.constant 1.000000e+00 : f32
    %429 = vector.broadcast %cst_44 : f32 to vector<8x128xf32>
    %430 = arith.addf %429, %428 : vector<8x128xf32>
    %431 = arith.divf %429, %430 : vector<8x128xf32>
    %432 = vector.extract_strided_slice %431 {offsets = [0, 0], sizes = [8, 32], strides = [1, 1]} : vector<8x128xf32> to vector<8x32xf32>
    %433 = vector.extract_strided_slice %431 {offsets = [0, 32], sizes = [8, 32], strides = [1, 1]} : vector<8x128xf32> to vector<8x32xf32>
    %434 = vector.extract_strided_slice %431 {offsets = [0, 96], sizes = [8, 32], strides = [1, 1]} : vector<8x128xf32> to vector<8x32xf32>
    %435 = vector.extract_strided_slice %426 {offsets = [0, 64], sizes = [8, 32], strides = [1, 1]} : vector<8x128xf32> to vector<8x32xf32>
    %436 = math.tanh %435 : vector<8x32xf32>
    %437 = arith.mulf %433, %368 : vector<8x32xf32>
    %438 = arith.mulf %432, %436 : vector<8x32xf32>
    %439 = arith.addf %437, %438 : vector<8x32xf32>
    %440 = math.tanh %439 : vector<8x32xf32>
    %441 = arith.mulf %434, %440 : vector<8x32xf32>
    %442 = vector.extract_strided_slice %6 {offsets = [48, 0], sizes = [8, 256], strides = [1, 1]} : vector<64x512xf32> to vector<8x256xf32>
    %443 = vector.extract_strided_slice %6 {offsets = [8, 256], sizes = [8, 256], strides = [1, 1]} : vector<64x512xf32> to vector<8x256xf32>
    %444 = tpu.concatenate %442, %443 in 1 : vector<8x256xf32>, vector<8x256xf32> -> vector<8x512xf32>
    %445 = tpu.concatenate %393, %409, %425, %441 in 1 : vector<8x32xf32>, vector<8x32xf32>, vector<8x32xf32>, vector<8x32xf32> -> vector<8x128xf32>
    %446 = arith.truncf %445 : vector<8x128xf32> to vector<8x128xbf16>
    %cst_45 = arith.constant dense<0.000000e+00> : vector<8x512xf32>
    %447 = tpu.matmul %446, %7, %cst_45 {dimension_numbers = #tpu.dot_dimension_numbers<[1], [0], [0], [1], [0, 0, 1, 1], [], []>} : vector<8x128xbf16>, vector<128x512xbf16>, vector<8x512xf32> -> vector<8x512xf32>
    %448 = arith.addf %444, %447 : vector<8x512xf32>
    %449 = vector.extract_strided_slice %448 {offsets = [0, 0], sizes = [8, 128], strides = [1, 1]} : vector<8x512xf32> to vector<8x128xf32>
    %450 = arith.negf %449 : vector<8x128xf32>
    %451 = math.exp %450 : vector<8x128xf32>
    %cst_46 = arith.constant 1.000000e+00 : f32
    %452 = vector.broadcast %cst_46 : f32 to vector<8x128xf32>
    %453 = arith.addf %452, %451 : vector<8x128xf32>
    %454 = arith.divf %452, %453 : vector<8x128xf32>
    %455 = vector.extract_strided_slice %454 {offsets = [0, 0], sizes = [8, 32], strides = [1, 1]} : vector<8x128xf32> to vector<8x32xf32>
    %456 = vector.extract_strided_slice %454 {offsets = [0, 32], sizes = [8, 32], strides = [1, 1]} : vector<8x128xf32> to vector<8x32xf32>
    %457 = vector.extract_strided_slice %454 {offsets = [0, 96], sizes = [8, 32], strides = [1, 1]} : vector<8x128xf32> to vector<8x32xf32>
    %458 = vector.extract_strided_slice %449 {offsets = [0, 64], sizes = [8, 32], strides = [1, 1]} : vector<8x128xf32> to vector<8x32xf32>
    %459 = math.tanh %458 : vector<8x32xf32>
    %460 = arith.mulf %456, %391 : vector<8x32xf32>
    %461 = arith.mulf %455, %459 : vector<8x32xf32>
    %462 = arith.addf %460, %461 : vector<8x32xf32>
    %463 = math.tanh %462 : vector<8x32xf32>
    %464 = arith.mulf %457, %463 : vector<8x32xf32>
    %465 = vector.extract_strided_slice %448 {offsets = [0, 128], sizes = [8, 128], strides = [1, 1]} : vector<8x512xf32> to vector<8x128xf32>
    %466 = arith.negf %465 : vector<8x128xf32>
    %467 = math.exp %466 : vector<8x128xf32>
    %cst_47 = arith.constant 1.000000e+00 : f32
    %468 = vector.broadcast %cst_47 : f32 to vector<8x128xf32>
    %469 = arith.addf %468, %467 : vector<8x128xf32>
    %470 = arith.divf %468, %469 : vector<8x128xf32>
    %471 = vector.extract_strided_slice %470 {offsets = [0, 0], sizes = [8, 32], strides = [1, 1]} : vector<8x128xf32> to vector<8x32xf32>
    %472 = vector.extract_strided_slice %470 {offsets = [0, 32], sizes = [8, 32], strides = [1, 1]} : vector<8x128xf32> to vector<8x32xf32>
    %473 = vector.extract_strided_slice %470 {offsets = [0, 96], sizes = [8, 32], strides = [1, 1]} : vector<8x128xf32> to vector<8x32xf32>
    %474 = vector.extract_strided_slice %465 {offsets = [0, 64], sizes = [8, 32], strides = [1, 1]} : vector<8x128xf32> to vector<8x32xf32>
    %475 = math.tanh %474 : vector<8x32xf32>
    %476 = arith.mulf %472, %407 : vector<8x32xf32>
    %477 = arith.mulf %471, %475 : vector<8x32xf32>
    %478 = arith.addf %476, %477 : vector<8x32xf32>
    %479 = math.tanh %478 : vector<8x32xf32>
    %480 = arith.mulf %473, %479 : vector<8x32xf32>
    %481 = vector.extract_strided_slice %448 {offsets = [0, 256], sizes = [8, 128], strides = [1, 1]} : vector<8x512xf32> to vector<8x128xf32>
    %482 = arith.negf %481 : vector<8x128xf32>
    %483 = math.exp %482 : vector<8x128xf32>
    %cst_48 = arith.constant 1.000000e+00 : f32
    %484 = vector.broadcast %cst_48 : f32 to vector<8x128xf32>
    %485 = arith.addf %484, %483 : vector<8x128xf32>
    %486 = arith.divf %484, %485 : vector<8x128xf32>
    %487 = vector.extract_strided_slice %486 {offsets = [0, 0], sizes = [8, 32], strides = [1, 1]} : vector<8x128xf32> to vector<8x32xf32>
    %488 = vector.extract_strided_slice %486 {offsets = [0, 32], sizes = [8, 32], strides = [1, 1]} : vector<8x128xf32> to vector<8x32xf32>
    %489 = vector.extract_strided_slice %486 {offsets = [0, 96], sizes = [8, 32], strides = [1, 1]} : vector<8x128xf32> to vector<8x32xf32>
    %490 = vector.extract_strided_slice %481 {offsets = [0, 64], sizes = [8, 32], strides = [1, 1]} : vector<8x128xf32> to vector<8x32xf32>
    %491 = math.tanh %490 : vector<8x32xf32>
    %492 = arith.mulf %488, %423 : vector<8x32xf32>
    %493 = arith.mulf %487, %491 : vector<8x32xf32>
    %494 = arith.addf %492, %493 : vector<8x32xf32>
    %495 = math.tanh %494 : vector<8x32xf32>
    %496 = arith.mulf %489, %495 : vector<8x32xf32>
    %497 = vector.extract_strided_slice %448 {offsets = [0, 384], sizes = [8, 128], strides = [1, 1]} : vector<8x512xf32> to vector<8x128xf32>
    %498 = arith.negf %497 : vector<8x128xf32>
    %499 = math.exp %498 : vector<8x128xf32>
    %cst_49 = arith.constant 1.000000e+00 : f32
    %500 = vector.broadcast %cst_49 : f32 to vector<8x128xf32>
    %501 = arith.addf %500, %499 : vector<8x128xf32>
    %502 = arith.divf %500, %501 : vector<8x128xf32>
    %503 = vector.extract_strided_slice %502 {offsets = [0, 0], sizes = [8, 32], strides = [1, 1]} : vector<8x128xf32> to vector<8x32xf32>
    %504 = vector.extract_strided_slice %502 {offsets = [0, 32], sizes = [8, 32], strides = [1, 1]} : vector<8x128xf32> to vector<8x32xf32>
    %505 = vector.extract_strided_slice %502 {offsets = [0, 96], sizes = [8, 32], strides = [1, 1]} : vector<8x128xf32> to vector<8x32xf32>
    %506 = vector.extract_strided_slice %497 {offsets = [0, 64], sizes = [8, 32], strides = [1, 1]} : vector<8x128xf32> to vector<8x32xf32>
    %507 = math.tanh %506 : vector<8x32xf32>
    %508 = arith.mulf %504, %439 : vector<8x32xf32>
    %509 = arith.mulf %503, %507 : vector<8x32xf32>
    %510 = arith.addf %508, %509 : vector<8x32xf32>
    %511 = math.tanh %510 : vector<8x32xf32>
    %512 = arith.mulf %505, %511 : vector<8x32xf32>
    %513 = vector.extract_strided_slice %6 {offsets = [56, 0], sizes = [8, 256], strides = [1, 1]} : vector<64x512xf32> to vector<8x256xf32>
    %514 = vector.extract_strided_slice %6 {offsets = [0, 256], sizes = [8, 256], strides = [1, 1]} : vector<64x512xf32> to vector<8x256xf32>
    %515 = tpu.concatenate %513, %514 in 1 : vector<8x256xf32>, vector<8x256xf32> -> vector<8x512xf32>
    %516 = tpu.concatenate %464, %480, %496, %512 in 1 : vector<8x32xf32>, vector<8x32xf32>, vector<8x32xf32>, vector<8x32xf32> -> vector<8x128xf32>
    %517 = arith.truncf %516 : vector<8x128xf32> to vector<8x128xbf16>
    %cst_50 = arith.constant dense<0.000000e+00> : vector<8x512xf32>
    %518 = tpu.matmul %517, %7, %cst_50 {dimension_numbers = #tpu.dot_dimension_numbers<[1], [0], [0], [1], [0, 0, 1, 1], [], []>} : vector<8x128xbf16>, vector<128x512xbf16>, vector<8x512xf32> -> vector<8x512xf32>
    %519 = arith.addf %515, %518 : vector<8x512xf32>
    %520 = vector.extract_strided_slice %519 {offsets = [0, 0], sizes = [8, 128], strides = [1, 1]} : vector<8x512xf32> to vector<8x128xf32>
    %521 = arith.negf %520 : vector<8x128xf32>
    %522 = math.exp %521 : vector<8x128xf32>
    %cst_51 = arith.constant 1.000000e+00 : f32
    %523 = vector.broadcast %cst_51 : f32 to vector<8x128xf32>
    %524 = arith.addf %523, %522 : vector<8x128xf32>
    %525 = arith.divf %523, %524 : vector<8x128xf32>
    %526 = vector.extract_strided_slice %525 {offsets = [0, 0], sizes = [8, 32], strides = [1, 1]} : vector<8x128xf32> to vector<8x32xf32>
    %527 = vector.extract_strided_slice %525 {offsets = [0, 32], sizes = [8, 32], strides = [1, 1]} : vector<8x128xf32> to vector<8x32xf32>
    %528 = vector.extract_strided_slice %525 {offsets = [0, 96], sizes = [8, 32], strides = [1, 1]} : vector<8x128xf32> to vector<8x32xf32>
    %529 = vector.extract_strided_slice %520 {offsets = [0, 64], sizes = [8, 32], strides = [1, 1]} : vector<8x128xf32> to vector<8x32xf32>
    %530 = math.tanh %529 : vector<8x32xf32>
    %531 = arith.mulf %527, %462 : vector<8x32xf32>
    %532 = arith.mulf %526, %530 : vector<8x32xf32>
    %533 = arith.addf %531, %532 : vector<8x32xf32>
    %534 = math.tanh %533 : vector<8x32xf32>
    %535 = arith.mulf %528, %534 : vector<8x32xf32>
    %536 = vector.extract_strided_slice %519 {offsets = [0, 128], sizes = [8, 128], strides = [1, 1]} : vector<8x512xf32> to vector<8x128xf32>
    %537 = arith.negf %536 : vector<8x128xf32>
    %538 = math.exp %537 : vector<8x128xf32>
    %cst_52 = arith.constant 1.000000e+00 : f32
    %539 = vector.broadcast %cst_52 : f32 to vector<8x128xf32>
    %540 = arith.addf %539, %538 : vector<8x128xf32>
    %541 = arith.divf %539, %540 : vector<8x128xf32>
    %542 = vector.extract_strided_slice %541 {offsets = [0, 0], sizes = [8, 32], strides = [1, 1]} : vector<8x128xf32> to vector<8x32xf32>
    %543 = vector.extract_strided_slice %541 {offsets = [0, 32], sizes = [8, 32], strides = [1, 1]} : vector<8x128xf32> to vector<8x32xf32>
    %544 = vector.extract_strided_slice %541 {offsets = [0, 96], sizes = [8, 32], strides = [1, 1]} : vector<8x128xf32> to vector<8x32xf32>
    %545 = vector.extract_strided_slice %536 {offsets = [0, 64], sizes = [8, 32], strides = [1, 1]} : vector<8x128xf32> to vector<8x32xf32>
    %546 = math.tanh %545 : vector<8x32xf32>
    %547 = arith.mulf %543, %478 : vector<8x32xf32>
    %548 = arith.mulf %542, %546 : vector<8x32xf32>
    %549 = arith.addf %547, %548 : vector<8x32xf32>
    %550 = math.tanh %549 : vector<8x32xf32>
    %551 = arith.mulf %544, %550 : vector<8x32xf32>
    %552 = vector.extract_strided_slice %519 {offsets = [0, 256], sizes = [8, 128], strides = [1, 1]} : vector<8x512xf32> to vector<8x128xf32>
    %553 = arith.negf %552 : vector<8x128xf32>
    %554 = math.exp %553 : vector<8x128xf32>
    %cst_53 = arith.constant 1.000000e+00 : f32
    %555 = vector.broadcast %cst_53 : f32 to vector<8x128xf32>
    %556 = arith.addf %555, %554 : vector<8x128xf32>
    %557 = arith.divf %555, %556 : vector<8x128xf32>
    %558 = vector.extract_strided_slice %557 {offsets = [0, 0], sizes = [8, 32], strides = [1, 1]} : vector<8x128xf32> to vector<8x32xf32>
    %559 = vector.extract_strided_slice %557 {offsets = [0, 32], sizes = [8, 32], strides = [1, 1]} : vector<8x128xf32> to vector<8x32xf32>
    %560 = vector.extract_strided_slice %557 {offsets = [0, 96], sizes = [8, 32], strides = [1, 1]} : vector<8x128xf32> to vector<8x32xf32>
    %561 = vector.extract_strided_slice %552 {offsets = [0, 64], sizes = [8, 32], strides = [1, 1]} : vector<8x128xf32> to vector<8x32xf32>
    %562 = math.tanh %561 : vector<8x32xf32>
    %563 = arith.mulf %559, %494 : vector<8x32xf32>
    %564 = arith.mulf %558, %562 : vector<8x32xf32>
    %565 = arith.addf %563, %564 : vector<8x32xf32>
    %566 = math.tanh %565 : vector<8x32xf32>
    %567 = arith.mulf %560, %566 : vector<8x32xf32>
    %568 = vector.extract_strided_slice %519 {offsets = [0, 384], sizes = [8, 128], strides = [1, 1]} : vector<8x512xf32> to vector<8x128xf32>
    %569 = arith.negf %568 : vector<8x128xf32>
    %570 = math.exp %569 : vector<8x128xf32>
    %cst_54 = arith.constant 1.000000e+00 : f32
    %571 = vector.broadcast %cst_54 : f32 to vector<8x128xf32>
    %572 = arith.addf %571, %570 : vector<8x128xf32>
    %573 = arith.divf %571, %572 : vector<8x128xf32>
    %574 = vector.extract_strided_slice %573 {offsets = [0, 0], sizes = [8, 32], strides = [1, 1]} : vector<8x128xf32> to vector<8x32xf32>
    %575 = vector.extract_strided_slice %573 {offsets = [0, 32], sizes = [8, 32], strides = [1, 1]} : vector<8x128xf32> to vector<8x32xf32>
    %576 = vector.extract_strided_slice %573 {offsets = [0, 96], sizes = [8, 32], strides = [1, 1]} : vector<8x128xf32> to vector<8x32xf32>
    %577 = vector.extract_strided_slice %568 {offsets = [0, 64], sizes = [8, 32], strides = [1, 1]} : vector<8x128xf32> to vector<8x32xf32>
    %578 = math.tanh %577 : vector<8x32xf32>
    %579 = arith.mulf %575, %510 : vector<8x32xf32>
    %580 = arith.mulf %574, %578 : vector<8x32xf32>
    %581 = arith.addf %579, %580 : vector<8x32xf32>
    %582 = math.tanh %581 : vector<8x32xf32>
    %583 = arith.mulf %576, %582 : vector<8x32xf32>
    %584 = tpu.concatenate %551, %583, %549, %581 in 1 : vector<8x32xf32>, vector<8x32xf32>, vector<8x32xf32>, vector<8x32xf32> -> vector<8x128xf32>
    %c0_55 = arith.constant 0 : index
    %c0_56 = arith.constant 0 : index
    %585 = vector.load %arg11[%c0_55, %c0_56] : memref<8x128xf32, #tpu.memory_space<vmem>>, vector<8x128xf32>
    tpu.vector_store %arg11[%c0_55, %c0_56], %584 {strides = array<i32>} : memref<8x128xf32, #tpu.memory_space<vmem>>, vector<8x128xf32>,
    %c0_57 = arith.constant 0 : index
    %c0_58 = arith.constant 0 : index
    %586 = vector.load %arg1[%c0_57, %c0_58] : memref<64x28xf32, #tpu.memory_space<vmem>>, vector<64x28xf32>
    %587 = arith.truncf %586 : vector<64x28xf32> to vector<64x28xbf16>
    %c0_59 = arith.constant 0 : index
    %c0_60 = arith.constant 0 : index
    %588 = vector.load %arg5[%c0_59, %c0_60] : memref<28x256xbf16, #tpu.memory_space<vmem>>, vector<28x256xbf16>
    %cst_61 = arith.constant dense<0.000000e+00> : vector<64x256xf32>
    %589 = tpu.matmul %587, %588, %cst_61 {dimension_numbers = #tpu.dot_dimension_numbers<[1], [0], [0], [1], [0, 0, 1, 1], [], []>} : vector<64x28xbf16>, vector<28x256xbf16>, vector<64x256xf32> -> vector<64x256xf32>
    %c0_62 = arith.constant 0 : index
    %c0_63 = arith.constant 0 : index
    %590 = vector.load %arg6[%c0_62, %c0_63] : memref<1x256xf32, #tpu.memory_space<vmem>>, vector<1x256xf32>
    %591 = vector.broadcast %590 : vector<1x256xf32> to vector<64x256xf32>
    %592 = arith.addf %589, %591 : vector<64x256xf32>
    %c0_64 = arith.constant 0 : index
    %c0_65 = arith.constant 0 : index
    %593 = vector.load %arg7[%c0_64, %c0_65] : memref<64x256xbf16, #tpu.memory_space<vmem>>, vector<64x256xbf16>
    %594 = vector.extract_strided_slice %592 {offsets = [0, 0], sizes = [8, 128], strides = [1, 1]} : vector<64x256xf32> to vector<8x128xf32>
    %595 = vector.extract_strided_slice %592 {offsets = [56, 128], sizes = [8, 128], strides = [1, 1]} : vector<64x256xf32> to vector<8x128xf32>
    %596 = tpu.concatenate %594, %595 in 1 : vector<8x128xf32>, vector<8x128xf32> -> vector<8x256xf32>
    %597 = tpu.concatenate %535, %567 in 1 : vector<8x32xf32>, vector<8x32xf32> -> vector<8x64xf32>
    %598 = arith.truncf %597 : vector<8x64xf32> to vector<8x64xbf16>
    %cst_66 = arith.constant dense<0.000000e+00> : vector<8x256xf32>
    %599 = tpu.matmul %598, %593, %cst_66 {dimension_numbers = #tpu.dot_dimension_numbers<[1], [0], [0], [1], [0, 0, 1, 1], [], []>} : vector<8x64xbf16>, vector<64x256xbf16>, vector<8x256xf32> -> vector<8x256xf32>
    %600 = arith.addf %596, %599 : vector<8x256xf32>
    %601 = vector.extract_strided_slice %600 {offsets = [0, 0], sizes = [8, 128], strides = [1, 1]} : vector<8x256xf32> to vector<8x128xf32>
    %602 = arith.negf %601 : vector<8x128xf32>
    %603 = math.exp %602 : vector<8x128xf32>
    %cst_67 = arith.constant 1.000000e+00 : f32
    %604 = vector.broadcast %cst_67 : f32 to vector<8x128xf32>
    %605 = arith.addf %604, %603 : vector<8x128xf32>
    %606 = arith.divf %604, %605 : vector<8x128xf32>
    %607 = vector.extract_strided_slice %606 {offsets = [0, 0], sizes = [8, 32], strides = [1, 1]} : vector<8x128xf32> to vector<8x32xf32>
    %608 = vector.extract_strided_slice %606 {offsets = [0, 32], sizes = [8, 32], strides = [1, 1]} : vector<8x128xf32> to vector<8x32xf32>
    %609 = vector.extract_strided_slice %606 {offsets = [0, 96], sizes = [8, 32], strides = [1, 1]} : vector<8x128xf32> to vector<8x32xf32>
    %610 = vector.extract_strided_slice %601 {offsets = [0, 64], sizes = [8, 32], strides = [1, 1]} : vector<8x128xf32> to vector<8x32xf32>
    %611 = math.tanh %610 : vector<8x32xf32>
    %612 = arith.mulf %608, %533 : vector<8x32xf32>
    %613 = arith.mulf %607, %611 : vector<8x32xf32>
    %614 = arith.addf %612, %613 : vector<8x32xf32>
    %615 = math.tanh %614 : vector<8x32xf32>
    %616 = arith.mulf %609, %615 : vector<8x32xf32>
    %617 = vector.extract_strided_slice %600 {offsets = [0, 128], sizes = [8, 128], strides = [1, 1]} : vector<8x256xf32> to vector<8x128xf32>
    %618 = arith.negf %617 : vector<8x128xf32>
    %619 = math.exp %618 : vector<8x128xf32>
    %cst_68 = arith.constant 1.000000e+00 : f32
    %620 = vector.broadcast %cst_68 : f32 to vector<8x128xf32>
    %621 = arith.addf %620, %619 : vector<8x128xf32>
    %622 = arith.divf %620, %621 : vector<8x128xf32>
    %623 = vector.extract_strided_slice %622 {offsets = [0, 0], sizes = [8, 32], strides = [1, 1]} : vector<8x128xf32> to vector<8x32xf32>
    %624 = vector.extract_strided_slice %622 {offsets = [0, 32], sizes = [8, 32], strides = [1, 1]} : vector<8x128xf32> to vector<8x32xf32>
    %625 = vector.extract_strided_slice %622 {offsets = [0, 96], sizes = [8, 32], strides = [1, 1]} : vector<8x128xf32> to vector<8x32xf32>
    %626 = vector.extract_strided_slice %617 {offsets = [0, 64], sizes = [8, 32], strides = [1, 1]} : vector<8x128xf32> to vector<8x32xf32>
    %627 = math.tanh %626 : vector<8x32xf32>
    %628 = arith.mulf %624, %565 : vector<8x32xf32>
    %629 = arith.mulf %623, %627 : vector<8x32xf32>
    %630 = arith.addf %628, %629 : vector<8x32xf32>
    %631 = math.tanh %630 : vector<8x32xf32>
    %632 = arith.mulf %625, %631 : vector<8x32xf32>
    %633 = vector.extract_strided_slice %592 {offsets = [8, 0], sizes = [8, 128], strides = [1, 1]} : vector<64x256xf32> to vector<8x128xf32>
    %634 = vector.extract_strided_slice %592 {offsets = [48, 128], sizes = [8, 128], strides = [1, 1]} : vector<64x256xf32> to vector<8x128xf32>
    %635 = tpu.concatenate %633, %634 in 1 : vector<8x128xf32>, vector<8x128xf32> -> vector<8x256xf32>
    %636 = tpu.concatenate %616, %632 in 1 : vector<8x32xf32>, vector<8x32xf32> -> vector<8x64xf32>
    %637 = arith.truncf %636 : vector<8x64xf32> to vector<8x64xbf16>
    %cst_69 = arith.constant dense<0.000000e+00> : vector<8x256xf32>
    %638 = tpu.matmul %637, %593, %cst_69 {dimension_numbers = #tpu.dot_dimension_numbers<[1], [0], [0], [1], [0, 0, 1, 1], [], []>} : vector<8x64xbf16>, vector<64x256xbf16>, vector<8x256xf32> -> vector<8x256xf32>
    %639 = arith.addf %635, %638 : vector<8x256xf32>
    %640 = vector.extract_strided_slice %639 {offsets = [0, 0], sizes = [8, 128], strides = [1, 1]} : vector<8x256xf32> to vector<8x128xf32>
    %641 = arith.negf %640 : vector<8x128xf32>
    %642 = math.exp %641 : vector<8x128xf32>
    %cst_70 = arith.constant 1.000000e+00 : f32
    %643 = vector.broadcast %cst_70 : f32 to vector<8x128xf32>
    %644 = arith.addf %643, %642 : vector<8x128xf32>
    %645 = arith.divf %643, %644 : vector<8x128xf32>
    %646 = vector.extract_strided_slice %645 {offsets = [0, 0], sizes = [8, 32], strides = [1, 1]} : vector<8x128xf32> to vector<8x32xf32>
    %647 = vector.extract_strided_slice %645 {offsets = [0, 32], sizes = [8, 32], strides = [1, 1]} : vector<8x128xf32> to vector<8x32xf32>
    %648 = vector.extract_strided_slice %645 {offsets = [0, 96], sizes = [8, 32], strides = [1, 1]} : vector<8x128xf32> to vector<8x32xf32>
    %649 = vector.extract_strided_slice %640 {offsets = [0, 64], sizes = [8, 32], strides = [1, 1]} : vector<8x128xf32> to vector<8x32xf32>
    %650 = math.tanh %649 : vector<8x32xf32>
    %651 = arith.mulf %647, %614 : vector<8x32xf32>
    %652 = arith.mulf %646, %650 : vector<8x32xf32>
    %653 = arith.addf %651, %652 : vector<8x32xf32>
    %654 = math.tanh %653 : vector<8x32xf32>
    %655 = arith.mulf %648, %654 : vector<8x32xf32>
    %656 = vector.extract_strided_slice %639 {offsets = [0, 128], sizes = [8, 128], strides = [1, 1]} : vector<8x256xf32> to vector<8x128xf32>
    %657 = arith.negf %656 : vector<8x128xf32>
    %658 = math.exp %657 : vector<8x128xf32>
    %cst_71 = arith.constant 1.000000e+00 : f32
    %659 = vector.broadcast %cst_71 : f32 to vector<8x128xf32>
    %660 = arith.addf %659, %658 : vector<8x128xf32>
    %661 = arith.divf %659, %660 : vector<8x128xf32>
    %662 = vector.extract_strided_slice %661 {offsets = [0, 0], sizes = [8, 32], strides = [1, 1]} : vector<8x128xf32> to vector<8x32xf32>
    %663 = vector.extract_strided_slice %661 {offsets = [0, 32], sizes = [8, 32], strides = [1, 1]} : vector<8x128xf32> to vector<8x32xf32>
    %664 = vector.extract_strided_slice %661 {offsets = [0, 96], sizes = [8, 32], strides = [1, 1]} : vector<8x128xf32> to vector<8x32xf32>
    %665 = vector.extract_strided_slice %656 {offsets = [0, 64], sizes = [8, 32], strides = [1, 1]} : vector<8x128xf32> to vector<8x32xf32>
    %666 = math.tanh %665 : vector<8x32xf32>
    %667 = arith.mulf %663, %630 : vector<8x32xf32>
    %668 = arith.mulf %662, %666 : vector<8x32xf32>
    %669 = arith.addf %667, %668 : vector<8x32xf32>
    %670 = math.tanh %669 : vector<8x32xf32>
    %671 = arith.mulf %664, %670 : vector<8x32xf32>
    %672 = vector.extract_strided_slice %592 {offsets = [16, 0], sizes = [8, 128], strides = [1, 1]} : vector<64x256xf32> to vector<8x128xf32>
    %673 = vector.extract_strided_slice %592 {offsets = [40, 128], sizes = [8, 128], strides = [1, 1]} : vector<64x256xf32> to vector<8x128xf32>
    %674 = tpu.concatenate %672, %673 in 1 : vector<8x128xf32>, vector<8x128xf32> -> vector<8x256xf32>
    %675 = tpu.concatenate %655, %671 in 1 : vector<8x32xf32>, vector<8x32xf32> -> vector<8x64xf32>
    %676 = arith.truncf %675 : vector<8x64xf32> to vector<8x64xbf16>
    %cst_72 = arith.constant dense<0.000000e+00> : vector<8x256xf32>
    %677 = tpu.matmul %676, %593, %cst_72 {dimension_numbers = #tpu.dot_dimension_numbers<[1], [0], [0], [1], [0, 0, 1, 1], [], []>} : vector<8x64xbf16>, vector<64x256xbf16>, vector<8x256xf32> -> vector<8x256xf32>
    %678 = arith.addf %674, %677 : vector<8x256xf32>
    %679 = vector.extract_strided_slice %678 {offsets = [0, 0], sizes = [8, 128], strides = [1, 1]} : vector<8x256xf32> to vector<8x128xf32>
    %680 = arith.negf %679 : vector<8x128xf32>
    %681 = math.exp %680 : vector<8x128xf32>
    %cst_73 = arith.constant 1.000000e+00 : f32
    %682 = vector.broadcast %cst_73 : f32 to vector<8x128xf32>
    %683 = arith.addf %682, %681 : vector<8x128xf32>
    %684 = arith.divf %682, %683 : vector<8x128xf32>
    %685 = vector.extract_strided_slice %684 {offsets = [0, 0], sizes = [8, 32], strides = [1, 1]} : vector<8x128xf32> to vector<8x32xf32>
    %686 = vector.extract_strided_slice %684 {offsets = [0, 32], sizes = [8, 32], strides = [1, 1]} : vector<8x128xf32> to vector<8x32xf32>
    %687 = vector.extract_strided_slice %684 {offsets = [0, 96], sizes = [8, 32], strides = [1, 1]} : vector<8x128xf32> to vector<8x32xf32>
    %688 = vector.extract_strided_slice %679 {offsets = [0, 64], sizes = [8, 32], strides = [1, 1]} : vector<8x128xf32> to vector<8x32xf32>
    %689 = math.tanh %688 : vector<8x32xf32>
    %690 = arith.mulf %686, %653 : vector<8x32xf32>
    %691 = arith.mulf %685, %689 : vector<8x32xf32>
    %692 = arith.addf %690, %691 : vector<8x32xf32>
    %693 = math.tanh %692 : vector<8x32xf32>
    %694 = arith.mulf %687, %693 : vector<8x32xf32>
    %695 = vector.extract_strided_slice %678 {offsets = [0, 128], sizes = [8, 128], strides = [1, 1]} : vector<8x256xf32> to vector<8x128xf32>
    %696 = arith.negf %695 : vector<8x128xf32>
    %697 = math.exp %696 : vector<8x128xf32>
    %cst_74 = arith.constant 1.000000e+00 : f32
    %698 = vector.broadcast %cst_74 : f32 to vector<8x128xf32>
    %699 = arith.addf %698, %697 : vector<8x128xf32>
    %700 = arith.divf %698, %699 : vector<8x128xf32>
    %701 = vector.extract_strided_slice %700 {offsets = [0, 0], sizes = [8, 32], strides = [1, 1]} : vector<8x128xf32> to vector<8x32xf32>
    %702 = vector.extract_strided_slice %700 {offsets = [0, 32], sizes = [8, 32], strides = [1, 1]} : vector<8x128xf32> to vector<8x32xf32>
    %703 = vector.extract_strided_slice %700 {offsets = [0, 96], sizes = [8, 32], strides = [1, 1]} : vector<8x128xf32> to vector<8x32xf32>
    %704 = vector.extract_strided_slice %695 {offsets = [0, 64], sizes = [8, 32], strides = [1, 1]} : vector<8x128xf32> to vector<8x32xf32>
    %705 = math.tanh %704 : vector<8x32xf32>
    %706 = arith.mulf %702, %669 : vector<8x32xf32>
    %707 = arith.mulf %701, %705 : vector<8x32xf32>
    %708 = arith.addf %706, %707 : vector<8x32xf32>
    %709 = math.tanh %708 : vector<8x32xf32>
    %710 = arith.mulf %703, %709 : vector<8x32xf32>
    %711 = vector.extract_strided_slice %592 {offsets = [24, 0], sizes = [8, 128], strides = [1, 1]} : vector<64x256xf32> to vector<8x128xf32>
    %712 = vector.extract_strided_slice %592 {offsets = [32, 128], sizes = [8, 128], strides = [1, 1]} : vector<64x256xf32> to vector<8x128xf32>
    %713 = tpu.concatenate %711, %712 in 1 : vector<8x128xf32>, vector<8x128xf32> -> vector<8x256xf32>
    %714 = tpu.concatenate %694, %710 in 1 : vector<8x32xf32>, vector<8x32xf32> -> vector<8x64xf32>
    %715 = arith.truncf %714 : vector<8x64xf32> to vector<8x64xbf16>
    %cst_75 = arith.constant dense<0.000000e+00> : vector<8x256xf32>
    %716 = tpu.matmul %715, %593, %cst_75 {dimension_numbers = #tpu.dot_dimension_numbers<[1], [0], [0], [1], [0, 0, 1, 1], [], []>} : vector<8x64xbf16>, vector<64x256xbf16>, vector<8x256xf32> -> vector<8x256xf32>
    %717 = arith.addf %713, %716 : vector<8x256xf32>
    %718 = vector.extract_strided_slice %717 {offsets = [0, 0], sizes = [8, 128], strides = [1, 1]} : vector<8x256xf32> to vector<8x128xf32>
    %719 = arith.negf %718 : vector<8x128xf32>
    %720 = math.exp %719 : vector<8x128xf32>
    %cst_76 = arith.constant 1.000000e+00 : f32
    %721 = vector.broadcast %cst_76 : f32 to vector<8x128xf32>
    %722 = arith.addf %721, %720 : vector<8x128xf32>
    %723 = arith.divf %721, %722 : vector<8x128xf32>
    %724 = vector.extract_strided_slice %723 {offsets = [0, 0], sizes = [8, 32], strides = [1, 1]} : vector<8x128xf32> to vector<8x32xf32>
    %725 = vector.extract_strided_slice %723 {offsets = [0, 32], sizes = [8, 32], strides = [1, 1]} : vector<8x128xf32> to vector<8x32xf32>
    %726 = vector.extract_strided_slice %723 {offsets = [0, 96], sizes = [8, 32], strides = [1, 1]} : vector<8x128xf32> to vector<8x32xf32>
    %727 = vector.extract_strided_slice %718 {offsets = [0, 64], sizes = [8, 32], strides = [1, 1]} : vector<8x128xf32> to vector<8x32xf32>
    %728 = math.tanh %727 : vector<8x32xf32>
    %729 = arith.mulf %725, %692 : vector<8x32xf32>
    %730 = arith.mulf %724, %728 : vector<8x32xf32>
    %731 = arith.addf %729, %730 : vector<8x32xf32>
    %732 = math.tanh %731 : vector<8x32xf32>
    %733 = arith.mulf %726, %732 : vector<8x32xf32>
    %734 = vector.extract_strided_slice %717 {offsets = [0, 128], sizes = [8, 128], strides = [1, 1]} : vector<8x256xf32> to vector<8x128xf32>
    %735 = arith.negf %734 : vector<8x128xf32>
    %736 = math.exp %735 : vector<8x128xf32>
    %cst_77 = arith.constant 1.000000e+00 : f32
    %737 = vector.broadcast %cst_77 : f32 to vector<8x128xf32>
    %738 = arith.addf %737, %736 : vector<8x128xf32>
    %739 = arith.divf %737, %738 : vector<8x128xf32>
    %740 = vector.extract_strided_slice %739 {offsets = [0, 0], sizes = [8, 32], strides = [1, 1]} : vector<8x128xf32> to vector<8x32xf32>
    %741 = vector.extract_strided_slice %739 {offsets = [0, 32], sizes = [8, 32], strides = [1, 1]} : vector<8x128xf32> to vector<8x32xf32>
    %742 = vector.extract_strided_slice %739 {offsets = [0, 96], sizes = [8, 32], strides = [1, 1]} : vector<8x128xf32> to vector<8x32xf32>
    %743 = vector.extract_strided_slice %734 {offsets = [0, 64], sizes = [8, 32], strides = [1, 1]} : vector<8x128xf32> to vector<8x32xf32>
    %744 = math.tanh %743 : vector<8x32xf32>
    %745 = arith.mulf %741, %708 : vector<8x32xf32>
    %746 = arith.mulf %740, %744 : vector<8x32xf32>
    %747 = arith.addf %745, %746 : vector<8x32xf32>
    %748 = math.tanh %747 : vector<8x32xf32>
    %749 = arith.mulf %742, %748 : vector<8x32xf32>
    %750 = vector.extract_strided_slice %592 {offsets = [32, 0], sizes = [8, 128], strides = [1, 1]} : vector<64x256xf32> to vector<8x128xf32>
    %751 = vector.extract_strided_slice %592 {offsets = [24, 128], sizes = [8, 128], strides = [1, 1]} : vector<64x256xf32> to vector<8x128xf32>
    %752 = tpu.concatenate %750, %751 in 1 : vector<8x128xf32>, vector<8x128xf32> -> vector<8x256xf32>
    %753 = tpu.concatenate %733, %749 in 1 : vector<8x32xf32>, vector<8x32xf32> -> vector<8x64xf32>
    %754 = arith.truncf %753 : vector<8x64xf32> to vector<8x64xbf16>
    %cst_78 = arith.constant dense<0.000000e+00> : vector<8x256xf32>
    %755 = tpu.matmul %754, %593, %cst_78 {dimension_numbers = #tpu.dot_dimension_numbers<[1], [0], [0], [1], [0, 0, 1, 1], [], []>} : vector<8x64xbf16>, vector<64x256xbf16>, vector<8x256xf32> -> vector<8x256xf32>
    %756 = arith.addf %752, %755 : vector<8x256xf32>
    %757 = vector.extract_strided_slice %756 {offsets = [0, 0], sizes = [8, 128], strides = [1, 1]} : vector<8x256xf32> to vector<8x128xf32>
    %758 = arith.negf %757 : vector<8x128xf32>
    %759 = math.exp %758 : vector<8x128xf32>
    %cst_79 = arith.constant 1.000000e+00 : f32
    %760 = vector.broadcast %cst_79 : f32 to vector<8x128xf32>
    %761 = arith.addf %760, %759 : vector<8x128xf32>
    %762 = arith.divf %760, %761 : vector<8x128xf32>
    %763 = vector.extract_strided_slice %762 {offsets = [0, 0], sizes = [8, 32], strides = [1, 1]} : vector<8x128xf32> to vector<8x32xf32>
    %764 = vector.extract_strided_slice %762 {offsets = [0, 32], sizes = [8, 32], strides = [1, 1]} : vector<8x128xf32> to vector<8x32xf32>
    %765 = vector.extract_strided_slice %762 {offsets = [0, 96], sizes = [8, 32], strides = [1, 1]} : vector<8x128xf32> to vector<8x32xf32>
    %766 = vector.extract_strided_slice %757 {offsets = [0, 64], sizes = [8, 32], strides = [1, 1]} : vector<8x128xf32> to vector<8x32xf32>
    %767 = math.tanh %766 : vector<8x32xf32>
    %768 = arith.mulf %764, %731 : vector<8x32xf32>
    %769 = arith.mulf %763, %767 : vector<8x32xf32>
    %770 = arith.addf %768, %769 : vector<8x32xf32>
    %771 = math.tanh %770 : vector<8x32xf32>
    %772 = arith.mulf %765, %771 : vector<8x32xf32>
    %773 = vector.extract_strided_slice %756 {offsets = [0, 128], sizes = [8, 128], strides = [1, 1]} : vector<8x256xf32> to vector<8x128xf32>
    %774 = arith.negf %773 : vector<8x128xf32>
    %775 = math.exp %774 : vector<8x128xf32>
    %cst_80 = arith.constant 1.000000e+00 : f32
    %776 = vector.broadcast %cst_80 : f32 to vector<8x128xf32>
    %777 = arith.addf %776, %775 : vector<8x128xf32>
    %778 = arith.divf %776, %777 : vector<8x128xf32>
    %779 = vector.extract_strided_slice %778 {offsets = [0, 0], sizes = [8, 32], strides = [1, 1]} : vector<8x128xf32> to vector<8x32xf32>
    %780 = vector.extract_strided_slice %778 {offsets = [0, 32], sizes = [8, 32], strides = [1, 1]} : vector<8x128xf32> to vector<8x32xf32>
    %781 = vector.extract_strided_slice %778 {offsets = [0, 96], sizes = [8, 32], strides = [1, 1]} : vector<8x128xf32> to vector<8x32xf32>
    %782 = vector.extract_strided_slice %773 {offsets = [0, 64], sizes = [8, 32], strides = [1, 1]} : vector<8x128xf32> to vector<8x32xf32>
    %783 = math.tanh %782 : vector<8x32xf32>
    %784 = arith.mulf %780, %747 : vector<8x32xf32>
    %785 = arith.mulf %779, %783 : vector<8x32xf32>
    %786 = arith.addf %784, %785 : vector<8x32xf32>
    %787 = math.tanh %786 : vector<8x32xf32>
    %788 = arith.mulf %781, %787 : vector<8x32xf32>
    %789 = vector.extract_strided_slice %592 {offsets = [40, 0], sizes = [8, 128], strides = [1, 1]} : vector<64x256xf32> to vector<8x128xf32>
    %790 = vector.extract_strided_slice %592 {offsets = [16, 128], sizes = [8, 128], strides = [1, 1]} : vector<64x256xf32> to vector<8x128xf32>
    %791 = tpu.concatenate %789, %790 in 1 : vector<8x128xf32>, vector<8x128xf32> -> vector<8x256xf32>
    %792 = tpu.concatenate %772, %788 in 1 : vector<8x32xf32>, vector<8x32xf32> -> vector<8x64xf32>
    %793 = arith.truncf %792 : vector<8x64xf32> to vector<8x64xbf16>
    %cst_81 = arith.constant dense<0.000000e+00> : vector<8x256xf32>
    %794 = tpu.matmul %793, %593, %cst_81 {dimension_numbers = #tpu.dot_dimension_numbers<[1], [0], [0], [1], [0, 0, 1, 1], [], []>} : vector<8x64xbf16>, vector<64x256xbf16>, vector<8x256xf32> -> vector<8x256xf32>
    %795 = arith.addf %791, %794 : vector<8x256xf32>
    %796 = vector.extract_strided_slice %795 {offsets = [0, 0], sizes = [8, 128], strides = [1, 1]} : vector<8x256xf32> to vector<8x128xf32>
    %797 = arith.negf %796 : vector<8x128xf32>
    %798 = math.exp %797 : vector<8x128xf32>
    %cst_82 = arith.constant 1.000000e+00 : f32
    %799 = vector.broadcast %cst_82 : f32 to vector<8x128xf32>
    %800 = arith.addf %799, %798 : vector<8x128xf32>
    %801 = arith.divf %799, %800 : vector<8x128xf32>
    %802 = vector.extract_strided_slice %801 {offsets = [0, 0], sizes = [8, 32], strides = [1, 1]} : vector<8x128xf32> to vector<8x32xf32>
    %803 = vector.extract_strided_slice %801 {offsets = [0, 32], sizes = [8, 32], strides = [1, 1]} : vector<8x128xf32> to vector<8x32xf32>
    %804 = vector.extract_strided_slice %801 {offsets = [0, 96], sizes = [8, 32], strides = [1, 1]} : vector<8x128xf32> to vector<8x32xf32>
    %805 = vector.extract_strided_slice %796 {offsets = [0, 64], sizes = [8, 32], strides = [1, 1]} : vector<8x128xf32> to vector<8x32xf32>
    %806 = math.tanh %805 : vector<8x32xf32>
    %807 = arith.mulf %803, %770 : vector<8x32xf32>
    %808 = arith.mulf %802, %806 : vector<8x32xf32>
    %809 = arith.addf %807, %808 : vector<8x32xf32>
    %810 = math.tanh %809 : vector<8x32xf32>
    %811 = arith.mulf %804, %810 : vector<8x32xf32>
    %812 = vector.extract_strided_slice %795 {offsets = [0, 128], sizes = [8, 128], strides = [1, 1]} : vector<8x256xf32> to vector<8x128xf32>
    %813 = arith.negf %812 : vector<8x128xf32>
    %814 = math.exp %813 : vector<8x128xf32>
    %cst_83 = arith.constant 1.000000e+00 : f32
    %815 = vector.broadcast %cst_83 : f32 to vector<8x128xf32>
    %816 = arith.addf %815, %814 : vector<8x128xf32>
    %817 = arith.divf %815, %816 : vector<8x128xf32>
    %818 = vector.extract_strided_slice %817 {offsets = [0, 0], sizes = [8, 32], strides = [1, 1]} : vector<8x128xf32> to vector<8x32xf32>
    %819 = vector.extract_strided_slice %817 {offsets = [0, 32], sizes = [8, 32], strides = [1, 1]} : vector<8x128xf32> to vector<8x32xf32>
    %820 = vector.extract_strided_slice %817 {offsets = [0, 96], sizes = [8, 32], strides = [1, 1]} : vector<8x128xf32> to vector<8x32xf32>
    %821 = vector.extract_strided_slice %812 {offsets = [0, 64], sizes = [8, 32], strides = [1, 1]} : vector<8x128xf32> to vector<8x32xf32>
    %822 = math.tanh %821 : vector<8x32xf32>
    %823 = arith.mulf %819, %786 : vector<8x32xf32>
    %824 = arith.mulf %818, %822 : vector<8x32xf32>
    %825 = arith.addf %823, %824 : vector<8x32xf32>
    %826 = math.tanh %825 : vector<8x32xf32>
    %827 = arith.mulf %820, %826 : vector<8x32xf32>
    %828 = vector.extract_strided_slice %592 {offsets = [48, 0], sizes = [8, 128], strides = [1, 1]} : vector<64x256xf32> to vector<8x128xf32>
    %829 = vector.extract_strided_slice %592 {offsets = [8, 128], sizes = [8, 128], strides = [1, 1]} : vector<64x256xf32> to vector<8x128xf32>
    %830 = tpu.concatenate %828, %829 in 1 : vector<8x128xf32>, vector<8x128xf32> -> vector<8x256xf32>
    %831 = tpu.concatenate %811, %827 in 1 : vector<8x32xf32>, vector<8x32xf32> -> vector<8x64xf32>
    %832 = arith.truncf %831 : vector<8x64xf32> to vector<8x64xbf16>
    %cst_84 = arith.constant dense<0.000000e+00> : vector<8x256xf32>
    %833 = tpu.matmul %832, %593, %cst_84 {dimension_numbers = #tpu.dot_dimension_numbers<[1], [0], [0], [1], [0, 0, 1, 1], [], []>} : vector<8x64xbf16>, vector<64x256xbf16>, vector<8x256xf32> -> vector<8x256xf32>
    %834 = arith.addf %830, %833 : vector<8x256xf32>
    %835 = vector.extract_strided_slice %834 {offsets = [0, 0], sizes = [8, 128], strides = [1, 1]} : vector<8x256xf32> to vector<8x128xf32>
    %836 = arith.negf %835 : vector<8x128xf32>
    %837 = math.exp %836 : vector<8x128xf32>
    %cst_85 = arith.constant 1.000000e+00 : f32
    %838 = vector.broadcast %cst_85 : f32 to vector<8x128xf32>
    %839 = arith.addf %838, %837 : vector<8x128xf32>
    %840 = arith.divf %838, %839 : vector<8x128xf32>
    %841 = vector.extract_strided_slice %840 {offsets = [0, 0], sizes = [8, 32], strides = [1, 1]} : vector<8x128xf32> to vector<8x32xf32>
    %842 = vector.extract_strided_slice %840 {offsets = [0, 32], sizes = [8, 32], strides = [1, 1]} : vector<8x128xf32> to vector<8x32xf32>
    %843 = vector.extract_strided_slice %840 {offsets = [0, 96], sizes = [8, 32], strides = [1, 1]} : vector<8x128xf32> to vector<8x32xf32>
    %844 = vector.extract_strided_slice %835 {offsets = [0, 64], sizes = [8, 32], strides = [1, 1]} : vector<8x128xf32> to vector<8x32xf32>
    %845 = math.tanh %844 : vector<8x32xf32>
    %846 = arith.mulf %842, %809 : vector<8x32xf32>
    %847 = arith.mulf %841, %845 : vector<8x32xf32>
    %848 = arith.addf %846, %847 : vector<8x32xf32>
    %849 = math.tanh %848 : vector<8x32xf32>
    %850 = arith.mulf %843, %849 : vector<8x32xf32>
    %851 = vector.extract_strided_slice %834 {offsets = [0, 128], sizes = [8, 128], strides = [1, 1]} : vector<8x256xf32> to vector<8x128xf32>
    %852 = arith.negf %851 : vector<8x128xf32>
    %853 = math.exp %852 : vector<8x128xf32>
    %cst_86 = arith.constant 1.000000e+00 : f32
    %854 = vector.broadcast %cst_86 : f32 to vector<8x128xf32>
    %855 = arith.addf %854, %853 : vector<8x128xf32>
    %856 = arith.divf %854, %855 : vector<8x128xf32>
    %857 = vector.extract_strided_slice %856 {offsets = [0, 0], sizes = [8, 32], strides = [1, 1]} : vector<8x128xf32> to vector<8x32xf32>
    %858 = vector.extract_strided_slice %856 {offsets = [0, 32], sizes = [8, 32], strides = [1, 1]} : vector<8x128xf32> to vector<8x32xf32>
    %859 = vector.extract_strided_slice %856 {offsets = [0, 96], sizes = [8, 32], strides = [1, 1]} : vector<8x128xf32> to vector<8x32xf32>
    %860 = vector.extract_strided_slice %851 {offsets = [0, 64], sizes = [8, 32], strides = [1, 1]} : vector<8x128xf32> to vector<8x32xf32>
    %861 = math.tanh %860 : vector<8x32xf32>
    %862 = arith.mulf %858, %825 : vector<8x32xf32>
    %863 = arith.mulf %857, %861 : vector<8x32xf32>
    %864 = arith.addf %862, %863 : vector<8x32xf32>
    %865 = math.tanh %864 : vector<8x32xf32>
    %866 = arith.mulf %859, %865 : vector<8x32xf32>
    %867 = vector.extract_strided_slice %592 {offsets = [56, 0], sizes = [8, 128], strides = [1, 1]} : vector<64x256xf32> to vector<8x128xf32>
    %868 = vector.extract_strided_slice %592 {offsets = [0, 128], sizes = [8, 128], strides = [1, 1]} : vector<64x256xf32> to vector<8x128xf32>
    %869 = tpu.concatenate %867, %868 in 1 : vector<8x128xf32>, vector<8x128xf32> -> vector<8x256xf32>
    %870 = tpu.concatenate %850, %866 in 1 : vector<8x32xf32>, vector<8x32xf32> -> vector<8x64xf32>
    %871 = arith.truncf %870 : vector<8x64xf32> to vector<8x64xbf16>
    %cst_87 = arith.constant dense<0.000000e+00> : vector<8x256xf32>
    %872 = tpu.matmul %871, %593, %cst_87 {dimension_numbers = #tpu.dot_dimension_numbers<[1], [0], [0], [1], [0, 0, 1, 1], [], []>} : vector<8x64xbf16>, vector<64x256xbf16>, vector<8x256xf32> -> vector<8x256xf32>
    %873 = arith.addf %869, %872 : vector<8x256xf32>
    %874 = vector.extract_strided_slice %873 {offsets = [0, 0], sizes = [8, 128], strides = [1, 1]} : vector<8x256xf32> to vector<8x128xf32>
    %875 = arith.negf %874 : vector<8x128xf32>
    %876 = math.exp %875 : vector<8x128xf32>
    %cst_88 = arith.constant 1.000000e+00 : f32
    %877 = vector.broadcast %cst_88 : f32 to vector<8x128xf32>
    %878 = arith.addf %877, %876 : vector<8x128xf32>
    %879 = arith.divf %877, %878 : vector<8x128xf32>
    %880 = vector.extract_strided_slice %879 {offsets = [0, 0], sizes = [8, 32], strides = [1, 1]} : vector<8x128xf32> to vector<8x32xf32>
    %881 = vector.extract_strided_slice %879 {offsets = [0, 32], sizes = [8, 32], strides = [1, 1]} : vector<8x128xf32> to vector<8x32xf32>
    %882 = vector.extract_strided_slice %879 {offsets = [0, 96], sizes = [8, 32], strides = [1, 1]} : vector<8x128xf32> to vector<8x32xf32>
    %883 = vector.extract_strided_slice %874 {offsets = [0, 64], sizes = [8, 32], strides = [1, 1]} : vector<8x128xf32> to vector<8x32xf32>
    %884 = math.tanh %883 : vector<8x32xf32>
    %885 = arith.mulf %881, %848 : vector<8x32xf32>
    %886 = arith.mulf %880, %884 : vector<8x32xf32>
    %887 = arith.addf %885, %886 : vector<8x32xf32>
    %888 = math.tanh %887 : vector<8x32xf32>
    %889 = arith.mulf %882, %888 : vector<8x32xf32>
    %890 = vector.extract_strided_slice %873 {offsets = [0, 128], sizes = [8, 128], strides = [1, 1]} : vector<8x256xf32> to vector<8x128xf32>
    %891 = arith.negf %890 : vector<8x128xf32>
    %892 = math.exp %891 : vector<8x128xf32>
    %cst_89 = arith.constant 1.000000e+00 : f32
    %893 = vector.broadcast %cst_89 : f32 to vector<8x128xf32>
    %894 = arith.addf %893, %892 : vector<8x128xf32>
    %895 = arith.divf %893, %894 : vector<8x128xf32>
    %896 = vector.extract_strided_slice %895 {offsets = [0, 0], sizes = [8, 32], strides = [1, 1]} : vector<8x128xf32> to vector<8x32xf32>
    %897 = vector.extract_strided_slice %895 {offsets = [0, 32], sizes = [8, 32], strides = [1, 1]} : vector<8x128xf32> to vector<8x32xf32>
    %898 = vector.extract_strided_slice %895 {offsets = [0, 96], sizes = [8, 32], strides = [1, 1]} : vector<8x128xf32> to vector<8x32xf32>
    %899 = vector.extract_strided_slice %890 {offsets = [0, 64], sizes = [8, 32], strides = [1, 1]} : vector<8x128xf32> to vector<8x32xf32>
    %900 = math.tanh %899 : vector<8x32xf32>
    %901 = arith.mulf %897, %864 : vector<8x32xf32>
    %902 = arith.mulf %896, %900 : vector<8x32xf32>
    %903 = arith.addf %901, %902 : vector<8x32xf32>
    %904 = math.tanh %903 : vector<8x32xf32>
    %905 = arith.mulf %898, %904 : vector<8x32xf32>
    %906 = tpu.concatenate %889, %905 in 1 : vector<8x32xf32>, vector<8x32xf32> -> vector<8x64xf32>
    %c0_90 = arith.constant 0 : index
    %c0_91 = arith.constant 0 : index
    %907 = vector.load %arg8[%c0_90, %c0_91] : memref<64x32xf32, #tpu.memory_space<vmem>>, vector<64x32xf32>
    %cst_92 = arith.constant dense<0.000000e+00> : vector<8x32xf32>
    %908 = tpu.matmul %906, %907, %cst_92 {dimension_numbers = #tpu.dot_dimension_numbers<[1], [0], [0], [1], [0, 0, 1, 1], [], []>} : vector<8x64xf32>, vector<64x32xf32>, vector<8x32xf32> -> vector<8x32xf32>
    %c0_93 = arith.constant 0 : index
    %c0_94 = arith.constant 0 : index
    %909 = vector.load %arg9[%c0_93, %c0_94] : memref<1x32xf32, #tpu.memory_space<vmem>>, vector<1x32xf32>
    %910 = vector.broadcast %909 : vector<1x32xf32> to vector<8x32xf32>
    %911 = arith.addf %908, %910 : vector<8x32xf32>
    %912 = vector.extract_strided_slice %911 {offsets = [0, 0], sizes = [8, 16], strides = [1, 1]} : vector<8x32xf32> to vector<8x16xf32>
    %913 = vector.extract_strided_slice %911 {offsets = [0, 16], sizes = [8, 16], strides = [1, 1]} : vector<8x32xf32> to vector<8x16xf32>
    %cst_95 = arith.constant 5.000000e-01 : f32
    %914 = vector.broadcast %cst_95 : f32 to vector<8x16xf32>
    %915 = arith.mulf %914, %913 : vector<8x16xf32>
    %916 = math.exp %915 : vector<8x16xf32>
    %c0_96 = arith.constant 0 : index
    %c0_97 = arith.constant 0 : index
    %917 = vector.load %arg10[%c0_96, %c0_97] : memref<8x16xf32, #tpu.memory_space<vmem>>, vector<8x16xf32>
    %918 = arith.mulf %917, %916 : vector<8x16xf32>
    %919 = arith.addf %918, %912 : vector<8x16xf32>
    %c0_98 = arith.constant 0 : index
    %c0_99 = arith.constant 0 : index
    %920 = vector.load %arg12[%c0_98, %c0_99] : memref<8x16xf32, #tpu.memory_space<vmem>>, vector<8x16xf32>
    tpu.vector_store %arg12[%c0_98, %c0_99], %919 {strides = array<i32>} : memref<8x16xf32, #tpu.memory_space<vmem>>, vector<8x16xf32>,
    %921 = arith.mulf %912, %912 : vector<8x16xf32>
    %922 = arith.subf %913, %921 : vector<8x16xf32>
    %923 = math.exp %913 : vector<8x16xf32>
    %924 = arith.subf %922, %923 : vector<8x16xf32>
    %cst_100 = arith.constant 1.000000e+00 : f32
    %925 = vector.broadcast %cst_100 : f32 to vector<8x16xf32>
    %926 = arith.addf %924, %925 : vector<8x16xf32>
    %cst_101 = arith.constant dense<0.000000e+00> : vector<8xf32>
    %927 = vector.multi_reduction <add>, %926, %cst_101 [1] : vector<8x16xf32> to vector<8xf32>
    %928 = vector.shape_cast %927 : vector<8xf32> to vector<8x1xf32>
    %929 = tpu.iota {dimensions = array<i32: 0>} : vector<8x1xi32>
    %c2_i32 = arith.constant 2 : i32
    %930 = vector.broadcast %c2_i32 : i32 to vector<8x1xi32>
    %931 = arith.cmpi slt, %929, %930 : vector<8x1xi32>
    %cst_102 = arith.constant 0.000000e+00 : f32
    %932 = vector.broadcast %cst_102 : f32 to vector<8x1xf32>
    %933 = arith.select %931, %928, %932 : vector<8x1xi1>, vector<8x1xf32>
    %cst_103 = arith.constant dense<0.000000e+00> : vector<1xf32>
    %934 = vector.multi_reduction <add>, %933, %cst_103 [0] : vector<8x1xf32> to vector<1xf32>
    %935 = vector.shape_cast %934 : vector<1xf32> to vector<1x1xf32>
    %cst_104 = arith.constant -2.500000e-01 : f32
    %936 = vector.broadcast %cst_104 : f32 to vector<1x1xf32>
    %937 = arith.mulf %936, %935 : vector<1x1xf32>
    %c0_105 = arith.constant 0 : index
    %c0_106 = arith.constant 0 : index
    %938 = vector.load %arg13[%c0_105, %c0_106] : memref<1x1xf32, #tpu.memory_space<vmem>>, vector<1x1xf32>
    tpu.vector_store %arg13[%c0_105, %c0_106], %937 {strides = array<i32>} : memref<1x1xf32, #tpu.memory_space<vmem>>, vector<1x1xf32>,
    return
  }
}

module attributes {stable_mosaic.version = 11 : i64} {
  func.func @kernel(%arg0: memref<64x16xf32, #tpu.memory_space<vmem>>, %arg1: memref<8x16xf32, #tpu.memory_space<vmem>>, %arg2: memref<8x128xf32, #tpu.memory_space<vmem>>, %arg3: memref<16x128xbf16, #tpu.memory_space<vmem>>, %arg4: memref<16x128xbf16, #tpu.memory_space<vmem>>, %arg5: memref<1x128xf32, #tpu.memory_space<vmem>>, %arg6: memref<32x128xbf16, #tpu.memory_space<vmem>>, %arg7: memref<64x128xbf16, #tpu.memory_space<vmem>>, %arg8: memref<1x128xf32, #tpu.memory_space<vmem>>, %arg9: memref<32x128xbf16, #tpu.memory_space<vmem>>, %arg10: memref<1x128xf32, #tpu.memory_space<vmem>>, %arg11: memref<64x128xf32, #tpu.memory_space<vmem>>, %arg12: memref<8x128xf32, #tpu.memory_space<vmem>>, %arg13: memref<64x32xf32, #tpu.memory_space<vmem>>) attributes {dimension_semantics = [], scalar_prefetch = 0 : i64, scratch_operands = 1 : i64, tpu.core_type = #tpu.core_type<tc>} {
    %c0 = arith.constant 0 : index
    %c0_0 = arith.constant 0 : index
    %0 = vector.load %arg0[%c0, %c0_0] : memref<64x16xf32, #tpu.memory_space<vmem>>, vector<64x16xf32>
    %1 = arith.truncf %0 : vector<64x16xf32> to vector<64x16xbf16>
    %c0_1 = arith.constant 0 : index
    %c0_2 = arith.constant 0 : index
    %2 = vector.load %arg3[%c0_1, %c0_2] : memref<16x128xbf16, #tpu.memory_space<vmem>>, vector<16x128xbf16>
    %cst = arith.constant dense<0.000000e+00> : vector<64x128xf32>
    %3 = tpu.matmul %1, %2, %cst {dimension_numbers = #tpu.dot_dimension_numbers<[1], [0], [0], [1], [0, 0, 1, 1], [], []>} : vector<64x16xbf16>, vector<16x128xbf16>, vector<64x128xf32> -> vector<64x128xf32>
    %c0_3 = arith.constant 0 : index
    %c0_4 = arith.constant 0 : index
    %4 = vector.load %arg1[%c0_3, %c0_4] : memref<8x16xf32, #tpu.memory_space<vmem>>, vector<8x16xf32>
    %5 = arith.truncf %4 : vector<8x16xf32> to vector<8x16xbf16>
    %c0_5 = arith.constant 0 : index
    %c0_6 = arith.constant 0 : index
    %6 = vector.load %arg4[%c0_5, %c0_6] : memref<16x128xbf16, #tpu.memory_space<vmem>>, vector<16x128xbf16>
    %cst_7 = arith.constant dense<0.000000e+00> : vector<8x128xf32>
    %7 = tpu.matmul %5, %6, %cst_7 {dimension_numbers = #tpu.dot_dimension_numbers<[1], [0], [0], [1], [0, 0, 1, 1], [], []>} : vector<8x16xbf16>, vector<16x128xbf16>, vector<8x128xf32> -> vector<8x128xf32>
    %c0_8 = arith.constant 0 : index
    %c0_9 = arith.constant 0 : index
    %8 = vector.load %arg5[%c0_8, %c0_9] : memref<1x128xf32, #tpu.memory_space<vmem>>, vector<1x128xf32>
    %9 = vector.broadcast %8 : vector<1x128xf32> to vector<8x128xf32>
    %10 = arith.addf %7, %9 : vector<8x128xf32>
    %c0_10 = arith.constant 0 : index
    %c0_11 = arith.constant 0 : index
    %11 = vector.load %arg2[%c0_10, %c0_11] : memref<8x128xf32, #tpu.memory_space<vmem>>, vector<8x128xf32>
    %12 = vector.extract_strided_slice %11 {offsets = [0, 0], sizes = [8, 32], strides = [1, 1]} : vector<8x128xf32> to vector<8x32xf32>
    %13 = vector.extract_strided_slice %11 {offsets = [0, 32], sizes = [8, 32], strides = [1, 1]} : vector<8x128xf32> to vector<8x32xf32>
    %14 = vector.extract_strided_slice %11 {offsets = [0, 64], sizes = [8, 32], strides = [1, 1]} : vector<8x128xf32> to vector<8x32xf32>
    %15 = vector.extract_strided_slice %11 {offsets = [0, 96], sizes = [8, 32], strides = [1, 1]} : vector<8x128xf32> to vector<8x32xf32>
    %c0_12 = arith.constant 0 : index
    %c0_13 = arith.constant 0 : index
    %16 = vector.load %arg6[%c0_12, %c0_13] : memref<32x128xbf16, #tpu.memory_space<vmem>>, vector<32x128xbf16>
    %c0_14 = arith.constant 0 : index
    %c0_15 = arith.constant 0 : index
    %17 = vector.load %arg7[%c0_14, %c0_15] : memref<64x128xbf16, #tpu.memory_space<vmem>>, vector<64x128xbf16>
    %c0_16 = arith.constant 0 : index
    %c0_17 = arith.constant 0 : index
    %18 = vector.load %arg8[%c0_16, %c0_17] : memref<1x128xf32, #tpu.memory_space<vmem>>, vector<1x128xf32>
    %19 = vector.extract_strided_slice %3 {offsets = [0, 0], sizes = [8, 128], strides = [1, 1]} : vector<64x128xf32> to vector<8x128xf32>
    %20 = arith.addf %19, %10 : vector<8x128xf32>
    %21 = arith.truncf %12 : vector<8x32xf32> to vector<8x32xbf16>
    %cst_18 = arith.constant dense<0.000000e+00> : vector<8x128xf32>
    %22 = tpu.matmul %21, %16, %cst_18 {dimension_numbers = #tpu.dot_dimension_numbers<[1], [0], [0], [1], [0, 0, 1, 1], [], []>} : vector<8x32xbf16>, vector<32x128xbf16>, vector<8x128xf32> -> vector<8x128xf32>
    %23 = arith.addf %20, %22 : vector<8x128xf32>
    %24 = arith.negf %23 : vector<8x128xf32>
    %25 = math.exp %24 : vector<8x128xf32>
    %cst_19 = arith.constant 1.000000e+00 : f32
    %26 = vector.broadcast %cst_19 : f32 to vector<8x128xf32>
    %27 = arith.addf %26, %25 : vector<8x128xf32>
    %28 = arith.divf %26, %27 : vector<8x128xf32>
    %29 = vector.extract_strided_slice %28 {offsets = [0, 0], sizes = [8, 32], strides = [1, 1]} : vector<8x128xf32> to vector<8x32xf32>
    %30 = vector.extract_strided_slice %28 {offsets = [0, 32], sizes = [8, 32], strides = [1, 1]} : vector<8x128xf32> to vector<8x32xf32>
    %31 = vector.extract_strided_slice %28 {offsets = [0, 96], sizes = [8, 32], strides = [1, 1]} : vector<8x128xf32> to vector<8x32xf32>
    %32 = vector.extract_strided_slice %23 {offsets = [0, 64], sizes = [8, 32], strides = [1, 1]} : vector<8x128xf32> to vector<8x32xf32>
    %33 = math.tanh %32 : vector<8x32xf32>
    %34 = arith.mulf %30, %14 : vector<8x32xf32>
    %35 = arith.mulf %29, %33 : vector<8x32xf32>
    %36 = arith.addf %34, %35 : vector<8x32xf32>
    %37 = math.tanh %36 : vector<8x32xf32>
    %38 = arith.mulf %31, %37 : vector<8x32xf32>
    %39 = tpu.concatenate %38, %13 in 1 : vector<8x32xf32>, vector<8x32xf32> -> vector<8x64xf32>
    %40 = arith.truncf %39 : vector<8x64xf32> to vector<8x64xbf16>
    %cst_20 = arith.constant dense<0.000000e+00> : vector<8x128xf32>
    %41 = tpu.matmul %40, %17, %cst_20 {dimension_numbers = #tpu.dot_dimension_numbers<[1], [0], [0], [1], [0, 0, 1, 1], [], []>} : vector<8x64xbf16>, vector<64x128xbf16>, vector<8x128xf32> -> vector<8x128xf32>
    %42 = vector.broadcast %18 : vector<1x128xf32> to vector<8x128xf32>
    %43 = arith.addf %41, %42 : vector<8x128xf32>
    %44 = arith.negf %43 : vector<8x128xf32>
    %45 = math.exp %44 : vector<8x128xf32>
    %cst_21 = arith.constant 1.000000e+00 : f32
    %46 = vector.broadcast %cst_21 : f32 to vector<8x128xf32>
    %47 = arith.addf %46, %45 : vector<8x128xf32>
    %48 = arith.divf %46, %47 : vector<8x128xf32>
    %49 = vector.extract_strided_slice %48 {offsets = [0, 0], sizes = [8, 32], strides = [1, 1]} : vector<8x128xf32> to vector<8x32xf32>
    %50 = vector.extract_strided_slice %48 {offsets = [0, 32], sizes = [8, 32], strides = [1, 1]} : vector<8x128xf32> to vector<8x32xf32>
    %51 = vector.extract_strided_slice %48 {offsets = [0, 96], sizes = [8, 32], strides = [1, 1]} : vector<8x128xf32> to vector<8x32xf32>
    %52 = vector.extract_strided_slice %43 {offsets = [0, 64], sizes = [8, 32], strides = [1, 1]} : vector<8x128xf32> to vector<8x32xf32>
    %53 = math.tanh %52 : vector<8x32xf32>
    %54 = arith.mulf %50, %15 : vector<8x32xf32>
    %55 = arith.mulf %49, %53 : vector<8x32xf32>
    %56 = arith.addf %54, %55 : vector<8x32xf32>
    %57 = math.tanh %56 : vector<8x32xf32>
    %58 = arith.mulf %51, %57 : vector<8x32xf32>
    %c0_22 = arith.constant 0 : index
    %c0_23 = arith.constant 0 : index
    %59 = vector.load %arg13[%c0_22, %c0_23] : memref<64x32xf32, #tpu.memory_space<vmem>>, vector<8x32xf32>
    tpu.vector_store %arg13[%c0_22, %c0_23], %58 {strides = array<i32>} : memref<64x32xf32, #tpu.memory_space<vmem>>, vector<8x32xf32>,
    %60 = vector.extract_strided_slice %3 {offsets = [8, 0], sizes = [8, 128], strides = [1, 1]} : vector<64x128xf32> to vector<8x128xf32>
    %61 = arith.addf %60, %10 : vector<8x128xf32>
    %62 = arith.truncf %38 : vector<8x32xf32> to vector<8x32xbf16>
    %cst_24 = arith.constant dense<0.000000e+00> : vector<8x128xf32>
    %63 = tpu.matmul %62, %16, %cst_24 {dimension_numbers = #tpu.dot_dimension_numbers<[1], [0], [0], [1], [0, 0, 1, 1], [], []>} : vector<8x32xbf16>, vector<32x128xbf16>, vector<8x128xf32> -> vector<8x128xf32>
    %64 = arith.addf %61, %63 : vector<8x128xf32>
    %65 = arith.negf %64 : vector<8x128xf32>
    %66 = math.exp %65 : vector<8x128xf32>
    %cst_25 = arith.constant 1.000000e+00 : f32
    %67 = vector.broadcast %cst_25 : f32 to vector<8x128xf32>
    %68 = arith.addf %67, %66 : vector<8x128xf32>
    %69 = arith.divf %67, %68 : vector<8x128xf32>
    %70 = vector.extract_strided_slice %69 {offsets = [0, 0], sizes = [8, 32], strides = [1, 1]} : vector<8x128xf32> to vector<8x32xf32>
    %71 = vector.extract_strided_slice %69 {offsets = [0, 32], sizes = [8, 32], strides = [1, 1]} : vector<8x128xf32> to vector<8x32xf32>
    %72 = vector.extract_strided_slice %69 {offsets = [0, 96], sizes = [8, 32], strides = [1, 1]} : vector<8x128xf32> to vector<8x32xf32>
    %73 = vector.extract_strided_slice %64 {offsets = [0, 64], sizes = [8, 32], strides = [1, 1]} : vector<8x128xf32> to vector<8x32xf32>
    %74 = math.tanh %73 : vector<8x32xf32>
    %75 = arith.mulf %71, %36 : vector<8x32xf32>
    %76 = arith.mulf %70, %74 : vector<8x32xf32>
    %77 = arith.addf %75, %76 : vector<8x32xf32>
    %78 = math.tanh %77 : vector<8x32xf32>
    %79 = arith.mulf %72, %78 : vector<8x32xf32>
    %80 = tpu.concatenate %79, %58 in 1 : vector<8x32xf32>, vector<8x32xf32> -> vector<8x64xf32>
    %81 = arith.truncf %80 : vector<8x64xf32> to vector<8x64xbf16>
    %cst_26 = arith.constant dense<0.000000e+00> : vector<8x128xf32>
    %82 = tpu.matmul %81, %17, %cst_26 {dimension_numbers = #tpu.dot_dimension_numbers<[1], [0], [0], [1], [0, 0, 1, 1], [], []>} : vector<8x64xbf16>, vector<64x128xbf16>, vector<8x128xf32> -> vector<8x128xf32>
    %83 = vector.broadcast %18 : vector<1x128xf32> to vector<8x128xf32>
    %84 = arith.addf %82, %83 : vector<8x128xf32>
    %85 = arith.negf %84 : vector<8x128xf32>
    %86 = math.exp %85 : vector<8x128xf32>
    %cst_27 = arith.constant 1.000000e+00 : f32
    %87 = vector.broadcast %cst_27 : f32 to vector<8x128xf32>
    %88 = arith.addf %87, %86 : vector<8x128xf32>
    %89 = arith.divf %87, %88 : vector<8x128xf32>
    %90 = vector.extract_strided_slice %89 {offsets = [0, 0], sizes = [8, 32], strides = [1, 1]} : vector<8x128xf32> to vector<8x32xf32>
    %91 = vector.extract_strided_slice %89 {offsets = [0, 32], sizes = [8, 32], strides = [1, 1]} : vector<8x128xf32> to vector<8x32xf32>
    %92 = vector.extract_strided_slice %89 {offsets = [0, 96], sizes = [8, 32], strides = [1, 1]} : vector<8x128xf32> to vector<8x32xf32>
    %93 = vector.extract_strided_slice %84 {offsets = [0, 64], sizes = [8, 32], strides = [1, 1]} : vector<8x128xf32> to vector<8x32xf32>
    %94 = math.tanh %93 : vector<8x32xf32>
    %95 = arith.mulf %91, %56 : vector<8x32xf32>
    %96 = arith.mulf %90, %94 : vector<8x32xf32>
    %97 = arith.addf %95, %96 : vector<8x32xf32>
    %98 = math.tanh %97 : vector<8x32xf32>
    %99 = arith.mulf %92, %98 : vector<8x32xf32>
    %c8 = arith.constant 8 : index
    %c0_28 = arith.constant 0 : index
    %100 = vector.load %arg13[%c8, %c0_28] : memref<64x32xf32, #tpu.memory_space<vmem>>, vector<8x32xf32>
    tpu.vector_store %arg13[%c8, %c0_28], %99 {strides = array<i32>} : memref<64x32xf32, #tpu.memory_space<vmem>>, vector<8x32xf32>,
    %101 = vector.extract_strided_slice %3 {offsets = [16, 0], sizes = [8, 128], strides = [1, 1]} : vector<64x128xf32> to vector<8x128xf32>
    %102 = arith.addf %101, %10 : vector<8x128xf32>
    %103 = arith.truncf %79 : vector<8x32xf32> to vector<8x32xbf16>
    %cst_29 = arith.constant dense<0.000000e+00> : vector<8x128xf32>
    %104 = tpu.matmul %103, %16, %cst_29 {dimension_numbers = #tpu.dot_dimension_numbers<[1], [0], [0], [1], [0, 0, 1, 1], [], []>} : vector<8x32xbf16>, vector<32x128xbf16>, vector<8x128xf32> -> vector<8x128xf32>
    %105 = arith.addf %102, %104 : vector<8x128xf32>
    %106 = arith.negf %105 : vector<8x128xf32>
    %107 = math.exp %106 : vector<8x128xf32>
    %cst_30 = arith.constant 1.000000e+00 : f32
    %108 = vector.broadcast %cst_30 : f32 to vector<8x128xf32>
    %109 = arith.addf %108, %107 : vector<8x128xf32>
    %110 = arith.divf %108, %109 : vector<8x128xf32>
    %111 = vector.extract_strided_slice %110 {offsets = [0, 0], sizes = [8, 32], strides = [1, 1]} : vector<8x128xf32> to vector<8x32xf32>
    %112 = vector.extract_strided_slice %110 {offsets = [0, 32], sizes = [8, 32], strides = [1, 1]} : vector<8x128xf32> to vector<8x32xf32>
    %113 = vector.extract_strided_slice %110 {offsets = [0, 96], sizes = [8, 32], strides = [1, 1]} : vector<8x128xf32> to vector<8x32xf32>
    %114 = vector.extract_strided_slice %105 {offsets = [0, 64], sizes = [8, 32], strides = [1, 1]} : vector<8x128xf32> to vector<8x32xf32>
    %115 = math.tanh %114 : vector<8x32xf32>
    %116 = arith.mulf %112, %77 : vector<8x32xf32>
    %117 = arith.mulf %111, %115 : vector<8x32xf32>
    %118 = arith.addf %116, %117 : vector<8x32xf32>
    %119 = math.tanh %118 : vector<8x32xf32>
    %120 = arith.mulf %113, %119 : vector<8x32xf32>
    %121 = tpu.concatenate %120, %99 in 1 : vector<8x32xf32>, vector<8x32xf32> -> vector<8x64xf32>
    %122 = arith.truncf %121 : vector<8x64xf32> to vector<8x64xbf16>
    %cst_31 = arith.constant dense<0.000000e+00> : vector<8x128xf32>
    %123 = tpu.matmul %122, %17, %cst_31 {dimension_numbers = #tpu.dot_dimension_numbers<[1], [0], [0], [1], [0, 0, 1, 1], [], []>} : vector<8x64xbf16>, vector<64x128xbf16>, vector<8x128xf32> -> vector<8x128xf32>
    %124 = vector.broadcast %18 : vector<1x128xf32> to vector<8x128xf32>
    %125 = arith.addf %123, %124 : vector<8x128xf32>
    %126 = arith.negf %125 : vector<8x128xf32>
    %127 = math.exp %126 : vector<8x128xf32>
    %cst_32 = arith.constant 1.000000e+00 : f32
    %128 = vector.broadcast %cst_32 : f32 to vector<8x128xf32>
    %129 = arith.addf %128, %127 : vector<8x128xf32>
    %130 = arith.divf %128, %129 : vector<8x128xf32>
    %131 = vector.extract_strided_slice %130 {offsets = [0, 0], sizes = [8, 32], strides = [1, 1]} : vector<8x128xf32> to vector<8x32xf32>
    %132 = vector.extract_strided_slice %130 {offsets = [0, 32], sizes = [8, 32], strides = [1, 1]} : vector<8x128xf32> to vector<8x32xf32>
    %133 = vector.extract_strided_slice %130 {offsets = [0, 96], sizes = [8, 32], strides = [1, 1]} : vector<8x128xf32> to vector<8x32xf32>
    %134 = vector.extract_strided_slice %125 {offsets = [0, 64], sizes = [8, 32], strides = [1, 1]} : vector<8x128xf32> to vector<8x32xf32>
    %135 = math.tanh %134 : vector<8x32xf32>
    %136 = arith.mulf %132, %97 : vector<8x32xf32>
    %137 = arith.mulf %131, %135 : vector<8x32xf32>
    %138 = arith.addf %136, %137 : vector<8x32xf32>
    %139 = math.tanh %138 : vector<8x32xf32>
    %140 = arith.mulf %133, %139 : vector<8x32xf32>
    %c16 = arith.constant 16 : index
    %c0_33 = arith.constant 0 : index
    %141 = vector.load %arg13[%c16, %c0_33] : memref<64x32xf32, #tpu.memory_space<vmem>>, vector<8x32xf32>
    tpu.vector_store %arg13[%c16, %c0_33], %140 {strides = array<i32>} : memref<64x32xf32, #tpu.memory_space<vmem>>, vector<8x32xf32>,
    %142 = vector.extract_strided_slice %3 {offsets = [24, 0], sizes = [8, 128], strides = [1, 1]} : vector<64x128xf32> to vector<8x128xf32>
    %143 = arith.addf %142, %10 : vector<8x128xf32>
    %144 = arith.truncf %120 : vector<8x32xf32> to vector<8x32xbf16>
    %cst_34 = arith.constant dense<0.000000e+00> : vector<8x128xf32>
    %145 = tpu.matmul %144, %16, %cst_34 {dimension_numbers = #tpu.dot_dimension_numbers<[1], [0], [0], [1], [0, 0, 1, 1], [], []>} : vector<8x32xbf16>, vector<32x128xbf16>, vector<8x128xf32> -> vector<8x128xf32>
    %146 = arith.addf %143, %145 : vector<8x128xf32>
    %147 = arith.negf %146 : vector<8x128xf32>
    %148 = math.exp %147 : vector<8x128xf32>
    %cst_35 = arith.constant 1.000000e+00 : f32
    %149 = vector.broadcast %cst_35 : f32 to vector<8x128xf32>
    %150 = arith.addf %149, %148 : vector<8x128xf32>
    %151 = arith.divf %149, %150 : vector<8x128xf32>
    %152 = vector.extract_strided_slice %151 {offsets = [0, 0], sizes = [8, 32], strides = [1, 1]} : vector<8x128xf32> to vector<8x32xf32>
    %153 = vector.extract_strided_slice %151 {offsets = [0, 32], sizes = [8, 32], strides = [1, 1]} : vector<8x128xf32> to vector<8x32xf32>
    %154 = vector.extract_strided_slice %151 {offsets = [0, 96], sizes = [8, 32], strides = [1, 1]} : vector<8x128xf32> to vector<8x32xf32>
    %155 = vector.extract_strided_slice %146 {offsets = [0, 64], sizes = [8, 32], strides = [1, 1]} : vector<8x128xf32> to vector<8x32xf32>
    %156 = math.tanh %155 : vector<8x32xf32>
    %157 = arith.mulf %153, %118 : vector<8x32xf32>
    %158 = arith.mulf %152, %156 : vector<8x32xf32>
    %159 = arith.addf %157, %158 : vector<8x32xf32>
    %160 = math.tanh %159 : vector<8x32xf32>
    %161 = arith.mulf %154, %160 : vector<8x32xf32>
    %162 = tpu.concatenate %161, %140 in 1 : vector<8x32xf32>, vector<8x32xf32> -> vector<8x64xf32>
    %163 = arith.truncf %162 : vector<8x64xf32> to vector<8x64xbf16>
    %cst_36 = arith.constant dense<0.000000e+00> : vector<8x128xf32>
    %164 = tpu.matmul %163, %17, %cst_36 {dimension_numbers = #tpu.dot_dimension_numbers<[1], [0], [0], [1], [0, 0, 1, 1], [], []>} : vector<8x64xbf16>, vector<64x128xbf16>, vector<8x128xf32> -> vector<8x128xf32>
    %165 = vector.broadcast %18 : vector<1x128xf32> to vector<8x128xf32>
    %166 = arith.addf %164, %165 : vector<8x128xf32>
    %167 = arith.negf %166 : vector<8x128xf32>
    %168 = math.exp %167 : vector<8x128xf32>
    %cst_37 = arith.constant 1.000000e+00 : f32
    %169 = vector.broadcast %cst_37 : f32 to vector<8x128xf32>
    %170 = arith.addf %169, %168 : vector<8x128xf32>
    %171 = arith.divf %169, %170 : vector<8x128xf32>
    %172 = vector.extract_strided_slice %171 {offsets = [0, 0], sizes = [8, 32], strides = [1, 1]} : vector<8x128xf32> to vector<8x32xf32>
    %173 = vector.extract_strided_slice %171 {offsets = [0, 32], sizes = [8, 32], strides = [1, 1]} : vector<8x128xf32> to vector<8x32xf32>
    %174 = vector.extract_strided_slice %171 {offsets = [0, 96], sizes = [8, 32], strides = [1, 1]} : vector<8x128xf32> to vector<8x32xf32>
    %175 = vector.extract_strided_slice %166 {offsets = [0, 64], sizes = [8, 32], strides = [1, 1]} : vector<8x128xf32> to vector<8x32xf32>
    %176 = math.tanh %175 : vector<8x32xf32>
    %177 = arith.mulf %173, %138 : vector<8x32xf32>
    %178 = arith.mulf %172, %176 : vector<8x32xf32>
    %179 = arith.addf %177, %178 : vector<8x32xf32>
    %180 = math.tanh %179 : vector<8x32xf32>
    %181 = arith.mulf %174, %180 : vector<8x32xf32>
    %c24 = arith.constant 24 : index
    %c0_38 = arith.constant 0 : index
    %182 = vector.load %arg13[%c24, %c0_38] : memref<64x32xf32, #tpu.memory_space<vmem>>, vector<8x32xf32>
    tpu.vector_store %arg13[%c24, %c0_38], %181 {strides = array<i32>} : memref<64x32xf32, #tpu.memory_space<vmem>>, vector<8x32xf32>,
    %183 = vector.extract_strided_slice %3 {offsets = [32, 0], sizes = [8, 128], strides = [1, 1]} : vector<64x128xf32> to vector<8x128xf32>
    %184 = arith.addf %183, %10 : vector<8x128xf32>
    %185 = arith.truncf %161 : vector<8x32xf32> to vector<8x32xbf16>
    %cst_39 = arith.constant dense<0.000000e+00> : vector<8x128xf32>
    %186 = tpu.matmul %185, %16, %cst_39 {dimension_numbers = #tpu.dot_dimension_numbers<[1], [0], [0], [1], [0, 0, 1, 1], [], []>} : vector<8x32xbf16>, vector<32x128xbf16>, vector<8x128xf32> -> vector<8x128xf32>
    %187 = arith.addf %184, %186 : vector<8x128xf32>
    %188 = arith.negf %187 : vector<8x128xf32>
    %189 = math.exp %188 : vector<8x128xf32>
    %cst_40 = arith.constant 1.000000e+00 : f32
    %190 = vector.broadcast %cst_40 : f32 to vector<8x128xf32>
    %191 = arith.addf %190, %189 : vector<8x128xf32>
    %192 = arith.divf %190, %191 : vector<8x128xf32>
    %193 = vector.extract_strided_slice %192 {offsets = [0, 0], sizes = [8, 32], strides = [1, 1]} : vector<8x128xf32> to vector<8x32xf32>
    %194 = vector.extract_strided_slice %192 {offsets = [0, 32], sizes = [8, 32], strides = [1, 1]} : vector<8x128xf32> to vector<8x32xf32>
    %195 = vector.extract_strided_slice %192 {offsets = [0, 96], sizes = [8, 32], strides = [1, 1]} : vector<8x128xf32> to vector<8x32xf32>
    %196 = vector.extract_strided_slice %187 {offsets = [0, 64], sizes = [8, 32], strides = [1, 1]} : vector<8x128xf32> to vector<8x32xf32>
    %197 = math.tanh %196 : vector<8x32xf32>
    %198 = arith.mulf %194, %159 : vector<8x32xf32>
    %199 = arith.mulf %193, %197 : vector<8x32xf32>
    %200 = arith.addf %198, %199 : vector<8x32xf32>
    %201 = math.tanh %200 : vector<8x32xf32>
    %202 = arith.mulf %195, %201 : vector<8x32xf32>
    %203 = tpu.concatenate %202, %181 in 1 : vector<8x32xf32>, vector<8x32xf32> -> vector<8x64xf32>
    %204 = arith.truncf %203 : vector<8x64xf32> to vector<8x64xbf16>
    %cst_41 = arith.constant dense<0.000000e+00> : vector<8x128xf32>
    %205 = tpu.matmul %204, %17, %cst_41 {dimension_numbers = #tpu.dot_dimension_numbers<[1], [0], [0], [1], [0, 0, 1, 1], [], []>} : vector<8x64xbf16>, vector<64x128xbf16>, vector<8x128xf32> -> vector<8x128xf32>
    %206 = vector.broadcast %18 : vector<1x128xf32> to vector<8x128xf32>
    %207 = arith.addf %205, %206 : vector<8x128xf32>
    %208 = arith.negf %207 : vector<8x128xf32>
    %209 = math.exp %208 : vector<8x128xf32>
    %cst_42 = arith.constant 1.000000e+00 : f32
    %210 = vector.broadcast %cst_42 : f32 to vector<8x128xf32>
    %211 = arith.addf %210, %209 : vector<8x128xf32>
    %212 = arith.divf %210, %211 : vector<8x128xf32>
    %213 = vector.extract_strided_slice %212 {offsets = [0, 0], sizes = [8, 32], strides = [1, 1]} : vector<8x128xf32> to vector<8x32xf32>
    %214 = vector.extract_strided_slice %212 {offsets = [0, 32], sizes = [8, 32], strides = [1, 1]} : vector<8x128xf32> to vector<8x32xf32>
    %215 = vector.extract_strided_slice %212 {offsets = [0, 96], sizes = [8, 32], strides = [1, 1]} : vector<8x128xf32> to vector<8x32xf32>
    %216 = vector.extract_strided_slice %207 {offsets = [0, 64], sizes = [8, 32], strides = [1, 1]} : vector<8x128xf32> to vector<8x32xf32>
    %217 = math.tanh %216 : vector<8x32xf32>
    %218 = arith.mulf %214, %179 : vector<8x32xf32>
    %219 = arith.mulf %213, %217 : vector<8x32xf32>
    %220 = arith.addf %218, %219 : vector<8x32xf32>
    %221 = math.tanh %220 : vector<8x32xf32>
    %222 = arith.mulf %215, %221 : vector<8x32xf32>
    %c32 = arith.constant 32 : index
    %c0_43 = arith.constant 0 : index
    %223 = vector.load %arg13[%c32, %c0_43] : memref<64x32xf32, #tpu.memory_space<vmem>>, vector<8x32xf32>
    tpu.vector_store %arg13[%c32, %c0_43], %222 {strides = array<i32>} : memref<64x32xf32, #tpu.memory_space<vmem>>, vector<8x32xf32>,
    %224 = vector.extract_strided_slice %3 {offsets = [40, 0], sizes = [8, 128], strides = [1, 1]} : vector<64x128xf32> to vector<8x128xf32>
    %225 = arith.addf %224, %10 : vector<8x128xf32>
    %226 = arith.truncf %202 : vector<8x32xf32> to vector<8x32xbf16>
    %cst_44 = arith.constant dense<0.000000e+00> : vector<8x128xf32>
    %227 = tpu.matmul %226, %16, %cst_44 {dimension_numbers = #tpu.dot_dimension_numbers<[1], [0], [0], [1], [0, 0, 1, 1], [], []>} : vector<8x32xbf16>, vector<32x128xbf16>, vector<8x128xf32> -> vector<8x128xf32>
    %228 = arith.addf %225, %227 : vector<8x128xf32>
    %229 = arith.negf %228 : vector<8x128xf32>
    %230 = math.exp %229 : vector<8x128xf32>
    %cst_45 = arith.constant 1.000000e+00 : f32
    %231 = vector.broadcast %cst_45 : f32 to vector<8x128xf32>
    %232 = arith.addf %231, %230 : vector<8x128xf32>
    %233 = arith.divf %231, %232 : vector<8x128xf32>
    %234 = vector.extract_strided_slice %233 {offsets = [0, 0], sizes = [8, 32], strides = [1, 1]} : vector<8x128xf32> to vector<8x32xf32>
    %235 = vector.extract_strided_slice %233 {offsets = [0, 32], sizes = [8, 32], strides = [1, 1]} : vector<8x128xf32> to vector<8x32xf32>
    %236 = vector.extract_strided_slice %233 {offsets = [0, 96], sizes = [8, 32], strides = [1, 1]} : vector<8x128xf32> to vector<8x32xf32>
    %237 = vector.extract_strided_slice %228 {offsets = [0, 64], sizes = [8, 32], strides = [1, 1]} : vector<8x128xf32> to vector<8x32xf32>
    %238 = math.tanh %237 : vector<8x32xf32>
    %239 = arith.mulf %235, %200 : vector<8x32xf32>
    %240 = arith.mulf %234, %238 : vector<8x32xf32>
    %241 = arith.addf %239, %240 : vector<8x32xf32>
    %242 = math.tanh %241 : vector<8x32xf32>
    %243 = arith.mulf %236, %242 : vector<8x32xf32>
    %244 = tpu.concatenate %243, %222 in 1 : vector<8x32xf32>, vector<8x32xf32> -> vector<8x64xf32>
    %245 = arith.truncf %244 : vector<8x64xf32> to vector<8x64xbf16>
    %cst_46 = arith.constant dense<0.000000e+00> : vector<8x128xf32>
    %246 = tpu.matmul %245, %17, %cst_46 {dimension_numbers = #tpu.dot_dimension_numbers<[1], [0], [0], [1], [0, 0, 1, 1], [], []>} : vector<8x64xbf16>, vector<64x128xbf16>, vector<8x128xf32> -> vector<8x128xf32>
    %247 = vector.broadcast %18 : vector<1x128xf32> to vector<8x128xf32>
    %248 = arith.addf %246, %247 : vector<8x128xf32>
    %249 = arith.negf %248 : vector<8x128xf32>
    %250 = math.exp %249 : vector<8x128xf32>
    %cst_47 = arith.constant 1.000000e+00 : f32
    %251 = vector.broadcast %cst_47 : f32 to vector<8x128xf32>
    %252 = arith.addf %251, %250 : vector<8x128xf32>
    %253 = arith.divf %251, %252 : vector<8x128xf32>
    %254 = vector.extract_strided_slice %253 {offsets = [0, 0], sizes = [8, 32], strides = [1, 1]} : vector<8x128xf32> to vector<8x32xf32>
    %255 = vector.extract_strided_slice %253 {offsets = [0, 32], sizes = [8, 32], strides = [1, 1]} : vector<8x128xf32> to vector<8x32xf32>
    %256 = vector.extract_strided_slice %253 {offsets = [0, 96], sizes = [8, 32], strides = [1, 1]} : vector<8x128xf32> to vector<8x32xf32>
    %257 = vector.extract_strided_slice %248 {offsets = [0, 64], sizes = [8, 32], strides = [1, 1]} : vector<8x128xf32> to vector<8x32xf32>
    %258 = math.tanh %257 : vector<8x32xf32>
    %259 = arith.mulf %255, %220 : vector<8x32xf32>
    %260 = arith.mulf %254, %258 : vector<8x32xf32>
    %261 = arith.addf %259, %260 : vector<8x32xf32>
    %262 = math.tanh %261 : vector<8x32xf32>
    %263 = arith.mulf %256, %262 : vector<8x32xf32>
    %c40 = arith.constant 40 : index
    %c0_48 = arith.constant 0 : index
    %264 = vector.load %arg13[%c40, %c0_48] : memref<64x32xf32, #tpu.memory_space<vmem>>, vector<8x32xf32>
    tpu.vector_store %arg13[%c40, %c0_48], %263 {strides = array<i32>} : memref<64x32xf32, #tpu.memory_space<vmem>>, vector<8x32xf32>,
    %265 = vector.extract_strided_slice %3 {offsets = [48, 0], sizes = [8, 128], strides = [1, 1]} : vector<64x128xf32> to vector<8x128xf32>
    %266 = arith.addf %265, %10 : vector<8x128xf32>
    %267 = arith.truncf %243 : vector<8x32xf32> to vector<8x32xbf16>
    %cst_49 = arith.constant dense<0.000000e+00> : vector<8x128xf32>
    %268 = tpu.matmul %267, %16, %cst_49 {dimension_numbers = #tpu.dot_dimension_numbers<[1], [0], [0], [1], [0, 0, 1, 1], [], []>} : vector<8x32xbf16>, vector<32x128xbf16>, vector<8x128xf32> -> vector<8x128xf32>
    %269 = arith.addf %266, %268 : vector<8x128xf32>
    %270 = arith.negf %269 : vector<8x128xf32>
    %271 = math.exp %270 : vector<8x128xf32>
    %cst_50 = arith.constant 1.000000e+00 : f32
    %272 = vector.broadcast %cst_50 : f32 to vector<8x128xf32>
    %273 = arith.addf %272, %271 : vector<8x128xf32>
    %274 = arith.divf %272, %273 : vector<8x128xf32>
    %275 = vector.extract_strided_slice %274 {offsets = [0, 0], sizes = [8, 32], strides = [1, 1]} : vector<8x128xf32> to vector<8x32xf32>
    %276 = vector.extract_strided_slice %274 {offsets = [0, 32], sizes = [8, 32], strides = [1, 1]} : vector<8x128xf32> to vector<8x32xf32>
    %277 = vector.extract_strided_slice %274 {offsets = [0, 96], sizes = [8, 32], strides = [1, 1]} : vector<8x128xf32> to vector<8x32xf32>
    %278 = vector.extract_strided_slice %269 {offsets = [0, 64], sizes = [8, 32], strides = [1, 1]} : vector<8x128xf32> to vector<8x32xf32>
    %279 = math.tanh %278 : vector<8x32xf32>
    %280 = arith.mulf %276, %241 : vector<8x32xf32>
    %281 = arith.mulf %275, %279 : vector<8x32xf32>
    %282 = arith.addf %280, %281 : vector<8x32xf32>
    %283 = math.tanh %282 : vector<8x32xf32>
    %284 = arith.mulf %277, %283 : vector<8x32xf32>
    %285 = tpu.concatenate %284, %263 in 1 : vector<8x32xf32>, vector<8x32xf32> -> vector<8x64xf32>
    %286 = arith.truncf %285 : vector<8x64xf32> to vector<8x64xbf16>
    %cst_51 = arith.constant dense<0.000000e+00> : vector<8x128xf32>
    %287 = tpu.matmul %286, %17, %cst_51 {dimension_numbers = #tpu.dot_dimension_numbers<[1], [0], [0], [1], [0, 0, 1, 1], [], []>} : vector<8x64xbf16>, vector<64x128xbf16>, vector<8x128xf32> -> vector<8x128xf32>
    %288 = vector.broadcast %18 : vector<1x128xf32> to vector<8x128xf32>
    %289 = arith.addf %287, %288 : vector<8x128xf32>
    %290 = arith.negf %289 : vector<8x128xf32>
    %291 = math.exp %290 : vector<8x128xf32>
    %cst_52 = arith.constant 1.000000e+00 : f32
    %292 = vector.broadcast %cst_52 : f32 to vector<8x128xf32>
    %293 = arith.addf %292, %291 : vector<8x128xf32>
    %294 = arith.divf %292, %293 : vector<8x128xf32>
    %295 = vector.extract_strided_slice %294 {offsets = [0, 0], sizes = [8, 32], strides = [1, 1]} : vector<8x128xf32> to vector<8x32xf32>
    %296 = vector.extract_strided_slice %294 {offsets = [0, 32], sizes = [8, 32], strides = [1, 1]} : vector<8x128xf32> to vector<8x32xf32>
    %297 = vector.extract_strided_slice %294 {offsets = [0, 96], sizes = [8, 32], strides = [1, 1]} : vector<8x128xf32> to vector<8x32xf32>
    %298 = vector.extract_strided_slice %289 {offsets = [0, 64], sizes = [8, 32], strides = [1, 1]} : vector<8x128xf32> to vector<8x32xf32>
    %299 = math.tanh %298 : vector<8x32xf32>
    %300 = arith.mulf %296, %261 : vector<8x32xf32>
    %301 = arith.mulf %295, %299 : vector<8x32xf32>
    %302 = arith.addf %300, %301 : vector<8x32xf32>
    %303 = math.tanh %302 : vector<8x32xf32>
    %304 = arith.mulf %297, %303 : vector<8x32xf32>
    %c48 = arith.constant 48 : index
    %c0_53 = arith.constant 0 : index
    %305 = vector.load %arg13[%c48, %c0_53] : memref<64x32xf32, #tpu.memory_space<vmem>>, vector<8x32xf32>
    tpu.vector_store %arg13[%c48, %c0_53], %304 {strides = array<i32>} : memref<64x32xf32, #tpu.memory_space<vmem>>, vector<8x32xf32>,
    %306 = vector.extract_strided_slice %3 {offsets = [56, 0], sizes = [8, 128], strides = [1, 1]} : vector<64x128xf32> to vector<8x128xf32>
    %307 = arith.addf %306, %10 : vector<8x128xf32>
    %308 = arith.truncf %284 : vector<8x32xf32> to vector<8x32xbf16>
    %cst_54 = arith.constant dense<0.000000e+00> : vector<8x128xf32>
    %309 = tpu.matmul %308, %16, %cst_54 {dimension_numbers = #tpu.dot_dimension_numbers<[1], [0], [0], [1], [0, 0, 1, 1], [], []>} : vector<8x32xbf16>, vector<32x128xbf16>, vector<8x128xf32> -> vector<8x128xf32>
    %310 = arith.addf %307, %309 : vector<8x128xf32>
    %311 = arith.negf %310 : vector<8x128xf32>
    %312 = math.exp %311 : vector<8x128xf32>
    %cst_55 = arith.constant 1.000000e+00 : f32
    %313 = vector.broadcast %cst_55 : f32 to vector<8x128xf32>
    %314 = arith.addf %313, %312 : vector<8x128xf32>
    %315 = arith.divf %313, %314 : vector<8x128xf32>
    %316 = vector.extract_strided_slice %315 {offsets = [0, 0], sizes = [8, 32], strides = [1, 1]} : vector<8x128xf32> to vector<8x32xf32>
    %317 = vector.extract_strided_slice %315 {offsets = [0, 32], sizes = [8, 32], strides = [1, 1]} : vector<8x128xf32> to vector<8x32xf32>
    %318 = vector.extract_strided_slice %315 {offsets = [0, 96], sizes = [8, 32], strides = [1, 1]} : vector<8x128xf32> to vector<8x32xf32>
    %319 = vector.extract_strided_slice %310 {offsets = [0, 64], sizes = [8, 32], strides = [1, 1]} : vector<8x128xf32> to vector<8x32xf32>
    %320 = math.tanh %319 : vector<8x32xf32>
    %321 = arith.mulf %317, %282 : vector<8x32xf32>
    %322 = arith.mulf %316, %320 : vector<8x32xf32>
    %323 = arith.addf %321, %322 : vector<8x32xf32>
    %324 = math.tanh %323 : vector<8x32xf32>
    %325 = arith.mulf %318, %324 : vector<8x32xf32>
    %326 = tpu.concatenate %325, %304 in 1 : vector<8x32xf32>, vector<8x32xf32> -> vector<8x64xf32>
    %327 = arith.truncf %326 : vector<8x64xf32> to vector<8x64xbf16>
    %cst_56 = arith.constant dense<0.000000e+00> : vector<8x128xf32>
    %328 = tpu.matmul %327, %17, %cst_56 {dimension_numbers = #tpu.dot_dimension_numbers<[1], [0], [0], [1], [0, 0, 1, 1], [], []>} : vector<8x64xbf16>, vector<64x128xbf16>, vector<8x128xf32> -> vector<8x128xf32>
    %329 = vector.broadcast %18 : vector<1x128xf32> to vector<8x128xf32>
    %330 = arith.addf %328, %329 : vector<8x128xf32>
    %331 = arith.negf %330 : vector<8x128xf32>
    %332 = math.exp %331 : vector<8x128xf32>
    %cst_57 = arith.constant 1.000000e+00 : f32
    %333 = vector.broadcast %cst_57 : f32 to vector<8x128xf32>
    %334 = arith.addf %333, %332 : vector<8x128xf32>
    %335 = arith.divf %333, %334 : vector<8x128xf32>
    %336 = vector.extract_strided_slice %335 {offsets = [0, 0], sizes = [8, 32], strides = [1, 1]} : vector<8x128xf32> to vector<8x32xf32>
    %337 = vector.extract_strided_slice %335 {offsets = [0, 32], sizes = [8, 32], strides = [1, 1]} : vector<8x128xf32> to vector<8x32xf32>
    %338 = vector.extract_strided_slice %335 {offsets = [0, 96], sizes = [8, 32], strides = [1, 1]} : vector<8x128xf32> to vector<8x32xf32>
    %339 = vector.extract_strided_slice %330 {offsets = [0, 64], sizes = [8, 32], strides = [1, 1]} : vector<8x128xf32> to vector<8x32xf32>
    %340 = math.tanh %339 : vector<8x32xf32>
    %341 = arith.mulf %337, %302 : vector<8x32xf32>
    %342 = arith.mulf %336, %340 : vector<8x32xf32>
    %343 = arith.addf %341, %342 : vector<8x32xf32>
    %344 = math.tanh %343 : vector<8x32xf32>
    %345 = arith.mulf %338, %344 : vector<8x32xf32>
    %c56 = arith.constant 56 : index
    %c0_58 = arith.constant 0 : index
    %346 = vector.load %arg13[%c56, %c0_58] : memref<64x32xf32, #tpu.memory_space<vmem>>, vector<8x32xf32>
    tpu.vector_store %arg13[%c56, %c0_58], %345 {strides = array<i32>} : memref<64x32xf32, #tpu.memory_space<vmem>>, vector<8x32xf32>,
    %c0_59 = arith.constant 0 : index
    %c0_60 = arith.constant 0 : index
    %347 = vector.load %arg13[%c0_59, %c0_60] : memref<64x32xf32, #tpu.memory_space<vmem>>, vector<64x32xf32>
    %348 = arith.truncf %347 : vector<64x32xf32> to vector<64x32xbf16>
    %c0_61 = arith.constant 0 : index
    %c0_62 = arith.constant 0 : index
    %349 = vector.load %arg9[%c0_61, %c0_62] : memref<32x128xbf16, #tpu.memory_space<vmem>>, vector<32x128xbf16>
    %cst_63 = arith.constant dense<0.000000e+00> : vector<64x128xf32>
    %350 = tpu.matmul %348, %349, %cst_63 {dimension_numbers = #tpu.dot_dimension_numbers<[1], [0], [0], [1], [0, 0, 1, 1], [], []>} : vector<64x32xbf16>, vector<32x128xbf16>, vector<64x128xf32> -> vector<64x128xf32>
    %c0_64 = arith.constant 0 : index
    %c0_65 = arith.constant 0 : index
    %351 = vector.load %arg10[%c0_64, %c0_65] : memref<1x128xf32, #tpu.memory_space<vmem>>, vector<1x128xf32>
    %352 = vector.broadcast %351 : vector<1x128xf32> to vector<64x128xf32>
    %353 = arith.addf %350, %352 : vector<64x128xf32>
    %c0_66 = arith.constant 0 : index
    %c0_67 = arith.constant 0 : index
    %354 = vector.load %arg11[%c0_66, %c0_67] : memref<64x128xf32, #tpu.memory_space<vmem>>, vector<64x128xf32>
    tpu.vector_store %arg11[%c0_66, %c0_67], %353 {strides = array<i32>} : memref<64x128xf32, #tpu.memory_space<vmem>>, vector<64x128xf32>,
    %355 = tpu.concatenate %325, %345, %323, %343 in 1 : vector<8x32xf32>, vector<8x32xf32>, vector<8x32xf32>, vector<8x32xf32> -> vector<8x128xf32>
    %c0_68 = arith.constant 0 : index
    %c0_69 = arith.constant 0 : index
    %356 = vector.load %arg12[%c0_68, %c0_69] : memref<8x128xf32, #tpu.memory_space<vmem>>, vector<8x128xf32>
    tpu.vector_store %arg12[%c0_68, %c0_69], %355 {strides = array<i32>} : memref<8x128xf32, #tpu.memory_space<vmem>>, vector<8x128xf32>,
    return
  }
}

</mosaic_0001>

<llo_original>
// kernel: fwd.3
$region0: #{fwd.3}
  #allocation0 [shape = 'u32[]', space=smem, size = 0x4, offset = 0x4, fixed_abs, tag = 'smem constant byte address 0x4 - core index']
  #allocation1 [shape = 'u32[72,128]{1,0:T(1,128)}', space=vmem, size = 0x9000, scoped, tag = 'internal scratch']
  %s0 = inlined_call_operand.vmem [shape: bf16[240,48], index: 0, kind: input, shape index: {}]
  %s1 = inlined_call_operand.vmem [shape: bf16[240,48], index: 1, kind: input, shape index: {}]
  %s2 = inlined_call_operand.vmem [shape: bf16[48,12], index: 2, kind: input, shape index: {}]
  %s3 = inlined_call_operand.vmem [shape: bf16[48,12], index: 3, kind: input, shape index: {}]
  %s4 = inlined_call_operand.vmem [shape: f32[16,12], index: 4, kind: output, shape index: {0}]
  %s5 = inlined_call_operand.vmem [shape: f32[16,12], index: 5, kind: output, shape index: {1}]
  %6 = xla_tuple %s4, %s5
  %s7 = sld [smem:[#allocation0]]
  $region34: #{fwd.3} parent=0
    _
  %s9 = ssub.s32 1, %s7
  %s10 = scalar_select 0, %s9, %s7
  // Predicated region
  $region2: #{fwd.3} parent=0 // pred_check
    _
  $region3: #{fwd.3} parent=0 // pred_check_branch
    %12 = sbr.rel (0) target = $region5
  $region4: #{fwd.3} parent=0 // pred_region
    _
  $region5: #{fwd.3} parent=0 // pred_fallthru
    _
  // Predicated region
  $region6: #{fwd.3} parent=0 // pred_check
    _
  $region7: #{fwd.3} parent=0 // pred_check_branch
    %14 = sbr.rel (0) target = $region9
  $region8: #{fwd.3} parent=0 // pred_region
    _
  $region9: #{fwd.3} parent=0 // pred_fallthru
    _
  // Predicated region
  $region10: #{fwd.3} parent=0 // pred_check
    _
  $region11: #{fwd.3} parent=0 // pred_check_branch
    %16 = sbr.rel (0) target = $region13
  $region12: #{fwd.3} parent=0 // pred_region
    _
  $region13: #{fwd.3} parent=0 // pred_fallthru
    _
  // Predicated region
  $region14: #{fwd.3} parent=0 // pred_check
    _
  $region15: #{fwd.3} parent=0 // pred_check_branch
    %18 = sbr.rel (0) target = $region17
  $region16: #{fwd.3} parent=0 // pred_region
    _
  $region17: #{fwd.3} parent=0 // pred_fallthru
    _
  %v20 = vld [vmem:[%s0] sm:$0xf]
  %v21 = vld [vmem:[%s0 + $0x4] sm:$0xf]
  %v22 = vld [vmem:[%s0 + $0x8] sm:$0xf]
  %v23 = vld [vmem:[%s0 + $0xc] sm:$0xf]
  %v24 = vld [vmem:[%s0 + $0x10] sm:$0xf]
  %v25 = vld [vmem:[%s0 + $0x14] sm:$0xf]
  %v26 = vld [vmem:[%s0 + $0x18] sm:$0xf]
  %v27 = vld [vmem:[%s0 + $0x1c] sm:$0xf]
  %v28 = vld [vmem:[%s0 + $0x20] sm:$0xf]
  %v29 = vld [vmem:[%s0 + $0x24] sm:$0xf]
  %v30 = vld [vmem:[%s0 + $0x28] sm:$0xf]
  %v31 = vld [vmem:[%s0 + $0x2c] sm:$0xf]
  %v32 = vld [vmem:[%s0 + $0x30] sm:$0xf]
  %v33 = vld [vmem:[%s0 + $0x34] sm:$0xf]
  %v34 = vld [vmem:[%s0 + $0x38] sm:$0xf]
  %v35 = vld [vmem:[%s0 + $0x3c] sm:$0xf]
  %v36 = vld [vmem:[%s0 + $0x40] sm:$0xf]
  %v37 = vld [vmem:[%s0 + $0x44] sm:$0xf]
  %v38 = vld [vmem:[%s0 + $0x48] sm:$0xf]
  %v39 = vld [vmem:[%s0 + $0x4c] sm:$0xf]
  %v40 = vld [vmem:[%s0 + $0x50] sm:$0xf]
  %v41 = vld [vmem:[%s0 + $0x54] sm:$0xf]
  %v42 = vld [vmem:[%s0 + $0x58] sm:$0xf]
  %v43 = vld [vmem:[%s0 + $0x5c] sm:$0xf]
  %v44 = vld [vmem:[%s0 + $0x60] sm:$0xf]
  %v45 = vld [vmem:[%s0 + $0x64] sm:$0xf]
  %v46 = vld [vmem:[%s0 + $0x68] sm:$0xf]
  %v47 = vld [vmem:[%s0 + $0x6c] sm:$0xf]
  %v48 = vld [vmem:[%s0 + $0x70] sm:$0xf]
  %v49 = vld [vmem:[%s0 + $0x74] sm:$0xf]
  %v50 = vld [vmem:[%s2] sm:$0xf]
  %v51 = vld [vmem:[%s2 + $0x4] sm:$0xf]
  %v52 = vld [vmem:[%s2 + $0x8] sm:$0xf]
  %v53 = vld [vmem:[%s2 + $0xc] sm:$0xf]
  %v54 = vld [vmem:[%s2 + $0x10] sm:$0xf]
  %v55 = vld [vmem:[%s2 + $0x14] sm:$0xf]
  %v86 = vunpack.c.l.b16 %v20
  %v87 = vunpack.c.l.b16 %v21
  %v88 = vunpack.c.l.b16 %v22
  %v89 = vunpack.c.l.b16 %v23
  %v90 = vunpack.c.l.b16 %v24
  %v91 = vunpack.c.l.b16 %v25
  %v92 = vunpack.c.l.b16 %v26
  %v93 = vunpack.c.l.b16 %v27
  %v94 = vunpack.c.l.b16 %v28
  %v95 = vunpack.c.l.b16 %v29
  %v96 = vunpack.c.l.b16 %v30
  %v97 = vunpack.c.l.b16 %v31
  %v98 = vunpack.c.l.b16 %v32
  %v99 = vunpack.c.l.b16 %v33
  %v100 = vunpack.c.l.b16 %v34
  %v101 = vunpack.c.l.b16 %v35
  %v102 = vunpack.c.l.b16 %v36
  %v103 = vunpack.c.l.b16 %v37
  %v104 = vunpack.c.l.b16 %v38
  %v105 = vunpack.c.l.b16 %v39
  %v106 = vunpack.c.l.b16 %v40
  %v107 = vunpack.c.l.b16 %v41
  %v108 = vunpack.c.l.b16 %v42
  %v109 = vunpack.c.l.b16 %v43
  %v110 = vunpack.c.l.b16 %v44
  %v111 = vunpack.c.l.b16 %v45
  %v112 = vunpack.c.l.b16 %v46
  %v113 = vunpack.c.l.b16 %v47
  %v114 = vunpack.c.l.b16 %v48
  %v115 = vunpack.c.l.b16 %v49
  %v116 = vpack.c.b16 %v87, %v86
  %v117 = vpack.c.b16 %v89, %v88
  %v118 = vpack.c.b16 %v91, %v90
  %v119 = vpack.c.b16 %v93, %v92
  %v120 = vpack.c.b16 %v95, %v94
  %v121 = vpack.c.b16 %v97, %v96
  %v122 = vpack.c.b16 %v99, %v98
  %v123 = vpack.c.b16 %v101, %v100
  %v124 = vpack.c.b16 %v103, %v102
  %v125 = vpack.c.b16 %v105, %v104
  %v126 = vpack.c.b16 %v107, %v106
  %v127 = vpack.c.b16 %v109, %v108
  %v128 = vpack.c.b16 %v111, %v110
  %v129 = vpack.c.b16 %v113, %v112
  %v130 = vpack.c.b16 %v115, %v114
  %v137 = vunpack.c.l.b16 %v50
  %v138 = vunpack.c.l.b16 %v51
  %v139 = vunpack.c.l.b16 %v52
  %v140 = vunpack.c.l.b16 %v53
  %v141 = vunpack.c.l.b16 %v54
  %v142 = vunpack.c.l.b16 %v55
  %v143 = vpack.c.b16 %v138, %v137
  %v144 = vpack.c.b16 %v140, %v139
  %v145 = vpack.c.b16 %v142, %v141
  %vm149 = vcmask 392192
  %v151 = vsel %vm149, %v116, 0
  %v154 = vsel %vm149, %v117, 0
  %v157 = vsel %vm149, %v118, 0
  %v160 = vsel %vm149, %v119, 0
  %v163 = vsel %vm149, %v120, 0
  %v166 = vsel %vm149, %v121, 0
  %v169 = vsel %vm149, %v122, 0
  %v172 = vsel %vm149, %v123, 0
  %v175 = vsel %vm149, %v124, 0
  %v178 = vsel %vm149, %v125, 0
  %v181 = vsel %vm149, %v126, 0
  %v184 = vsel %vm149, %v127, 0
  %v187 = vsel %vm149, %v128, 0
  %v190 = vsel %vm149, %v129, 0
  %v193 = vsel %vm149, %v130, 0
  %195 = vmatpush.bf16.msra.mxu0 0
  %196 = vmatpush.bf16.msra.mxu0 0
  %197 = vmatpush.bf16.msra.mxu0 0
  %198 = vmatpush.bf16.msra.mxu0 0
  %199 = vmatpush.bf16.msra.mxu0 0
  %200 = vmatpush.bf16.msra.mxu0 %v145
  %201 = vmatpush.bf16.msra.mxu0 %v144
  %202 = vmatpush.bf16.msra.mxu0 %v143
  %203 = vmatmul.bf16.gmra.mxu0 %v151
  %v204 = vpop.f32.mrf.mxu0
  %v205 = vadd.f32 0.0, %v204
  %v206 = vpop.f32.mrf.mxu0
  %v207 = vadd.f32 0.0, %v206
  %208 = vmatmul.bf16.gmra.mxu0 %v154
  %v209 = vpop.f32.mrf.mxu0
  %v210 = vadd.f32 0.0, %v209
  %v211 = vpop.f32.mrf.mxu0
  %v212 = vadd.f32 0.0, %v211
  %213 = vmatmul.bf16.gmra.mxu0 %v157
  %v214 = vpop.f32.mrf.mxu0
  %v215 = vadd.f32 0.0, %v214
  %v216 = vpop.f32.mrf.mxu0
  %v217 = vadd.f32 0.0, %v216
  %218 = vmatmul.bf16.gmra.mxu0 %v160
  %v219 = vpop.f32.mrf.mxu0
  %v220 = vadd.f32 0.0, %v219
  %v221 = vpop.f32.mrf.mxu0
  %v222 = vadd.f32 0.0, %v221
  %223 = vmatmul.bf16.gmra.mxu0 %v163
  %v224 = vpop.f32.mrf.mxu0
  %v225 = vadd.f32 0.0, %v224
  %v226 = vpop.f32.mrf.mxu0
  %v227 = vadd.f32 0.0, %v226
  %228 = vmatmul.bf16.gmra.mxu0 %v166
  %v229 = vpop.f32.mrf.mxu0
  %v230 = vadd.f32 0.0, %v229
  %v231 = vpop.f32.mrf.mxu0
  %v232 = vadd.f32 0.0, %v231
  %233 = vmatmul.bf16.gmra.mxu0 %v169
  %v234 = vpop.f32.mrf.mxu0
  %v235 = vadd.f32 0.0, %v234
  %v236 = vpop.f32.mrf.mxu0
  %v237 = vadd.f32 0.0, %v236
  %238 = vmatmul.bf16.gmra.mxu0 %v172
  %v239 = vpop.f32.mrf.mxu0
  %v240 = vadd.f32 0.0, %v239
  %v241 = vpop.f32.mrf.mxu0
  %v242 = vadd.f32 0.0, %v241
  %243 = vmatmul.bf16.gmra.mxu0 %v175
  %v244 = vpop.f32.mrf.mxu0
  %v245 = vadd.f32 0.0, %v244
  %v246 = vpop.f32.mrf.mxu0
  %v247 = vadd.f32 0.0, %v246
  %248 = vmatmul.bf16.gmra.mxu0 %v178
  %v249 = vpop.f32.mrf.mxu0
  %v250 = vadd.f32 0.0, %v249
  %v251 = vpop.f32.mrf.mxu0
  %v252 = vadd.f32 0.0, %v251
  %253 = vmatmul.bf16.gmra.mxu0 %v181
  %v254 = vpop.f32.mrf.mxu0
  %v255 = vadd.f32 0.0, %v254
  %v256 = vpop.f32.mrf.mxu0
  %v257 = vadd.f32 0.0, %v256
  %258 = vmatmul.bf16.gmra.mxu0 %v184
  %v259 = vpop.f32.mrf.mxu0
  %v260 = vadd.f32 0.0, %v259
  %v261 = vpop.f32.mrf.mxu0
  %v262 = vadd.f32 0.0, %v261
  %263 = vmatmul.bf16.gmra.mxu0 %v187
  %v264 = vpop.f32.mrf.mxu0
  %v265 = vadd.f32 0.0, %v264
  %v266 = vpop.f32.mrf.mxu0
  %v267 = vadd.f32 0.0, %v266
  %268 = vmatmul.bf16.gmra.mxu0 %v190
  %v269 = vpop.f32.mrf.mxu0
  %v270 = vadd.f32 0.0, %v269
  %v271 = vpop.f32.mrf.mxu0
  %v272 = vadd.f32 0.0, %v271
  %273 = vmatmul.bf16.gmra.mxu0 %v193
  %v274 = vpop.f32.mrf.mxu0
  %v275 = vadd.f32 0.0, %v274
  %v276 = vpop.f32.mrf.mxu0
  %v277 = vadd.f32 0.0, %v276
  %278 = vdwg.mxu0
  %v279 = vmax.f32 %v205, 0.0
  %v280 = vmax.f32 %v207, 0.0
  %v281 = vmax.f32 %v210, 0.0
  %v282 = vmax.f32 %v212, 0.0
  %v283 = vmax.f32 %v215, 0.0
  %v284 = vmax.f32 %v217, 0.0
  %v285 = vmax.f32 %v220, 0.0
  %v286 = vmax.f32 %v222, 0.0
  %v287 = vmax.f32 %v225, 0.0
  %v288 = vmax.f32 %v227, 0.0
  %v289 = vmax.f32 %v230, 0.0
  %v290 = vmax.f32 %v232, 0.0
  %v291 = vmax.f32 %v235, 0.0
  %v292 = vmax.f32 %v237, 0.0
  %v293 = vmax.f32 %v240, 0.0
  %v294 = vmax.f32 %v242, 0.0
  %v295 = vmax.f32 %v245, 0.0
  %v296 = vmax.f32 %v247, 0.0
  %v297 = vmax.f32 %v250, 0.0
  %v298 = vmax.f32 %v252, 0.0
  %v299 = vmax.f32 %v255, 0.0
  %v300 = vmax.f32 %v257, 0.0
  %v301 = vmax.f32 %v260, 0.0
  %v302 = vmax.f32 %v262, 0.0
  %v303 = vmax.f32 %v265, 0.0
  %v304 = vmax.f32 %v267, 0.0
  %v305 = vmax.f32 %v270, 0.0
  %v306 = vmax.f32 %v272, 0.0
  %v307 = vmax.f32 %v275, 0.0
  %v308 = vmax.f32 %v277, 0.0
  %v309 = vmax.f32 %v279, %v281
  %v310 = vmax.f32 %v280, %v282
  %v311 = vmax.f32 %v309, %v283
  %v312 = vmax.f32 %v310, %v284
  %v313 = vmax.f32 %v311, %v285
  %v314 = vmax.f32 %v312, %v286
  %v315 = vmax.f32 %v313, %v287
  %v316 = vmax.f32 %v314, %v288
  %v317 = vmax.f32 %v315, %v289
  %v318 = vmax.f32 %v316, %v290
  %v319 = vmax.f32 %v291, %v293
  %v320 = vmax.f32 %v292, %v294
  %v321 = vmax.f32 %v319, %v295
  %v322 = vmax.f32 %v320, %v296
  %v323 = vmax.f32 %v321, %v297
  %v324 = vmax.f32 %v322, %v298
  %v325 = vmax.f32 %v323, %v299
  %v326 = vmax.f32 %v324, %v300
  %v327 = vadd.f32 %v317, %v325
  %v328 = vadd.f32 %v318, %v326
  %v329 = vmax.f32 %v301, %v303
  %v330 = vmax.f32 %v302, %v304
  %v331 = vmax.f32 %v329, %v305
  %v332 = vmax.f32 %v330, %v306
  %v333 = vmax.f32 %v331, %v307
  %v334 = vmax.f32 %v332, %v308
  %v335 = vadd.f32 %v327, %v333
  %v336 = vadd.f32 %v328, %v334
  %vm337 = vcmask 97280
  %338 = vst.msk [vmem:[%s4] sm:$0xff] %vm337, %v335
  %339 = vst.msk [vmem:[%s4 + $0x8] sm:$0xff] %vm337, %v336
  %v340 = vld [vmem:[%s1] sm:$0xf]
  %v341 = vld [vmem:[%s1 + $0x4] sm:$0xf]
  %v342 = vld [vmem:[%s1 + $0x8] sm:$0xf]
  %v343 = vld [vmem:[%s1 + $0xc] sm:$0xf]
  %v344 = vld [vmem:[%s1 + $0x10] sm:$0xf]
  %v345 = vld [vmem:[%s1 + $0x14] sm:$0xf]
  %v346 = vld [vmem:[%s1 + $0x18] sm:$0xf]
  %v347 = vld [vmem:[%s1 + $0x1c] sm:$0xf]
  %v348 = vld [vmem:[%s1 + $0x20] sm:$0xf]
  %v349 = vld [vmem:[%s1 + $0x24] sm:$0xf]
  %v350 = vld [vmem:[%s1 + $0x28] sm:$0xf]
  %v351 = vld [vmem:[%s1 + $0x2c] sm:$0xf]
  %v352 = vld [vmem:[%s1 + $0x30] sm:$0xf]
  %v353 = vld [vmem:[%s1 + $0x34] sm:$0xf]
  %v354 = vld [vmem:[%s1 + $0x38] sm:$0xf]
  %v355 = vld [vmem:[%s1 + $0x3c] sm:$0xf]
  %v356 = vld [vmem:[%s1 + $0x40] sm:$0xf]
  %v357 = vld [vmem:[%s1 + $0x44] sm:$0xf]
  %v358 = vld [vmem:[%s1 + $0x48] sm:$0xf]
  %v359 = vld [vmem:[%s1 + $0x4c] sm:$0xf]
  %v360 = vld [vmem:[%s1 + $0x50] sm:$0xf]
  %v361 = vld [vmem:[%s1 + $0x54] sm:$0xf]
  %v362 = vld [vmem:[%s1 + $0x58] sm:$0xf]
  %v363 = vld [vmem:[%s1 + $0x5c] sm:$0xf]
  %v364 = vld [vmem:[%s1 + $0x60] sm:$0xf]
  %v365 = vld [vmem:[%s1 + $0x64] sm:$0xf]
  %v366 = vld [vmem:[%s1 + $0x68] sm:$0xf]
  %v367 = vld [vmem:[%s1 + $0x6c] sm:$0xf]
  %v368 = vld [vmem:[%s1 + $0x70] sm:$0xf]
  %v369 = vld [vmem:[%s1 + $0x74] sm:$0xf]
  %v370 = vld [vmem:[%s3] sm:$0xf]
  %v371 = vld [vmem:[%s3 + $0x4] sm:$0xf]
  %v372 = vld [vmem:[%s3 + $0x8] sm:$0xf]
  %v373 = vld [vmem:[%s3 + $0xc] sm:$0xf]
  %v374 = vld [vmem:[%s3 + $0x10] sm:$0xf]
  %v375 = vld [vmem:[%s3 + $0x14] sm:$0xf]
  %v406 = vunpack.c.l.b16 %v340
  %v407 = vunpack.c.l.b16 %v341
  %v408 = vunpack.c.l.b16 %v342
  %v409 = vunpack.c.l.b16 %v343
  %v410 = vunpack.c.l.b16 %v344
  %v411 = vunpack.c.l.b16 %v345
  %v412 = vunpack.c.l.b16 %v346
  %v413 = vunpack.c.l.b16 %v347
  %v414 = vunpack.c.l.b16 %v348
  %v415 = vunpack.c.l.b16 %v349
  %v416 = vunpack.c.l.b16 %v350
  %v417 = vunpack.c.l.b16 %v351
  %v418 = vunpack.c.l.b16 %v352
  %v419 = vunpack.c.l.b16 %v353
  %v420 = vunpack.c.l.b16 %v354
  %v421 = vunpack.c.l.b16 %v355
  %v422 = vunpack.c.l.b16 %v356
  %v423 = vunpack.c.l.b16 %v357
  %v424 = vunpack.c.l.b16 %v358
  %v425 = vunpack.c.l.b16 %v359
  %v426 = vunpack.c.l.b16 %v360
  %v427 = vunpack.c.l.b16 %v361
  %v428 = vunpack.c.l.b16 %v362
  %v429 = vunpack.c.l.b16 %v363
  %v430 = vunpack.c.l.b16 %v364
  %v431 = vunpack.c.l.b16 %v365
  %v432 = vunpack.c.l.b16 %v366
  %v433 = vunpack.c.l.b16 %v367
  %v434 = vunpack.c.l.b16 %v368
  %v435 = vunpack.c.l.b16 %v369
  %v436 = vpack.c.b16 %v407, %v406
  %v437 = vpack.c.b16 %v409, %v408
  %v438 = vpack.c.b16 %v411, %v410
  %v439 = vpack.c.b16 %v413, %v412
  %v440 = vpack.c.b16 %v415, %v414
  %v441 = vpack.c.b16 %v417, %v416
  %v442 = vpack.c.b16 %v419, %v418
  %v443 = vpack.c.b16 %v421, %v420
  %v444 = vpack.c.b16 %v423, %v422
  %v445 = vpack.c.b16 %v425, %v424
  %v446 = vpack.c.b16 %v427, %v426
  %v447 = vpack.c.b16 %v429, %v428
  %v448 = vpack.c.b16 %v431, %v430
  %v449 = vpack.c.b16 %v433, %v432
  %v450 = vpack.c.b16 %v435, %v434
  %v457 = vunpack.c.l.b16 %v370
  %v458 = vunpack.c.l.b16 %v371
  %v459 = vunpack.c.l.b16 %v372
  %v460 = vunpack.c.l.b16 %v373
  %v461 = vunpack.c.l.b16 %v374
  %v462 = vunpack.c.l.b16 %v375
  %v463 = vpack.c.b16 %v458, %v457
  %v464 = vpack.c.b16 %v460, %v459
  %v465 = vpack.c.b16 %v462, %v461
  %v470 = vsel %vm149, %v436, 0
  %v473 = vsel %vm149, %v437, 0
  %v476 = vsel %vm149, %v438, 0
  %v479 = vsel %vm149, %v439, 0
  %v482 = vsel %vm149, %v440, 0
  %v485 = vsel %vm149, %v441, 0
  %v488 = vsel %vm149, %v442, 0
  %v491 = vsel %vm149, %v443, 0
  %v494 = vsel %vm149, %v444, 0
  %v497 = vsel %vm149, %v445, 0
  %v500 = vsel %vm149, %v446, 0
  %v503 = vsel %vm149, %v447, 0
  %v506 = vsel %vm149, %v448, 0
  %v509 = vsel %vm149, %v449, 0
  %v512 = vsel %vm149, %v450, 0
  %514 = vmatpush.bf16.msra.mxu0 0
  %515 = vmatpush.bf16.msra.mxu0 0
  %516 = vmatpush.bf16.msra.mxu0 0
  %517 = vmatpush.bf16.msra.mxu0 0
  %518 = vmatpush.bf16.msra.mxu0 0
  %519 = vmatpush.bf16.msra.mxu0 %v465
  %520 = vmatpush.bf16.msra.mxu0 %v464
  %521 = vmatpush.bf16.msra.mxu0 %v463
  %522 = vmatmul.bf16.gmra.mxu0 %v470
  %v523 = vpop.f32.mrf.mxu0
  %v524 = vadd.f32 0.0, %v523
  %v525 = vpop.f32.mrf.mxu0
  %v526 = vadd.f32 0.0, %v525
  %527 = vmatmul.bf16.gmra.mxu0 %v473
  %v528 = vpop.f32.mrf.mxu0
  %v529 = vadd.f32 0.0, %v528
  %v530 = vpop.f32.mrf.mxu0
  %v531 = vadd.f32 0.0, %v530
  %532 = vmatmul.bf16.gmra.mxu0 %v476
  %v533 = vpop.f32.mrf.mxu0
  %v534 = vadd.f32 0.0, %v533
  %v535 = vpop.f32.mrf.mxu0
  %v536 = vadd.f32 0.0, %v535
  %537 = vmatmul.bf16.gmra.mxu0 %v479
  %v538 = vpop.f32.mrf.mxu0
  %v539 = vadd.f32 0.0, %v538
  %v540 = vpop.f32.mrf.mxu0
  %v541 = vadd.f32 0.0, %v540
  %542 = vmatmul.bf16.gmra.mxu0 %v482
  %v543 = vpop.f32.mrf.mxu0
  %v544 = vadd.f32 0.0, %v543
  %v545 = vpop.f32.mrf.mxu0
  %v546 = vadd.f32 0.0, %v545
  %547 = vmatmul.bf16.gmra.mxu0 %v485
  %v548 = vpop.f32.mrf.mxu0
  %v549 = vadd.f32 0.0, %v548
  %v550 = vpop.f32.mrf.mxu0
  %v551 = vadd.f32 0.0, %v550
  %552 = vmatmul.bf16.gmra.mxu0 %v488
  %v553 = vpop.f32.mrf.mxu0
  %v554 = vadd.f32 0.0, %v553
  %v555 = vpop.f32.mrf.mxu0
  %v556 = vadd.f32 0.0, %v555
  %557 = vmatmul.bf16.gmra.mxu0 %v491
  %v558 = vpop.f32.mrf.mxu0
  %v559 = vadd.f32 0.0, %v558
  %v560 = vpop.f32.mrf.mxu0
  %v561 = vadd.f32 0.0, %v560
  %562 = vmatmul.bf16.gmra.mxu0 %v494
  %v563 = vpop.f32.mrf.mxu0
  %v564 = vadd.f32 0.0, %v563
  %v565 = vpop.f32.mrf.mxu0
  %v566 = vadd.f32 0.0, %v565
  %567 = vmatmul.bf16.gmra.mxu0 %v497
  %v568 = vpop.f32.mrf.mxu0
  %v569 = vadd.f32 0.0, %v568
  %v570 = vpop.f32.mrf.mxu0
  %v571 = vadd.f32 0.0, %v570
  %572 = vmatmul.bf16.gmra.mxu0 %v500
  %v573 = vpop.f32.mrf.mxu0
  %v574 = vadd.f32 0.0, %v573
  %v575 = vpop.f32.mrf.mxu0
  %v576 = vadd.f32 0.0, %v575
  %577 = vmatmul.bf16.gmra.mxu0 %v503
  %v578 = vpop.f32.mrf.mxu0
  %v579 = vadd.f32 0.0, %v578
  %v580 = vpop.f32.mrf.mxu0
  %v581 = vadd.f32 0.0, %v580
  %582 = vmatmul.bf16.gmra.mxu0 %v506
  %v583 = vpop.f32.mrf.mxu0
  %v584 = vadd.f32 0.0, %v583
  %v585 = vpop.f32.mrf.mxu0
  %v586 = vadd.f32 0.0, %v585
  %587 = vmatmul.bf16.gmra.mxu0 %v509
  %v588 = vpop.f32.mrf.mxu0
  %v589 = vadd.f32 0.0, %v588
  %v590 = vpop.f32.mrf.mxu0
  %v591 = vadd.f32 0.0, %v590
  %592 = vmatmul.bf16.gmra.mxu0 %v512
  %v593 = vpop.f32.mrf.mxu0
  %v594 = vadd.f32 0.0, %v593
  %v595 = vpop.f32.mrf.mxu0
  %v596 = vadd.f32 0.0, %v595
  %597 = vdwg.mxu0
  %v598 = vmax.f32 %v524, 0.0
  %v599 = vmax.f32 %v526, 0.0
  %v600 = vmax.f32 %v529, 0.0
  %v601 = vmax.f32 %v531, 0.0
  %v602 = vmax.f32 %v534, 0.0
  %v603 = vmax.f32 %v536, 0.0
  %v604 = vmax.f32 %v539, 0.0
  %v605 = vmax.f32 %v541, 0.0
  %v606 = vmax.f32 %v544, 0.0
  %v607 = vmax.f32 %v546, 0.0
  %v608 = vmax.f32 %v549, 0.0
  %v609 = vmax.f32 %v551, 0.0
  %v610 = vmax.f32 %v554, 0.0
  %v611 = vmax.f32 %v556, 0.0
  %v612 = vmax.f32 %v559, 0.0
  %v613 = vmax.f32 %v561, 0.0
  %v614 = vmax.f32 %v564, 0.0
  %v615 = vmax.f32 %v566, 0.0
  %v616 = vmax.f32 %v569, 0.0
  %v617 = vmax.f32 %v571, 0.0
  %v618 = vmax.f32 %v574, 0.0
  %v619 = vmax.f32 %v576, 0.0
  %v620 = vmax.f32 %v579, 0.0
  %v621 = vmax.f32 %v581, 0.0
  %v622 = vmax.f32 %v584, 0.0
  %v623 = vmax.f32 %v586, 0.0
  %v624 = vmax.f32 %v589, 0.0
  %v625 = vmax.f32 %v591, 0.0
  %v626 = vmax.f32 %v594, 0.0
  %v627 = vmax.f32 %v596, 0.0
  %v628 = vmax.f32 %v598, %v600
  %v629 = vmax.f32 %v599, %v601
  %v630 = vmax.f32 %v628, %v602
  %v631 = vmax.f32 %v629, %v603
  %v632 = vmax.f32 %v630, %v604
  %v633 = vmax.f32 %v631, %v605
  %v634 = vmax.f32 %v632, %v606
  %v635 = vmax.f32 %v633, %v607
  %v636 = vmax.f32 %v634, %v608
  %v637 = vmax.f32 %v635, %v609
  %v638 = vmax.f32 %v610, %v612
  %v639 = vmax.f32 %v611, %v613
  %v640 = vmax.f32 %v638, %v614
  %v641 = vmax.f32 %v639, %v615
  %v642 = vmax.f32 %v640, %v616
  %v643 = vmax.f32 %v641, %v617
  %v644 = vmax.f32 %v642, %v618
  %v645 = vmax.f32 %v643, %v619
  %v646 = vadd.f32 %v636, %v644
  %v647 = vadd.f32 %v637, %v645
  %v648 = vmax.f32 %v620, %v622
  %v649 = vmax.f32 %v621, %v623
  %v650 = vmax.f32 %v648, %v624
  %v651 = vmax.f32 %v649, %v625
  %v652 = vmax.f32 %v650, %v626
  %v653 = vmax.f32 %v651, %v627
  %v654 = vadd.f32 %v646, %v652
  %v655 = vadd.f32 %v647, %v653
  %656 = vst.msk [vmem:[%s5] sm:$0xff] %vm337, %v654
  %657 = vst.msk [vmem:[%s5 + $0x8] sm:$0xff] %vm337, %v655
  // Predicated region
  $region18: #{fwd.3} parent=0 // pred_check
    _
  $region19: #{fwd.3} parent=0 // pred_check_branch
    %659 = sbr.rel (0) target = $region21
  $region20: #{fwd.3} parent=0 // pred_region
    _
  $region21: #{fwd.3} parent=0 // pred_fallthru
    _
  // Predicated region
  $region22: #{fwd.3} parent=0 // pred_check
    _
  $region23: #{fwd.3} parent=0 // pred_check_branch
    %661 = sbr.rel (0) target = $region25
  $region24: #{fwd.3} parent=0 // pred_region
    _
  $region25: #{fwd.3} parent=0 // pred_fallthru
    _
  // Predicated region
  $region26: #{fwd.3} parent=0 // pred_check
    _
  $region27: #{fwd.3} parent=0 // pred_check_branch
    %663 = sbr.rel (0) target = $region29
  $region28: #{fwd.3} parent=0 // pred_region
    _
  $region29: #{fwd.3} parent=0 // pred_fallthru
    _
  // Predicated region
  $region30: #{fwd.3} parent=0 // pred_check
    _
  $region31: #{fwd.3} parent=0 // pred_check_branch
    %665 = sbr.rel (0) target = $region33
  $region32: #{fwd.3} parent=0 // pred_region
    _
  $region33: #{fwd.3} parent=0 // pred_fallthru
    _

// kernel: fwd.5
$region0: #{fwd.5}
  #allocation0 [shape = 'u32[]', space=smem, size = 0x4, offset = 0x4, fixed_abs, tag = 'smem constant byte address 0x4 - core index']
  #allocation1 [shape = 'u32[72,128]{1,0:T(1,128)}', space=vmem, size = 0x9000, scoped, tag = 'internal scratch']
  #allocation2 [shape = 'f32[64,32]{1,0:T(8,128)}', space=vmem, size = 0x8000, scoped, tag = 'scratch operand']
  %s0 = inlined_call_operand.vmem [shape: f32[64,16], index: 0, kind: input, shape index: {}]
  %s1 = inlined_call_operand.vmem [shape: f32[8,16], index: 1, kind: input, shape index: {}]
  %s2 = inlined_call_operand.vmem [shape: f32[8,128], index: 2, kind: input, shape index: {}]
  %s3 = inlined_call_operand.vmem [shape: bf16[16,128], index: 3, kind: input, shape index: {}]
  %s4 = inlined_call_operand.vmem [shape: bf16[16,128], index: 4, kind: input, shape index: {}]
  %s5 = inlined_call_operand.vmem [shape: f32[1,128], index: 5, kind: input, shape index: {}]
  %s6 = inlined_call_operand.vmem [shape: bf16[32,128], index: 6, kind: input, shape index: {}]
  %s7 = inlined_call_operand.vmem [shape: bf16[64,128], index: 7, kind: input, shape index: {}]
  %s8 = inlined_call_operand.vmem [shape: f32[1,128], index: 8, kind: input, shape index: {}]
  %s9 = inlined_call_operand.vmem [shape: bf16[32,128], index: 9, kind: input, shape index: {}]
  %s10 = inlined_call_operand.vmem [shape: f32[1,128], index: 10, kind: input, shape index: {}]
  %s11 = inlined_call_operand.vmem [shape: f32[64,128], index: 11, kind: output, shape index: {0}]
  %s12 = inlined_call_operand.vmem [shape: f32[8,128], index: 12, kind: output, shape index: {1}]
  %13 = xla_tuple %s11, %s12
  %s14 = sld [smem:[#allocation0]]
  $region62: #{fwd.5} parent=0
    _
  %s16 = ssub.s32 1, %s14
  %s17 = scalar_select 0, %s16, %s14
  // Predicated region
  $region2: #{fwd.5} parent=0 // pred_check
    _
  $region3: #{fwd.5} parent=0 // pred_check_branch
    %19 = sbr.rel (0) target = $region5
  $region4: #{fwd.5} parent=0 // pred_region
    _
  $region5: #{fwd.5} parent=0 // pred_fallthru
    _
  // Predicated region
  $region6: #{fwd.5} parent=0 // pred_check
    _
  $region7: #{fwd.5} parent=0 // pred_check_branch
    %21 = sbr.rel (0) target = $region9
  $region8: #{fwd.5} parent=0 // pred_region
    _
  $region9: #{fwd.5} parent=0 // pred_fallthru
    _
  // Predicated region
  $region10: #{fwd.5} parent=0 // pred_check
    _
  $region11: #{fwd.5} parent=0 // pred_check_branch
    %23 = sbr.rel (0) target = $region13
  $region12: #{fwd.5} parent=0 // pred_region
    _
  $region13: #{fwd.5} parent=0 // pred_fallthru
    _
  // Predicated region
  $region14: #{fwd.5} parent=0 // pred_check
    _
  $region15: #{fwd.5} parent=0 // pred_check_branch
    %25 = sbr.rel (0) target = $region17
  $region16: #{fwd.5} parent=0 // pred_region
    _
  $region17: #{fwd.5} parent=0 // pred_fallthru
    _
  // Predicated region
  $region18: #{fwd.5} parent=0 // pred_check
    _
  $region19: #{fwd.5} parent=0 // pred_check_branch
    %27 = sbr.rel (0) target = $region21
  $region20: #{fwd.5} parent=0 // pred_region
    _
  $region21: #{fwd.5} parent=0 // pred_fallthru
    _
  // Predicated region
  $region22: #{fwd.5} parent=0 // pred_check
    _
  $region23: #{fwd.5} parent=0 // pred_check_branch
    %29 = sbr.rel (0) target = $region25
  $region24: #{fwd.5} parent=0 // pred_region
    _
  $region25: #{fwd.5} parent=0 // pred_fallthru
    _
  // Predicated region
  $region26: #{fwd.5} parent=0 // pred_check
    _
  $region27: #{fwd.5} parent=0 // pred_check_branch
    %31 = sbr.rel (0) target = $region29
  $region28: #{fwd.5} parent=0 // pred_region
    _
  $region29: #{fwd.5} parent=0 // pred_fallthru
    _
  // Predicated region
  $region30: #{fwd.5} parent=0 // pred_check
    _
  $region31: #{fwd.5} parent=0 // pred_check_branch
    %33 = sbr.rel (0) target = $region33
  $region32: #{fwd.5} parent=0 // pred_region
    _
  $region33: #{fwd.5} parent=0 // pred_fallthru
    _
  // Predicated region
  $region34: #{fwd.5} parent=0 // pred_check
    _
  $region35: #{fwd.5} parent=0 // pred_check_branch
    %35 = sbr.rel (0) target = $region37
  $region36: #{fwd.5} parent=0 // pred_region
    _
  $region37: #{fwd.5} parent=0 // pred_fallthru
    _
  // Predicated region
  $region38: #{fwd.5} parent=0 // pred_check
    _
  $region39: #{fwd.5} parent=0 // pred_check_branch
    %37 = sbr.rel (0) target = $region41
  $region40: #{fwd.5} parent=0 // pred_region
    _
  $region41: #{fwd.5} parent=0 // pred_fallthru
    _
  // Predicated region
  $region42: #{fwd.5} parent=0 // pred_check
    _
  $region43: #{fwd.5} parent=0 // pred_check_branch
    %39 = sbr.rel (0) target = $region45
  $region44: #{fwd.5} parent=0 // pred_region
    _
  $region45: #{fwd.5} parent=0 // pred_fallthru
    _
  %v41 = vld [vmem:[%s0] sm:$0xff]
  %v42 = vld [vmem:[%s0 + $0x8] sm:$0xff]
  %v43 = vld [vmem:[%s0 + $0x10] sm:$0xff]
  %v44 = vld [vmem:[%s0 + $0x18] sm:$0xff]
  %v45 = vld [vmem:[%s0 + $0x20] sm:$0xff]
  %v46 = vld [vmem:[%s0 + $0x28] sm:$0xff]
  %v47 = vld [vmem:[%s0 + $0x30] sm:$0xff]
  %v48 = vld [vmem:[%s0 + $0x38] sm:$0xff]
  %v49 = vpack.c.bf16 %v42, %v41
  %v50 = vpack.c.bf16 %v44, %v43
  %v51 = vpack.c.bf16 %v46, %v45
  %v52 = vpack.c.bf16 %v48, %v47
  %v53 = vld [vmem:[%s3] sm:$0xf]
  %v54 = vld [vmem:[%s3 + $0x4] sm:$0xf]
  %v57 = vunpack.c.l.b16 %v53
  %v58 = vunpack.c.l.b16 %v54
  %v59 = vpack.c.b16 %v58, %v57
  %vm61 = vcmask 130048
  %v63 = vsel %vm61, %v49, 0
  %v66 = vsel %vm61, %v50, 0
  %v69 = vsel %vm61, %v51, 0
  %v72 = vsel %vm61, %v52, 0
  %74 = vmatpush.bf16.msra.mxu0 0
  %75 = vmatpush.bf16.msra.mxu0 0
  %76 = vmatpush.bf16.msra.mxu0 0
  %77 = vmatpush.bf16.msra.mxu0 0
  %78 = vmatpush.bf16.msra.mxu0 0
  %79 = vmatpush.bf16.msra.mxu0 0
  %80 = vmatpush.bf16.msra.mxu0 0
  %81 = vmatpush.bf16.msra.mxu0 %v59
  %82 = vmatmul.bf16.gmra.mxu0 %v63
  %v83 = vpop.f32.mrf.mxu0
  %v84 = vadd.f32 0.0, %v83
  %v85 = vpop.f32.mrf.mxu0
  %v86 = vadd.f32 0.0, %v85
  %87 = vmatmul.bf16.gmra.mxu0 %v66
  %v88 = vpop.f32.mrf.mxu0
  %v89 = vadd.f32 0.0, %v88
  %v90 = vpop.f32.mrf.mxu0
  %v91 = vadd.f32 0.0, %v90
  %92 = vmatmul.bf16.gmra.mxu0 %v69
  %v93 = vpop.f32.mrf.mxu0
  %v94 = vadd.f32 0.0, %v93
  %v95 = vpop.f32.mrf.mxu0
  %v96 = vadd.f32 0.0, %v95
  %97 = vmatmul.bf16.gmra.mxu0 %v72
  %v98 = vpop.f32.mrf.mxu0
  %v99 = vadd.f32 0.0, %v98
  %v100 = vpop.f32.mrf.mxu0
  %v101 = vadd.f32 0.0, %v100
  %102 = vdwg.mxu0
  %v103 = vld [vmem:[%s1] sm:$0xff]
  %v104 = vpack.c.bf16 %v103, %v103
  %v105 = vld [vmem:[%s4] sm:$0xf]
  %v106 = vld [vmem:[%s4 + $0x4] sm:$0xf]
  %v107 = vld [vmem:[%s5] sm:$0x1]
  %v109 = vperm.slane %v107, 0
  %v113 = vunpack.c.l.b16 %v105
  %v114 = vunpack.c.l.b16 %v106
  %v115 = vpack.c.b16 %v114, %v113
  %v118 = vsel %vm61, %v104, 0
  %120 = vmatpush.bf16.msra.mxu0 0
  %121 = vmatpush.bf16.msra.mxu0 0
  %122 = vmatpush.bf16.msra.mxu0 0
  %123 = vmatpush.bf16.msra.mxu0 0
  %124 = vmatpush.bf16.msra.mxu0 0
  %125 = vmatpush.bf16.msra.mxu0 0
  %126 = vmatpush.bf16.msra.mxu0 0
  %127 = vmatpush.bf16.msra.mxu0 %v115
  %128 = vmatmul.bf16.gmra.mxu0 %v118
  %v129 = vpop.f32.mrf.mxu0
  %v130 = vadd.f32 %v109, %v129
  %v131 = vpop.f32.mrf.mxu0
  %132 = vdwg.mxu0
  %v133 = vld [vmem:[%s2] sm:$0xff]
  %v134 = vld [vmem:[%s6] sm:$0xf]
  %v135 = vld [vmem:[%s6 + $0x4] sm:$0xf]
  %v136 = vld [vmem:[%s6 + $0x8] sm:$0xf]
  %v137 = vld [vmem:[%s6 + $0xc] sm:$0xf]
  %v138 = vld [vmem:[%s7] sm:$0xf]
  %v139 = vld [vmem:[%s7 + $0x4] sm:$0xf]
  %v140 = vld [vmem:[%s7 + $0x8] sm:$0xf]
  %v141 = vld [vmem:[%s7 + $0xc] sm:$0xf]
  %v142 = vld [vmem:[%s7 + $0x10] sm:$0xf]
  %v143 = vld [vmem:[%s7 + $0x14] sm:$0xf]
  %v144 = vld [vmem:[%s7 + $0x18] sm:$0xf]
  %v145 = vld [vmem:[%s7 + $0x1c] sm:$0xf]
  %v146 = vld [vmem:[%s8] sm:$0x1]
  %v147 = vadd.f32 %v84, %v130
  %v148 = vpack.c.bf16 %v133, %v133
  %v153 = vunpack.c.l.b16 %v134
  %v154 = vunpack.c.l.b16 %v135
  %v155 = vunpack.c.l.b16 %v136
  %v156 = vunpack.c.l.b16 %v137
  %v157 = vpack.c.b16 %v154, %v153
  %v158 = vpack.c.b16 %v156, %v155
  %vm161 = vcmask 261120
  %v163 = vsel %vm161, %v148, 0
  %165 = vmatpush.bf16.msra.mxu0 0
  %166 = vmatpush.bf16.msra.mxu0 0
  %167 = vmatpush.bf16.msra.mxu0 0
  %168 = vmatpush.bf16.msra.mxu0 0
  %169 = vmatpush.bf16.msra.mxu0 0
  %170 = vmatpush.bf16.msra.mxu0 0
  %171 = vmatpush.bf16.msra.mxu0 %v158
  %172 = vmatpush.bf16.msra.mxu0 %v157
  %173 = vmatmul.bf16.gmra.mxu0 %v163
  %v174 = vpop.f32.mrf.mxu0
  %v175 = vadd.f32 0.0, %v174
  %v176 = vpop.f32.mrf.mxu0
  %177 = vdwg.mxu0
  %v178 = vadd.f32 %v147, %v175
  %v179 = vxor.u32 %v178, 2147483648
  %v180 = vmul.f32 %v179, 1.442695
  %v181 = vpow.pop %v180
  %v182 = vadd.f32 %v181, 1.0
  %v183 = vrcp.pop %v182
  %v184 = vmul.f32 %v182, %v183
  %v185 = vsub.f32 1.0, %v184
  %v186 = vmul.f32 %v183, %v185
  %v187 = vadd.f32 %v183, %v186
  %vm188 = vweird.f32 %v182
  %vm189 = vweird.f32 %v183
  %vm190 = vmor %vm188, %vm189
  %v191 = vsel %vm190, %v183, %v187
  %v192 = vand.u32 2147483647, %v182
  %vm193 = vcmp.eq.f32.partialorder %v192, 8.507059e+37
  %v194 = vand.u32 %v182, 2147483648
  %v195 = vor.u32 1.1754944e-38, %v194
  %v196 = vsel %vm193, %v195, %v191
  %v197 = vmul.f32 1.0, %v196
  %v198 = vtanh.pop %v178
  %200 = vrot.lane.b32.xlu0 %v133, 96
  %v201 = vpop.permute.xlu0 %200
  %v203 = vmul.f32 %v197, %v201
  %205 = vrot.lane.b32.xlu0 %v198, 64
  %v206 = vpop.permute.xlu0 %205
  %v208 = vmul.f32 %v197, %v206
  %210 = vrot.lane.b32.xlu0 %v208, 32
  %v211 = vpop.permute.xlu0 %210
  %v213 = vadd.f32 %v203, %v211
  %v214 = vtanh.pop %v213
  %216 = vrot.lane.b32.xlu0 %v214, 64
  %v217 = vpop.permute.xlu0 %216
  %v219 = vmul.f32 %v197, %v217
  %221 = vrot.lane.b32.xlu0 %v219, 32
  %v222 = vpop.permute.xlu0 %221
  %v224 = vsel %vm161, %v222, %v133
  %v225 = vpack.c.bf16 %v224, %v224
  %v227 = vperm.slane %v146, 0
  %v237 = vunpack.c.l.b16 %v138
  %v238 = vunpack.c.l.b16 %v139
  %v239 = vunpack.c.l.b16 %v140
  %v240 = vunpack.c.l.b16 %v141
  %v241 = vunpack.c.l.b16 %v142
  %v242 = vunpack.c.l.b16 %v143
  %v243 = vunpack.c.l.b16 %v144
  %v244 = vunpack.c.l.b16 %v145
  %v245 = vpack.c.b16 %v238, %v237
  %v246 = vpack.c.b16 %v240, %v239
  %v247 = vpack.c.b16 %v242, %v241
  %v248 = vpack.c.b16 %v244, %v243
  %vm253 = vcmask 523264
  %v255 = vsel %vm253, %v225, 0
  %257 = vmatpush.bf16.msra.mxu0 0
  %258 = vmatpush.bf16.msra.mxu0 0
  %259 = vmatpush.bf16.msra.mxu0 0
  %260 = vmatpush.bf16.msra.mxu0 0
  %261 = vmatpush.bf16.msra.mxu0 %v248
  %262 = vmatpush.bf16.msra.mxu0 %v247
  %263 = vmatpush.bf16.msra.mxu0 %v246
  %264 = vmatpush.bf16.msra.mxu0 %v245
  %265 = vmatmul.bf16.gmra.mxu0 %v255
  %v266 = vpop.f32.mrf.mxu0
  %v267 = vadd.f32 %v227, %v266
  %v268 = vpop.f32.mrf.mxu0
  %269 = vdwg.mxu0
  %v270 = vxor.u32 %v267, 2147483648
  %v271 = vmul.f32 %v270, 1.442695
  %v272 = vpow.pop %v271
  %v273 = vadd.f32 %v272, 1.0
  %v274 = vrcp.pop %v273
  %v275 = vmul.f32 %v273, %v274
  %v276 = vsub.f32 1.0, %v275
  %v277 = vmul.f32 %v274, %v276
  %v278 = vadd.f32 %v274, %v277
  %vm279 = vweird.f32 %v273
  %vm280 = vweird.f32 %v274
  %vm281 = vmor %vm279, %vm280
  %v282 = vsel %vm281, %v274, %v278
  %v283 = vand.u32 2147483647, %v273
  %vm284 = vcmp.eq.f32.partialorder %v283, 8.507059e+37
  %v285 = vand.u32 %v273, 2147483648
  %v286 = vor.u32 1.1754944e-38, %v285
  %v287 = vsel %vm284, %v286, %v282
  %v288 = vmul.f32 1.0, %v287
  %v289 = vtanh.pop %v267
  %290 = vrot.lane.b32.xlu0 %v133, 64
  %v291 = vpop.permute.xlu0 %290
  %v293 = vmul.f32 %v288, %v291
  %295 = vrot.lane.b32.xlu0 %v289, 64
  %v296 = vpop.permute.xlu0 %295
  %v298 = vmul.f32 %v288, %v296
  %300 = vrot.lane.b32.xlu0 %v298, 32
  %v301 = vpop.permute.xlu0 %300
  %v303 = vadd.f32 %v293, %v301
  %v304 = vtanh.pop %v303
  %306 = vrot.lane.b32.xlu0 %v304, 64
  %v307 = vpop.permute.xlu0 %306
  %v309 = vmul.f32 %v288, %v307
  %311 = vrot.lane.b32.xlu0 %v309, 32
  %v312 = vpop.permute.xlu0 %311
  %314 = vst.msk [vmem:[#allocation2] sm:$0xff] %vm161, %v312
  %v315 = vadd.f32 %v86, %v130
  %v316 = vpack.c.bf16 %v219, %v219
  %318 = vrot.lane.b32.xlu0 %v316, 32
  %v319 = vpop.permute.xlu0 %318
  %v321 = vsel %vm161, %v319, 0
  %323 = vmatpush.bf16.msra.mxu0 0
  %324 = vmatpush.bf16.msra.mxu0 0
  %325 = vmatpush.bf16.msra.mxu0 0
  %326 = vmatpush.bf16.msra.mxu0 0
  %327 = vmatpush.bf16.msra.mxu0 0
  %328 = vmatpush.bf16.msra.mxu0 0
  %329 = vmatpush.bf16.msra.mxu0 %v158
  %330 = vmatpush.bf16.msra.mxu0 %v157
  %331 = vmatmul.bf16.gmra.mxu0 %v321
  %v332 = vpop.f32.mrf.mxu0
  %v333 = vadd.f32 0.0, %v332
  %v334 = vpop.f32.mrf.mxu0
  %335 = vdwg.mxu0
  %v336 = vadd.f32 %v315, %v333
  %v337 = vxor.u32 %v336, 2147483648
  %v338 = vmul.f32 %v337, 1.442695
  %v339 = vpow.pop %v338
  %v340 = vadd.f32 %v339, 1.0
  %v341 = vrcp.pop %v340
  %v342 = vmul.f32 %v340, %v341
  %v343 = vsub.f32 1.0, %v342
  %v344 = vmul.f32 %v341, %v343
  %v345 = vadd.f32 %v341, %v344
  %vm346 = vweird.f32 %v340
  %vm347 = vweird.f32 %v341
  %vm348 = vmor %vm346, %vm347
  %v349 = vsel %vm348, %v341, %v345
  %v350 = vand.u32 2147483647, %v340
  %vm351 = vcmp.eq.f32.partialorder %v350, 8.507059e+37
  %v352 = vand.u32 %v340, 2147483648
  %v353 = vor.u32 1.1754944e-38, %v352
  %v354 = vsel %vm351, %v353, %v349
  %v355 = vmul.f32 1.0, %v354
  %v356 = vtanh.pop %v336
  %v357 = vmul.f32 %v355, %v213
  %359 = vrot.lane.b32.xlu0 %v356, 64
  %v360 = vpop.permute.xlu0 %359
  %v362 = vmul.f32 %v355, %v360
  %364 = vrot.lane.b32.xlu0 %v362, 32
  %v365 = vpop.permute.xlu0 %364
  %v367 = vadd.f32 %v357, %v365
  %v368 = vtanh.pop %v367
  %370 = vrot.lane.b32.xlu0 %v368, 64
  %v371 = vpop.permute.xlu0 %370
  %v373 = vmul.f32 %v355, %v371
  %375 = vrot.lane.b32.xlu0 %v373, 32
  %v376 = vpop.permute.xlu0 %375
  %378 = vrot.lane.b32.xlu0 %v309, 64
  %v379 = vpop.permute.xlu0 %378
  %v381 = vsel %vm161, %v376, %v379
  %v382 = vpack.c.bf16 %v381, %v381
  %v384 = vsel %vm253, %v382, 0
  %386 = vmatpush.bf16.msra.mxu0 0
  %387 = vmatpush.bf16.msra.mxu0 0
  %388 = vmatpush.bf16.msra.mxu0 0
  %389 = vmatpush.bf16.msra.mxu0 0
  %390 = vmatpush.bf16.msra.mxu0 %v248
  %391 = vmatpush.bf16.msra.mxu0 %v247
  %392 = vmatpush.bf16.msra.mxu0 %v246
  %393 = vmatpush.bf16.msra.mxu0 %v245
  %394 = vmatmul.bf16.gmra.mxu0 %v384
  %v395 = vpop.f32.mrf.mxu0
  %v396 = vadd.f32 %v227, %v395
  %v397 = vpop.f32.mrf.mxu0
  %398 = vdwg.mxu0
  %v399 = vxor.u32 %v396, 2147483648
  %v400 = vmul.f32 %v399, 1.442695
  %v401 = vpow.pop %v400
  %v402 = vadd.f32 %v401, 1.0
  %v403 = vrcp.pop %v402
  %v404 = vmul.f32 %v402, %v403
  %v405 = vsub.f32 1.0, %v404
  %v406 = vmul.f32 %v403, %v405
  %v407 = vadd.f32 %v403, %v406
  %vm408 = vweird.f32 %v402
  %vm409 = vweird.f32 %v403
  %vm410 = vmor %vm408, %vm409
  %v411 = vsel %vm410, %v403, %v407
  %v412 = vand.u32 2147483647, %v402
  %vm413 = vcmp.eq.f32.partialorder %v412, 8.507059e+37
  %v414 = vand.u32 %v402, 2147483648
  %v415 = vor.u32 1.1754944e-38, %v414
  %v416 = vsel %vm413, %v415, %v411
  %v417 = vmul.f32 1.0, %v416
  %v418 = vtanh.pop %v396
  %v419 = vmul.f32 %v417, %v303
  %421 = vrot.lane.b32.xlu0 %v418, 64
  %v422 = vpop.permute.xlu0 %421
  %v424 = vmul.f32 %v417, %v422
  %426 = vrot.lane.b32.xlu0 %v424, 32
  %v427 = vpop.permute.xlu0 %426
  %v429 = vadd.f32 %v419, %v427
  %v430 = vtanh.pop %v429
  %432 = vrot.lane.b32.xlu0 %v430, 64
  %v433 = vpop.permute.xlu0 %432
  %v435 = vmul.f32 %v417, %v433
  %437 = vrot.lane.b32.xlu0 %v435, 32
  %v438 = vpop.permute.xlu0 %437
  %440 = vst.msk [vmem:[#allocation2 + $0x8] sm:$0xff] %vm161, %v438
  %v441 = vadd.f32 %v89, %v130
  %v442 = vpack.c.bf16 %v373, %v373
  %444 = vrot.lane.b32.xlu0 %v442, 32
  %v445 = vpop.permute.xlu0 %444
  %v447 = vsel %vm161, %v445, 0
  %449 = vmatpush.bf16.msra.mxu0 0
  %450 = vmatpush.bf16.msra.mxu0 0
  %451 = vmatpush.bf16.msra.mxu0 0
  %452 = vmatpush.bf16.msra.mxu0 0
  %453 = vmatpush.bf16.msra.mxu0 0
  %454 = vmatpush.bf16.msra.mxu0 0
  %455 = vmatpush.bf16.msra.mxu0 %v158
  %456 = vmatpush.bf16.msra.mxu0 %v157
  %457 = vmatmul.bf16.gmra.mxu0 %v447
  %v458 = vpop.f32.mrf.mxu0
  %v459 = vadd.f32 0.0, %v458
  %v460 = vpop.f32.mrf.mxu0
  %461 = vdwg.mxu0
  %v462 = vadd.f32 %v441, %v459
  %v463 = vxor.u32 %v462, 2147483648
  %v464 = vmul.f32 %v463, 1.442695
  %v465 = vpow.pop %v464
  %v466 = vadd.f32 %v465, 1.0
  %v467 = vrcp.pop %v466
  %v468 = vmul.f32 %v466, %v467
  %v469 = vsub.f32 1.0, %v468
  %v470 = vmul.f32 %v467, %v469
  %v471 = vadd.f32 %v467, %v470
  %vm472 = vweird.f32 %v466
  %vm473 = vweird.f32 %v467
  %vm474 = vmor %vm472, %vm473
  %v475 = vsel %vm474, %v467, %v471
  %v476 = vand.u32 2147483647, %v466
  %vm477 = vcmp.eq.f32.partialorder %v476, 8.507059e+37
  %v478 = vand.u32 %v466, 2147483648
  %v479 = vor.u32 1.1754944e-38, %v478
  %v480 = vsel %vm477, %v479, %v475
  %v481 = vmul.f32 1.0, %v480
  %v482 = vtanh.pop %v462
  %v483 = vmul.f32 %v481, %v367
  %485 = vrot.lane.b32.xlu0 %v482, 64
  %v486 = vpop.permute.xlu0 %485
  %v488 = vmul.f32 %v481, %v486
  %490 = vrot.lane.b32.xlu0 %v488, 32
  %v491 = vpop.permute.xlu0 %490
  %v493 = vadd.f32 %v483, %v491
  %v494 = vtanh.pop %v493
  %496 = vrot.lane.b32.xlu0 %v494, 64
  %v497 = vpop.permute.xlu0 %496
  %v499 = vmul.f32 %v481, %v497
  %501 = vrot.lane.b32.xlu0 %v499, 32
  %v502 = vpop.permute.xlu0 %501
  %504 = vrot.lane.b32.xlu0 %v435, 64
  %v505 = vpop.permute.xlu0 %504
  %v507 = vsel %vm161, %v502, %v505
  %v508 = vpack.c.bf16 %v507, %v507
  %v510 = vsel %vm253, %v508, 0
  %512 = vmatpush.bf16.msra.mxu0 0
  %513 = vmatpush.bf16.msra.mxu0 0
  %514 = vmatpush.bf16.msra.mxu0 0
  %515 = vmatpush.bf16.msra.mxu0 0
  %516 = vmatpush.bf16.msra.mxu0 %v248
  %517 = vmatpush.bf16.msra.mxu0 %v247
  %518 = vmatpush.bf16.msra.mxu0 %v246
  %519 = vmatpush.bf16.msra.mxu0 %v245
  %520 = vmatmul.bf16.gmra.mxu0 %v510
  %v521 = vpop.f32.mrf.mxu0
  %v522 = vadd.f32 %v227, %v521
  %v523 = vpop.f32.mrf.mxu0
  %524 = vdwg.mxu0
  %v525 = vxor.u32 %v522, 2147483648
  %v526 = vmul.f32 %v525, 1.442695
  %v527 = vpow.pop %v526
  %v528 = vadd.f32 %v527, 1.0
  %v529 = vrcp.pop %v528
  %v530 = vmul.f32 %v528, %v529
  %v531 = vsub.f32 1.0, %v530
  %v532 = vmul.f32 %v529, %v531
  %v533 = vadd.f32 %v529, %v532
  %vm534 = vweird.f32 %v528
  %vm535 = vweird.f32 %v529
  %vm536 = vmor %vm534, %vm535
  %v537 = vsel %vm536, %v529, %v533
  %v538 = vand.u32 2147483647, %v528
  %vm539 = vcmp.eq.f32.partialorder %v538, 8.507059e+37
  %v540 = vand.u32 %v528, 2147483648
  %v541 = vor.u32 1.1754944e-38, %v540
  %v542 = vsel %vm539, %v541, %v537
  %v543 = vmul.f32 1.0, %v542
  %v544 = vtanh.pop %v522
  %v545 = vmul.f32 %v543, %v429
  %547 = vrot.lane.b32.xlu0 %v544, 64
  %v548 = vpop.permute.xlu0 %547
  %v550 = vmul.f32 %v543, %v548
  %552 = vrot.lane.b32.xlu0 %v550, 32
  %v553 = vpop.permute.xlu0 %552
  %v555 = vadd.f32 %v545, %v553
  %v556 = vtanh.pop %v555
  %558 = vrot.lane.b32.xlu0 %v556, 64
  %v559 = vpop.permute.xlu0 %558
  %v561 = vmul.f32 %v543, %v559
  %563 = vrot.lane.b32.xlu0 %v561, 32
  %v564 = vpop.permute.xlu0 %563
  %566 = vst.msk [vmem:[#allocation2 + $0x10] sm:$0xff] %vm161, %v564
  %v567 = vadd.f32 %v91, %v130
  %v568 = vpack.c.bf16 %v499, %v499
  %570 = vrot.lane.b32.xlu0 %v568, 32
  %v571 = vpop.permute.xlu0 %570
  %v573 = vsel %vm161, %v571, 0
  %575 = vmatpush.bf16.msra.mxu0 0
  %576 = vmatpush.bf16.msra.mxu0 0
  %577 = vmatpush.bf16.msra.mxu0 0
  %578 = vmatpush.bf16.msra.mxu0 0
  %579 = vmatpush.bf16.msra.mxu0 0
  %580 = vmatpush.bf16.msra.mxu0 0
  %581 = vmatpush.bf16.msra.mxu0 %v158
  %582 = vmatpush.bf16.msra.mxu0 %v157
  %583 = vmatmul.bf16.gmra.mxu0 %v573
  %v584 = vpop.f32.mrf.mxu0
  %v585 = vadd.f32 0.0, %v584
  %v586 = vpop.f32.mrf.mxu0
  %587 = vdwg.mxu0
  %v588 = vadd.f32 %v567, %v585
  %v589 = vxor.u32 %v588, 2147483648
  %v590 = vmul.f32 %v589, 1.442695
  %v591 = vpow.pop %v590
  %v592 = vadd.f32 %v591, 1.0
  %v593 = vrcp.pop %v592
  %v594 = vmul.f32 %v592, %v593
  %v595 = vsub.f32 1.0, %v594
  %v596 = vmul.f32 %v593, %v595
  %v597 = vadd.f32 %v593, %v596
  %vm598 = vweird.f32 %v592
  %vm599 = vweird.f32 %v593
  %vm600 = vmor %vm598, %vm599
  %v601 = vsel %vm600, %v593, %v597
  %v602 = vand.u32 2147483647, %v592
  %vm603 = vcmp.eq.f32.partialorder %v602, 8.507059e+37
  %v604 = vand.u32 %v592, 2147483648
  %v605 = vor.u32 1.1754944e-38, %v604
  %v606 = vsel %vm603, %v605, %v601
  %v607 = vmul.f32 1.0, %v606
  %v608 = vtanh.pop %v588
  %v609 = vmul.f32 %v607, %v493
  %611 = vrot.lane.b32.xlu0 %v608, 64
  %v612 = vpop.permute.xlu0 %611
  %v614 = vmul.f32 %v607, %v612
  %616 = vrot.lane.b32.xlu0 %v614, 32
  %v617 = vpop.permute.xlu0 %616
  %v619 = vadd.f32 %v609, %v617
  %v620 = vtanh.pop %v619
  %622 = vrot.lane.b32.xlu0 %v620, 64
  %v623 = vpop.permute.xlu0 %622
  %v625 = vmul.f32 %v607, %v623
  %627 = vrot.lane.b32.xlu0 %v625, 32
  %v628 = vpop.permute.xlu0 %627
  %630 = vrot.lane.b32.xlu0 %v561, 64
  %v631 = vpop.permute.xlu0 %630
  %v633 = vsel %vm161, %v628, %v631
  %v634 = vpack.c.bf16 %v633, %v633
  %v636 = vsel %vm253, %v634, 0
  %638 = vmatpush.bf16.msra.mxu0 0
  %639 = vmatpush.bf16.msra.mxu0 0
  %640 = vmatpush.bf16.msra.mxu0 0
  %641 = vmatpush.bf16.msra.mxu0 0
  %642 = vmatpush.bf16.msra.mxu0 %v248
  %643 = vmatpush.bf16.msra.mxu0 %v247
  %644 = vmatpush.bf16.msra.mxu0 %v246
  %645 = vmatpush.bf16.msra.mxu0 %v245
  %646 = vmatmul.bf16.gmra.mxu0 %v636
  %v647 = vpop.f32.mrf.mxu0
  %v648 = vadd.f32 %v227, %v647
  %v649 = vpop.f32.mrf.mxu0
  %650 = vdwg.mxu0
  %v651 = vxor.u32 %v648, 2147483648
  %v652 = vmul.f32 %v651, 1.442695
  %v653 = vpow.pop %v652
  %v654 = vadd.f32 %v653, 1.0
  %v655 = vrcp.pop %v654
  %v656 = vmul.f32 %v654, %v655
  %v657 = vsub.f32 1.0, %v656
  %v658 = vmul.f32 %v655, %v657
  %v659 = vadd.f32 %v655, %v658
  %vm660 = vweird.f32 %v654
  %vm661 = vweird.f32 %v655
  %vm662 = vmor %vm660, %vm661
  %v663 = vsel %vm662, %v655, %v659
  %v664 = vand.u32 2147483647, %v654
  %vm665 = vcmp.eq.f32.partialorder %v664, 8.507059e+37
  %v666 = vand.u32 %v654, 2147483648
  %v667 = vor.u32 1.1754944e-38, %v666
  %v668 = vsel %vm665, %v667, %v663
  %v669 = vmul.f32 1.0, %v668
  %v670 = vtanh.pop %v648
  %v671 = vmul.f32 %v669, %v555
  %673 = vrot.lane.b32.xlu0 %v670, 64
  %v674 = vpop.permute.xlu0 %673
  %v676 = vmul.f32 %v669, %v674
  %678 = vrot.lane.b32.xlu0 %v676, 32
  %v679 = vpop.permute.xlu0 %678
  %v681 = vadd.f32 %v671, %v679
  %v682 = vtanh.pop %v681
  %684 = vrot.lane.b32.xlu0 %v682, 64
  %v685 = vpop.permute.xlu0 %684
  %v687 = vmul.f32 %v669, %v685
  %689 = vrot.lane.b32.xlu0 %v687, 32
  %v690 = vpop.permute.xlu0 %689
  %692 = vst.msk [vmem:[#allocation2 + $0x18] sm:$0xff] %vm161, %v690
  %v693 = vadd.f32 %v94, %v130
  %v694 = vpack.c.bf16 %v625, %v625
  %696 = vrot.lane.b32.xlu0 %v694, 32
  %v697 = vpop.permute.xlu0 %696
  %v699 = vsel %vm161, %v697, 0
  %701 = vmatpush.bf16.msra.mxu0 0
  %702 = vmatpush.bf16.msra.mxu0 0
  %703 = vmatpush.bf16.msra.mxu0 0
  %704 = vmatpush.bf16.msra.mxu0 0
  %705 = vmatpush.bf16.msra.mxu0 0
  %706 = vmatpush.bf16.msra.mxu0 0
  %707 = vmatpush.bf16.msra.mxu0 %v158
  %708 = vmatpush.bf16.msra.mxu0 %v157
  %709 = vmatmul.bf16.gmra.mxu0 %v699
  %v710 = vpop.f32.mrf.mxu0
  %v711 = vadd.f32 0.0, %v710
  %v712 = vpop.f32.mrf.mxu0
  %713 = vdwg.mxu0
  %v714 = vadd.f32 %v693, %v711
  %v715 = vxor.u32 %v714, 2147483648
  %v716 = vmul.f32 %v715, 1.442695
  %v717 = vpow.pop %v716
  %v718 = vadd.f32 %v717, 1.0
  %v719 = vrcp.pop %v718
  %v720 = vmul.f32 %v718, %v719
  %v721 = vsub.f32 1.0, %v720
  %v722 = vmul.f32 %v719, %v721
  %v723 = vadd.f32 %v719, %v722
  %vm724 = vweird.f32 %v718
  %vm725 = vweird.f32 %v719
  %vm726 = vmor %vm724, %vm725
  %v727 = vsel %vm726, %v719, %v723
  %v728 = vand.u32 2147483647, %v718
  %vm729 = vcmp.eq.f32.partialorder %v728, 8.507059e+37
  %v730 = vand.u32 %v718, 2147483648
  %v731 = vor.u32 1.1754944e-38, %v730
  %v732 = vsel %vm729, %v731, %v727
  %v733 = vmul.f32 1.0, %v732
  %v734 = vtanh.pop %v714
  %v735 = vmul.f32 %v733, %v619
  %737 = vrot.lane.b32.xlu0 %v734, 64
  %v738 = vpop.permute.xlu0 %737
  %v740 = vmul.f32 %v733, %v738
  %742 = vrot.lane.b32.xlu0 %v740, 32
  %v743 = vpop.permute.xlu0 %742
  %v745 = vadd.f32 %v735, %v743
  %v746 = vtanh.pop %v745
  %748 = vrot.lane.b32.xlu0 %v746, 64
  %v749 = vpop.permute.xlu0 %748
  %v751 = vmul.f32 %v733, %v749
  %753 = vrot.lane.b32.xlu0 %v751, 32
  %v754 = vpop.permute.xlu0 %753
  %756 = vrot.lane.b32.xlu0 %v687, 64
  %v757 = vpop.permute.xlu0 %756
  %v759 = vsel %vm161, %v754, %v757
  %v760 = vpack.c.bf16 %v759, %v759
  %v762 = vsel %vm253, %v760, 0
  %764 = vmatpush.bf16.msra.mxu0 0
  %765 = vmatpush.bf16.msra.mxu0 0
  %766 = vmatpush.bf16.msra.mxu0 0
  %767 = vmatpush.bf16.msra.mxu0 0
  %768 = vmatpush.bf16.msra.mxu0 %v248
  %769 = vmatpush.bf16.msra.mxu0 %v247
  %770 = vmatpush.bf16.msra.mxu0 %v246
  %771 = vmatpush.bf16.msra.mxu0 %v245
  %772 = vmatmul.bf16.gmra.mxu0 %v762
  %v773 = vpop.f32.mrf.mxu0
  %v774 = vadd.f32 %v227, %v773
  %v775 = vpop.f32.mrf.mxu0
  %776 = vdwg.mxu0
  %v777 = vxor.u32 %v774, 2147483648
  %v778 = vmul.f32 %v777, 1.442695
  %v779 = vpow.pop %v778
  %v780 = vadd.f32 %v779, 1.0
  %v781 = vrcp.pop %v780
  %v782 = vmul.f32 %v780, %v781
  %v783 = vsub.f32 1.0, %v782
  %v784 = vmul.f32 %v781, %v783
  %v785 = vadd.f32 %v781, %v784
  %vm786 = vweird.f32 %v780
  %vm787 = vweird.f32 %v781
  %vm788 = vmor %vm786, %vm787
  %v789 = vsel %vm788, %v781, %v785
  %v790 = vand.u32 2147483647, %v780
  %vm791 = vcmp.eq.f32.partialorder %v790, 8.507059e+37
  %v792 = vand.u32 %v780, 2147483648
  %v793 = vor.u32 1.1754944e-38, %v792
  %v794 = vsel %vm791, %v793, %v789
  %v795 = vmul.f32 1.0, %v794
  %v796 = vtanh.pop %v774
  %v797 = vmul.f32 %v795, %v681
  %799 = vrot.lane.b32.xlu0 %v796, 64
  %v800 = vpop.permute.xlu0 %799
  %v802 = vmul.f32 %v795, %v800
  %804 = vrot.lane.b32.xlu0 %v802, 32
  %v805 = vpop.permute.xlu0 %804
  %v807 = vadd.f32 %v797, %v805
  %v808 = vtanh.pop %v807
  %810 = vrot.lane.b32.xlu0 %v808, 64
  %v811 = vpop.permute.xlu0 %810
  %v813 = vmul.f32 %v795, %v811
  %815 = vrot.lane.b32.xlu0 %v813, 32
  %v816 = vpop.permute.xlu0 %815
  %818 = vst.msk [vmem:[#allocation2 + $0x20] sm:$0xff] %vm161, %v816
  %v819 = vadd.f32 %v96, %v130
  %v820 = vpack.c.bf16 %v751, %v751
  %822 = vrot.lane.b32.xlu0 %v820, 32
  %v823 = vpop.permute.xlu0 %822
  %v825 = vsel %vm161, %v823, 0
  %827 = vmatpush.bf16.msra.mxu0 0
  %828 = vmatpush.bf16.msra.mxu0 0
  %829 = vmatpush.bf16.msra.mxu0 0
  %830 = vmatpush.bf16.msra.mxu0 0
  %831 = vmatpush.bf16.msra.mxu0 0
  %832 = vmatpush.bf16.msra.mxu0 0
  %833 = vmatpush.bf16.msra.mxu0 %v158
  %834 = vmatpush.bf16.msra.mxu0 %v157
  %835 = vmatmul.bf16.gmra.mxu0 %v825
  %v836 = vpop.f32.mrf.mxu0
  %v837 = vadd.f32 0.0, %v836
  %v838 = vpop.f32.mrf.mxu0
  %839 = vdwg.mxu0
  %v840 = vadd.f32 %v819, %v837
  %v841 = vxor.u32 %v840, 2147483648
  %v842 = vmul.f32 %v841, 1.442695
  %v843 = vpow.pop %v842
  %v844 = vadd.f32 %v843, 1.0
  %v845 = vrcp.pop %v844
  %v846 = vmul.f32 %v844, %v845
  %v847 = vsub.f32 1.0, %v846
  %v848 = vmul.f32 %v845, %v847
  %v849 = vadd.f32 %v845, %v848
  %vm850 = vweird.f32 %v844
  %vm851 = vweird.f32 %v845
  %vm852 = vmor %vm850, %vm851
  %v853 = vsel %vm852, %v845, %v849
  %v854 = vand.u32 2147483647, %v844
  %vm855 = vcmp.eq.f32.partialorder %v854, 8.507059e+37
  %v856 = vand.u32 %v844, 2147483648
  %v857 = vor.u32 1.1754944e-38, %v856
  %v858 = vsel %vm855, %v857, %v853
  %v859 = vmul.f32 1.0, %v858
  %v860 = vtanh.pop %v840
  %v861 = vmul.f32 %v859, %v745
  %863 = vrot.lane.b32.xlu0 %v860, 64
  %v864 = vpop.permute.xlu0 %863
  %v866 = vmul.f32 %v859, %v864
  %868 = vrot.lane.b32.xlu0 %v866, 32
  %v869 = vpop.permute.xlu0 %868
  %v871 = vadd.f32 %v861, %v869
  %v872 = vtanh.pop %v871
  %874 = vrot.lane.b32.xlu0 %v872, 64
  %v875 = vpop.permute.xlu0 %874
  %v877 = vmul.f32 %v859, %v875
  %879 = vrot.lane.b32.xlu0 %v877, 32
  %v880 = vpop.permute.xlu0 %879
  %882 = vrot.lane.b32.xlu0 %v813, 64
  %v883 = vpop.permute.xlu0 %882
  %v885 = vsel %vm161, %v880, %v883
  %v886 = vpack.c.bf16 %v885, %v885
  %v888 = vsel %vm253, %v886, 0
  %890 = vmatpush.bf16.msra.mxu0 0
  %891 = vmatpush.bf16.msra.mxu0 0
  %892 = vmatpush.bf16.msra.mxu0 0
  %893 = vmatpush.bf16.msra.mxu0 0
  %894 = vmatpush.bf16.msra.mxu0 %v248
  %895 = vmatpush.bf16.msra.mxu0 %v247
  %896 = vmatpush.bf16.msra.mxu0 %v246
  %897 = vmatpush.bf16.msra.mxu0 %v245
  %898 = vmatmul.bf16.gmra.mxu0 %v888
  %v899 = vpop.f32.mrf.mxu0
  %v900 = vadd.f32 %v227, %v899
  %v901 = vpop.f32.mrf.mxu0
  %902 = vdwg.mxu0
  %v903 = vxor.u32 %v900, 2147483648
  %v904 = vmul.f32 %v903, 1.442695
  %v905 = vpow.pop %v904
  %v906 = vadd.f32 %v905, 1.0
  %v907 = vrcp.pop %v906
  %v908 = vmul.f32 %v906, %v907
  %v909 = vsub.f32 1.0, %v908
  %v910 = vmul.f32 %v907, %v909
  %v911 = vadd.f32 %v907, %v910
  %vm912 = vweird.f32 %v906
  %vm913 = vweird.f32 %v907
  %vm914 = vmor %vm912, %vm913
  %v915 = vsel %vm914, %v907, %v911
  %v916 = vand.u32 2147483647, %v906
  %vm917 = vcmp.eq.f32.partialorder %v916, 8.507059e+37
  %v918 = vand.u32 %v906, 2147483648
  %v919 = vor.u32 1.1754944e-38, %v918
  %v920 = vsel %vm917, %v919, %v915
  %v921 = vmul.f32 1.0, %v920
  %v922 = vtanh.pop %v900
  %v923 = vmul.f32 %v921, %v807
  %925 = vrot.lane.b32.xlu0 %v922, 64
  %v926 = vpop.permute.xlu0 %925
  %v928 = vmul.f32 %v921, %v926
  %930 = vrot.lane.b32.xlu0 %v928, 32
  %v931 = vpop.permute.xlu0 %930
  %v933 = vadd.f32 %v923, %v931
  %v934 = vtanh.pop %v933
  %936 = vrot.lane.b32.xlu0 %v934, 64
  %v937 = vpop.permute.xlu0 %936
  %v939 = vmul.f32 %v921, %v937
  %941 = vrot.lane.b32.xlu0 %v939, 32
  %v942 = vpop.permute.xlu0 %941
  %944 = vst.msk [vmem:[#allocation2 + $0x28] sm:$0xff] %vm161, %v942
  %v945 = vadd.f32 %v99, %v130
  %v946 = vpack.c.bf16 %v877, %v877
  %948 = vrot.lane.b32.xlu0 %v946, 32
  %v949 = vpop.permute.xlu0 %948
  %v951 = vsel %vm161, %v949, 0
  %953 = vmatpush.bf16.msra.mxu0 0
  %954 = vmatpush.bf16.msra.mxu0 0
  %955 = vmatpush.bf16.msra.mxu0 0
  %956 = vmatpush.bf16.msra.mxu0 0
  %957 = vmatpush.bf16.msra.mxu0 0
  %958 = vmatpush.bf16.msra.mxu0 0
  %959 = vmatpush.bf16.msra.mxu0 %v158
  %960 = vmatpush.bf16.msra.mxu0 %v157
  %961 = vmatmul.bf16.gmra.mxu0 %v951
  %v962 = vpop.f32.mrf.mxu0
  %v963 = vadd.f32 0.0, %v962
  %v964 = vpop.f32.mrf.mxu0
  %965 = vdwg.mxu0
  %v966 = vadd.f32 %v945, %v963
  %v967 = vxor.u32 %v966, 2147483648
  %v968 = vmul.f32 %v967, 1.442695
  %v969 = vpow.pop %v968
  %v970 = vadd.f32 %v969, 1.0
  %v971 = vrcp.pop %v970
  %v972 = vmul.f32 %v970, %v971
  %v973 = vsub.f32 1.0, %v972
  %v974 = vmul.f32 %v971, %v973
  %v975 = vadd.f32 %v971, %v974
  %vm976 = vweird.f32 %v970
  %vm977 = vweird.f32 %v971
  %vm978 = vmor %vm976, %vm977
  %v979 = vsel %vm978, %v971, %v975
  %v980 = vand.u32 2147483647, %v970
  %vm981 = vcmp.eq.f32.partialorder %v980, 8.507059e+37
  %v982 = vand.u32 %v970, 2147483648
  %v983 = vor.u32 1.1754944e-38, %v982
  %v984 = vsel %vm981, %v983, %v979
  %v985 = vmul.f32 1.0, %v984
  %v986 = vtanh.pop %v966
  %v987 = vmul.f32 %v985, %v871
  %989 = vrot.lane.b32.xlu0 %v986, 64
  %v990 = vpop.permute.xlu0 %989
  %v992 = vmul.f32 %v985, %v990
  %994 = vrot.lane.b32.xlu0 %v992, 32
  %v995 = vpop.permute.xlu0 %994
  %v997 = vadd.f32 %v987, %v995
  %v998 = vtanh.pop %v997
  %1000 = vrot.lane.b32.xlu0 %v998, 64
  %v1001 = vpop.permute.xlu0 %1000
  %v1003 = vmul.f32 %v985, %v1001
  %1005 = vrot.lane.b32.xlu0 %v1003, 32
  %v1006 = vpop.permute.xlu0 %1005
  %1008 = vrot.lane.b32.xlu0 %v939, 64
  %v1009 = vpop.permute.xlu0 %1008
  %v1011 = vsel %vm161, %v1006, %v1009
  %v1012 = vpack.c.bf16 %v1011, %v1011
  %v1014 = vsel %vm253, %v1012, 0
  %1016 = vmatpush.bf16.msra.mxu0 0
  %1017 = vmatpush.bf16.msra.mxu0 0
  %1018 = vmatpush.bf16.msra.mxu0 0
  %1019 = vmatpush.bf16.msra.mxu0 0
  %1020 = vmatpush.bf16.msra.mxu0 %v248
  %1021 = vmatpush.bf16.msra.mxu0 %v247
  %1022 = vmatpush.bf16.msra.mxu0 %v246
  %1023 = vmatpush.bf16.msra.mxu0 %v245
  %1024 = vmatmul.bf16.gmra.mxu0 %v1014
  %v1025 = vpop.f32.mrf.mxu0
  %v1026 = vadd.f32 %v227, %v1025
  %v1027 = vpop.f32.mrf.mxu0
  %1028 = vdwg.mxu0
  %v1029 = vxor.u32 %v1026, 2147483648
  %v1030 = vmul.f32 %v1029, 1.442695
  %v1031 = vpow.pop %v1030
  %v1032 = vadd.f32 %v1031, 1.0
  %v1033 = vrcp.pop %v1032
  %v1034 = vmul.f32 %v1032, %v1033
  %v1035 = vsub.f32 1.0, %v1034
  %v1036 = vmul.f32 %v1033, %v1035
  %v1037 = vadd.f32 %v1033, %v1036
  %vm1038 = vweird.f32 %v1032
  %vm1039 = vweird.f32 %v1033
  %vm1040 = vmor %vm1038, %vm1039
  %v1041 = vsel %vm1040, %v1033, %v1037
  %v1042 = vand.u32 2147483647, %v1032
  %vm1043 = vcmp.eq.f32.partialorder %v1042, 8.507059e+37
  %v1044 = vand.u32 %v1032, 2147483648
  %v1045 = vor.u32 1.1754944e-38, %v1044
  %v1046 = vsel %vm1043, %v1045, %v1041
  %v1047 = vmul.f32 1.0, %v1046
  %v1048 = vtanh.pop %v1026
  %v1049 = vmul.f32 %v1047, %v933
  %1051 = vrot.lane.b32.xlu0 %v1048, 64
  %v1052 = vpop.permute.xlu0 %1051
  %v1054 = vmul.f32 %v1047, %v1052
  %1056 = vrot.lane.b32.xlu0 %v1054, 32
  %v1057 = vpop.permute.xlu0 %1056
  %v1059 = vadd.f32 %v1049, %v1057
  %v1060 = vtanh.pop %v1059
  %1062 = vrot.lane.b32.xlu0 %v1060, 64
  %v1063 = vpop.permute.xlu0 %1062
  %v1065 = vmul.f32 %v1047, %v1063
  %1067 = vrot.lane.b32.xlu0 %v1065, 32
  %v1068 = vpop.permute.xlu0 %1067
  %1070 = vst.msk [vmem:[#allocation2 + $0x30] sm:$0xff] %vm161, %v1068
  %v1071 = vadd.f32 %v101, %v130
  %v1072 = vpack.c.bf16 %v1003, %v1003
  %1074 = vrot.lane.b32.xlu0 %v1072, 32
  %v1075 = vpop.permute.xlu0 %1074
  %v1077 = vsel %vm161, %v1075, 0
  %1079 = vmatpush.bf16.msra.mxu0 0
  %1080 = vmatpush.bf16.msra.mxu0 0
  %1081 = vmatpush.bf16.msra.mxu0 0
  %1082 = vmatpush.bf16.msra.mxu0 0
  %1083 = vmatpush.bf16.msra.mxu0 0
  %1084 = vmatpush.bf16.msra.mxu0 0
  %1085 = vmatpush.bf16.msra.mxu0 %v158
  %1086 = vmatpush.bf16.msra.mxu0 %v157
  %1087 = vmatmul.bf16.gmra.mxu0 %v1077
  %v1088 = vpop.f32.mrf.mxu0
  %v1089 = vadd.f32 0.0, %v1088
  %v1090 = vpop.f32.mrf.mxu0
  %1091 = vdwg.mxu0
  %v1092 = vadd.f32 %v1071, %v1089
  %v1093 = vxor.u32 %v1092, 2147483648
  %v1094 = vmul.f32 %v1093, 1.442695
  %v1095 = vpow.pop %v1094
  %v1096 = vadd.f32 %v1095, 1.0
  %v1097 = vrcp.pop %v1096
  %v1098 = vmul.f32 %v1096, %v1097
  %v1099 = vsub.f32 1.0, %v1098
  %v1100 = vmul.f32 %v1097, %v1099
  %v1101 = vadd.f32 %v1097, %v1100
  %vm1102 = vweird.f32 %v1096
  %vm1103 = vweird.f32 %v1097
  %vm1104 = vmor %vm1102, %vm1103
  %v1105 = vsel %vm1104, %v1097, %v1101
  %v1106 = vand.u32 2147483647, %v1096
  %vm1107 = vcmp.eq.f32.partialorder %v1106, 8.507059e+37
  %v1108 = vand.u32 %v1096, 2147483648
  %v1109 = vor.u32 1.1754944e-38, %v1108
  %v1110 = vsel %vm1107, %v1109, %v1105
  %v1111 = vmul.f32 1.0, %v1110
  %v1112 = vtanh.pop %v1092
  %v1113 = vmul.f32 %v1111, %v997
  %1115 = vrot.lane.b32.xlu0 %v1112, 64
  %v1116 = vpop.permute.xlu0 %1115
  %v1118 = vmul.f32 %v1111, %v1116
  %1120 = vrot.lane.b32.xlu0 %v1118, 32
  %v1121 = vpop.permute.xlu0 %1120
  %v1123 = vadd.f32 %v1113, %v1121
  %v1124 = vtanh.pop %v1123
  %1126 = vrot.lane.b32.xlu0 %v1124, 64
  %v1127 = vpop.permute.xlu0 %1126
  %v1129 = vmul.f32 %v1111, %v1127
  %1131 = vrot.lane.b32.xlu0 %v1129, 32
  %v1132 = vpop.permute.xlu0 %1131
  %1134 = vrot.lane.b32.xlu0 %v1065, 64
  %v1135 = vpop.permute.xlu0 %1134
  %v1137 = vsel %vm161, %v1132, %v1135
  %v1138 = vpack.c.bf16 %v1137, %v1137
  %v1140 = vsel %vm253, %v1138, 0
  %1142 = vmatpush.bf16.msra.mxu0 0
  %1143 = vmatpush.bf16.msra.mxu0 0
  %1144 = vmatpush.bf16.msra.mxu0 0
  %1145 = vmatpush.bf16.msra.mxu0 0
  %1146 = vmatpush.bf16.msra.mxu0 %v248
  %1147 = vmatpush.bf16.msra.mxu0 %v247
  %1148 = vmatpush.bf16.msra.mxu0 %v246
  %1149 = vmatpush.bf16.msra.mxu0 %v245
  %1150 = vmatmul.bf16.gmra.mxu0 %v1140
  %v1151 = vpop.f32.mrf.mxu0
  %v1152 = vadd.f32 %v227, %v1151
  %v1153 = vpop.f32.mrf.mxu0
  %1154 = vdwg.mxu0
  %v1155 = vxor.u32 %v1152, 2147483648
  %v1156 = vmul.f32 %v1155, 1.442695
  %v1157 = vpow.pop %v1156
  %v1158 = vadd.f32 %v1157, 1.0
  %v1159 = vrcp.pop %v1158
  %v1160 = vmul.f32 %v1158, %v1159
  %v1161 = vsub.f32 1.0, %v1160
  %v1162 = vmul.f32 %v1159, %v1161
  %v1163 = vadd.f32 %v1159, %v1162
  %vm1164 = vweird.f32 %v1158
  %vm1165 = vweird.f32 %v1159
  %vm1166 = vmor %vm1164, %vm1165
  %v1167 = vsel %vm1166, %v1159, %v1163
  %v1168 = vand.u32 2147483647, %v1158
  %vm1169 = vcmp.eq.f32.partialorder %v1168, 8.507059e+37
  %v1170 = vand.u32 %v1158, 2147483648
  %v1171 = vor.u32 1.1754944e-38, %v1170
  %v1172 = vsel %vm1169, %v1171, %v1167
  %v1173 = vmul.f32 1.0, %v1172
  %v1174 = vtanh.pop %v1152
  %v1175 = vmul.f32 %v1173, %v1059
  %1177 = vrot.lane.b32.xlu0 %v1174, 64
  %v1178 = vpop.permute.xlu0 %1177
  %v1180 = vmul.f32 %v1173, %v1178
  %1182 = vrot.lane.b32.xlu0 %v1180, 32
  %v1183 = vpop.permute.xlu0 %1182
  %v1185 = vadd.f32 %v1175, %v1183
  %v1186 = vtanh.pop %v1185
  %1188 = vrot.lane.b32.xlu0 %v1186, 64
  %v1189 = vpop.permute.xlu0 %1188
  %v1191 = vmul.f32 %v1173, %v1189
  %1193 = vrot.lane.b32.xlu0 %v1191, 32
  %v1194 = vpop.permute.xlu0 %1193
  %1196 = vst.msk [vmem:[#allocation2 + $0x38] sm:$0xff] %vm161, %v1194
  %v1197 = vld [vmem:[#allocation2] sm:$0xff]
  %v1198 = vld [vmem:[#allocation2 + $0x8] sm:$0xff]
  %v1199 = vld [vmem:[#allocation2 + $0x10] sm:$0xff]
  %v1200 = vld [vmem:[#allocation2 + $0x18] sm:$0xff]
  %v1201 = vld [vmem:[#allocation2 + $0x20] sm:$0xff]
  %v1202 = vld [vmem:[#allocation2 + $0x28] sm:$0xff]
  %v1203 = vld [vmem:[#allocation2 + $0x30] sm:$0xff]
  %v1204 = vld [vmem:[#allocation2 + $0x38] sm:$0xff]
  %v1205 = vpack.c.bf16 %v1198, %v1197
  %v1206 = vpack.c.bf16 %v1200, %v1199
  %v1207 = vpack.c.bf16 %v1202, %v1201
  %v1208 = vpack.c.bf16 %v1204, %v1203
  %v1209 = vld [vmem:[%s9] sm:$0xf]
  %v1210 = vld [vmem:[%s9 + $0x4] sm:$0xf]
  %v1211 = vld [vmem:[%s9 + $0x8] sm:$0xf]
  %v1212 = vld [vmem:[%s9 + $0xc] sm:$0xf]
  %v1213 = vld [vmem:[%s10] sm:$0x1]
  %v1215 = vperm.slane %v1213, 0
  %v1221 = vunpack.c.l.b16 %v1209
  %v1222 = vunpack.c.l.b16 %v1210
  %v1223 = vunpack.c.l.b16 %v1211
  %v1224 = vunpack.c.l.b16 %v1212
  %v1225 = vpack.c.b16 %v1222, %v1221
  %v1226 = vpack.c.b16 %v1224, %v1223
  %v1230 = vsel %vm161, %v1205, 0
  %v1233 = vsel %vm161, %v1206, 0
  %v1236 = vsel %vm161, %v1207, 0
  %v1239 = vsel %vm161, %v1208, 0
  %1241 = vmatpush.bf16.msra.mxu0 0
  %1242 = vmatpush.bf16.msra.mxu0 0
  %1243 = vmatpush.bf16.msra.mxu0 0
  %1244 = vmatpush.bf16.msra.mxu0 0
  %1245 = vmatpush.bf16.msra.mxu0 0
  %1246 = vmatpush.bf16.msra.mxu0 0
  %1247 = vmatpush.bf16.msra.mxu0 %v1226
  %1248 = vmatpush.bf16.msra.mxu0 %v1225
  %1249 = vmatmul.bf16.gmra.mxu0 %v1230
  %v1250 = vpop.f32.mrf.mxu0
  %v1251 = vadd.f32 %v1215, %v1250
  %v1252 = vpop.f32.mrf.mxu0
  %v1253 = vadd.f32 %v1215, %v1252
  %1254 = vmatmul.bf16.gmra.mxu0 %v1233
  %v1255 = vpop.f32.mrf.mxu0
  %v1256 = vadd.f32 %v1215, %v1255
  %v1257 = vpop.f32.mrf.mxu0
  %v1258 = vadd.f32 %v1215, %v1257
  %1259 = vmatmul.bf16.gmra.mxu0 %v1236
  %v1260 = vpop.f32.mrf.mxu0
  %v1261 = vadd.f32 %v1215, %v1260
  %v1262 = vpop.f32.mrf.mxu0
  %v1263 = vadd.f32 %v1215, %v1262
  %1264 = vmatmul.bf16.gmra.mxu0 %v1239
  %v1265 = vpop.f32.mrf.mxu0
  %v1266 = vadd.f32 %v1215, %v1265
  %v1267 = vpop.f32.mrf.mxu0
  %v1268 = vadd.f32 %v1215, %v1267
  %1269 = vdwg.mxu0
  %1270 = vst [vmem:[%s11] sm:$0xff] %v1251
  %1271 = vst [vmem:[%s11 + $0x8] sm:$0xff] %v1253
  %1272 = vst [vmem:[%s11 + $0x10] sm:$0xff] %v1256
  %1273 = vst [vmem:[%s11 + $0x18] sm:$0xff] %v1258
  %1274 = vst [vmem:[%s11 + $0x20] sm:$0xff] %v1261
  %1275 = vst [vmem:[%s11 + $0x28] sm:$0xff] %v1263
  %1276 = vst [vmem:[%s11 + $0x30] sm:$0xff] %v1266
  %1277 = vst [vmem:[%s11 + $0x38] sm:$0xff] %v1268
  %1278 = vrot.lane.b32.xlu0 %v1191, 64
  %v1279 = vpop.permute.xlu0 %1278
  %1282 = vrot.lane.b32.xlu0 %v1123, 32
  %v1283 = vpop.permute.xlu0 %1282
  %1286 = vrot.lane.b32.xlu0 %v1185, 64
  %v1287 = vpop.permute.xlu0 %1286
  %v1289 = vsel %vm161, %v1132, %v1279
  %v1290 = vsel %vm253, %v1289, %v1283
  %vm1291 = vcmask 785408
  %v1292 = vsel %vm1291, %v1290, %v1287
  %1293 = vst [vmem:[%s12] sm:$0xff] %v1292
  // Predicated region
  $region46: #{fwd.5} parent=0 // pred_check
    _
  $region47: #{fwd.5} parent=0 // pred_check_branch
    %1295 = sbr.rel (0) target = $region49
  $region48: #{fwd.5} parent=0 // pred_region
    _
  $region49: #{fwd.5} parent=0 // pred_fallthru
    _
  // Predicated region
  $region50: #{fwd.5} parent=0 // pred_check
    _
  $region51: #{fwd.5} parent=0 // pred_check_branch
    %1297 = sbr.rel (0) target = $region53
  $region52: #{fwd.5} parent=0 // pred_region
    _
  $region53: #{fwd.5} parent=0 // pred_fallthru
    _
  // Predicated region
  $region54: #{fwd.5} parent=0 // pred_check
    _
  $region55: #{fwd.5} parent=0 // pred_check_branch
    %1299 = sbr.rel (0) target = $region57
  $region56: #{fwd.5} parent=0 // pred_region
    _
  $region57: #{fwd.5} parent=0 // pred_fallthru
    _
  // Predicated region
  $region58: #{fwd.5} parent=0 // pred_check
    _
  $region59: #{fwd.5} parent=0 // pred_check_branch
    %1301 = sbr.rel (0) target = $region61
  $region60: #{fwd.5} parent=0 // pred_region
    _
  $region61: #{fwd.5} parent=0 // pred_fallthru
    _

// kernel: fwd.4
$region0: #{fwd.4}
  #allocation0 [shape = 'u32[]', space=smem, size = 0x4, offset = 0x4, fixed_abs, tag = 'smem constant byte address 0x4 - core index']
  #allocation1 [shape = 'u32[72,128]{1,0:T(1,128)}', space=vmem, size = 0x9000, scoped, tag = 'internal scratch']
  %s0 = inlined_call_operand.vmem [shape: f32[64,28], index: 0, kind: input, shape index: {}]
  %s1 = inlined_call_operand.vmem [shape: f32[64,28], index: 1, kind: input, shape index: {}]
  %s2 = inlined_call_operand.vmem [shape: bf16[28,512], index: 2, kind: input, shape index: {}]
  %s3 = inlined_call_operand.vmem [shape: f32[1,512], index: 3, kind: input, shape index: {}]
  %s4 = inlined_call_operand.vmem [shape: bf16[128,512], index: 4, kind: input, shape index: {}]
  %s5 = inlined_call_operand.vmem [shape: bf16[28,256], index: 5, kind: input, shape index: {}]
  %s6 = inlined_call_operand.vmem [shape: f32[1,256], index: 6, kind: input, shape index: {}]
  %s7 = inlined_call_operand.vmem [shape: bf16[64,256], index: 7, kind: input, shape index: {}]
  %s8 = inlined_call_operand.vmem [shape: f32[64,32], index: 8, kind: input, shape index: {}]
  %s9 = inlined_call_operand.vmem [shape: f32[1,32], index: 9, kind: input, shape index: {}]
  %s10 = inlined_call_operand.vmem [shape: f32[8,16], index: 10, kind: input, shape index: {}]
  %s11 = inlined_call_operand.vmem [shape: f32[8,128], index: 11, kind: output, shape index: {0}]
  %s12 = inlined_call_operand.vmem [shape: f32[8,16], index: 12, kind: output, shape index: {1}]
  %s13 = inlined_call_operand.hbm [shape: f32[1,1], index: 13, kind: output, shape index: {2}]
  %14 = xla_tuple %s11, %s12, %s13
  %s15 = sld [smem:[#allocation0]]
  $region70: #{fwd.4} parent=0
    _
  %s17 = ssub.s32 1, %s15
  %s18 = scalar_select 0, %s17, %s15
  $region1: #{fwd.4} parent=0
    #allocation2 [shape = 'u8[512]{0}', space=vmem, size = 0x400, scoped, tag = 'output window, operand 2, single buffered']
    #allocation3 [shape = 's32[1]{0}', space=sflag, size = 0x4, scoped, tag = 'scoped memory for fwd.4']
    %19 = vsyncpa [#allocation3], 0
    // Predicated region
    $region2: #{fwd.4} parent=1 // pred_check
      _
    $region3: #{fwd.4} parent=1 // pred_check_branch
      %21 = sbr.rel (0) target = $region5
    $region4: #{fwd.4} parent=1 // pred_region
      _
    $region5: #{fwd.4} parent=1 // pred_fallthru
      _
    // Predicated region
    $region6: #{fwd.4} parent=1 // pred_check
      _
    $region7: #{fwd.4} parent=1 // pred_check_branch
      %23 = sbr.rel (0) target = $region9
    $region8: #{fwd.4} parent=1 // pred_region
      _
    $region9: #{fwd.4} parent=1 // pred_fallthru
      _
    // Predicated region
    $region10: #{fwd.4} parent=1 // pred_check
      _
    $region11: #{fwd.4} parent=1 // pred_check_branch
      %25 = sbr.rel (0) target = $region13
    $region12: #{fwd.4} parent=1 // pred_region
      _
    $region13: #{fwd.4} parent=1 // pred_fallthru
      _
    // Predicated region
    $region14: #{fwd.4} parent=1 // pred_check
      _
    $region15: #{fwd.4} parent=1 // pred_check_branch
      %27 = sbr.rel (0) target = $region17
    $region16: #{fwd.4} parent=1 // pred_region
      _
    $region17: #{fwd.4} parent=1 // pred_fallthru
      _
    // Predicated region
    $region18: #{fwd.4} parent=1 // pred_check
      _
    $region19: #{fwd.4} parent=1 // pred_check_branch
      %29 = sbr.rel (0) target = $region21
    $region20: #{fwd.4} parent=1 // pred_region
      _
    $region21: #{fwd.4} parent=1 // pred_fallthru
      _
    // Predicated region
    $region22: #{fwd.4} parent=1 // pred_check
      _
    $region23: #{fwd.4} parent=1 // pred_check_branch
      %31 = sbr.rel (0) target = $region25
    $region24: #{fwd.4} parent=1 // pred_region
      _
    $region25: #{fwd.4} parent=1 // pred_fallthru
      _
    // Predicated region
    $region26: #{fwd.4} parent=1 // pred_check
      _
    $region27: #{fwd.4} parent=1 // pred_check_branch
      %33 = sbr.rel (0) target = $region29
    $region28: #{fwd.4} parent=1 // pred_region
      _
    $region29: #{fwd.4} parent=1 // pred_fallthru
      _
    // Predicated region
    $region30: #{fwd.4} parent=1 // pred_check
      _
    $region31: #{fwd.4} parent=1 // pred_check_branch
      %35 = sbr.rel (0) target = $region33
    $region32: #{fwd.4} parent=1 // pred_region
      _
    $region33: #{fwd.4} parent=1 // pred_fallthru
      _
    // Predicated region
    $region34: #{fwd.4} parent=1 // pred_check
      _
    $region35: #{fwd.4} parent=1 // pred_check_branch
      %37 = sbr.rel (0) target = $region37
    $region36: #{fwd.4} parent=1 // pred_region
      _
    $region37: #{fwd.4} parent=1 // pred_fallthru
      _
    // Predicated region
    $region38: #{fwd.4} parent=1 // pred_check
      _
    $region39: #{fwd.4} parent=1 // pred_check_branch
      %39 = sbr.rel (0) target = $region41
    $region40: #{fwd.4} parent=1 // pred_region
      _
    $region41: #{fwd.4} parent=1 // pred_fallthru
      _
    // Predicated region
    $region42: #{fwd.4} parent=1 // pred_check
      _
    $region43: #{fwd.4} parent=1 // pred_check_branch
      %41 = sbr.rel (0) target = $region45
    $region44: #{fwd.4} parent=1 // pred_region
      _
    $region45: #{fwd.4} parent=1 // pred_fallthru
      _
    %v43 = vld [vmem:[%s0] sm:$0xff]
    %v44 = vld [vmem:[%s0 + $0x8] sm:$0xff]
    %v45 = vld [vmem:[%s0 + $0x10] sm:$0xff]
    %v46 = vld [vmem:[%s0 + $0x18] sm:$0xff]
    %v47 = vld [vmem:[%s0 + $0x20] sm:$0xff]
    %v48 = vld [vmem:[%s0 + $0x28] sm:$0xff]
    %v49 = vld [vmem:[%s0 + $0x30] sm:$0xff]
    %v50 = vld [vmem:[%s0 + $0x38] sm:$0xff]
    %v51 = vpack.c.bf16 %v44, %v43
    %v52 = vpack.c.bf16 %v46, %v45
    %v53 = vpack.c.bf16 %v48, %v47
    %v54 = vpack.c.bf16 %v50, %v49
    %v55 = vld [vmem:[%s2] sm:$0xff]
    %v56 = vld [vmem:[%s2 + $0x8] sm:$0xff]
    %v57 = vld [vmem:[%s2 + $0x10] sm:$0xff]
    %v58 = vld [vmem:[%s2 + $0x18] sm:$0xff]
    %v59 = vld [vmem:[%s2 + $0x20] sm:$0xff]
    %v60 = vld [vmem:[%s2 + $0x28] sm:$0xff]
    %v61 = vld [vmem:[%s2 + $0x30] sm:$0x33]
    %v62 = vld [vmem:[%s2 + $0x38] sm:$0x33]
    %v63 = vld [vmem:[%s3] sm:$0xf]
    %v65 = vperm.slane %v63, 0
    %v66 = vperm.slane %v63, 1
    %v67 = vperm.slane %v63, 2
    %v68 = vperm.slane %v63, 3
    %v81 = vunpack.c.l.b16 %v55
    %v82 = vunpack.c.h.b16 %v55
    %v83 = vunpack.c.l.b16 %v56
    %v84 = vunpack.c.h.b16 %v56
    %v85 = vunpack.c.l.b16 %v57
    %v86 = vunpack.c.h.b16 %v57
    %v87 = vunpack.c.l.b16 %v58
    %v88 = vunpack.c.h.b16 %v58
    %v89 = vunpack.c.l.b16 %v59
    %v90 = vunpack.c.h.b16 %v59
    %v91 = vunpack.c.l.b16 %v60
    %v92 = vunpack.c.h.b16 %v60
    %v93 = vunpack.c.l.b16 %v61
    %v94 = vunpack.c.h.b16 %v61
    %v95 = vunpack.c.l.b16 %v62
    %v96 = vunpack.c.h.b16 %v62
    %v97 = vpack.c.b16 %v85, %v81
    %v98 = vpack.c.b16 %v86, %v82
    %v99 = vpack.c.b16 %v87, %v83
    %v100 = vpack.c.b16 %v88, %v84
    %v101 = vpack.c.b16 %v93, %v89
    %v102 = vpack.c.b16 %v94, %v90
    %v103 = vpack.c.b16 %v95, %v91
    %v104 = vpack.c.b16 %v96, %v92
    %vm109 = vcmask 228352
    %v111 = vsel %vm109, %v51, 0
    %v114 = vsel %vm109, %v52, 0
    %v117 = vsel %vm109, %v53, 0
    %v120 = vsel %vm109, %v54, 0
    %vm122 = vcmask 1045504
    %v124 = vsel %vm122, %v101, 0
    %v127 = vsel %vm122, %v102, 0
    %v130 = vsel %vm122, %v103, 0
    %v133 = vsel %vm122, %v104, 0
    %135 = vmatpush.bf16.msra.mxu0 0
    %136 = vmatpush.bf16.msra.mxu0 0
    %137 = vmatpush.bf16.msra.mxu0 0
    %138 = vmatpush.bf16.msra.mxu0 0
    %139 = vmatpush.bf16.msra.mxu0 0
    %140 = vmatpush.bf16.msra.mxu0 0
    %141 = vmatpush.bf16.msra.mxu0 %v124
    %142 = vmatpush.bf16.msra.mxu0 %v97
    %143 = vmatmul.bf16.gmra.mxu0 %v111
    %v144 = vpop.f32.mrf.mxu0
    %v145 = vadd.f32 %v65, %v144
    %v146 = vpop.f32.mrf.mxu0
    %v147 = vadd.f32 %v65, %v146
    %148 = vmatmul.bf16.gmra.mxu0 %v114
    %v149 = vpop.f32.mrf.mxu0
    %v150 = vadd.f32 %v65, %v149
    %v151 = vpop.f32.mrf.mxu0
    %v152 = vadd.f32 %v65, %v151
    %153 = vmatmul.bf16.gmra.mxu0 %v117
    %v154 = vpop.f32.mrf.mxu0
    %v155 = vadd.f32 %v65, %v154
    %v156 = vpop.f32.mrf.mxu0
    %v157 = vadd.f32 %v65, %v156
    %158 = vmatmul.bf16.gmra.mxu0 %v120
    %v159 = vpop.f32.mrf.mxu0
    %v160 = vadd.f32 %v65, %v159
    %v161 = vpop.f32.mrf.mxu0
    %v162 = vadd.f32 %v65, %v161
    %163 = vdwg.mxu0
    %164 = vmatpush.bf16.msra.mxu0 0
    %165 = vmatpush.bf16.msra.mxu0 0
    %166 = vmatpush.bf16.msra.mxu0 0
    %167 = vmatpush.bf16.msra.mxu0 0
    %168 = vmatpush.bf16.msra.mxu0 0
    %169 = vmatpush.bf16.msra.mxu0 0
    %170 = vmatpush.bf16.msra.mxu0 %v127
    %171 = vmatpush.bf16.msra.mxu0 %v98
    %172 = vmatmul.bf16.gmra.mxu0 %v111
    %v173 = vpop.f32.mrf.mxu0
    %v174 = vadd.f32 %v66, %v173
    %v175 = vpop.f32.mrf.mxu0
    %v176 = vadd.f32 %v66, %v175
    %177 = vmatmul.bf16.gmra.mxu0 %v114
    %v178 = vpop.f32.mrf.mxu0
    %v179 = vadd.f32 %v66, %v178
    %v180 = vpop.f32.mrf.mxu0
    %v181 = vadd.f32 %v66, %v180
    %182 = vmatmul.bf16.gmra.mxu0 %v117
    %v183 = vpop.f32.mrf.mxu0
    %v184 = vadd.f32 %v66, %v183
    %v185 = vpop.f32.mrf.mxu0
    %v186 = vadd.f32 %v66, %v185
    %187 = vmatmul.bf16.gmra.mxu0 %v120
    %v188 = vpop.f32.mrf.mxu0
    %v189 = vadd.f32 %v66, %v188
    %v190 = vpop.f32.mrf.mxu0
    %v191 = vadd.f32 %v66, %v190
    %192 = vdwg.mxu0
    %193 = vmatpush.bf16.msra.mxu0 0
    %194 = vmatpush.bf16.msra.mxu0 0
    %195 = vmatpush.bf16.msra.mxu0 0
    %196 = vmatpush.bf16.msra.mxu0 0
    %197 = vmatpush.bf16.msra.mxu0 0
    %198 = vmatpush.bf16.msra.mxu0 0
    %199 = vmatpush.bf16.msra.mxu0 %v130
    %200 = vmatpush.bf16.msra.mxu0 %v99
    %201 = vmatmul.bf16.gmra.mxu0 %v111
    %v202 = vpop.f32.mrf.mxu0
    %v203 = vadd.f32 %v67, %v202
    %v204 = vpop.f32.mrf.mxu0
    %v205 = vadd.f32 %v67, %v204
    %206 = vmatmul.bf16.gmra.mxu0 %v114
    %v207 = vpop.f32.mrf.mxu0
    %v208 = vadd.f32 %v67, %v207
    %v209 = vpop.f32.mrf.mxu0
    %v210 = vadd.f32 %v67, %v209
    %211 = vmatmul.bf16.gmra.mxu0 %v117
    %v212 = vpop.f32.mrf.mxu0
    %v213 = vadd.f32 %v67, %v212
    %v214 = vpop.f32.mrf.mxu0
    %v215 = vadd.f32 %v67, %v214
    %216 = vmatmul.bf16.gmra.mxu0 %v120
    %v217 = vpop.f32.mrf.mxu0
    %v218 = vadd.f32 %v67, %v217
    %v219 = vpop.f32.mrf.mxu0
    %v220 = vadd.f32 %v67, %v219
    %221 = vdwg.mxu0
    %222 = vmatpush.bf16.msra.mxu0 0
    %223 = vmatpush.bf16.msra.mxu0 0
    %224 = vmatpush.bf16.msra.mxu0 0
    %225 = vmatpush.bf16.msra.mxu0 0
    %226 = vmatpush.bf16.msra.mxu0 0
    %227 = vmatpush.bf16.msra.mxu0 0
    %228 = vmatpush.bf16.msra.mxu0 %v133
    %229 = vmatpush.bf16.msra.mxu0 %v100
    %230 = vmatmul.bf16.gmra.mxu0 %v111
    %v231 = vpop.f32.mrf.mxu0
    %v232 = vadd.f32 %v68, %v231
    %v233 = vpop.f32.mrf.mxu0
    %v234 = vadd.f32 %v68, %v233
    %235 = vmatmul.bf16.gmra.mxu0 %v114
    %v236 = vpop.f32.mrf.mxu0
    %v237 = vadd.f32 %v68, %v236
    %v238 = vpop.f32.mrf.mxu0
    %v239 = vadd.f32 %v68, %v238
    %240 = vmatmul.bf16.gmra.mxu0 %v117
    %v241 = vpop.f32.mrf.mxu0
    %v242 = vadd.f32 %v68, %v241
    %v243 = vpop.f32.mrf.mxu0
    %v244 = vadd.f32 %v68, %v243
    %245 = vmatmul.bf16.gmra.mxu0 %v120
    %v246 = vpop.f32.mrf.mxu0
    %v247 = vadd.f32 %v68, %v246
    %v248 = vpop.f32.mrf.mxu0
    %v249 = vadd.f32 %v68, %v248
    %250 = vdwg.mxu0
    %v251 = vld [vmem:[%s4] sm:$0xff]
    %v252 = vld [vmem:[%s4 + $0x8] sm:$0xff]
    %v253 = vld [vmem:[%s4 + $0x10] sm:$0xff]
    %v254 = vld [vmem:[%s4 + $0x18] sm:$0xff]
    %v255 = vld [vmem:[%s4 + $0x20] sm:$0xff]
    %v256 = vld [vmem:[%s4 + $0x28] sm:$0xff]
    %v257 = vld [vmem:[%s4 + $0x30] sm:$0xff]
    %v258 = vld [vmem:[%s4 + $0x38] sm:$0xff]
    %v259 = vld [vmem:[%s4 + $0x40] sm:$0xff]
    %v260 = vld [vmem:[%s4 + $0x48] sm:$0xff]
    %v261 = vld [vmem:[%s4 + $0x50] sm:$0xff]
    %v262 = vld [vmem:[%s4 + $0x58] sm:$0xff]
    %v263 = vld [vmem:[%s4 + $0x60] sm:$0xff]
    %v264 = vld [vmem:[%s4 + $0x68] sm:$0xff]
    %v265 = vld [vmem:[%s4 + $0x70] sm:$0xff]
    %v266 = vld [vmem:[%s4 + $0x78] sm:$0xff]
    %v267 = vld [vmem:[%s4 + $0x80] sm:$0xff]
    %v268 = vld [vmem:[%s4 + $0x88] sm:$0xff]
    %v269 = vld [vmem:[%s4 + $0x90] sm:$0xff]
    %v270 = vld [vmem:[%s4 + $0x98] sm:$0xff]
    %v271 = vld [vmem:[%s4 + $0xa0] sm:$0xff]
    %v272 = vld [vmem:[%s4 + $0xa8] sm:$0xff]
    %v273 = vld [vmem:[%s4 + $0xb0] sm:$0xff]
    %v274 = vld [vmem:[%s4 + $0xb8] sm:$0xff]
    %v275 = vld [vmem:[%s4 + $0xc0] sm:$0xff]
    %v276 = vld [vmem:[%s4 + $0xc8] sm:$0xff]
    %v277 = vld [vmem:[%s4 + $0xd0] sm:$0xff]
    %v278 = vld [vmem:[%s4 + $0xd8] sm:$0xff]
    %v279 = vld [vmem:[%s4 + $0xe0] sm:$0xff]
    %v280 = vld [vmem:[%s4 + $0xe8] sm:$0xff]
    %v281 = vld [vmem:[%s4 + $0xf0] sm:$0xff]
    %v282 = vld [vmem:[%s4 + $0xf8] sm:$0xff]
    %v283 = vpack.c.bf16 0.0, 0.0
    %v316 = vunpack.c.l.b16 %v251
    %v317 = vunpack.c.h.b16 %v251
    %v318 = vunpack.c.l.b16 %v252
    %v319 = vunpack.c.h.b16 %v252
    %v320 = vunpack.c.l.b16 %v253
    %v321 = vunpack.c.h.b16 %v253
    %v322 = vunpack.c.l.b16 %v254
    %v323 = vunpack.c.h.b16 %v254
    %v324 = vunpack.c.l.b16 %v255
    %v325 = vunpack.c.h.b16 %v255
    %v326 = vunpack.c.l.b16 %v256
    %v327 = vunpack.c.h.b16 %v256
    %v328 = vunpack.c.l.b16 %v257
    %v329 = vunpack.c.h.b16 %v257
    %v330 = vunpack.c.l.b16 %v258
    %v331 = vunpack.c.h.b16 %v258
    %v332 = vunpack.c.l.b16 %v259
    %v333 = vunpack.c.h.b16 %v259
    %v334 = vunpack.c.l.b16 %v260
    %v335 = vunpack.c.h.b16 %v260
    %v336 = vunpack.c.l.b16 %v261
    %v337 = vunpack.c.h.b16 %v261
    %v338 = vunpack.c.l.b16 %v262
    %v339 = vunpack.c.h.b16 %v262
    %v340 = vunpack.c.l.b16 %v263
    %v341 = vunpack.c.h.b16 %v263
    %v342 = vunpack.c.l.b16 %v264
    %v343 = vunpack.c.h.b16 %v264
    %v344 = vunpack.c.l.b16 %v265
    %v345 = vunpack.c.h.b16 %v265
    %v346 = vunpack.c.l.b16 %v266
    %v347 = vunpack.c.h.b16 %v266
    %v348 = vunpack.c.l.b16 %v267
    %v349 = vunpack.c.h.b16 %v267
    %v350 = vunpack.c.l.b16 %v268
    %v351 = vunpack.c.h.b16 %v268
    %v352 = vunpack.c.l.b16 %v269
    %v353 = vunpack.c.h.b16 %v269
    %v354 = vunpack.c.l.b16 %v270
    %v355 = vunpack.c.h.b16 %v270
    %v356 = vunpack.c.l.b16 %v271
    %v357 = vunpack.c.h.b16 %v271
    %v358 = vunpack.c.l.b16 %v272
    %v359 = vunpack.c.h.b16 %v272
    %v360 = vunpack.c.l.b16 %v273
    %v361 = vunpack.c.h.b16 %v273
    %v362 = vunpack.c.l.b16 %v274
    %v363 = vunpack.c.h.b16 %v274
    %v364 = vunpack.c.l.b16 %v275
    %v365 = vunpack.c.h.b16 %v275
    %v366 = vunpack.c.l.b16 %v276
    %v367 = vunpack.c.h.b16 %v276
    %v368 = vunpack.c.l.b16 %v277
    %v369 = vunpack.c.h.b16 %v277
    %v370 = vunpack.c.l.b16 %v278
    %v371 = vunpack.c.h.b16 %v278
    %v372 = vunpack.c.l.b16 %v279
    %v373 = vunpack.c.h.b16 %v279
    %v374 = vunpack.c.l.b16 %v280
    %v375 = vunpack.c.h.b16 %v280
    %v376 = vunpack.c.l.b16 %v281
    %v377 = vunpack.c.h.b16 %v281
    %v378 = vunpack.c.l.b16 %v282
    %v379 = vunpack.c.h.b16 %v282
    %v380 = vpack.c.b16 %v320, %v316
    %v381 = vpack.c.b16 %v321, %v317
    %v382 = vpack.c.b16 %v322, %v318
    %v383 = vpack.c.b16 %v323, %v319
    %v384 = vpack.c.b16 %v328, %v324
    %v385 = vpack.c.b16 %v329, %v325
    %v386 = vpack.c.b16 %v330, %v326
    %v387 = vpack.c.b16 %v331, %v327
    %v388 = vpack.c.b16 %v336, %v332
    %v389 = vpack.c.b16 %v337, %v333
    %v390 = vpack.c.b16 %v338, %v334
    %v391 = vpack.c.b16 %v339, %v335
    %v392 = vpack.c.b16 %v344, %v340
    %v393 = vpack.c.b16 %v345, %v341
    %v394 = vpack.c.b16 %v346, %v342
    %v395 = vpack.c.b16 %v347, %v343
    %v396 = vpack.c.b16 %v352, %v348
    %v397 = vpack.c.b16 %v353, %v349
    %v398 = vpack.c.b16 %v354, %v350
    %v399 = vpack.c.b16 %v355, %v351
    %v400 = vpack.c.b16 %v360, %v356
    %v401 = vpack.c.b16 %v361, %v357
    %v402 = vpack.c.b16 %v362, %v358
    %v403 = vpack.c.b16 %v363, %v359
    %v404 = vpack.c.b16 %v368, %v364
    %v405 = vpack.c.b16 %v369, %v365
    %v406 = vpack.c.b16 %v370, %v366
    %v407 = vpack.c.b16 %v371, %v367
    %v408 = vpack.c.b16 %v376, %v372
    %v409 = vpack.c.b16 %v377, %v373
    %v410 = vpack.c.b16 %v378, %v374
    %v411 = vpack.c.b16 %v379, %v375
    %444 = vmatpush.bf16.msra.mxu0 %v408
    %445 = vmatpush.bf16.msra.mxu0 %v404
    %446 = vmatpush.bf16.msra.mxu0 %v400
    %447 = vmatpush.bf16.msra.mxu0 %v396
    %448 = vmatpush.bf16.msra.mxu0 %v392
    %449 = vmatpush.bf16.msra.mxu0 %v388
    %450 = vmatpush.bf16.msra.mxu0 %v384
    %451 = vmatpush.bf16.msra.mxu0 %v380
    %452 = vmatmul.bf16.gmra.mxu0 %v283
    %v453 = vpop.f32.mrf.mxu0
    %v454 = vadd.f32 0.0, %v453
    %v455 = vpop.f32.mrf.mxu0
    %456 = vdwg.mxu0
    %457 = vmatpush.bf16.msra.mxu0 %v409
    %458 = vmatpush.bf16.msra.mxu0 %v405
    %459 = vmatpush.bf16.msra.mxu0 %v401
    %460 = vmatpush.bf16.msra.mxu0 %v397
    %461 = vmatpush.bf16.msra.mxu0 %v393
    %462 = vmatpush.bf16.msra.mxu0 %v389
    %463 = vmatpush.bf16.msra.mxu0 %v385
    %464 = vmatpush.bf16.msra.mxu0 %v381
    %465 = vmatmul.bf16.gmra.mxu0 %v283
    %v466 = vpop.f32.mrf.mxu0
    %v467 = vadd.f32 0.0, %v466
    %v468 = vpop.f32.mrf.mxu0
    %469 = vdwg.mxu0
    %470 = vmatpush.bf16.msra.mxu0 %v410
    %471 = vmatpush.bf16.msra.mxu0 %v406
    %472 = vmatpush.bf16.msra.mxu0 %v402
    %473 = vmatpush.bf16.msra.mxu0 %v398
    %474 = vmatpush.bf16.msra.mxu0 %v394
    %475 = vmatpush.bf16.msra.mxu0 %v390
    %476 = vmatpush.bf16.msra.mxu0 %v386
    %477 = vmatpush.bf16.msra.mxu0 %v382
    %478 = vmatmul.bf16.gmra.mxu0 %v283
    %v479 = vpop.f32.mrf.mxu0
    %v480 = vadd.f32 0.0, %v479
    %v481 = vpop.f32.mrf.mxu0
    %482 = vdwg.mxu0
    %483 = vmatpush.bf16.msra.mxu0 %v411
    %484 = vmatpush.bf16.msra.mxu0 %v407
    %485 = vmatpush.bf16.msra.mxu0 %v403
    %486 = vmatpush.bf16.msra.mxu0 %v399
    %487 = vmatpush.bf16.msra.mxu0 %v395
    %488 = vmatpush.bf16.msra.mxu0 %v391
    %489 = vmatpush.bf16.msra.mxu0 %v387
    %490 = vmatpush.bf16.msra.mxu0 %v383
    %491 = vmatmul.bf16.gmra.mxu0 %v283
    %v492 = vpop.f32.mrf.mxu0
    %v493 = vadd.f32 0.0, %v492
    %v494 = vpop.f32.mrf.mxu0
    %495 = vdwg.mxu0
    %v496 = vadd.f32 %v145, %v454
    %v497 = vadd.f32 %v174, %v467
    %v498 = vadd.f32 %v220, %v480
    %v499 = vadd.f32 %v249, %v493
    %v500 = vxor.u32 %v496, 2147483648
    %v501 = vmul.f32 %v500, 1.442695
    %v502 = vpow.pop %v501
    %v503 = vadd.f32 %v502, 1.0
    %v504 = vrcp.pop %v503
    %v505 = vmul.f32 %v503, %v504
    %v506 = vsub.f32 1.0, %v505
    %v507 = vmul.f32 %v504, %v506
    %v508 = vadd.f32 %v504, %v507
    %vm509 = vweird.f32 %v503
    %vm510 = vweird.f32 %v504
    %vm511 = vmor %vm509, %vm510
    %v512 = vsel %vm511, %v504, %v508
    %v513 = vand.u32 2147483647, %v503
    %vm514 = vcmp.eq.f32.partialorder %v513, 8.507059e+37
    %v515 = vand.u32 %v503, 2147483648
    %v516 = vor.u32 1.1754944e-38, %v515
    %v517 = vsel %vm514, %v516, %v512
    %v518 = vmul.f32 1.0, %v517
    %v519 = vtanh.pop %v496
    %v520 = vmul.f32 %v518, 0.0
    %522 = vrot.lane.b32.xlu0 %v519, 64
    %v523 = vpop.permute.xlu0 %522
    %v525 = vmul.f32 %v518, %v523
    %527 = vrot.lane.b32.xlu0 %v525, 32
    %v528 = vpop.permute.xlu0 %527
    %v530 = vadd.f32 %v520, %v528
    %v531 = vtanh.pop %v530
    %533 = vrot.lane.b32.xlu0 %v531, 64
    %v534 = vpop.permute.xlu0 %533
    %v536 = vmul.f32 %v518, %v534
    %v537 = vxor.u32 %v497, 2147483648
    %v538 = vmul.f32 %v537, 1.442695
    %v539 = vpow.pop %v538
    %v540 = vadd.f32 %v539, 1.0
    %v541 = vrcp.pop %v540
    %v542 = vmul.f32 %v540, %v541
    %v543 = vsub.f32 1.0, %v542
    %v544 = vmul.f32 %v541, %v543
    %v545 = vadd.f32 %v541, %v544
    %vm546 = vweird.f32 %v540
    %vm547 = vweird.f32 %v541
    %vm548 = vmor %vm546, %vm547
    %v549 = vsel %vm548, %v541, %v545
    %v550 = vand.u32 2147483647, %v540
    %vm551 = vcmp.eq.f32.partialorder %v550, 8.507059e+37
    %v552 = vand.u32 %v540, 2147483648
    %v553 = vor.u32 1.1754944e-38, %v552
    %v554 = vsel %vm551, %v553, %v549
    %v555 = vmul.f32 1.0, %v554
    %v556 = vtanh.pop %v497
    %v557 = vmul.f32 %v555, 0.0
    %559 = vrot.lane.b32.xlu0 %v556, 64
    %v560 = vpop.permute.xlu0 %559
    %v562 = vmul.f32 %v555, %v560
    %564 = vrot.lane.b32.xlu0 %v562, 32
    %v565 = vpop.permute.xlu0 %564
    %v567 = vadd.f32 %v557, %v565
    %v568 = vtanh.pop %v567
    %570 = vrot.lane.b32.xlu0 %v568, 64
    %v571 = vpop.permute.xlu0 %570
    %v573 = vmul.f32 %v555, %v571
    %v574 = vxor.u32 %v498, 2147483648
    %v575 = vmul.f32 %v574, 1.442695
    %v576 = vpow.pop %v575
    %v577 = vadd.f32 %v576, 1.0
    %v578 = vrcp.pop %v577
    %v579 = vmul.f32 %v577, %v578
    %v580 = vsub.f32 1.0, %v579
    %v581 = vmul.f32 %v578, %v580
    %v582 = vadd.f32 %v578, %v581
    %vm583 = vweird.f32 %v577
    %vm584 = vweird.f32 %v578
    %vm585 = vmor %vm583, %vm584
    %v586 = vsel %vm585, %v578, %v582
    %v587 = vand.u32 2147483647, %v577
    %vm588 = vcmp.eq.f32.partialorder %v587, 8.507059e+37
    %v589 = vand.u32 %v577, 2147483648
    %v590 = vor.u32 1.1754944e-38, %v589
    %v591 = vsel %vm588, %v590, %v586
    %v592 = vmul.f32 1.0, %v591
    %v593 = vtanh.pop %v498
    %v594 = vmul.f32 %v592, 0.0
    %596 = vrot.lane.b32.xlu0 %v593, 64
    %v597 = vpop.permute.xlu0 %596
    %v599 = vmul.f32 %v592, %v597
    %601 = vrot.lane.b32.xlu0 %v599, 32
    %v602 = vpop.permute.xlu0 %601
    %v604 = vadd.f32 %v594, %v602
    %v605 = vtanh.pop %v604
    %607 = vrot.lane.b32.xlu0 %v605, 64
    %v608 = vpop.permute.xlu0 %607
    %v610 = vmul.f32 %v592, %v608
    %v611 = vxor.u32 %v499, 2147483648
    %v612 = vmul.f32 %v611, 1.442695
    %v613 = vpow.pop %v612
    %v614 = vadd.f32 %v613, 1.0
    %v615 = vrcp.pop %v614
    %v616 = vmul.f32 %v614, %v615
    %v617 = vsub.f32 1.0, %v616
    %v618 = vmul.f32 %v615, %v617
    %v619 = vadd.f32 %v615, %v618
    %vm620 = vweird.f32 %v614
    %vm621 = vweird.f32 %v615
    %vm622 = vmor %vm620, %vm621
    %v623 = vsel %vm622, %v615, %v619
    %v624 = vand.u32 2147483647, %v614
    %vm625 = vcmp.eq.f32.partialorder %v624, 8.507059e+37
    %v626 = vand.u32 %v614, 2147483648
    %v627 = vor.u32 1.1754944e-38, %v626
    %v628 = vsel %vm625, %v627, %v623
    %v629 = vmul.f32 1.0, %v628
    %v630 = vtanh.pop %v499
    %v631 = vmul.f32 %v629, 0.0
    %633 = vrot.lane.b32.xlu0 %v630, 64
    %v634 = vpop.permute.xlu0 %633
    %v636 = vmul.f32 %v629, %v634
    %638 = vrot.lane.b32.xlu0 %v636, 32
    %v639 = vpop.permute.xlu0 %638
    %v641 = vadd.f32 %v631, %v639
    %v642 = vtanh.pop %v641
    %644 = vrot.lane.b32.xlu0 %v642, 64
    %v645 = vpop.permute.xlu0 %644
    %v647 = vmul.f32 %v629, %v645
    %649 = vrot.lane.b32.xlu0 %v536, 32
    %v650 = vpop.permute.xlu0 %649
    %653 = vrot.lane.b32.xlu0 %v573, 64
    %v654 = vpop.permute.xlu0 %653
    %657 = vrot.lane.b32.xlu0 %v610, 96
    %v658 = vpop.permute.xlu0 %657
    %vm660 = vcmask 261120
    %v661 = vsel %vm660, %v650, %v654
    %vm662 = vcmask 523264
    %v663 = vsel %vm662, %v661, %v658
    %vm664 = vcmask 785408
    %v665 = vsel %vm664, %v663, %v647
    %v666 = vpack.c.bf16 %v665, %v665
    %667 = vmatpush.bf16.msra.mxu0 %v408
    %668 = vmatpush.bf16.msra.mxu0 %v404
    %669 = vmatpush.bf16.msra.mxu0 %v400
    %670 = vmatpush.bf16.msra.mxu0 %v396
    %671 = vmatpush.bf16.msra.mxu0 %v392
    %672 = vmatpush.bf16.msra.mxu0 %v388
    %673 = vmatpush.bf16.msra.mxu0 %v384
    %674 = vmatpush.bf16.msra.mxu0 %v380
    %675 = vmatmul.bf16.gmra.mxu0 %v666
    %v676 = vpop.f32.mrf.mxu0
    %v677 = vadd.f32 0.0, %v676
    %v678 = vpop.f32.mrf.mxu0
    %679 = vdwg.mxu0
    %680 = vmatpush.bf16.msra.mxu0 %v409
    %681 = vmatpush.bf16.msra.mxu0 %v405
    %682 = vmatpush.bf16.msra.mxu0 %v401
    %683 = vmatpush.bf16.msra.mxu0 %v397
    %684 = vmatpush.bf16.msra.mxu0 %v393
    %685 = vmatpush.bf16.msra.mxu0 %v389
    %686 = vmatpush.bf16.msra.mxu0 %v385
    %687 = vmatpush.bf16.msra.mxu0 %v381
    %688 = vmatmul.bf16.gmra.mxu0 %v666
    %v689 = vpop.f32.mrf.mxu0
    %v690 = vadd.f32 0.0, %v689
    %v691 = vpop.f32.mrf.mxu0
    %692 = vdwg.mxu0
    %693 = vmatpush.bf16.msra.mxu0 %v410
    %694 = vmatpush.bf16.msra.mxu0 %v406
    %695 = vmatpush.bf16.msra.mxu0 %v402
    %696 = vmatpush.bf16.msra.mxu0 %v398
    %697 = vmatpush.bf16.msra.mxu0 %v394
    %698 = vmatpush.bf16.msra.mxu0 %v390
    %699 = vmatpush.bf16.msra.mxu0 %v386
    %700 = vmatpush.bf16.msra.mxu0 %v382
    %701 = vmatmul.bf16.gmra.mxu0 %v666
    %v702 = vpop.f32.mrf.mxu0
    %v703 = vadd.f32 0.0, %v702
    %v704 = vpop.f32.mrf.mxu0
    %705 = vdwg.mxu0
    %706 = vmatpush.bf16.msra.mxu0 %v411
    %707 = vmatpush.bf16.msra.mxu0 %v407
    %708 = vmatpush.bf16.msra.mxu0 %v403
    %709 = vmatpush.bf16.msra.mxu0 %v399
    %710 = vmatpush.bf16.msra.mxu0 %v395
    %711 = vmatpush.bf16.msra.mxu0 %v391
    %712 = vmatpush.bf16.msra.mxu0 %v387
    %713 = vmatpush.bf16.msra.mxu0 %v383
    %714 = vmatmul.bf16.gmra.mxu0 %v666
    %v715 = vpop.f32.mrf.mxu0
    %v716 = vadd.f32 0.0, %v715
    %v717 = vpop.f32.mrf.mxu0
    %718 = vdwg.mxu0
    %v719 = vadd.f32 %v147, %v677
    %v720 = vadd.f32 %v176, %v690
    %v721 = vadd.f32 %v218, %v703
    %v722 = vadd.f32 %v247, %v716
    %v723 = vxor.u32 %v719, 2147483648
    %v724 = vmul.f32 %v723, 1.442695
    %v725 = vpow.pop %v724
    %v726 = vadd.f32 %v725, 1.0
    %v727 = vrcp.pop %v726
    %v728 = vmul.f32 %v726, %v727
    %v729 = vsub.f32 1.0, %v728
    %v730 = vmul.f32 %v727, %v729
    %v731 = vadd.f32 %v727, %v730
    %vm732 = vweird.f32 %v726
    %vm733 = vweird.f32 %v727
    %vm734 = vmor %vm732, %vm733
    %v735 = vsel %vm734, %v727, %v731
    %v736 = vand.u32 2147483647, %v726
    %vm737 = vcmp.eq.f32.partialorder %v736, 8.507059e+37
    %v738 = vand.u32 %v726, 2147483648
    %v739 = vor.u32 1.1754944e-38, %v738
    %v740 = vsel %vm737, %v739, %v735
    %v741 = vmul.f32 1.0, %v740
    %v742 = vtanh.pop %v719
    %v743 = vmul.f32 %v741, %v530
    %745 = vrot.lane.b32.xlu0 %v742, 64
    %v746 = vpop.permute.xlu0 %745
    %v748 = vmul.f32 %v741, %v746
    %750 = vrot.lane.b32.xlu0 %v748, 32
    %v751 = vpop.permute.xlu0 %750
    %v753 = vadd.f32 %v743, %v751
    %v754 = vtanh.pop %v753
    %756 = vrot.lane.b32.xlu0 %v754, 64
    %v757 = vpop.permute.xlu0 %756
    %v759 = vmul.f32 %v741, %v757
    %v760 = vxor.u32 %v720, 2147483648
    %v761 = vmul.f32 %v760, 1.442695
    %v762 = vpow.pop %v761
    %v763 = vadd.f32 %v762, 1.0
    %v764 = vrcp.pop %v763
    %v765 = vmul.f32 %v763, %v764
    %v766 = vsub.f32 1.0, %v765
    %v767 = vmul.f32 %v764, %v766
    %v768 = vadd.f32 %v764, %v767
    %vm769 = vweird.f32 %v763
    %vm770 = vweird.f32 %v764
    %vm771 = vmor %vm769, %vm770
    %v772 = vsel %vm771, %v764, %v768
    %v773 = vand.u32 2147483647, %v763
    %vm774 = vcmp.eq.f32.partialorder %v773, 8.507059e+37
    %v775 = vand.u32 %v763, 2147483648
    %v776 = vor.u32 1.1754944e-38, %v775
    %v777 = vsel %vm774, %v776, %v772
    %v778 = vmul.f32 1.0, %v777
    %v779 = vtanh.pop %v720
    %v780 = vmul.f32 %v778, %v567
    %782 = vrot.lane.b32.xlu0 %v779, 64
    %v783 = vpop.permute.xlu0 %782
    %v785 = vmul.f32 %v778, %v783
    %787 = vrot.lane.b32.xlu0 %v785, 32
    %v788 = vpop.permute.xlu0 %787
    %v790 = vadd.f32 %v780, %v788
    %v791 = vtanh.pop %v790
    %793 = vrot.lane.b32.xlu0 %v791, 64
    %v794 = vpop.permute.xlu0 %793
    %v796 = vmul.f32 %v778, %v794
    %v797 = vxor.u32 %v721, 2147483648
    %v798 = vmul.f32 %v797, 1.442695
    %v799 = vpow.pop %v798
    %v800 = vadd.f32 %v799, 1.0
    %v801 = vrcp.pop %v800
    %v802 = vmul.f32 %v800, %v801
    %v803 = vsub.f32 1.0, %v802
    %v804 = vmul.f32 %v801, %v803
    %v805 = vadd.f32 %v801, %v804
    %vm806 = vweird.f32 %v800
    %vm807 = vweird.f32 %v801
    %vm808 = vmor %vm806, %vm807
    %v809 = vsel %vm808, %v801, %v805
    %v810 = vand.u32 2147483647, %v800
    %vm811 = vcmp.eq.f32.partialorder %v810, 8.507059e+37
    %v812 = vand.u32 %v800, 2147483648
    %v813 = vor.u32 1.1754944e-38, %v812
    %v814 = vsel %vm811, %v813, %v809
    %v815 = vmul.f32 1.0, %v814
    %v816 = vtanh.pop %v721
    %v817 = vmul.f32 %v815, %v604
    %819 = vrot.lane.b32.xlu0 %v816, 64
    %v820 = vpop.permute.xlu0 %819
    %v822 = vmul.f32 %v815, %v820
    %824 = vrot.lane.b32.xlu0 %v822, 32
    %v825 = vpop.permute.xlu0 %824
    %v827 = vadd.f32 %v817, %v825
    %v828 = vtanh.pop %v827
    %830 = vrot.lane.b32.xlu0 %v828, 64
    %v831 = vpop.permute.xlu0 %830
    %v833 = vmul.f32 %v815, %v831
    %v834 = vxor.u32 %v722, 2147483648
    %v835 = vmul.f32 %v834, 1.442695
    %v836 = vpow.pop %v835
    %v837 = vadd.f32 %v836, 1.0
    %v838 = vrcp.pop %v837
    %v839 = vmul.f32 %v837, %v838
    %v840 = vsub.f32 1.0, %v839
    %v841 = vmul.f32 %v838, %v840
    %v842 = vadd.f32 %v838, %v841
    %vm843 = vweird.f32 %v837
    %vm844 = vweird.f32 %v838
    %vm845 = vmor %vm843, %vm844
    %v846 = vsel %vm845, %v838, %v842
    %v847 = vand.u32 2147483647, %v837
    %vm848 = vcmp.eq.f32.partialorder %v847, 8.507059e+37
    %v849 = vand.u32 %v837, 2147483648
    %v850 = vor.u32 1.1754944e-38, %v849
    %v851 = vsel %vm848, %v850, %v846
    %v852 = vmul.f32 1.0, %v851
    %v853 = vtanh.pop %v722
    %v854 = vmul.f32 %v852, %v641
    %856 = vrot.lane.b32.xlu0 %v853, 64
    %v857 = vpop.permute.xlu0 %856
    %v859 = vmul.f32 %v852, %v857
    %861 = vrot.lane.b32.xlu0 %v859, 32
    %v862 = vpop.permute.xlu0 %861
    %v864 = vadd.f32 %v854, %v862
    %v865 = vtanh.pop %v864
    %867 = vrot.lane.b32.xlu0 %v865, 64
    %v868 = vpop.permute.xlu0 %867
    %v870 = vmul.f32 %v852, %v868
    %872 = vrot.lane.b32.xlu0 %v759, 32
    %v873 = vpop.permute.xlu0 %872
    %876 = vrot.lane.b32.xlu0 %v796, 64
    %v877 = vpop.permute.xlu0 %876
    %880 = vrot.lane.b32.xlu0 %v833, 96
    %v881 = vpop.permute.xlu0 %880
    %v883 = vsel %vm660, %v873, %v877
    %v884 = vsel %vm662, %v883, %v881
    %v885 = vsel %vm664, %v884, %v870
    %v886 = vpack.c.bf16 %v885, %v885
    %887 = vmatpush.bf16.msra.mxu0 %v408
    %888 = vmatpush.bf16.msra.mxu0 %v404
    %889 = vmatpush.bf16.msra.mxu0 %v400
    %890 = vmatpush.bf16.msra.mxu0 %v396
    %891 = vmatpush.bf16.msra.mxu0 %v392
    %892 = vmatpush.bf16.msra.mxu0 %v388
    %893 = vmatpush.bf16.msra.mxu0 %v384
    %894 = vmatpush.bf16.msra.mxu0 %v380
    %895 = vmatmul.bf16.gmra.mxu0 %v886
    %v896 = vpop.f32.mrf.mxu0
    %v897 = vadd.f32 0.0, %v896
    %v898 = vpop.f32.mrf.mxu0
    %899 = vdwg.mxu0
    %900 = vmatpush.bf16.msra.mxu0 %v409
    %901 = vmatpush.bf16.msra.mxu0 %v405
    %902 = vmatpush.bf16.msra.mxu0 %v401
    %903 = vmatpush.bf16.msra.mxu0 %v397
    %904 = vmatpush.bf16.msra.mxu0 %v393
    %905 = vmatpush.bf16.msra.mxu0 %v389
    %906 = vmatpush.bf16.msra.mxu0 %v385
    %907 = vmatpush.bf16.msra.mxu0 %v381
    %908 = vmatmul.bf16.gmra.mxu0 %v886
    %v909 = vpop.f32.mrf.mxu0
    %v910 = vadd.f32 0.0, %v909
    %v911 = vpop.f32.mrf.mxu0
    %912 = vdwg.mxu0
    %913 = vmatpush.bf16.msra.mxu0 %v410
    %914 = vmatpush.bf16.msra.mxu0 %v406
    %915 = vmatpush.bf16.msra.mxu0 %v402
    %916 = vmatpush.bf16.msra.mxu0 %v398
    %917 = vmatpush.bf16.msra.mxu0 %v394
    %918 = vmatpush.bf16.msra.mxu0 %v390
    %919 = vmatpush.bf16.msra.mxu0 %v386
    %920 = vmatpush.bf16.msra.mxu0 %v382
    %921 = vmatmul.bf16.gmra.mxu0 %v886
    %v922 = vpop.f32.mrf.mxu0
    %v923 = vadd.f32 0.0, %v922
    %v924 = vpop.f32.mrf.mxu0
    %925 = vdwg.mxu0
    %926 = vmatpush.bf16.msra.mxu0 %v411
    %927 = vmatpush.bf16.msra.mxu0 %v407
    %928 = vmatpush.bf16.msra.mxu0 %v403
    %929 = vmatpush.bf16.msra.mxu0 %v399
    %930 = vmatpush.bf16.msra.mxu0 %v395
    %931 = vmatpush.bf16.msra.mxu0 %v391
    %932 = vmatpush.bf16.msra.mxu0 %v387
    %933 = vmatpush.bf16.msra.mxu0 %v383
    %934 = vmatmul.bf16.gmra.mxu0 %v886
    %v935 = vpop.f32.mrf.mxu0
    %v936 = vadd.f32 0.0, %v935
    %v937 = vpop.f32.mrf.mxu0
    %938 = vdwg.mxu0
    %v939 = vadd.f32 %v150, %v897
    %v940 = vadd.f32 %v179, %v910
    %v941 = vadd.f32 %v215, %v923
    %v942 = vadd.f32 %v244, %v936
    %v943 = vxor.u32 %v939, 2147483648
    %v944 = vmul.f32 %v943, 1.442695
    %v945 = vpow.pop %v944
    %v946 = vadd.f32 %v945, 1.0
    %v947 = vrcp.pop %v946
    %v948 = vmul.f32 %v946, %v947
    %v949 = vsub.f32 1.0, %v948
    %v950 = vmul.f32 %v947, %v949
    %v951 = vadd.f32 %v947, %v950
    %vm952 = vweird.f32 %v946
    %vm953 = vweird.f32 %v947
    %vm954 = vmor %vm952, %vm953
    %v955 = vsel %vm954, %v947, %v951
    %v956 = vand.u32 2147483647, %v946
    %vm957 = vcmp.eq.f32.partialorder %v956, 8.507059e+37
    %v958 = vand.u32 %v946, 2147483648
    %v959 = vor.u32 1.1754944e-38, %v958
    %v960 = vsel %vm957, %v959, %v955
    %v961 = vmul.f32 1.0, %v960
    %v962 = vtanh.pop %v939
    %v963 = vmul.f32 %v961, %v753
    %965 = vrot.lane.b32.xlu0 %v962, 64
    %v966 = vpop.permute.xlu0 %965
    %v968 = vmul.f32 %v961, %v966
    %970 = vrot.lane.b32.xlu0 %v968, 32
    %v971 = vpop.permute.xlu0 %970
    %v973 = vadd.f32 %v963, %v971
    %v974 = vtanh.pop %v973
    %976 = vrot.lane.b32.xlu0 %v974, 64
    %v977 = vpop.permute.xlu0 %976
    %v979 = vmul.f32 %v961, %v977
    %v980 = vxor.u32 %v940, 2147483648
    %v981 = vmul.f32 %v980, 1.442695
    %v982 = vpow.pop %v981
    %v983 = vadd.f32 %v982, 1.0
    %v984 = vrcp.pop %v983
    %v985 = vmul.f32 %v983, %v984
    %v986 = vsub.f32 1.0, %v985
    %v987 = vmul.f32 %v984, %v986
    %v988 = vadd.f32 %v984, %v987
    %vm989 = vweird.f32 %v983
    %vm990 = vweird.f32 %v984
    %vm991 = vmor %vm989, %vm990
    %v992 = vsel %vm991, %v984, %v988
    %v993 = vand.u32 2147483647, %v983
    %vm994 = vcmp.eq.f32.partialorder %v993, 8.507059e+37
    %v995 = vand.u32 %v983, 2147483648
    %v996 = vor.u32 1.1754944e-38, %v995
    %v997 = vsel %vm994, %v996, %v992
    %v998 = vmul.f32 1.0, %v997
    %v999 = vtanh.pop %v940
    %v1000 = vmul.f32 %v998, %v790
    %1002 = vrot.lane.b32.xlu0 %v999, 64
    %v1003 = vpop.permute.xlu0 %1002
    %v1005 = vmul.f32 %v998, %v1003
    %1007 = vrot.lane.b32.xlu0 %v1005, 32
    %v1008 = vpop.permute.xlu0 %1007
    %v1010 = vadd.f32 %v1000, %v1008
    %v1011 = vtanh.pop %v1010
    %1013 = vrot.lane.b32.xlu0 %v1011, 64
    %v1014 = vpop.permute.xlu0 %1013
    %v1016 = vmul.f32 %v998, %v1014
    %v1017 = vxor.u32 %v941, 2147483648
    %v1018 = vmul.f32 %v1017, 1.442695
    %v1019 = vpow.pop %v1018
    %v1020 = vadd.f32 %v1019, 1.0
    %v1021 = vrcp.pop %v1020
    %v1022 = vmul.f32 %v1020, %v1021
    %v1023 = vsub.f32 1.0, %v1022
    %v1024 = vmul.f32 %v1021, %v1023
    %v1025 = vadd.f32 %v1021, %v1024
    %vm1026 = vweird.f32 %v1020
    %vm1027 = vweird.f32 %v1021
    %vm1028 = vmor %vm1026, %vm1027
    %v1029 = vsel %vm1028, %v1021, %v1025
    %v1030 = vand.u32 2147483647, %v1020
    %vm1031 = vcmp.eq.f32.partialorder %v1030, 8.507059e+37
    %v1032 = vand.u32 %v1020, 2147483648
    %v1033 = vor.u32 1.1754944e-38, %v1032
    %v1034 = vsel %vm1031, %v1033, %v1029
    %v1035 = vmul.f32 1.0, %v1034
    %v1036 = vtanh.pop %v941
    %v1037 = vmul.f32 %v1035, %v827
    %1039 = vrot.lane.b32.xlu0 %v1036, 64
    %v1040 = vpop.permute.xlu0 %1039
    %v1042 = vmul.f32 %v1035, %v1040
    %1044 = vrot.lane.b32.xlu0 %v1042, 32
    %v1045 = vpop.permute.xlu0 %1044
    %v1047 = vadd.f32 %v1037, %v1045
    %v1048 = vtanh.pop %v1047
    %1050 = vrot.lane.b32.xlu0 %v1048, 64
    %v1051 = vpop.permute.xlu0 %1050
    %v1053 = vmul.f32 %v1035, %v1051
    %v1054 = vxor.u32 %v942, 2147483648
    %v1055 = vmul.f32 %v1054, 1.442695
    %v1056 = vpow.pop %v1055
    %v1057 = vadd.f32 %v1056, 1.0
    %v1058 = vrcp.pop %v1057
    %v1059 = vmul.f32 %v1057, %v1058
    %v1060 = vsub.f32 1.0, %v1059
    %v1061 = vmul.f32 %v1058, %v1060
    %v1062 = vadd.f32 %v1058, %v1061
    %vm1063 = vweird.f32 %v1057
    %vm1064 = vweird.f32 %v1058
    %vm1065 = vmor %vm1063, %vm1064
    %v1066 = vsel %vm1065, %v1058, %v1062
    %v1067 = vand.u32 2147483647, %v1057
    %vm1068 = vcmp.eq.f32.partialorder %v1067, 8.507059e+37
    %v1069 = vand.u32 %v1057, 2147483648
    %v1070 = vor.u32 1.1754944e-38, %v1069
    %v1071 = vsel %vm1068, %v1070, %v1066
    %v1072 = vmul.f32 1.0, %v1071
    %v1073 = vtanh.pop %v942
    %v1074 = vmul.f32 %v1072, %v864
    %1076 = vrot.lane.b32.xlu0 %v1073, 64
    %v1077 = vpop.permute.xlu0 %1076
    %v1079 = vmul.f32 %v1072, %v1077
    %1081 = vrot.lane.b32.xlu0 %v1079, 32
    %v1082 = vpop.permute.xlu0 %1081
    %v1084 = vadd.f32 %v1074, %v1082
    %v1085 = vtanh.pop %v1084
    %1087 = vrot.lane.b32.xlu0 %v1085, 64
    %v1088 = vpop.permute.xlu0 %1087
    %v1090 = vmul.f32 %v1072, %v1088
    %1092 = vrot.lane.b32.xlu0 %v979, 32
    %v1093 = vpop.permute.xlu0 %1092
    %1096 = vrot.lane.b32.xlu0 %v1016, 64
    %v1097 = vpop.permute.xlu0 %1096
    %1100 = vrot.lane.b32.xlu0 %v1053, 96
    %v1101 = vpop.permute.xlu0 %1100
    %v1103 = vsel %vm660, %v1093, %v1097
    %v1104 = vsel %vm662, %v1103, %v1101
    %v1105 = vsel %vm664, %v1104, %v1090
    %v1106 = vpack.c.bf16 %v1105, %v1105
    %1107 = vmatpush.bf16.msra.mxu0 %v408
    %1108 = vmatpush.bf16.msra.mxu0 %v404
    %1109 = vmatpush.bf16.msra.mxu0 %v400
    %1110 = vmatpush.bf16.msra.mxu0 %v396
    %1111 = vmatpush.bf16.msra.mxu0 %v392
    %1112 = vmatpush.bf16.msra.mxu0 %v388
    %1113 = vmatpush.bf16.msra.mxu0 %v384
    %1114 = vmatpush.bf16.msra.mxu0 %v380
    %1115 = vmatmul.bf16.gmra.mxu0 %v1106
    %v1116 = vpop.f32.mrf.mxu0
    %v1117 = vadd.f32 0.0, %v1116
    %v1118 = vpop.f32.mrf.mxu0
    %1119 = vdwg.mxu0
    %1120 = vmatpush.bf16.msra.mxu0 %v409
    %1121 = vmatpush.bf16.msra.mxu0 %v405
    %1122 = vmatpush.bf16.msra.mxu0 %v401
    %1123 = vmatpush.bf16.msra.mxu0 %v397
    %1124 = vmatpush.bf16.msra.mxu0 %v393
    %1125 = vmatpush.bf16.msra.mxu0 %v389
    %1126 = vmatpush.bf16.msra.mxu0 %v385
    %1127 = vmatpush.bf16.msra.mxu0 %v381
    %1128 = vmatmul.bf16.gmra.mxu0 %v1106
    %v1129 = vpop.f32.mrf.mxu0
    %v1130 = vadd.f32 0.0, %v1129
    %v1131 = vpop.f32.mrf.mxu0
    %1132 = vdwg.mxu0
    %1133 = vmatpush.bf16.msra.mxu0 %v410
    %1134 = vmatpush.bf16.msra.mxu0 %v406
    %1135 = vmatpush.bf16.msra.mxu0 %v402
    %1136 = vmatpush.bf16.msra.mxu0 %v398
    %1137 = vmatpush.bf16.msra.mxu0 %v394
    %1138 = vmatpush.bf16.msra.mxu0 %v390
    %1139 = vmatpush.bf16.msra.mxu0 %v386
    %1140 = vmatpush.bf16.msra.mxu0 %v382
    %1141 = vmatmul.bf16.gmra.mxu0 %v1106
    %v1142 = vpop.f32.mrf.mxu0
    %v1143 = vadd.f32 0.0, %v1142
    %v1144 = vpop.f32.mrf.mxu0
    %1145 = vdwg.mxu0
    %1146 = vmatpush.bf16.msra.mxu0 %v411
    %1147 = vmatpush.bf16.msra.mxu0 %v407
    %1148 = vmatpush.bf16.msra.mxu0 %v403
    %1149 = vmatpush.bf16.msra.mxu0 %v399
    %1150 = vmatpush.bf16.msra.mxu0 %v395
    %1151 = vmatpush.bf16.msra.mxu0 %v391
    %1152 = vmatpush.bf16.msra.mxu0 %v387
    %1153 = vmatpush.bf16.msra.mxu0 %v383
    %1154 = vmatmul.bf16.gmra.mxu0 %v1106
    %v1155 = vpop.f32.mrf.mxu0
    %v1156 = vadd.f32 0.0, %v1155
    %v1157 = vpop.f32.mrf.mxu0
    %1158 = vdwg.mxu0
    %v1159 = vadd.f32 %v152, %v1117
    %v1160 = vadd.f32 %v181, %v1130
    %v1161 = vadd.f32 %v213, %v1143
    %v1162 = vadd.f32 %v242, %v1156
    %v1163 = vxor.u32 %v1159, 2147483648
    %v1164 = vmul.f32 %v1163, 1.442695
    %v1165 = vpow.pop %v1164
    %v1166 = vadd.f32 %v1165, 1.0
    %v1167 = vrcp.pop %v1166
    %v1168 = vmul.f32 %v1166, %v1167
    %v1169 = vsub.f32 1.0, %v1168
    %v1170 = vmul.f32 %v1167, %v1169
    %v1171 = vadd.f32 %v1167, %v1170
    %vm1172 = vweird.f32 %v1166
    %vm1173 = vweird.f32 %v1167
    %vm1174 = vmor %vm1172, %vm1173
    %v1175 = vsel %vm1174, %v1167, %v1171
    %v1176 = vand.u32 2147483647, %v1166
    %vm1177 = vcmp.eq.f32.partialorder %v1176, 8.507059e+37
    %v1178 = vand.u32 %v1166, 2147483648
    %v1179 = vor.u32 1.1754944e-38, %v1178
    %v1180 = vsel %vm1177, %v1179, %v1175
    %v1181 = vmul.f32 1.0, %v1180
    %v1182 = vtanh.pop %v1159
    %v1183 = vmul.f32 %v1181, %v973
    %1185 = vrot.lane.b32.xlu0 %v1182, 64
    %v1186 = vpop.permute.xlu0 %1185
    %v1188 = vmul.f32 %v1181, %v1186
    %1190 = vrot.lane.b32.xlu0 %v1188, 32
    %v1191 = vpop.permute.xlu0 %1190
    %v1193 = vadd.f32 %v1183, %v1191
    %v1194 = vtanh.pop %v1193
    %1196 = vrot.lane.b32.xlu0 %v1194, 64
    %v1197 = vpop.permute.xlu0 %1196
    %v1199 = vmul.f32 %v1181, %v1197
    %v1200 = vxor.u32 %v1160, 2147483648
    %v1201 = vmul.f32 %v1200, 1.442695
    %v1202 = vpow.pop %v1201
    %v1203 = vadd.f32 %v1202, 1.0
    %v1204 = vrcp.pop %v1203
    %v1205 = vmul.f32 %v1203, %v1204
    %v1206 = vsub.f32 1.0, %v1205
    %v1207 = vmul.f32 %v1204, %v1206
    %v1208 = vadd.f32 %v1204, %v1207
    %vm1209 = vweird.f32 %v1203
    %vm1210 = vweird.f32 %v1204
    %vm1211 = vmor %vm1209, %vm1210
    %v1212 = vsel %vm1211, %v1204, %v1208
    %v1213 = vand.u32 2147483647, %v1203
    %vm1214 = vcmp.eq.f32.partialorder %v1213, 8.507059e+37
    %v1215 = vand.u32 %v1203, 2147483648
    %v1216 = vor.u32 1.1754944e-38, %v1215
    %v1217 = vsel %vm1214, %v1216, %v1212
    %v1218 = vmul.f32 1.0, %v1217
    %v1219 = vtanh.pop %v1160
    %v1220 = vmul.f32 %v1218, %v1010
    %1222 = vrot.lane.b32.xlu0 %v1219, 64
    %v1223 = vpop.permute.xlu0 %1222
    %v1225 = vmul.f32 %v1218, %v1223
    %1227 = vrot.lane.b32.xlu0 %v1225, 32
    %v1228 = vpop.permute.xlu0 %1227
    %v1230 = vadd.f32 %v1220, %v1228
    %v1231 = vtanh.pop %v1230
    %1233 = vrot.lane.b32.xlu0 %v1231, 64
    %v1234 = vpop.permute.xlu0 %1233
    %v1236 = vmul.f32 %v1218, %v1234
    %v1237 = vxor.u32 %v1161, 2147483648
    %v1238 = vmul.f32 %v1237, 1.442695
    %v1239 = vpow.pop %v1238
    %v1240 = vadd.f32 %v1239, 1.0
    %v1241 = vrcp.pop %v1240
    %v1242 = vmul.f32 %v1240, %v1241
    %v1243 = vsub.f32 1.0, %v1242
    %v1244 = vmul.f32 %v1241, %v1243
    %v1245 = vadd.f32 %v1241, %v1244
    %vm1246 = vweird.f32 %v1240
    %vm1247 = vweird.f32 %v1241
    %vm1248 = vmor %vm1246, %vm1247
    %v1249 = vsel %vm1248, %v1241, %v1245
    %v1250 = vand.u32 2147483647, %v1240
    %vm1251 = vcmp.eq.f32.partialorder %v1250, 8.507059e+37
    %v1252 = vand.u32 %v1240, 2147483648
    %v1253 = vor.u32 1.1754944e-38, %v1252
    %v1254 = vsel %vm1251, %v1253, %v1249
    %v1255 = vmul.f32 1.0, %v1254
    %v1256 = vtanh.pop %v1161
    %v1257 = vmul.f32 %v1255, %v1047
    %1259 = vrot.lane.b32.xlu0 %v1256, 64
    %v1260 = vpop.permute.xlu0 %1259
    %v1262 = vmul.f32 %v1255, %v1260
    %1264 = vrot.lane.b32.xlu0 %v1262, 32
    %v1265 = vpop.permute.xlu0 %1264
    %v1267 = vadd.f32 %v1257, %v1265
    %v1268 = vtanh.pop %v1267
    %1270 = vrot.lane.b32.xlu0 %v1268, 64
    %v1271 = vpop.permute.xlu0 %1270
    %v1273 = vmul.f32 %v1255, %v1271
    %v1274 = vxor.u32 %v1162, 2147483648
    %v1275 = vmul.f32 %v1274, 1.442695
    %v1276 = vpow.pop %v1275
    %v1277 = vadd.f32 %v1276, 1.0
    %v1278 = vrcp.pop %v1277
    %v1279 = vmul.f32 %v1277, %v1278
    %v1280 = vsub.f32 1.0, %v1279
    %v1281 = vmul.f32 %v1278, %v1280
    %v1282 = vadd.f32 %v1278, %v1281
    %vm1283 = vweird.f32 %v1277
    %vm1284 = vweird.f32 %v1278
    %vm1285 = vmor %vm1283, %vm1284
    %v1286 = vsel %vm1285, %v1278, %v1282
    %v1287 = vand.u32 2147483647, %v1277
    %vm1288 = vcmp.eq.f32.partialorder %v1287, 8.507059e+37
    %v1289 = vand.u32 %v1277, 2147483648
    %v1290 = vor.u32 1.1754944e-38, %v1289
    %v1291 = vsel %vm1288, %v1290, %v1286
    %v1292 = vmul.f32 1.0, %v1291
    %v1293 = vtanh.pop %v1162
    %v1294 = vmul.f32 %v1292, %v1084
    %1296 = vrot.lane.b32.xlu0 %v1293, 64
    %v1297 = vpop.permute.xlu0 %1296
    %v1299 = vmul.f32 %v1292, %v1297
    %1301 = vrot.lane.b32.xlu0 %v1299, 32
    %v1302 = vpop.permute.xlu0 %1301
    %v1304 = vadd.f32 %v1294, %v1302
    %v1305 = vtanh.pop %v1304
    %1307 = vrot.lane.b32.xlu0 %v1305, 64
    %v1308 = vpop.permute.xlu0 %1307
    %v1310 = vmul.f32 %v1292, %v1308
    %1312 = vrot.lane.b32.xlu0 %v1199, 32
    %v1313 = vpop.permute.xlu0 %1312
    %1316 = vrot.lane.b32.xlu0 %v1236, 64
    %v1317 = vpop.permute.xlu0 %1316
    %1320 = vrot.lane.b32.xlu0 %v1273, 96
    %v1321 = vpop.permute.xlu0 %1320
    %v1323 = vsel %vm660, %v1313, %v1317
    %v1324 = vsel %vm662, %v1323, %v1321
    %v1325 = vsel %vm664, %v1324, %v1310
    %v1326 = vpack.c.bf16 %v1325, %v1325
    %1327 = vmatpush.bf16.msra.mxu0 %v408
    %1328 = vmatpush.bf16.msra.mxu0 %v404
    %1329 = vmatpush.bf16.msra.mxu0 %v400
    %1330 = vmatpush.bf16.msra.mxu0 %v396
    %1331 = vmatpush.bf16.msra.mxu0 %v392
    %1332 = vmatpush.bf16.msra.mxu0 %v388
    %1333 = vmatpush.bf16.msra.mxu0 %v384
    %1334 = vmatpush.bf16.msra.mxu0 %v380
    %1335 = vmatmul.bf16.gmra.mxu0 %v1326
    %v1336 = vpop.f32.mrf.mxu0
    %v1337 = vadd.f32 0.0, %v1336
    %v1338 = vpop.f32.mrf.mxu0
    %1339 = vdwg.mxu0
    %1340 = vmatpush.bf16.msra.mxu0 %v409
    %1341 = vmatpush.bf16.msra.mxu0 %v405
    %1342 = vmatpush.bf16.msra.mxu0 %v401
    %1343 = vmatpush.bf16.msra.mxu0 %v397
    %1344 = vmatpush.bf16.msra.mxu0 %v393
    %1345 = vmatpush.bf16.msra.mxu0 %v389
    %1346 = vmatpush.bf16.msra.mxu0 %v385
    %1347 = vmatpush.bf16.msra.mxu0 %v381
    %1348 = vmatmul.bf16.gmra.mxu0 %v1326
    %v1349 = vpop.f32.mrf.mxu0
    %v1350 = vadd.f32 0.0, %v1349
    %v1351 = vpop.f32.mrf.mxu0
    %1352 = vdwg.mxu0
    %1353 = vmatpush.bf16.msra.mxu0 %v410
    %1354 = vmatpush.bf16.msra.mxu0 %v406
    %1355 = vmatpush.bf16.msra.mxu0 %v402
    %1356 = vmatpush.bf16.msra.mxu0 %v398
    %1357 = vmatpush.bf16.msra.mxu0 %v394
    %1358 = vmatpush.bf16.msra.mxu0 %v390
    %1359 = vmatpush.bf16.msra.mxu0 %v386
    %1360 = vmatpush.bf16.msra.mxu0 %v382
    %1361 = vmatmul.bf16.gmra.mxu0 %v1326
    %v1362 = vpop.f32.mrf.mxu0
    %v1363 = vadd.f32 0.0, %v1362
    %v1364 = vpop.f32.mrf.mxu0
    %1365 = vdwg.mxu0
    %1366 = vmatpush.bf16.msra.mxu0 %v411
    %1367 = vmatpush.bf16.msra.mxu0 %v407
    %1368 = vmatpush.bf16.msra.mxu0 %v403
    %1369 = vmatpush.bf16.msra.mxu0 %v399
    %1370 = vmatpush.bf16.msra.mxu0 %v395
    %1371 = vmatpush.bf16.msra.mxu0 %v391
    %1372 = vmatpush.bf16.msra.mxu0 %v387
    %1373 = vmatpush.bf16.msra.mxu0 %v383
    %1374 = vmatmul.bf16.gmra.mxu0 %v1326
    %v1375 = vpop.f32.mrf.mxu0
    %v1376 = vadd.f32 0.0, %v1375
    %v1377 = vpop.f32.mrf.mxu0
    %1378 = vdwg.mxu0
    %v1379 = vadd.f32 %v155, %v1337
    %v1380 = vadd.f32 %v184, %v1350
    %v1381 = vadd.f32 %v210, %v1363
    %v1382 = vadd.f32 %v239, %v1376
    %v1383 = vxor.u32 %v1379, 2147483648
    %v1384 = vmul.f32 %v1383, 1.442695
    %v1385 = vpow.pop %v1384
    %v1386 = vadd.f32 %v1385, 1.0
    %v1387 = vrcp.pop %v1386
    %v1388 = vmul.f32 %v1386, %v1387
    %v1389 = vsub.f32 1.0, %v1388
    %v1390 = vmul.f32 %v1387, %v1389
    %v1391 = vadd.f32 %v1387, %v1390
    %vm1392 = vweird.f32 %v1386
    %vm1393 = vweird.f32 %v1387
    %vm1394 = vmor %vm1392, %vm1393
    %v1395 = vsel %vm1394, %v1387, %v1391
    %v1396 = vand.u32 2147483647, %v1386
    %vm1397 = vcmp.eq.f32.partialorder %v1396, 8.507059e+37
    %v1398 = vand.u32 %v1386, 2147483648
    %v1399 = vor.u32 1.1754944e-38, %v1398
    %v1400 = vsel %vm1397, %v1399, %v1395
    %v1401 = vmul.f32 1.0, %v1400
    %v1402 = vtanh.pop %v1379
    %v1403 = vmul.f32 %v1401, %v1193
    %1405 = vrot.lane.b32.xlu0 %v1402, 64
    %v1406 = vpop.permute.xlu0 %1405
    %v1408 = vmul.f32 %v1401, %v1406
    %1410 = vrot.lane.b32.xlu0 %v1408, 32
    %v1411 = vpop.permute.xlu0 %1410
    %v1413 = vadd.f32 %v1403, %v1411
    %v1414 = vtanh.pop %v1413
    %1416 = vrot.lane.b32.xlu0 %v1414, 64
    %v1417 = vpop.permute.xlu0 %1416
    %v1419 = vmul.f32 %v1401, %v1417
    %v1420 = vxor.u32 %v1380, 2147483648
    %v1421 = vmul.f32 %v1420, 1.442695
    %v1422 = vpow.pop %v1421
    %v1423 = vadd.f32 %v1422, 1.0
    %v1424 = vrcp.pop %v1423
    %v1425 = vmul.f32 %v1423, %v1424
    %v1426 = vsub.f32 1.0, %v1425
    %v1427 = vmul.f32 %v1424, %v1426
    %v1428 = vadd.f32 %v1424, %v1427
    %vm1429 = vweird.f32 %v1423
    %vm1430 = vweird.f32 %v1424
    %vm1431 = vmor %vm1429, %vm1430
    %v1432 = vsel %vm1431, %v1424, %v1428
    %v1433 = vand.u32 2147483647, %v1423
    %vm1434 = vcmp.eq.f32.partialorder %v1433, 8.507059e+37
    %v1435 = vand.u32 %v1423, 2147483648
    %v1436 = vor.u32 1.1754944e-38, %v1435
    %v1437 = vsel %vm1434, %v1436, %v1432
    %v1438 = vmul.f32 1.0, %v1437
    %v1439 = vtanh.pop %v1380
    %v1440 = vmul.f32 %v1438, %v1230
    %1442 = vrot.lane.b32.xlu0 %v1439, 64
    %v1443 = vpop.permute.xlu0 %1442
    %v1445 = vmul.f32 %v1438, %v1443
    %1447 = vrot.lane.b32.xlu0 %v1445, 32
    %v1448 = vpop.permute.xlu0 %1447
    %v1450 = vadd.f32 %v1440, %v1448
    %v1451 = vtanh.pop %v1450
    %1453 = vrot.lane.b32.xlu0 %v1451, 64
    %v1454 = vpop.permute.xlu0 %1453
    %v1456 = vmul.f32 %v1438, %v1454
    %v1457 = vxor.u32 %v1381, 2147483648
    %v1458 = vmul.f32 %v1457, 1.442695
    %v1459 = vpow.pop %v1458
    %v1460 = vadd.f32 %v1459, 1.0
    %v1461 = vrcp.pop %v1460
    %v1462 = vmul.f32 %v1460, %v1461
    %v1463 = vsub.f32 1.0, %v1462
    %v1464 = vmul.f32 %v1461, %v1463
    %v1465 = vadd.f32 %v1461, %v1464
    %vm1466 = vweird.f32 %v1460
    %vm1467 = vweird.f32 %v1461
    %vm1468 = vmor %vm1466, %vm1467
    %v1469 = vsel %vm1468, %v1461, %v1465
    %v1470 = vand.u32 2147483647, %v1460
    %vm1471 = vcmp.eq.f32.partialorder %v1470, 8.507059e+37
    %v1472 = vand.u32 %v1460, 2147483648
    %v1473 = vor.u32 1.1754944e-38, %v1472
    %v1474 = vsel %vm1471, %v1473, %v1469
    %v1475 = vmul.f32 1.0, %v1474
    %v1476 = vtanh.pop %v1381
    %v1477 = vmul.f32 %v1475, %v1267
    %1479 = vrot.lane.b32.xlu0 %v1476, 64
    %v1480 = vpop.permute.xlu0 %1479
    %v1482 = vmul.f32 %v1475, %v1480
    %1484 = vrot.lane.b32.xlu0 %v1482, 32
    %v1485 = vpop.permute.xlu0 %1484
    %v1487 = vadd.f32 %v1477, %v1485
    %v1488 = vtanh.pop %v1487
    %1490 = vrot.lane.b32.xlu0 %v1488, 64
    %v1491 = vpop.permute.xlu0 %1490
    %v1493 = vmul.f32 %v1475, %v1491
    %v1494 = vxor.u32 %v1382, 2147483648
    %v1495 = vmul.f32 %v1494, 1.442695
    %v1496 = vpow.pop %v1495
    %v1497 = vadd.f32 %v1496, 1.0
    %v1498 = vrcp.pop %v1497
    %v1499 = vmul.f32 %v1497, %v1498
    %v1500 = vsub.f32 1.0, %v1499
    %v1501 = vmul.f32 %v1498, %v1500
    %v1502 = vadd.f32 %v1498, %v1501
    %vm1503 = vweird.f32 %v1497
    %vm1504 = vweird.f32 %v1498
    %vm1505 = vmor %vm1503, %vm1504
    %v1506 = vsel %vm1505, %v1498, %v1502
    %v1507 = vand.u32 2147483647, %v1497
    %vm1508 = vcmp.eq.f32.partialorder %v1507, 8.507059e+37
    %v1509 = vand.u32 %v1497, 2147483648
    %v1510 = vor.u32 1.1754944e-38, %v1509
    %v1511 = vsel %vm1508, %v1510, %v1506
    %v1512 = vmul.f32 1.0, %v1511
    %v1513 = vtanh.pop %v1382
    %v1514 = vmul.f32 %v1512, %v1304
    %1516 = vrot.lane.b32.xlu0 %v1513, 64
    %v1517 = vpop.permute.xlu0 %1516
    %v1519 = vmul.f32 %v1512, %v1517
    %1521 = vrot.lane.b32.xlu0 %v1519, 32
    %v1522 = vpop.permute.xlu0 %1521
    %v1524 = vadd.f32 %v1514, %v1522
    %v1525 = vtanh.pop %v1524
    %1527 = vrot.lane.b32.xlu0 %v1525, 64
    %v1528 = vpop.permute.xlu0 %1527
    %v1530 = vmul.f32 %v1512, %v1528
    %1532 = vrot.lane.b32.xlu0 %v1419, 32
    %v1533 = vpop.permute.xlu0 %1532
    %1536 = vrot.lane.b32.xlu0 %v1456, 64
    %v1537 = vpop.permute.xlu0 %1536
    %1540 = vrot.lane.b32.xlu0 %v1493, 96
    %v1541 = vpop.permute.xlu0 %1540
    %v1543 = vsel %vm660, %v1533, %v1537
    %v1544 = vsel %vm662, %v1543, %v1541
    %v1545 = vsel %vm664, %v1544, %v1530
    %v1546 = vpack.c.bf16 %v1545, %v1545
    %1547 = vmatpush.bf16.msra.mxu0 %v408
    %1548 = vmatpush.bf16.msra.mxu0 %v404
    %1549 = vmatpush.bf16.msra.mxu0 %v400
    %1550 = vmatpush.bf16.msra.mxu0 %v396
    %1551 = vmatpush.bf16.msra.mxu0 %v392
    %1552 = vmatpush.bf16.msra.mxu0 %v388
    %1553 = vmatpush.bf16.msra.mxu0 %v384
    %1554 = vmatpush.bf16.msra.mxu0 %v380
    %1555 = vmatmul.bf16.gmra.mxu0 %v1546
    %v1556 = vpop.f32.mrf.mxu0
    %v1557 = vadd.f32 0.0, %v1556
    %v1558 = vpop.f32.mrf.mxu0
    %1559 = vdwg.mxu0
    %1560 = vmatpush.bf16.msra.mxu0 %v409
    %1561 = vmatpush.bf16.msra.mxu0 %v405
    %1562 = vmatpush.bf16.msra.mxu0 %v401
    %1563 = vmatpush.bf16.msra.mxu0 %v397
    %1564 = vmatpush.bf16.msra.mxu0 %v393
    %1565 = vmatpush.bf16.msra.mxu0 %v389
    %1566 = vmatpush.bf16.msra.mxu0 %v385
    %1567 = vmatpush.bf16.msra.mxu0 %v381
    %1568 = vmatmul.bf16.gmra.mxu0 %v1546
    %v1569 = vpop.f32.mrf.mxu0
    %v1570 = vadd.f32 0.0, %v1569
    %v1571 = vpop.f32.mrf.mxu0
    %1572 = vdwg.mxu0
    %1573 = vmatpush.bf16.msra.mxu0 %v410
    %1574 = vmatpush.bf16.msra.mxu0 %v406
    %1575 = vmatpush.bf16.msra.mxu0 %v402
    %1576 = vmatpush.bf16.msra.mxu0 %v398
    %1577 = vmatpush.bf16.msra.mxu0 %v394
    %1578 = vmatpush.bf16.msra.mxu0 %v390
    %1579 = vmatpush.bf16.msra.mxu0 %v386
    %1580 = vmatpush.bf16.msra.mxu0 %v382
    %1581 = vmatmul.bf16.gmra.mxu0 %v1546
    %v1582 = vpop.f32.mrf.mxu0
    %v1583 = vadd.f32 0.0, %v1582
    %v1584 = vpop.f32.mrf.mxu0
    %1585 = vdwg.mxu0
    %1586 = vmatpush.bf16.msra.mxu0 %v411
    %1587 = vmatpush.bf16.msra.mxu0 %v407
    %1588 = vmatpush.bf16.msra.mxu0 %v403
    %1589 = vmatpush.bf16.msra.mxu0 %v399
    %1590 = vmatpush.bf16.msra.mxu0 %v395
    %1591 = vmatpush.bf16.msra.mxu0 %v391
    %1592 = vmatpush.bf16.msra.mxu0 %v387
    %1593 = vmatpush.bf16.msra.mxu0 %v383
    %1594 = vmatmul.bf16.gmra.mxu0 %v1546
    %v1595 = vpop.f32.mrf.mxu0
    %v1596 = vadd.f32 0.0, %v1595
    %v1597 = vpop.f32.mrf.mxu0
    %1598 = vdwg.mxu0
    %v1599 = vadd.f32 %v157, %v1557
    %v1600 = vadd.f32 %v186, %v1570
    %v1601 = vadd.f32 %v208, %v1583
    %v1602 = vadd.f32 %v237, %v1596
    %v1603 = vxor.u32 %v1599, 2147483648
    %v1604 = vmul.f32 %v1603, 1.442695
    %v1605 = vpow.pop %v1604
    %v1606 = vadd.f32 %v1605, 1.0
    %v1607 = vrcp.pop %v1606
    %v1608 = vmul.f32 %v1606, %v1607
    %v1609 = vsub.f32 1.0, %v1608
    %v1610 = vmul.f32 %v1607, %v1609
    %v1611 = vadd.f32 %v1607, %v1610
    %vm1612 = vweird.f32 %v1606
    %vm1613 = vweird.f32 %v1607
    %vm1614 = vmor %vm1612, %vm1613
    %v1615 = vsel %vm1614, %v1607, %v1611
    %v1616 = vand.u32 2147483647, %v1606
    %vm1617 = vcmp.eq.f32.partialorder %v1616, 8.507059e+37
    %v1618 = vand.u32 %v1606, 2147483648
    %v1619 = vor.u32 1.1754944e-38, %v1618
    %v1620 = vsel %vm1617, %v1619, %v1615
    %v1621 = vmul.f32 1.0, %v1620
    %v1622 = vtanh.pop %v1599
    %v1623 = vmul.f32 %v1621, %v1413
    %1625 = vrot.lane.b32.xlu0 %v1622, 64
    %v1626 = vpop.permute.xlu0 %1625
    %v1628 = vmul.f32 %v1621, %v1626
    %1630 = vrot.lane.b32.xlu0 %v1628, 32
    %v1631 = vpop.permute.xlu0 %1630
    %v1633 = vadd.f32 %v1623, %v1631
    %v1634 = vtanh.pop %v1633
    %1636 = vrot.lane.b32.xlu0 %v1634, 64
    %v1637 = vpop.permute.xlu0 %1636
    %v1639 = vmul.f32 %v1621, %v1637
    %v1640 = vxor.u32 %v1600, 2147483648
    %v1641 = vmul.f32 %v1640, 1.442695
    %v1642 = vpow.pop %v1641
    %v1643 = vadd.f32 %v1642, 1.0
    %v1644 = vrcp.pop %v1643
    %v1645 = vmul.f32 %v1643, %v1644
    %v1646 = vsub.f32 1.0, %v1645
    %v1647 = vmul.f32 %v1644, %v1646
    %v1648 = vadd.f32 %v1644, %v1647
    %vm1649 = vweird.f32 %v1643
    %vm1650 = vweird.f32 %v1644
    %vm1651 = vmor %vm1649, %vm1650
    %v1652 = vsel %vm1651, %v1644, %v1648
    %v1653 = vand.u32 2147483647, %v1643
    %vm1654 = vcmp.eq.f32.partialorder %v1653, 8.507059e+37
    %v1655 = vand.u32 %v1643, 2147483648
    %v1656 = vor.u32 1.1754944e-38, %v1655
    %v1657 = vsel %vm1654, %v1656, %v1652
    %v1658 = vmul.f32 1.0, %v1657
    %v1659 = vtanh.pop %v1600
    %v1660 = vmul.f32 %v1658, %v1450
    %1662 = vrot.lane.b32.xlu0 %v1659, 64
    %v1663 = vpop.permute.xlu0 %1662
    %v1665 = vmul.f32 %v1658, %v1663
    %1667 = vrot.lane.b32.xlu0 %v1665, 32
    %v1668 = vpop.permute.xlu0 %1667
    %v1670 = vadd.f32 %v1660, %v1668
    %v1671 = vtanh.pop %v1670
    %1673 = vrot.lane.b32.xlu0 %v1671, 64
    %v1674 = vpop.permute.xlu0 %1673
    %v1676 = vmul.f32 %v1658, %v1674
    %v1677 = vxor.u32 %v1601, 2147483648
    %v1678 = vmul.f32 %v1677, 1.442695
    %v1679 = vpow.pop %v1678
    %v1680 = vadd.f32 %v1679, 1.0
    %v1681 = vrcp.pop %v1680
    %v1682 = vmul.f32 %v1680, %v1681
    %v1683 = vsub.f32 1.0, %v1682
    %v1684 = vmul.f32 %v1681, %v1683
    %v1685 = vadd.f32 %v1681, %v1684
    %vm1686 = vweird.f32 %v1680
    %vm1687 = vweird.f32 %v1681
    %vm1688 = vmor %vm1686, %vm1687
    %v1689 = vsel %vm1688, %v1681, %v1685
    %v1690 = vand.u32 2147483647, %v1680
    %vm1691 = vcmp.eq.f32.partialorder %v1690, 8.507059e+37
    %v1692 = vand.u32 %v1680, 2147483648
    %v1693 = vor.u32 1.1754944e-38, %v1692
    %v1694 = vsel %vm1691, %v1693, %v1689
    %v1695 = vmul.f32 1.0, %v1694
    %v1696 = vtanh.pop %v1601
    %v1697 = vmul.f32 %v1695, %v1487
    %1699 = vrot.lane.b32.xlu0 %v1696, 64
    %v1700 = vpop.permute.xlu0 %1699
    %v1702 = vmul.f32 %v1695, %v1700
    %1704 = vrot.lane.b32.xlu0 %v1702, 32
    %v1705 = vpop.permute.xlu0 %1704
    %v1707 = vadd.f32 %v1697, %v1705
    %v1708 = vtanh.pop %v1707
    %1710 = vrot.lane.b32.xlu0 %v1708, 64
    %v1711 = vpop.permute.xlu0 %1710
    %v1713 = vmul.f32 %v1695, %v1711
    %v1714 = vxor.u32 %v1602, 2147483648
    %v1715 = vmul.f32 %v1714, 1.442695
    %v1716 = vpow.pop %v1715
    %v1717 = vadd.f32 %v1716, 1.0
    %v1718 = vrcp.pop %v1717
    %v1719 = vmul.f32 %v1717, %v1718
    %v1720 = vsub.f32 1.0, %v1719
    %v1721 = vmul.f32 %v1718, %v1720
    %v1722 = vadd.f32 %v1718, %v1721
    %vm1723 = vweird.f32 %v1717
    %vm1724 = vweird.f32 %v1718
    %vm1725 = vmor %vm1723, %vm1724
    %v1726 = vsel %vm1725, %v1718, %v1722
    %v1727 = vand.u32 2147483647, %v1717
    %vm1728 = vcmp.eq.f32.partialorder %v1727, 8.507059e+37
    %v1729 = vand.u32 %v1717, 2147483648
    %v1730 = vor.u32 1.1754944e-38, %v1729
    %v1731 = vsel %vm1728, %v1730, %v1726
    %v1732 = vmul.f32 1.0, %v1731
    %v1733 = vtanh.pop %v1602
    %v1734 = vmul.f32 %v1732, %v1524
    %1736 = vrot.lane.b32.xlu0 %v1733, 64
    %v1737 = vpop.permute.xlu0 %1736
    %v1739 = vmul.f32 %v1732, %v1737
    %1741 = vrot.lane.b32.xlu0 %v1739, 32
    %v1742 = vpop.permute.xlu0 %1741
    %v1744 = vadd.f32 %v1734, %v1742
    %v1745 = vtanh.pop %v1744
    %1747 = vrot.lane.b32.xlu0 %v1745, 64
    %v1748 = vpop.permute.xlu0 %1747
    %v1750 = vmul.f32 %v1732, %v1748
    %1752 = vrot.lane.b32.xlu0 %v1639, 32
    %v1753 = vpop.permute.xlu0 %1752
    %1756 = vrot.lane.b32.xlu0 %v1676, 64
    %v1757 = vpop.permute.xlu0 %1756
    %1760 = vrot.lane.b32.xlu0 %v1713, 96
    %v1761 = vpop.permute.xlu0 %1760
    %v1763 = vsel %vm660, %v1753, %v1757
    %v1764 = vsel %vm662, %v1763, %v1761
    %v1765 = vsel %vm664, %v1764, %v1750
    %v1766 = vpack.c.bf16 %v1765, %v1765
    %1767 = vmatpush.bf16.msra.mxu0 %v408
    %1768 = vmatpush.bf16.msra.mxu0 %v404
    %1769 = vmatpush.bf16.msra.mxu0 %v400
    %1770 = vmatpush.bf16.msra.mxu0 %v396
    %1771 = vmatpush.bf16.msra.mxu0 %v392
    %1772 = vmatpush.bf16.msra.mxu0 %v388
    %1773 = vmatpush.bf16.msra.mxu0 %v384
    %1774 = vmatpush.bf16.msra.mxu0 %v380
    %1775 = vmatmul.bf16.gmra.mxu0 %v1766
    %v1776 = vpop.f32.mrf.mxu0
    %v1777 = vadd.f32 0.0, %v1776
    %v1778 = vpop.f32.mrf.mxu0
    %1779 = vdwg.mxu0
    %1780 = vmatpush.bf16.msra.mxu0 %v409
    %1781 = vmatpush.bf16.msra.mxu0 %v405
    %1782 = vmatpush.bf16.msra.mxu0 %v401
    %1783 = vmatpush.bf16.msra.mxu0 %v397
    %1784 = vmatpush.bf16.msra.mxu0 %v393
    %1785 = vmatpush.bf16.msra.mxu0 %v389
    %1786 = vmatpush.bf16.msra.mxu0 %v385
    %1787 = vmatpush.bf16.msra.mxu0 %v381
    %1788 = vmatmul.bf16.gmra.mxu0 %v1766
    %v1789 = vpop.f32.mrf.mxu0
    %v1790 = vadd.f32 0.0, %v1789
    %v1791 = vpop.f32.mrf.mxu0
    %1792 = vdwg.mxu0
    %1793 = vmatpush.bf16.msra.mxu0 %v410
    %1794 = vmatpush.bf16.msra.mxu0 %v406
    %1795 = vmatpush.bf16.msra.mxu0 %v402
    %1796 = vmatpush.bf16.msra.mxu0 %v398
    %1797 = vmatpush.bf16.msra.mxu0 %v394
    %1798 = vmatpush.bf16.msra.mxu0 %v390
    %1799 = vmatpush.bf16.msra.mxu0 %v386
    %1800 = vmatpush.bf16.msra.mxu0 %v382
    %1801 = vmatmul.bf16.gmra.mxu0 %v1766
    %v1802 = vpop.f32.mrf.mxu0
    %v1803 = vadd.f32 0.0, %v1802
    %v1804 = vpop.f32.mrf.mxu0
    %1805 = vdwg.mxu0
    %1806 = vmatpush.bf16.msra.mxu0 %v411
    %1807 = vmatpush.bf16.msra.mxu0 %v407
    %1808 = vmatpush.bf16.msra.mxu0 %v403
    %1809 = vmatpush.bf16.msra.mxu0 %v399
    %1810 = vmatpush.bf16.msra.mxu0 %v395
    %1811 = vmatpush.bf16.msra.mxu0 %v391
    %1812 = vmatpush.bf16.msra.mxu0 %v387
    %1813 = vmatpush.bf16.msra.mxu0 %v383
    %1814 = vmatmul.bf16.gmra.mxu0 %v1766
    %v1815 = vpop.f32.mrf.mxu0
    %v1816 = vadd.f32 0.0, %v1815
    %v1817 = vpop.f32.mrf.mxu0
    %1818 = vdwg.mxu0
    %v1819 = vadd.f32 %v160, %v1777
    %v1820 = vadd.f32 %v189, %v1790
    %v1821 = vadd.f32 %v205, %v1803
    %v1822 = vadd.f32 %v234, %v1816
    %v1823 = vxor.u32 %v1819, 2147483648
    %v1824 = vmul.f32 %v1823, 1.442695
    %v1825 = vpow.pop %v1824
    %v1826 = vadd.f32 %v1825, 1.0
    %v1827 = vrcp.pop %v1826
    %v1828 = vmul.f32 %v1826, %v1827
    %v1829 = vsub.f32 1.0, %v1828
    %v1830 = vmul.f32 %v1827, %v1829
    %v1831 = vadd.f32 %v1827, %v1830
    %vm1832 = vweird.f32 %v1826
    %vm1833 = vweird.f32 %v1827
    %vm1834 = vmor %vm1832, %vm1833
    %v1835 = vsel %vm1834, %v1827, %v1831
    %v1836 = vand.u32 2147483647, %v1826
    %vm1837 = vcmp.eq.f32.partialorder %v1836, 8.507059e+37
    %v1838 = vand.u32 %v1826, 2147483648
    %v1839 = vor.u32 1.1754944e-38, %v1838
    %v1840 = vsel %vm1837, %v1839, %v1835
    %v1841 = vmul.f32 1.0, %v1840
    %v1842 = vtanh.pop %v1819
    %v1843 = vmul.f32 %v1841, %v1633
    %1845 = vrot.lane.b32.xlu0 %v1842, 64
    %v1846 = vpop.permute.xlu0 %1845
    %v1848 = vmul.f32 %v1841, %v1846
    %1850 = vrot.lane.b32.xlu0 %v1848, 32
    %v1851 = vpop.permute.xlu0 %1850
    %v1853 = vadd.f32 %v1843, %v1851
    %v1854 = vtanh.pop %v1853
    %1856 = vrot.lane.b32.xlu0 %v1854, 64
    %v1857 = vpop.permute.xlu0 %1856
    %v1859 = vmul.f32 %v1841, %v1857
    %v1860 = vxor.u32 %v1820, 2147483648
    %v1861 = vmul.f32 %v1860, 1.442695
    %v1862 = vpow.pop %v1861
    %v1863 = vadd.f32 %v1862, 1.0
    %v1864 = vrcp.pop %v1863
    %v1865 = vmul.f32 %v1863, %v1864
    %v1866 = vsub.f32 1.0, %v1865
    %v1867 = vmul.f32 %v1864, %v1866
    %v1868 = vadd.f32 %v1864, %v1867
    %vm1869 = vweird.f32 %v1863
    %vm1870 = vweird.f32 %v1864
    %vm1871 = vmor %vm1869, %vm1870
    %v1872 = vsel %vm1871, %v1864, %v1868
    %v1873 = vand.u32 2147483647, %v1863
    %vm1874 = vcmp.eq.f32.partialorder %v1873, 8.507059e+37
    %v1875 = vand.u32 %v1863, 2147483648
    %v1876 = vor.u32 1.1754944e-38, %v1875
    %v1877 = vsel %vm1874, %v1876, %v1872
    %v1878 = vmul.f32 1.0, %v1877
    %v1879 = vtanh.pop %v1820
    %v1880 = vmul.f32 %v1878, %v1670
    %1882 = vrot.lane.b32.xlu0 %v1879, 64
    %v1883 = vpop.permute.xlu0 %1882
    %v1885 = vmul.f32 %v1878, %v1883
    %1887 = vrot.lane.b32.xlu0 %v1885, 32
    %v1888 = vpop.permute.xlu0 %1887
    %v1890 = vadd.f32 %v1880, %v1888
    %v1891 = vtanh.pop %v1890
    %1893 = vrot.lane.b32.xlu0 %v1891, 64
    %v1894 = vpop.permute.xlu0 %1893
    %v1896 = vmul.f32 %v1878, %v1894
    %v1897 = vxor.u32 %v1821, 2147483648
    %v1898 = vmul.f32 %v1897, 1.442695
    %v1899 = vpow.pop %v1898
    %v1900 = vadd.f32 %v1899, 1.0
    %v1901 = vrcp.pop %v1900
    %v1902 = vmul.f32 %v1900, %v1901
    %v1903 = vsub.f32 1.0, %v1902
    %v1904 = vmul.f32 %v1901, %v1903
    %v1905 = vadd.f32 %v1901, %v1904
    %vm1906 = vweird.f32 %v1900
    %vm1907 = vweird.f32 %v1901
    %vm1908 = vmor %vm1906, %vm1907
    %v1909 = vsel %vm1908, %v1901, %v1905
    %v1910 = vand.u32 2147483647, %v1900
    %vm1911 = vcmp.eq.f32.partialorder %v1910, 8.507059e+37
    %v1912 = vand.u32 %v1900, 2147483648
    %v1913 = vor.u32 1.1754944e-38, %v1912
    %v1914 = vsel %vm1911, %v1913, %v1909
    %v1915 = vmul.f32 1.0, %v1914
    %v1916 = vtanh.pop %v1821
    %v1917 = vmul.f32 %v1915, %v1707
    %1919 = vrot.lane.b32.xlu0 %v1916, 64
    %v1920 = vpop.permute.xlu0 %1919
    %v1922 = vmul.f32 %v1915, %v1920
    %1924 = vrot.lane.b32.xlu0 %v1922, 32
    %v1925 = vpop.permute.xlu0 %1924
    %v1927 = vadd.f32 %v1917, %v1925
    %v1928 = vtanh.pop %v1927
    %1930 = vrot.lane.b32.xlu0 %v1928, 64
    %v1931 = vpop.permute.xlu0 %1930
    %v1933 = vmul.f32 %v1915, %v1931
    %v1934 = vxor.u32 %v1822, 2147483648
    %v1935 = vmul.f32 %v1934, 1.442695
    %v1936 = vpow.pop %v1935
    %v1937 = vadd.f32 %v1936, 1.0
    %v1938 = vrcp.pop %v1937
    %v1939 = vmul.f32 %v1937, %v1938
    %v1940 = vsub.f32 1.0, %v1939
    %v1941 = vmul.f32 %v1938, %v1940
    %v1942 = vadd.f32 %v1938, %v1941
    %vm1943 = vweird.f32 %v1937
    %vm1944 = vweird.f32 %v1938
    %vm1945 = vmor %vm1943, %vm1944
    %v1946 = vsel %vm1945, %v1938, %v1942
    %v1947 = vand.u32 2147483647, %v1937
    %vm1948 = vcmp.eq.f32.partialorder %v1947, 8.507059e+37
    %v1949 = vand.u32 %v1937, 2147483648
    %v1950 = vor.u32 1.1754944e-38, %v1949
    %v1951 = vsel %vm1948, %v1950, %v1946
    %v1952 = vmul.f32 1.0, %v1951
    %v1953 = vtanh.pop %v1822
    %v1954 = vmul.f32 %v1952, %v1744
    %1956 = vrot.lane.b32.xlu0 %v1953, 64
    %v1957 = vpop.permute.xlu0 %1956
    %v1959 = vmul.f32 %v1952, %v1957
    %1961 = vrot.lane.b32.xlu0 %v1959, 32
    %v1962 = vpop.permute.xlu0 %1961
    %v1964 = vadd.f32 %v1954, %v1962
    %v1965 = vtanh.pop %v1964
    %1967 = vrot.lane.b32.xlu0 %v1965, 64
    %v1968 = vpop.permute.xlu0 %1967
    %v1970 = vmul.f32 %v1952, %v1968
    %1972 = vrot.lane.b32.xlu0 %v1859, 32
    %v1973 = vpop.permute.xlu0 %1972
    %1976 = vrot.lane.b32.xlu0 %v1896, 64
    %v1977 = vpop.permute.xlu0 %1976
    %1980 = vrot.lane.b32.xlu0 %v1933, 96
    %v1981 = vpop.permute.xlu0 %1980
    %v1983 = vsel %vm660, %v1973, %v1977
    %v1984 = vsel %vm662, %v1983, %v1981
    %v1985 = vsel %vm664, %v1984, %v1970
    %v1986 = vpack.c.bf16 %v1985, %v1985
    %1987 = vmatpush.bf16.msra.mxu0 %v408
    %1988 = vmatpush.bf16.msra.mxu0 %v404
    %1989 = vmatpush.bf16.msra.mxu0 %v400
    %1990 = vmatpush.bf16.msra.mxu0 %v396
    %1991 = vmatpush.bf16.msra.mxu0 %v392
    %1992 = vmatpush.bf16.msra.mxu0 %v388
    %1993 = vmatpush.bf16.msra.mxu0 %v384
    %1994 = vmatpush.bf16.msra.mxu0 %v380
    %1995 = vmatmul.bf16.gmra.mxu0 %v1986
    %v1996 = vpop.f32.mrf.mxu0
    %v1997 = vadd.f32 0.0, %v1996
    %v1998 = vpop.f32.mrf.mxu0
    %1999 = vdwg.mxu0
    %2000 = vmatpush.bf16.msra.mxu0 %v409
    %2001 = vmatpush.bf16.msra.mxu0 %v405
    %2002 = vmatpush.bf16.msra.mxu0 %v401
    %2003 = vmatpush.bf16.msra.mxu0 %v397
    %2004 = vmatpush.bf16.msra.mxu0 %v393
    %2005 = vmatpush.bf16.msra.mxu0 %v389
    %2006 = vmatpush.bf16.msra.mxu0 %v385
    %2007 = vmatpush.bf16.msra.mxu0 %v381
    %2008 = vmatmul.bf16.gmra.mxu0 %v1986
    %v2009 = vpop.f32.mrf.mxu0
    %v2010 = vadd.f32 0.0, %v2009
    %v2011 = vpop.f32.mrf.mxu0
    %2012 = vdwg.mxu0
    %2013 = vmatpush.bf16.msra.mxu0 %v410
    %2014 = vmatpush.bf16.msra.mxu0 %v406
    %2015 = vmatpush.bf16.msra.mxu0 %v402
    %2016 = vmatpush.bf16.msra.mxu0 %v398
    %2017 = vmatpush.bf16.msra.mxu0 %v394
    %2018 = vmatpush.bf16.msra.mxu0 %v390
    %2019 = vmatpush.bf16.msra.mxu0 %v386
    %2020 = vmatpush.bf16.msra.mxu0 %v382
    %2021 = vmatmul.bf16.gmra.mxu0 %v1986
    %v2022 = vpop.f32.mrf.mxu0
    %v2023 = vadd.f32 0.0, %v2022
    %v2024 = vpop.f32.mrf.mxu0
    %2025 = vdwg.mxu0
    %2026 = vmatpush.bf16.msra.mxu0 %v411
    %2027 = vmatpush.bf16.msra.mxu0 %v407
    %2028 = vmatpush.bf16.msra.mxu0 %v403
    %2029 = vmatpush.bf16.msra.mxu0 %v399
    %2030 = vmatpush.bf16.msra.mxu0 %v395
    %2031 = vmatpush.bf16.msra.mxu0 %v391
    %2032 = vmatpush.bf16.msra.mxu0 %v387
    %2033 = vmatpush.bf16.msra.mxu0 %v383
    %2034 = vmatmul.bf16.gmra.mxu0 %v1986
    %v2035 = vpop.f32.mrf.mxu0
    %v2036 = vadd.f32 0.0, %v2035
    %v2037 = vpop.f32.mrf.mxu0
    %2038 = vdwg.mxu0
    %v2039 = vadd.f32 %v162, %v1997
    %v2040 = vadd.f32 %v191, %v2010
    %v2041 = vadd.f32 %v203, %v2023
    %v2042 = vadd.f32 %v232, %v2036
    %v2043 = vxor.u32 %v2039, 2147483648
    %v2044 = vmul.f32 %v2043, 1.442695
    %v2045 = vpow.pop %v2044
    %v2046 = vadd.f32 %v2045, 1.0
    %v2047 = vrcp.pop %v2046
    %v2048 = vmul.f32 %v2046, %v2047
    %v2049 = vsub.f32 1.0, %v2048
    %v2050 = vmul.f32 %v2047, %v2049
    %v2051 = vadd.f32 %v2047, %v2050
    %vm2052 = vweird.f32 %v2046
    %vm2053 = vweird.f32 %v2047
    %vm2054 = vmor %vm2052, %vm2053
    %v2055 = vsel %vm2054, %v2047, %v2051
    %v2056 = vand.u32 2147483647, %v2046
    %vm2057 = vcmp.eq.f32.partialorder %v2056, 8.507059e+37
    %v2058 = vand.u32 %v2046, 2147483648
    %v2059 = vor.u32 1.1754944e-38, %v2058
    %v2060 = vsel %vm2057, %v2059, %v2055
    %v2061 = vmul.f32 1.0, %v2060
    %v2062 = vtanh.pop %v2039
    %v2063 = vmul.f32 %v2061, %v1853
    %2065 = vrot.lane.b32.xlu0 %v2062, 64
    %v2066 = vpop.permute.xlu0 %2065
    %v2068 = vmul.f32 %v2061, %v2066
    %2070 = vrot.lane.b32.xlu0 %v2068, 32
    %v2071 = vpop.permute.xlu0 %2070
    %v2073 = vadd.f32 %v2063, %v2071
    %v2074 = vtanh.pop %v2073
    %2076 = vrot.lane.b32.xlu0 %v2074, 64
    %v2077 = vpop.permute.xlu0 %2076
    %v2079 = vmul.f32 %v2061, %v2077
    %v2080 = vxor.u32 %v2040, 2147483648
    %v2081 = vmul.f32 %v2080, 1.442695
    %v2082 = vpow.pop %v2081
    %v2083 = vadd.f32 %v2082, 1.0
    %v2084 = vrcp.pop %v2083
    %v2085 = vmul.f32 %v2083, %v2084
    %v2086 = vsub.f32 1.0, %v2085
    %v2087 = vmul.f32 %v2084, %v2086
    %v2088 = vadd.f32 %v2084, %v2087
    %vm2089 = vweird.f32 %v2083
    %vm2090 = vweird.f32 %v2084
    %vm2091 = vmor %vm2089, %vm2090
    %v2092 = vsel %vm2091, %v2084, %v2088
    %v2093 = vand.u32 2147483647, %v2083
    %vm2094 = vcmp.eq.f32.partialorder %v2093, 8.507059e+37
    %v2095 = vand.u32 %v2083, 2147483648
    %v2096 = vor.u32 1.1754944e-38, %v2095
    %v2097 = vsel %vm2094, %v2096, %v2092
    %v2098 = vmul.f32 1.0, %v2097
    %v2099 = vtanh.pop %v2040
    %v2100 = vmul.f32 %v2098, %v1890
    %2102 = vrot.lane.b32.xlu0 %v2099, 64
    %v2103 = vpop.permute.xlu0 %2102
    %v2105 = vmul.f32 %v2098, %v2103
    %2107 = vrot.lane.b32.xlu0 %v2105, 32
    %v2108 = vpop.permute.xlu0 %2107
    %v2110 = vadd.f32 %v2100, %v2108
    %v2111 = vtanh.pop %v2110
    %2113 = vrot.lane.b32.xlu0 %v2111, 64
    %v2114 = vpop.permute.xlu0 %2113
    %v2116 = vmul.f32 %v2098, %v2114
    %v2117 = vxor.u32 %v2041, 2147483648
    %v2118 = vmul.f32 %v2117, 1.442695
    %v2119 = vpow.pop %v2118
    %v2120 = vadd.f32 %v2119, 1.0
    %v2121 = vrcp.pop %v2120
    %v2122 = vmul.f32 %v2120, %v2121
    %v2123 = vsub.f32 1.0, %v2122
    %v2124 = vmul.f32 %v2121, %v2123
    %v2125 = vadd.f32 %v2121, %v2124
    %vm2126 = vweird.f32 %v2120
    %vm2127 = vweird.f32 %v2121
    %vm2128 = vmor %vm2126, %vm2127
    %v2129 = vsel %vm2128, %v2121, %v2125
    %v2130 = vand.u32 2147483647, %v2120
    %vm2131 = vcmp.eq.f32.partialorder %v2130, 8.507059e+37
    %v2132 = vand.u32 %v2120, 2147483648
    %v2133 = vor.u32 1.1754944e-38, %v2132
    %v2134 = vsel %vm2131, %v2133, %v2129
    %v2135 = vmul.f32 1.0, %v2134
    %v2136 = vtanh.pop %v2041
    %v2137 = vmul.f32 %v2135, %v1927
    %2139 = vrot.lane.b32.xlu0 %v2136, 64
    %v2140 = vpop.permute.xlu0 %2139
    %v2142 = vmul.f32 %v2135, %v2140
    %2144 = vrot.lane.b32.xlu0 %v2142, 32
    %v2145 = vpop.permute.xlu0 %2144
    %v2147 = vadd.f32 %v2137, %v2145
    %v2148 = vtanh.pop %v2147
    %2150 = vrot.lane.b32.xlu0 %v2148, 64
    %v2151 = vpop.permute.xlu0 %2150
    %v2153 = vmul.f32 %v2135, %v2151
    %v2154 = vxor.u32 %v2042, 2147483648
    %v2155 = vmul.f32 %v2154, 1.442695
    %v2156 = vpow.pop %v2155
    %v2157 = vadd.f32 %v2156, 1.0
    %v2158 = vrcp.pop %v2157
    %v2159 = vmul.f32 %v2157, %v2158
    %v2160 = vsub.f32 1.0, %v2159
    %v2161 = vmul.f32 %v2158, %v2160
    %v2162 = vadd.f32 %v2158, %v2161
    %vm2163 = vweird.f32 %v2157
    %vm2164 = vweird.f32 %v2158
    %vm2165 = vmor %vm2163, %vm2164
    %v2166 = vsel %vm2165, %v2158, %v2162
    %v2167 = vand.u32 2147483647, %v2157
    %vm2168 = vcmp.eq.f32.partialorder %v2167, 8.507059e+37
    %v2169 = vand.u32 %v2157, 2147483648
    %v2170 = vor.u32 1.1754944e-38, %v2169
    %v2171 = vsel %vm2168, %v2170, %v2166
    %v2172 = vmul.f32 1.0, %v2171
    %v2173 = vtanh.pop %v2042
    %v2174 = vmul.f32 %v2172, %v1964
    %2176 = vrot.lane.b32.xlu0 %v2173, 64
    %v2177 = vpop.permute.xlu0 %2176
    %v2179 = vmul.f32 %v2172, %v2177
    %2181 = vrot.lane.b32.xlu0 %v2179, 32
    %v2182 = vpop.permute.xlu0 %2181
    %v2184 = vadd.f32 %v2174, %v2182
    %v2185 = vtanh.pop %v2184
    %2187 = vrot.lane.b32.xlu0 %v2185, 64
    %v2188 = vpop.permute.xlu0 %2187
    %v2190 = vmul.f32 %v2172, %v2188
    %2192 = vrot.lane.b32.xlu0 %v2116, 32
    %v2193 = vpop.permute.xlu0 %2192
    %2196 = vrot.lane.b32.xlu0 %v2190, 64
    %v2197 = vpop.permute.xlu0 %2196
    %2200 = vrot.lane.b32.xlu0 %v2110, 32
    %v2201 = vpop.permute.xlu0 %2200
    %2204 = vrot.lane.b32.xlu0 %v2184, 64
    %v2205 = vpop.permute.xlu0 %2204
    %v2207 = vsel %vm660, %v2193, %v2197
    %v2208 = vsel %vm662, %v2207, %v2201
    %v2209 = vsel %vm664, %v2208, %v2205
    %2210 = vst [vmem:[%s11] sm:$0xff] %v2209
    %v2211 = vld [vmem:[%s1] sm:$0xff]
    %v2212 = vld [vmem:[%s1 + $0x8] sm:$0xff]
    %v2213 = vld [vmem:[%s1 + $0x10] sm:$0xff]
    %v2214 = vld [vmem:[%s1 + $0x18] sm:$0xff]
    %v2215 = vld [vmem:[%s1 + $0x20] sm:$0xff]
    %v2216 = vld [vmem:[%s1 + $0x28] sm:$0xff]
    %v2217 = vld [vmem:[%s1 + $0x30] sm:$0xff]
    %v2218 = vld [vmem:[%s1 + $0x38] sm:$0xff]
    %v2219 = vpack.c.bf16 %v2212, %v2211
    %v2220 = vpack.c.bf16 %v2214, %v2213
    %v2221 = vpack.c.bf16 %v2216, %v2215
    %v2222 = vpack.c.bf16 %v2218, %v2217
    %v2223 = vld [vmem:[%s5] sm:$0xff]
    %v2224 = vld [vmem:[%s5 + $0x8] sm:$0xff]
    %v2225 = vld [vmem:[%s5 + $0x10] sm:$0xff]
    %v2226 = vld [vmem:[%s5 + $0x18] sm:$0x33]
    %v2227 = vld [vmem:[%s6] sm:$0x3]
    %v2229 = vperm.slane %v2227, 0
    %v2230 = vperm.slane %v2227, 1
    %v2237 = vunpack.c.l.b16 %v2223
    %v2238 = vunpack.c.h.b16 %v2223
    %v2239 = vunpack.c.l.b16 %v2224
    %v2240 = vunpack.c.h.b16 %v2224
    %v2241 = vunpack.c.l.b16 %v2225
    %v2242 = vunpack.c.h.b16 %v2225
    %v2243 = vunpack.c.l.b16 %v2226
    %v2244 = vunpack.c.h.b16 %v2226
    %v2245 = vpack.c.b16 %v2239, %v2237
    %v2246 = vpack.c.b16 %v2240, %v2238
    %v2247 = vpack.c.b16 %v2243, %v2241
    %v2248 = vpack.c.b16 %v2244, %v2242
    %v2252 = vsel %vm109, %v2219, 0
    %v2255 = vsel %vm109, %v2220, 0
    %v2258 = vsel %vm109, %v2221, 0
    %v2261 = vsel %vm109, %v2222, 0
    %v2264 = vsel %vm122, %v2247, 0
    %v2267 = vsel %vm122, %v2248, 0
    %2269 = vmatpush.bf16.msra.mxu0 0
    %2270 = vmatpush.bf16.msra.mxu0 0
    %2271 = vmatpush.bf16.msra.mxu0 0
    %2272 = vmatpush.bf16.msra.mxu0 0
    %2273 = vmatpush.bf16.msra.mxu0 0
    %2274 = vmatpush.bf16.msra.mxu0 0
    %2275 = vmatpush.bf16.msra.mxu0 %v2264
    %2276 = vmatpush.bf16.msra.mxu0 %v2245
    %2277 = vmatmul.bf16.gmra.mxu0 %v2252
    %v2278 = vpop.f32.mrf.mxu0
    %v2279 = vadd.f32 %v2229, %v2278
    %v2280 = vpop.f32.mrf.mxu0
    %v2281 = vadd.f32 %v2229, %v2280
    %2282 = vmatmul.bf16.gmra.mxu0 %v2255
    %v2283 = vpop.f32.mrf.mxu0
    %v2284 = vadd.f32 %v2229, %v2283
    %v2285 = vpop.f32.mrf.mxu0
    %v2286 = vadd.f32 %v2229, %v2285
    %2287 = vmatmul.bf16.gmra.mxu0 %v2258
    %v2288 = vpop.f32.mrf.mxu0
    %v2289 = vadd.f32 %v2229, %v2288
    %v2290 = vpop.f32.mrf.mxu0
    %v2291 = vadd.f32 %v2229, %v2290
    %2292 = vmatmul.bf16.gmra.mxu0 %v2261
    %v2293 = vpop.f32.mrf.mxu0
    %v2294 = vadd.f32 %v2229, %v2293
    %v2295 = vpop.f32.mrf.mxu0
    %v2296 = vadd.f32 %v2229, %v2295
    %2297 = vdwg.mxu0
    %2298 = vmatpush.bf16.msra.mxu0 0
    %2299 = vmatpush.bf16.msra.mxu0 0
    %2300 = vmatpush.bf16.msra.mxu0 0
    %2301 = vmatpush.bf16.msra.mxu0 0
    %2302 = vmatpush.bf16.msra.mxu0 0
    %2303 = vmatpush.bf16.msra.mxu0 0
    %2304 = vmatpush.bf16.msra.mxu0 %v2267
    %2305 = vmatpush.bf16.msra.mxu0 %v2246
    %2306 = vmatmul.bf16.gmra.mxu0 %v2252
    %v2307 = vpop.f32.mrf.mxu0
    %v2308 = vadd.f32 %v2230, %v2307
    %v2309 = vpop.f32.mrf.mxu0
    %v2310 = vadd.f32 %v2230, %v2309
    %2311 = vmatmul.bf16.gmra.mxu0 %v2255
    %v2312 = vpop.f32.mrf.mxu0
    %v2313 = vadd.f32 %v2230, %v2312
    %v2314 = vpop.f32.mrf.mxu0
    %v2315 = vadd.f32 %v2230, %v2314
    %2316 = vmatmul.bf16.gmra.mxu0 %v2258
    %v2317 = vpop.f32.mrf.mxu0
    %v2318 = vadd.f32 %v2230, %v2317
    %v2319 = vpop.f32.mrf.mxu0
    %v2320 = vadd.f32 %v2230, %v2319
    %2321 = vmatmul.bf16.gmra.mxu0 %v2261
    %v2322 = vpop.f32.mrf.mxu0
    %v2323 = vadd.f32 %v2230, %v2322
    %v2324 = vpop.f32.mrf.mxu0
    %v2325 = vadd.f32 %v2230, %v2324
    %2326 = vdwg.mxu0
    %v2327 = vld [vmem:[%s7] sm:$0xff]
    %v2328 = vld [vmem:[%s7 + $0x8] sm:$0xff]
    %v2329 = vld [vmem:[%s7 + $0x10] sm:$0xff]
    %v2330 = vld [vmem:[%s7 + $0x18] sm:$0xff]
    %v2331 = vld [vmem:[%s7 + $0x20] sm:$0xff]
    %v2332 = vld [vmem:[%s7 + $0x28] sm:$0xff]
    %v2333 = vld [vmem:[%s7 + $0x30] sm:$0xff]
    %v2334 = vld [vmem:[%s7 + $0x38] sm:$0xff]
    %2336 = vrot.lane.b32.xlu0 %v2079, 32
    %v2337 = vpop.permute.xlu0 %2336
    %2340 = vrot.lane.b32.xlu0 %v2153, 64
    %v2341 = vpop.permute.xlu0 %2340
    %v2343 = vsel %vm660, %v2337, %v2341
    %v2344 = vpack.c.bf16 %v2343, %v2343
    %v2353 = vunpack.c.l.b16 %v2327
    %v2354 = vunpack.c.h.b16 %v2327
    %v2355 = vunpack.c.l.b16 %v2328
    %v2356 = vunpack.c.h.b16 %v2328
    %v2357 = vunpack.c.l.b16 %v2329
    %v2358 = vunpack.c.h.b16 %v2329
    %v2359 = vunpack.c.l.b16 %v2330
    %v2360 = vunpack.c.h.b16 %v2330
    %v2361 = vunpack.c.l.b16 %v2331
    %v2362 = vunpack.c.h.b16 %v2331
    %v2363 = vunpack.c.l.b16 %v2332
    %v2364 = vunpack.c.h.b16 %v2332
    %v2365 = vunpack.c.l.b16 %v2333
    %v2366 = vunpack.c.h.b16 %v2333
    %v2367 = vunpack.c.l.b16 %v2334
    %v2368 = vunpack.c.h.b16 %v2334
    %v2369 = vpack.c.b16 %v2355, %v2353
    %v2370 = vpack.c.b16 %v2356, %v2354
    %v2371 = vpack.c.b16 %v2359, %v2357
    %v2372 = vpack.c.b16 %v2360, %v2358
    %v2373 = vpack.c.b16 %v2363, %v2361
    %v2374 = vpack.c.b16 %v2364, %v2362
    %v2375 = vpack.c.b16 %v2367, %v2365
    %v2376 = vpack.c.b16 %v2368, %v2366
    %v2386 = vsel %vm662, %v2344, 0
    %2388 = vmatpush.bf16.msra.mxu0 0
    %2389 = vmatpush.bf16.msra.mxu0 0
    %2390 = vmatpush.bf16.msra.mxu0 0
    %2391 = vmatpush.bf16.msra.mxu0 0
    %2392 = vmatpush.bf16.msra.mxu0 %v2375
    %2393 = vmatpush.bf16.msra.mxu0 %v2373
    %2394 = vmatpush.bf16.msra.mxu0 %v2371
    %2395 = vmatpush.bf16.msra.mxu0 %v2369
    %2396 = vmatmul.bf16.gmra.mxu0 %v2386
    %v2397 = vpop.f32.mrf.mxu0
    %v2398 = vadd.f32 0.0, %v2397
    %v2399 = vpop.f32.mrf.mxu0
    %2400 = vdwg.mxu0
    %2401 = vmatpush.bf16.msra.mxu0 0
    %2402 = vmatpush.bf16.msra.mxu0 0
    %2403 = vmatpush.bf16.msra.mxu0 0
    %2404 = vmatpush.bf16.msra.mxu0 0
    %2405 = vmatpush.bf16.msra.mxu0 %v2376
    %2406 = vmatpush.bf16.msra.mxu0 %v2374
    %2407 = vmatpush.bf16.msra.mxu0 %v2372
    %2408 = vmatpush.bf16.msra.mxu0 %v2370
    %2409 = vmatmul.bf16.gmra.mxu0 %v2386
    %v2410 = vpop.f32.mrf.mxu0
    %v2411 = vadd.f32 0.0, %v2410
    %v2412 = vpop.f32.mrf.mxu0
    %2413 = vdwg.mxu0
    %v2414 = vadd.f32 %v2279, %v2398
    %v2415 = vadd.f32 %v2325, %v2411
    %v2416 = vxor.u32 %v2414, 2147483648
    %v2417 = vmul.f32 %v2416, 1.442695
    %v2418 = vpow.pop %v2417
    %v2419 = vadd.f32 %v2418, 1.0
    %v2420 = vrcp.pop %v2419
    %v2421 = vmul.f32 %v2419, %v2420
    %v2422 = vsub.f32 1.0, %v2421
    %v2423 = vmul.f32 %v2420, %v2422
    %v2424 = vadd.f32 %v2420, %v2423
    %vm2425 = vweird.f32 %v2419
    %vm2426 = vweird.f32 %v2420
    %vm2427 = vmor %vm2425, %vm2426
    %v2428 = vsel %vm2427, %v2420, %v2424
    %v2429 = vand.u32 2147483647, %v2419
    %vm2430 = vcmp.eq.f32.partialorder %v2429, 8.507059e+37
    %v2431 = vand.u32 %v2419, 2147483648
    %v2432 = vor.u32 1.1754944e-38, %v2431
    %v2433 = vsel %vm2430, %v2432, %v2428
    %v2434 = vmul.f32 1.0, %v2433
    %v2435 = vtanh.pop %v2414
    %v2436 = vmul.f32 %v2434, %v2073
    %2438 = vrot.lane.b32.xlu0 %v2435, 64
    %v2439 = vpop.permute.xlu0 %2438
    %v2441 = vmul.f32 %v2434, %v2439
    %2443 = vrot.lane.b32.xlu0 %v2441, 32
    %v2444 = vpop.permute.xlu0 %2443
    %v2446 = vadd.f32 %v2436, %v2444
    %v2447 = vtanh.pop %v2446
    %2449 = vrot.lane.b32.xlu0 %v2447, 64
    %v2450 = vpop.permute.xlu0 %2449
    %v2452 = vmul.f32 %v2434, %v2450
    %v2453 = vxor.u32 %v2415, 2147483648
    %v2454 = vmul.f32 %v2453, 1.442695
    %v2455 = vpow.pop %v2454
    %v2456 = vadd.f32 %v2455, 1.0
    %v2457 = vrcp.pop %v2456
    %v2458 = vmul.f32 %v2456, %v2457
    %v2459 = vsub.f32 1.0, %v2458
    %v2460 = vmul.f32 %v2457, %v2459
    %v2461 = vadd.f32 %v2457, %v2460
    %vm2462 = vweird.f32 %v2456
    %vm2463 = vweird.f32 %v2457
    %vm2464 = vmor %vm2462, %vm2463
    %v2465 = vsel %vm2464, %v2457, %v2461
    %v2466 = vand.u32 2147483647, %v2456
    %vm2467 = vcmp.eq.f32.partialorder %v2466, 8.507059e+37
    %v2468 = vand.u32 %v2456, 2147483648
    %v2469 = vor.u32 1.1754944e-38, %v2468
    %v2470 = vsel %vm2467, %v2469, %v2465
    %v2471 = vmul.f32 1.0, %v2470
    %v2472 = vtanh.pop %v2415
    %v2473 = vmul.f32 %v2471, %v2147
    %2475 = vrot.lane.b32.xlu0 %v2472, 64
    %v2476 = vpop.permute.xlu0 %2475
    %v2478 = vmul.f32 %v2471, %v2476
    %2480 = vrot.lane.b32.xlu0 %v2478, 32
    %v2481 = vpop.permute.xlu0 %2480
    %v2483 = vadd.f32 %v2473, %v2481
    %v2484 = vtanh.pop %v2483
    %2486 = vrot.lane.b32.xlu0 %v2484, 64
    %v2487 = vpop.permute.xlu0 %2486
    %v2489 = vmul.f32 %v2471, %v2487
    %2491 = vrot.lane.b32.xlu0 %v2452, 32
    %v2492 = vpop.permute.xlu0 %2491
    %2495 = vrot.lane.b32.xlu0 %v2489, 64
    %v2496 = vpop.permute.xlu0 %2495
    %v2498 = vsel %vm660, %v2492, %v2496
    %v2499 = vpack.c.bf16 %v2498, %v2498
    %v2501 = vsel %vm662, %v2499, 0
    %2503 = vmatpush.bf16.msra.mxu0 0
    %2504 = vmatpush.bf16.msra.mxu0 0
    %2505 = vmatpush.bf16.msra.mxu0 0
    %2506 = vmatpush.bf16.msra.mxu0 0
    %2507 = vmatpush.bf16.msra.mxu0 %v2375
    %2508 = vmatpush.bf16.msra.mxu0 %v2373
    %2509 = vmatpush.bf16.msra.mxu0 %v2371
    %2510 = vmatpush.bf16.msra.mxu0 %v2369
    %2511 = vmatmul.bf16.gmra.mxu0 %v2501
    %v2512 = vpop.f32.mrf.mxu0
    %v2513 = vadd.f32 0.0, %v2512
    %v2514 = vpop.f32.mrf.mxu0
    %2515 = vdwg.mxu0
    %2516 = vmatpush.bf16.msra.mxu0 0
    %2517 = vmatpush.bf16.msra.mxu0 0
    %2518 = vmatpush.bf16.msra.mxu0 0
    %2519 = vmatpush.bf16.msra.mxu0 0
    %2520 = vmatpush.bf16.msra.mxu0 %v2376
    %2521 = vmatpush.bf16.msra.mxu0 %v2374
    %2522 = vmatpush.bf16.msra.mxu0 %v2372
    %2523 = vmatpush.bf16.msra.mxu0 %v2370
    %2524 = vmatmul.bf16.gmra.mxu0 %v2501
    %v2525 = vpop.f32.mrf.mxu0
    %v2526 = vadd.f32 0.0, %v2525
    %v2527 = vpop.f32.mrf.mxu0
    %2528 = vdwg.mxu0
    %v2529 = vadd.f32 %v2281, %v2513
    %v2530 = vadd.f32 %v2323, %v2526
    %v2531 = vxor.u32 %v2529, 2147483648
    %v2532 = vmul.f32 %v2531, 1.442695
    %v2533 = vpow.pop %v2532
    %v2534 = vadd.f32 %v2533, 1.0
    %v2535 = vrcp.pop %v2534
    %v2536 = vmul.f32 %v2534, %v2535
    %v2537 = vsub.f32 1.0, %v2536
    %v2538 = vmul.f32 %v2535, %v2537
    %v2539 = vadd.f32 %v2535, %v2538
    %vm2540 = vweird.f32 %v2534
    %vm2541 = vweird.f32 %v2535
    %vm2542 = vmor %vm2540, %vm2541
    %v2543 = vsel %vm2542, %v2535, %v2539
    %v2544 = vand.u32 2147483647, %v2534
    %vm2545 = vcmp.eq.f32.partialorder %v2544, 8.507059e+37
    %v2546 = vand.u32 %v2534, 2147483648
    %v2547 = vor.u32 1.1754944e-38, %v2546
    %v2548 = vsel %vm2545, %v2547, %v2543
    %v2549 = vmul.f32 1.0, %v2548
    %v2550 = vtanh.pop %v2529
    %v2551 = vmul.f32 %v2549, %v2446
    %2553 = vrot.lane.b32.xlu0 %v2550, 64
    %v2554 = vpop.permute.xlu0 %2553
    %v2556 = vmul.f32 %v2549, %v2554
    %2558 = vrot.lane.b32.xlu0 %v2556, 32
    %v2559 = vpop.permute.xlu0 %2558
    %v2561 = vadd.f32 %v2551, %v2559
    %v2562 = vtanh.pop %v2561
    %2564 = vrot.lane.b32.xlu0 %v2562, 64
    %v2565 = vpop.permute.xlu0 %2564
    %v2567 = vmul.f32 %v2549, %v2565
    %v2568 = vxor.u32 %v2530, 2147483648
    %v2569 = vmul.f32 %v2568, 1.442695
    %v2570 = vpow.pop %v2569
    %v2571 = vadd.f32 %v2570, 1.0
    %v2572 = vrcp.pop %v2571
    %v2573 = vmul.f32 %v2571, %v2572
    %v2574 = vsub.f32 1.0, %v2573
    %v2575 = vmul.f32 %v2572, %v2574
    %v2576 = vadd.f32 %v2572, %v2575
    %vm2577 = vweird.f32 %v2571
    %vm2578 = vweird.f32 %v2572
    %vm2579 = vmor %vm2577, %vm2578
    %v2580 = vsel %vm2579, %v2572, %v2576
    %v2581 = vand.u32 2147483647, %v2571
    %vm2582 = vcmp.eq.f32.partialorder %v2581, 8.507059e+37
    %v2583 = vand.u32 %v2571, 2147483648
    %v2584 = vor.u32 1.1754944e-38, %v2583
    %v2585 = vsel %vm2582, %v2584, %v2580
    %v2586 = vmul.f32 1.0, %v2585
    %v2587 = vtanh.pop %v2530
    %v2588 = vmul.f32 %v2586, %v2483
    %2590 = vrot.lane.b32.xlu0 %v2587, 64
    %v2591 = vpop.permute.xlu0 %2590
    %v2593 = vmul.f32 %v2586, %v2591
    %2595 = vrot.lane.b32.xlu0 %v2593, 32
    %v2596 = vpop.permute.xlu0 %2595
    %v2598 = vadd.f32 %v2588, %v2596
    %v2599 = vtanh.pop %v2598
    %2601 = vrot.lane.b32.xlu0 %v2599, 64
    %v2602 = vpop.permute.xlu0 %2601
    %v2604 = vmul.f32 %v2586, %v2602
    %2606 = vrot.lane.b32.xlu0 %v2567, 32
    %v2607 = vpop.permute.xlu0 %2606
    %2610 = vrot.lane.b32.xlu0 %v2604, 64
    %v2611 = vpop.permute.xlu0 %2610
    %v2613 = vsel %vm660, %v2607, %v2611
    %v2614 = vpack.c.bf16 %v2613, %v2613
    %v2616 = vsel %vm662, %v2614, 0
    %2618 = vmatpush.bf16.msra.mxu0 0
    %2619 = vmatpush.bf16.msra.mxu0 0
    %2620 = vmatpush.bf16.msra.mxu0 0
    %2621 = vmatpush.bf16.msra.mxu0 0
    %2622 = vmatpush.bf16.msra.mxu0 %v2375
    %2623 = vmatpush.bf16.msra.mxu0 %v2373
    %2624 = vmatpush.bf16.msra.mxu0 %v2371
    %2625 = vmatpush.bf16.msra.mxu0 %v2369
    %2626 = vmatmul.bf16.gmra.mxu0 %v2616
    %v2627 = vpop.f32.mrf.mxu0
    %v2628 = vadd.f32 0.0, %v2627
    %v2629 = vpop.f32.mrf.mxu0
    %2630 = vdwg.mxu0
    %2631 = vmatpush.bf16.msra.mxu0 0
    %2632 = vmatpush.bf16.msra.mxu0 0
    %2633 = vmatpush.bf16.msra.mxu0 0
    %2634 = vmatpush.bf16.msra.mxu0 0
    %2635 = vmatpush.bf16.msra.mxu0 %v2376
    %2636 = vmatpush.bf16.msra.mxu0 %v2374
    %2637 = vmatpush.bf16.msra.mxu0 %v2372
    %2638 = vmatpush.bf16.msra.mxu0 %v2370
    %2639 = vmatmul.bf16.gmra.mxu0 %v2616
    %v2640 = vpop.f32.mrf.mxu0
    %v2641 = vadd.f32 0.0, %v2640
    %v2642 = vpop.f32.mrf.mxu0
    %2643 = vdwg.mxu0
    %v2644 = vadd.f32 %v2284, %v2628
    %v2645 = vadd.f32 %v2320, %v2641
    %v2646 = vxor.u32 %v2644, 2147483648
    %v2647 = vmul.f32 %v2646, 1.442695
    %v2648 = vpow.pop %v2647
    %v2649 = vadd.f32 %v2648, 1.0
    %v2650 = vrcp.pop %v2649
    %v2651 = vmul.f32 %v2649, %v2650
    %v2652 = vsub.f32 1.0, %v2651
    %v2653 = vmul.f32 %v2650, %v2652
    %v2654 = vadd.f32 %v2650, %v2653
    %vm2655 = vweird.f32 %v2649
    %vm2656 = vweird.f32 %v2650
    %vm2657 = vmor %vm2655, %vm2656
    %v2658 = vsel %vm2657, %v2650, %v2654
    %v2659 = vand.u32 2147483647, %v2649
    %vm2660 = vcmp.eq.f32.partialorder %v2659, 8.507059e+37
    %v2661 = vand.u32 %v2649, 2147483648
    %v2662 = vor.u32 1.1754944e-38, %v2661
    %v2663 = vsel %vm2660, %v2662, %v2658
    %v2664 = vmul.f32 1.0, %v2663
    %v2665 = vtanh.pop %v2644
    %v2666 = vmul.f32 %v2664, %v2561
    %2668 = vrot.lane.b32.xlu0 %v2665, 64
    %v2669 = vpop.permute.xlu0 %2668
    %v2671 = vmul.f32 %v2664, %v2669
    %2673 = vrot.lane.b32.xlu0 %v2671, 32
    %v2674 = vpop.permute.xlu0 %2673
    %v2676 = vadd.f32 %v2666, %v2674
    %v2677 = vtanh.pop %v2676
    %2679 = vrot.lane.b32.xlu0 %v2677, 64
    %v2680 = vpop.permute.xlu0 %2679
    %v2682 = vmul.f32 %v2664, %v2680
    %v2683 = vxor.u32 %v2645, 2147483648
    %v2684 = vmul.f32 %v2683, 1.442695
    %v2685 = vpow.pop %v2684
    %v2686 = vadd.f32 %v2685, 1.0
    %v2687 = vrcp.pop %v2686
    %v2688 = vmul.f32 %v2686, %v2687
    %v2689 = vsub.f32 1.0, %v2688
    %v2690 = vmul.f32 %v2687, %v2689
    %v2691 = vadd.f32 %v2687, %v2690
    %vm2692 = vweird.f32 %v2686
    %vm2693 = vweird.f32 %v2687
    %vm2694 = vmor %vm2692, %vm2693
    %v2695 = vsel %vm2694, %v2687, %v2691
    %v2696 = vand.u32 2147483647, %v2686
    %vm2697 = vcmp.eq.f32.partialorder %v2696, 8.507059e+37
    %v2698 = vand.u32 %v2686, 2147483648
    %v2699 = vor.u32 1.1754944e-38, %v2698
    %v2700 = vsel %vm2697, %v2699, %v2695
    %v2701 = vmul.f32 1.0, %v2700
    %v2702 = vtanh.pop %v2645
    %v2703 = vmul.f32 %v2701, %v2598
    %2705 = vrot.lane.b32.xlu0 %v2702, 64
    %v2706 = vpop.permute.xlu0 %2705
    %v2708 = vmul.f32 %v2701, %v2706
    %2710 = vrot.lane.b32.xlu0 %v2708, 32
    %v2711 = vpop.permute.xlu0 %2710
    %v2713 = vadd.f32 %v2703, %v2711
    %v2714 = vtanh.pop %v2713
    %2716 = vrot.lane.b32.xlu0 %v2714, 64
    %v2717 = vpop.permute.xlu0 %2716
    %v2719 = vmul.f32 %v2701, %v2717
    %2721 = vrot.lane.b32.xlu0 %v2682, 32
    %v2722 = vpop.permute.xlu0 %2721
    %2725 = vrot.lane.b32.xlu0 %v2719, 64
    %v2726 = vpop.permute.xlu0 %2725
    %v2728 = vsel %vm660, %v2722, %v2726
    %v2729 = vpack.c.bf16 %v2728, %v2728
    %v2731 = vsel %vm662, %v2729, 0
    %2733 = vmatpush.bf16.msra.mxu0 0
    %2734 = vmatpush.bf16.msra.mxu0 0
    %2735 = vmatpush.bf16.msra.mxu0 0
    %2736 = vmatpush.bf16.msra.mxu0 0
    %2737 = vmatpush.bf16.msra.mxu0 %v2375
    %2738 = vmatpush.bf16.msra.mxu0 %v2373
    %2739 = vmatpush.bf16.msra.mxu0 %v2371
    %2740 = vmatpush.bf16.msra.mxu0 %v2369
    %2741 = vmatmul.bf16.gmra.mxu0 %v2731
    %v2742 = vpop.f32.mrf.mxu0
    %v2743 = vadd.f32 0.0, %v2742
    %v2744 = vpop.f32.mrf.mxu0
    %2745 = vdwg.mxu0
    %2746 = vmatpush.bf16.msra.mxu0 0
    %2747 = vmatpush.bf16.msra.mxu0 0
    %2748 = vmatpush.bf16.msra.mxu0 0
    %2749 = vmatpush.bf16.msra.mxu0 0
    %2750 = vmatpush.bf16.msra.mxu0 %v2376
    %2751 = vmatpush.bf16.msra.mxu0 %v2374
    %2752 = vmatpush.bf16.msra.mxu0 %v2372
    %2753 = vmatpush.bf16.msra.mxu0 %v2370
    %2754 = vmatmul.bf16.gmra.mxu0 %v2731
    %v2755 = vpop.f32.mrf.mxu0
    %v2756 = vadd.f32 0.0, %v2755
    %v2757 = vpop.f32.mrf.mxu0
    %2758 = vdwg.mxu0
    %v2759 = vadd.f32 %v2286, %v2743
    %v2760 = vadd.f32 %v2318, %v2756
    %v2761 = vxor.u32 %v2759, 2147483648
    %v2762 = vmul.f32 %v2761, 1.442695
    %v2763 = vpow.pop %v2762
    %v2764 = vadd.f32 %v2763, 1.0
    %v2765 = vrcp.pop %v2764
    %v2766 = vmul.f32 %v2764, %v2765
    %v2767 = vsub.f32 1.0, %v2766
    %v2768 = vmul.f32 %v2765, %v2767
    %v2769 = vadd.f32 %v2765, %v2768
    %vm2770 = vweird.f32 %v2764
    %vm2771 = vweird.f32 %v2765
    %vm2772 = vmor %vm2770, %vm2771
    %v2773 = vsel %vm2772, %v2765, %v2769
    %v2774 = vand.u32 2147483647, %v2764
    %vm2775 = vcmp.eq.f32.partialorder %v2774, 8.507059e+37
    %v2776 = vand.u32 %v2764, 2147483648
    %v2777 = vor.u32 1.1754944e-38, %v2776
    %v2778 = vsel %vm2775, %v2777, %v2773
    %v2779 = vmul.f32 1.0, %v2778
    %v2780 = vtanh.pop %v2759
    %v2781 = vmul.f32 %v2779, %v2676
    %2783 = vrot.lane.b32.xlu0 %v2780, 64
    %v2784 = vpop.permute.xlu0 %2783
    %v2786 = vmul.f32 %v2779, %v2784
    %2788 = vrot.lane.b32.xlu0 %v2786, 32
    %v2789 = vpop.permute.xlu0 %2788
    %v2791 = vadd.f32 %v2781, %v2789
    %v2792 = vtanh.pop %v2791
    %2794 = vrot.lane.b32.xlu0 %v2792, 64
    %v2795 = vpop.permute.xlu0 %2794
    %v2797 = vmul.f32 %v2779, %v2795
    %v2798 = vxor.u32 %v2760, 2147483648
    %v2799 = vmul.f32 %v2798, 1.442695
    %v2800 = vpow.pop %v2799
    %v2801 = vadd.f32 %v2800, 1.0
    %v2802 = vrcp.pop %v2801
    %v2803 = vmul.f32 %v2801, %v2802
    %v2804 = vsub.f32 1.0, %v2803
    %v2805 = vmul.f32 %v2802, %v2804
    %v2806 = vadd.f32 %v2802, %v2805
    %vm2807 = vweird.f32 %v2801
    %vm2808 = vweird.f32 %v2802
    %vm2809 = vmor %vm2807, %vm2808
    %v2810 = vsel %vm2809, %v2802, %v2806
    %v2811 = vand.u32 2147483647, %v2801
    %vm2812 = vcmp.eq.f32.partialorder %v2811, 8.507059e+37
    %v2813 = vand.u32 %v2801, 2147483648
    %v2814 = vor.u32 1.1754944e-38, %v2813
    %v2815 = vsel %vm2812, %v2814, %v2810
    %v2816 = vmul.f32 1.0, %v2815
    %v2817 = vtanh.pop %v2760
    %v2818 = vmul.f32 %v2816, %v2713
    %2820 = vrot.lane.b32.xlu0 %v2817, 64
    %v2821 = vpop.permute.xlu0 %2820
    %v2823 = vmul.f32 %v2816, %v2821
    %2825 = vrot.lane.b32.xlu0 %v2823, 32
    %v2826 = vpop.permute.xlu0 %2825
    %v2828 = vadd.f32 %v2818, %v2826
    %v2829 = vtanh.pop %v2828
    %2831 = vrot.lane.b32.xlu0 %v2829, 64
    %v2832 = vpop.permute.xlu0 %2831
    %v2834 = vmul.f32 %v2816, %v2832
    %2836 = vrot.lane.b32.xlu0 %v2797, 32
    %v2837 = vpop.permute.xlu0 %2836
    %2840 = vrot.lane.b32.xlu0 %v2834, 64
    %v2841 = vpop.permute.xlu0 %2840
    %v2843 = vsel %vm660, %v2837, %v2841
    %v2844 = vpack.c.bf16 %v2843, %v2843
    %v2846 = vsel %vm662, %v2844, 0
    %2848 = vmatpush.bf16.msra.mxu0 0
    %2849 = vmatpush.bf16.msra.mxu0 0
    %2850 = vmatpush.bf16.msra.mxu0 0
    %2851 = vmatpush.bf16.msra.mxu0 0
    %2852 = vmatpush.bf16.msra.mxu0 %v2375
    %2853 = vmatpush.bf16.msra.mxu0 %v2373
    %2854 = vmatpush.bf16.msra.mxu0 %v2371
    %2855 = vmatpush.bf16.msra.mxu0 %v2369
    %2856 = vmatmul.bf16.gmra.mxu0 %v2846
    %v2857 = vpop.f32.mrf.mxu0
    %v2858 = vadd.f32 0.0, %v2857
    %v2859 = vpop.f32.mrf.mxu0
    %2860 = vdwg.mxu0
    %2861 = vmatpush.bf16.msra.mxu0 0
    %2862 = vmatpush.bf16.msra.mxu0 0
    %2863 = vmatpush.bf16.msra.mxu0 0
    %2864 = vmatpush.bf16.msra.mxu0 0
    %2865 = vmatpush.bf16.msra.mxu0 %v2376
    %2866 = vmatpush.bf16.msra.mxu0 %v2374
    %2867 = vmatpush.bf16.msra.mxu0 %v2372
    %2868 = vmatpush.bf16.msra.mxu0 %v2370
    %2869 = vmatmul.bf16.gmra.mxu0 %v2846
    %v2870 = vpop.f32.mrf.mxu0
    %v2871 = vadd.f32 0.0, %v2870
    %v2872 = vpop.f32.mrf.mxu0
    %2873 = vdwg.mxu0
    %v2874 = vadd.f32 %v2289, %v2858
    %v2875 = vadd.f32 %v2315, %v2871
    %v2876 = vxor.u32 %v2874, 2147483648
    %v2877 = vmul.f32 %v2876, 1.442695
    %v2878 = vpow.pop %v2877
    %v2879 = vadd.f32 %v2878, 1.0
    %v2880 = vrcp.pop %v2879
    %v2881 = vmul.f32 %v2879, %v2880
    %v2882 = vsub.f32 1.0, %v2881
    %v2883 = vmul.f32 %v2880, %v2882
    %v2884 = vadd.f32 %v2880, %v2883
    %vm2885 = vweird.f32 %v2879
    %vm2886 = vweird.f32 %v2880
    %vm2887 = vmor %vm2885, %vm2886
    %v2888 = vsel %vm2887, %v2880, %v2884
    %v2889 = vand.u32 2147483647, %v2879
    %vm2890 = vcmp.eq.f32.partialorder %v2889, 8.507059e+37
    %v2891 = vand.u32 %v2879, 2147483648
    %v2892 = vor.u32 1.1754944e-38, %v2891
    %v2893 = vsel %vm2890, %v2892, %v2888
    %v2894 = vmul.f32 1.0, %v2893
    %v2895 = vtanh.pop %v2874
    %v2896 = vmul.f32 %v2894, %v2791
    %2898 = vrot.lane.b32.xlu0 %v2895, 64
    %v2899 = vpop.permute.xlu0 %2898
    %v2901 = vmul.f32 %v2894, %v2899
    %2903 = vrot.lane.b32.xlu0 %v2901, 32
    %v2904 = vpop.permute.xlu0 %2903
    %v2906 = vadd.f32 %v2896, %v2904
    %v2907 = vtanh.pop %v2906
    %2909 = vrot.lane.b32.xlu0 %v2907, 64
    %v2910 = vpop.permute.xlu0 %2909
    %v2912 = vmul.f32 %v2894, %v2910
    %v2913 = vxor.u32 %v2875, 2147483648
    %v2914 = vmul.f32 %v2913, 1.442695
    %v2915 = vpow.pop %v2914
    %v2916 = vadd.f32 %v2915, 1.0
    %v2917 = vrcp.pop %v2916
    %v2918 = vmul.f32 %v2916, %v2917
    %v2919 = vsub.f32 1.0, %v2918
    %v2920 = vmul.f32 %v2917, %v2919
    %v2921 = vadd.f32 %v2917, %v2920
    %vm2922 = vweird.f32 %v2916
    %vm2923 = vweird.f32 %v2917
    %vm2924 = vmor %vm2922, %vm2923
    %v2925 = vsel %vm2924, %v2917, %v2921
    %v2926 = vand.u32 2147483647, %v2916
    %vm2927 = vcmp.eq.f32.partialorder %v2926, 8.507059e+37
    %v2928 = vand.u32 %v2916, 2147483648
    %v2929 = vor.u32 1.1754944e-38, %v2928
    %v2930 = vsel %vm2927, %v2929, %v2925
    %v2931 = vmul.f32 1.0, %v2930
    %v2932 = vtanh.pop %v2875
    %v2933 = vmul.f32 %v2931, %v2828
    %2935 = vrot.lane.b32.xlu0 %v2932, 64
    %v2936 = vpop.permute.xlu0 %2935
    %v2938 = vmul.f32 %v2931, %v2936
    %2940 = vrot.lane.b32.xlu0 %v2938, 32
    %v2941 = vpop.permute.xlu0 %2940
    %v2943 = vadd.f32 %v2933, %v2941
    %v2944 = vtanh.pop %v2943
    %2946 = vrot.lane.b32.xlu0 %v2944, 64
    %v2947 = vpop.permute.xlu0 %2946
    %v2949 = vmul.f32 %v2931, %v2947
    %2951 = vrot.lane.b32.xlu0 %v2912, 32
    %v2952 = vpop.permute.xlu0 %2951
    %2955 = vrot.lane.b32.xlu0 %v2949, 64
    %v2956 = vpop.permute.xlu0 %2955
    %v2958 = vsel %vm660, %v2952, %v2956
    %v2959 = vpack.c.bf16 %v2958, %v2958
    %v2961 = vsel %vm662, %v2959, 0
    %2963 = vmatpush.bf16.msra.mxu0 0
    %2964 = vmatpush.bf16.msra.mxu0 0
    %2965 = vmatpush.bf16.msra.mxu0 0
    %2966 = vmatpush.bf16.msra.mxu0 0
    %2967 = vmatpush.bf16.msra.mxu0 %v2375
    %2968 = vmatpush.bf16.msra.mxu0 %v2373
    %2969 = vmatpush.bf16.msra.mxu0 %v2371
    %2970 = vmatpush.bf16.msra.mxu0 %v2369
    %2971 = vmatmul.bf16.gmra.mxu0 %v2961
    %v2972 = vpop.f32.mrf.mxu0
    %v2973 = vadd.f32 0.0, %v2972
    %v2974 = vpop.f32.mrf.mxu0
    %2975 = vdwg.mxu0
    %2976 = vmatpush.bf16.msra.mxu0 0
    %2977 = vmatpush.bf16.msra.mxu0 0
    %2978 = vmatpush.bf16.msra.mxu0 0
    %2979 = vmatpush.bf16.msra.mxu0 0
    %2980 = vmatpush.bf16.msra.mxu0 %v2376
    %2981 = vmatpush.bf16.msra.mxu0 %v2374
    %2982 = vmatpush.bf16.msra.mxu0 %v2372
    %2983 = vmatpush.bf16.msra.mxu0 %v2370
    %2984 = vmatmul.bf16.gmra.mxu0 %v2961
    %v2985 = vpop.f32.mrf.mxu0
    %v2986 = vadd.f32 0.0, %v2985
    %v2987 = vpop.f32.mrf.mxu0
    %2988 = vdwg.mxu0
    %v2989 = vadd.f32 %v2291, %v2973
    %v2990 = vadd.f32 %v2313, %v2986
    %v2991 = vxor.u32 %v2989, 2147483648
    %v2992 = vmul.f32 %v2991, 1.442695
    %v2993 = vpow.pop %v2992
    %v2994 = vadd.f32 %v2993, 1.0
    %v2995 = vrcp.pop %v2994
    %v2996 = vmul.f32 %v2994, %v2995
    %v2997 = vsub.f32 1.0, %v2996
    %v2998 = vmul.f32 %v2995, %v2997
    %v2999 = vadd.f32 %v2995, %v2998
    %vm3000 = vweird.f32 %v2994
    %vm3001 = vweird.f32 %v2995
    %vm3002 = vmor %vm3000, %vm3001
    %v3003 = vsel %vm3002, %v2995, %v2999
    %v3004 = vand.u32 2147483647, %v2994
    %vm3005 = vcmp.eq.f32.partialorder %v3004, 8.507059e+37
    %v3006 = vand.u32 %v2994, 2147483648
    %v3007 = vor.u32 1.1754944e-38, %v3006
    %v3008 = vsel %vm3005, %v3007, %v3003
    %v3009 = vmul.f32 1.0, %v3008
    %v3010 = vtanh.pop %v2989
    %v3011 = vmul.f32 %v3009, %v2906
    %3013 = vrot.lane.b32.xlu0 %v3010, 64
    %v3014 = vpop.permute.xlu0 %3013
    %v3016 = vmul.f32 %v3009, %v3014
    %3018 = vrot.lane.b32.xlu0 %v3016, 32
    %v3019 = vpop.permute.xlu0 %3018
    %v3021 = vadd.f32 %v3011, %v3019
    %v3022 = vtanh.pop %v3021
    %3024 = vrot.lane.b32.xlu0 %v3022, 64
    %v3025 = vpop.permute.xlu0 %3024
    %v3027 = vmul.f32 %v3009, %v3025
    %v3028 = vxor.u32 %v2990, 2147483648
    %v3029 = vmul.f32 %v3028, 1.442695
    %v3030 = vpow.pop %v3029
    %v3031 = vadd.f32 %v3030, 1.0
    %v3032 = vrcp.pop %v3031
    %v3033 = vmul.f32 %v3031, %v3032
    %v3034 = vsub.f32 1.0, %v3033
    %v3035 = vmul.f32 %v3032, %v3034
    %v3036 = vadd.f32 %v3032, %v3035
    %vm3037 = vweird.f32 %v3031
    %vm3038 = vweird.f32 %v3032
    %vm3039 = vmor %vm3037, %vm3038
    %v3040 = vsel %vm3039, %v3032, %v3036
    %v3041 = vand.u32 2147483647, %v3031
    %vm3042 = vcmp.eq.f32.partialorder %v3041, 8.507059e+37
    %v3043 = vand.u32 %v3031, 2147483648
    %v3044 = vor.u32 1.1754944e-38, %v3043
    %v3045 = vsel %vm3042, %v3044, %v3040
    %v3046 = vmul.f32 1.0, %v3045
    %v3047 = vtanh.pop %v2990
    %v3048 = vmul.f32 %v3046, %v2943
    %3050 = vrot.lane.b32.xlu0 %v3047, 64
    %v3051 = vpop.permute.xlu0 %3050
    %v3053 = vmul.f32 %v3046, %v3051
    %3055 = vrot.lane.b32.xlu0 %v3053, 32
    %v3056 = vpop.permute.xlu0 %3055
    %v3058 = vadd.f32 %v3048, %v3056
    %v3059 = vtanh.pop %v3058
    %3061 = vrot.lane.b32.xlu0 %v3059, 64
    %v3062 = vpop.permute.xlu0 %3061
    %v3064 = vmul.f32 %v3046, %v3062
    %3066 = vrot.lane.b32.xlu0 %v3027, 32
    %v3067 = vpop.permute.xlu0 %3066
    %3070 = vrot.lane.b32.xlu0 %v3064, 64
    %v3071 = vpop.permute.xlu0 %3070
    %v3073 = vsel %vm660, %v3067, %v3071
    %v3074 = vpack.c.bf16 %v3073, %v3073
    %v3076 = vsel %vm662, %v3074, 0
    %3078 = vmatpush.bf16.msra.mxu0 0
    %3079 = vmatpush.bf16.msra.mxu0 0
    %3080 = vmatpush.bf16.msra.mxu0 0
    %3081 = vmatpush.bf16.msra.mxu0 0
    %3082 = vmatpush.bf16.msra.mxu0 %v2375
    %3083 = vmatpush.bf16.msra.mxu0 %v2373
    %3084 = vmatpush.bf16.msra.mxu0 %v2371
    %3085 = vmatpush.bf16.msra.mxu0 %v2369
    %3086 = vmatmul.bf16.gmra.mxu0 %v3076
    %v3087 = vpop.f32.mrf.mxu0
    %v3088 = vadd.f32 0.0, %v3087
    %v3089 = vpop.f32.mrf.mxu0
    %3090 = vdwg.mxu0
    %3091 = vmatpush.bf16.msra.mxu0 0
    %3092 = vmatpush.bf16.msra.mxu0 0
    %3093 = vmatpush.bf16.msra.mxu0 0
    %3094 = vmatpush.bf16.msra.mxu0 0
    %3095 = vmatpush.bf16.msra.mxu0 %v2376
    %3096 = vmatpush.bf16.msra.mxu0 %v2374
    %3097 = vmatpush.bf16.msra.mxu0 %v2372
    %3098 = vmatpush.bf16.msra.mxu0 %v2370
    %3099 = vmatmul.bf16.gmra.mxu0 %v3076
    %v3100 = vpop.f32.mrf.mxu0
    %v3101 = vadd.f32 0.0, %v3100
    %v3102 = vpop.f32.mrf.mxu0
    %3103 = vdwg.mxu0
    %v3104 = vadd.f32 %v2294, %v3088
    %v3105 = vadd.f32 %v2310, %v3101
    %v3106 = vxor.u32 %v3104, 2147483648
    %v3107 = vmul.f32 %v3106, 1.442695
    %v3108 = vpow.pop %v3107
    %v3109 = vadd.f32 %v3108, 1.0
    %v3110 = vrcp.pop %v3109
    %v3111 = vmul.f32 %v3109, %v3110
    %v3112 = vsub.f32 1.0, %v3111
    %v3113 = vmul.f32 %v3110, %v3112
    %v3114 = vadd.f32 %v3110, %v3113
    %vm3115 = vweird.f32 %v3109
    %vm3116 = vweird.f32 %v3110
    %vm3117 = vmor %vm3115, %vm3116
    %v3118 = vsel %vm3117, %v3110, %v3114
    %v3119 = vand.u32 2147483647, %v3109
    %vm3120 = vcmp.eq.f32.partialorder %v3119, 8.507059e+37
    %v3121 = vand.u32 %v3109, 2147483648
    %v3122 = vor.u32 1.1754944e-38, %v3121
    %v3123 = vsel %vm3120, %v3122, %v3118
    %v3124 = vmul.f32 1.0, %v3123
    %v3125 = vtanh.pop %v3104
    %v3126 = vmul.f32 %v3124, %v3021
    %3128 = vrot.lane.b32.xlu0 %v3125, 64
    %v3129 = vpop.permute.xlu0 %3128
    %v3131 = vmul.f32 %v3124, %v3129
    %3133 = vrot.lane.b32.xlu0 %v3131, 32
    %v3134 = vpop.permute.xlu0 %3133
    %v3136 = vadd.f32 %v3126, %v3134
    %v3137 = vtanh.pop %v3136
    %3139 = vrot.lane.b32.xlu0 %v3137, 64
    %v3140 = vpop.permute.xlu0 %3139
    %v3142 = vmul.f32 %v3124, %v3140
    %v3143 = vxor.u32 %v3105, 2147483648
    %v3144 = vmul.f32 %v3143, 1.442695
    %v3145 = vpow.pop %v3144
    %v3146 = vadd.f32 %v3145, 1.0
    %v3147 = vrcp.pop %v3146
    %v3148 = vmul.f32 %v3146, %v3147
    %v3149 = vsub.f32 1.0, %v3148
    %v3150 = vmul.f32 %v3147, %v3149
    %v3151 = vadd.f32 %v3147, %v3150
    %vm3152 = vweird.f32 %v3146
    %vm3153 = vweird.f32 %v3147
    %vm3154 = vmor %vm3152, %vm3153
    %v3155 = vsel %vm3154, %v3147, %v3151
    %v3156 = vand.u32 2147483647, %v3146
    %vm3157 = vcmp.eq.f32.partialorder %v3156, 8.507059e+37
    %v3158 = vand.u32 %v3146, 2147483648
    %v3159 = vor.u32 1.1754944e-38, %v3158
    %v3160 = vsel %vm3157, %v3159, %v3155
    %v3161 = vmul.f32 1.0, %v3160
    %v3162 = vtanh.pop %v3105
    %v3163 = vmul.f32 %v3161, %v3058
    %3165 = vrot.lane.b32.xlu0 %v3162, 64
    %v3166 = vpop.permute.xlu0 %3165
    %v3168 = vmul.f32 %v3161, %v3166
    %3170 = vrot.lane.b32.xlu0 %v3168, 32
    %v3171 = vpop.permute.xlu0 %3170
    %v3173 = vadd.f32 %v3163, %v3171
    %v3174 = vtanh.pop %v3173
    %3176 = vrot.lane.b32.xlu0 %v3174, 64
    %v3177 = vpop.permute.xlu0 %3176
    %v3179 = vmul.f32 %v3161, %v3177
    %3181 = vrot.lane.b32.xlu0 %v3142, 32
    %v3182 = vpop.permute.xlu0 %3181
    %3185 = vrot.lane.b32.xlu0 %v3179, 64
    %v3186 = vpop.permute.xlu0 %3185
    %v3188 = vsel %vm660, %v3182, %v3186
    %v3189 = vpack.c.bf16 %v3188, %v3188
    %v3191 = vsel %vm662, %v3189, 0
    %3193 = vmatpush.bf16.msra.mxu0 0
    %3194 = vmatpush.bf16.msra.mxu0 0
    %3195 = vmatpush.bf16.msra.mxu0 0
    %3196 = vmatpush.bf16.msra.mxu0 0
    %3197 = vmatpush.bf16.msra.mxu0 %v2375
    %3198 = vmatpush.bf16.msra.mxu0 %v2373
    %3199 = vmatpush.bf16.msra.mxu0 %v2371
    %3200 = vmatpush.bf16.msra.mxu0 %v2369
    %3201 = vmatmul.bf16.gmra.mxu0 %v3191
    %v3202 = vpop.f32.mrf.mxu0
    %v3203 = vadd.f32 0.0, %v3202
    %v3204 = vpop.f32.mrf.mxu0
    %3205 = vdwg.mxu0
    %3206 = vmatpush.bf16.msra.mxu0 0
    %3207 = vmatpush.bf16.msra.mxu0 0
    %3208 = vmatpush.bf16.msra.mxu0 0
    %3209 = vmatpush.bf16.msra.mxu0 0
    %3210 = vmatpush.bf16.msra.mxu0 %v2376
    %3211 = vmatpush.bf16.msra.mxu0 %v2374
    %3212 = vmatpush.bf16.msra.mxu0 %v2372
    %3213 = vmatpush.bf16.msra.mxu0 %v2370
    %3214 = vmatmul.bf16.gmra.mxu0 %v3191
    %v3215 = vpop.f32.mrf.mxu0
    %v3216 = vadd.f32 0.0, %v3215
    %v3217 = vpop.f32.mrf.mxu0
    %3218 = vdwg.mxu0
    %v3219 = vadd.f32 %v2296, %v3203
    %v3220 = vadd.f32 %v2308, %v3216
    %v3221 = vxor.u32 %v3219, 2147483648
    %v3222 = vmul.f32 %v3221, 1.442695
    %v3223 = vpow.pop %v3222
    %v3224 = vadd.f32 %v3223, 1.0
    %v3225 = vrcp.pop %v3224
    %v3226 = vmul.f32 %v3224, %v3225
    %v3227 = vsub.f32 1.0, %v3226
    %v3228 = vmul.f32 %v3225, %v3227
    %v3229 = vadd.f32 %v3225, %v3228
    %vm3230 = vweird.f32 %v3224
    %vm3231 = vweird.f32 %v3225
    %vm3232 = vmor %vm3230, %vm3231
    %v3233 = vsel %vm3232, %v3225, %v3229
    %v3234 = vand.u32 2147483647, %v3224
    %vm3235 = vcmp.eq.f32.partialorder %v3234, 8.507059e+37
    %v3236 = vand.u32 %v3224, 2147483648
    %v3237 = vor.u32 1.1754944e-38, %v3236
    %v3238 = vsel %vm3235, %v3237, %v3233
    %v3239 = vmul.f32 1.0, %v3238
    %v3240 = vtanh.pop %v3219
    %v3241 = vmul.f32 %v3239, %v3136
    %3243 = vrot.lane.b32.xlu0 %v3240, 64
    %v3244 = vpop.permute.xlu0 %3243
    %v3246 = vmul.f32 %v3239, %v3244
    %3248 = vrot.lane.b32.xlu0 %v3246, 32
    %v3249 = vpop.permute.xlu0 %3248
    %v3251 = vadd.f32 %v3241, %v3249
    %v3252 = vtanh.pop %v3251
    %3254 = vrot.lane.b32.xlu0 %v3252, 64
    %v3255 = vpop.permute.xlu0 %3254
    %v3257 = vmul.f32 %v3239, %v3255
    %v3258 = vxor.u32 %v3220, 2147483648
    %v3259 = vmul.f32 %v3258, 1.442695
    %v3260 = vpow.pop %v3259
    %v3261 = vadd.f32 %v3260, 1.0
    %v3262 = vrcp.pop %v3261
    %v3263 = vmul.f32 %v3261, %v3262
    %v3264 = vsub.f32 1.0, %v3263
    %v3265 = vmul.f32 %v3262, %v3264
    %v3266 = vadd.f32 %v3262, %v3265
    %vm3267 = vweird.f32 %v3261
    %vm3268 = vweird.f32 %v3262
    %vm3269 = vmor %vm3267, %vm3268
    %v3270 = vsel %vm3269, %v3262, %v3266
    %v3271 = vand.u32 2147483647, %v3261
    %vm3272 = vcmp.eq.f32.partialorder %v3271, 8.507059e+37
    %v3273 = vand.u32 %v3261, 2147483648
    %v3274 = vor.u32 1.1754944e-38, %v3273
    %v3275 = vsel %vm3272, %v3274, %v3270
    %v3276 = vmul.f32 1.0, %v3275
    %v3277 = vtanh.pop %v3220
    %v3278 = vmul.f32 %v3276, %v3173
    %3280 = vrot.lane.b32.xlu0 %v3277, 64
    %v3281 = vpop.permute.xlu0 %3280
    %v3283 = vmul.f32 %v3276, %v3281
    %3285 = vrot.lane.b32.xlu0 %v3283, 32
    %v3286 = vpop.permute.xlu0 %3285
    %v3288 = vadd.f32 %v3278, %v3286
    %v3289 = vtanh.pop %v3288
    %3291 = vrot.lane.b32.xlu0 %v3289, 64
    %v3292 = vpop.permute.xlu0 %3291
    %v3294 = vmul.f32 %v3276, %v3292
    %3296 = vrot.lane.b32.xlu0 %v3257, 32
    %v3297 = vpop.permute.xlu0 %3296
    %3300 = vrot.lane.b32.xlu0 %v3294, 64
    %v3301 = vpop.permute.xlu0 %3300
    %v3303 = vsel %vm660, %v3297, %v3301
    %v3304 = vld [vmem:[%s8] sm:$0xff]
    %v3305 = vld [vmem:[%s8 + $0x8] sm:$0xff]
    %v3306 = vld [vmem:[%s8 + $0x10] sm:$0xff]
    %v3307 = vld [vmem:[%s8 + $0x18] sm:$0xff]
    %v3308 = vld [vmem:[%s8 + $0x20] sm:$0xff]
    %v3309 = vld [vmem:[%s8 + $0x28] sm:$0xff]
    %v3310 = vld [vmem:[%s8 + $0x30] sm:$0xff]
    %v3311 = vld [vmem:[%s8 + $0x38] sm:$0xff]
    %v3312 = vld [vmem:[%s9] sm:$0x1]
    %v3314 = vperm.slane %v3312, 0
    %v3317 = vsel %vm662, %v3303, 0
    %3319 = vmatpush.msra.mxu0 0.0
    %3320 = vmatpush.msra.mxu0 0.0
    %3321 = vmatpush.msra.mxu0 0.0
    %3322 = vmatpush.msra.mxu0 0.0
    %3323 = vmatpush.msra.mxu0 0.0
    %3324 = vmatpush.msra.mxu0 0.0
    %3325 = vmatpush.msra.mxu0 0.0
    %3326 = vmatpush.msra.mxu0 0.0
    %3327 = vmatpush.msra.mxu0 %v3311
    %3328 = vmatpush.msra.mxu0 %v3310
    %3329 = vmatpush.msra.mxu0 %v3309
    %3330 = vmatpush.msra.mxu0 %v3308
    %3331 = vmatpush.msra.mxu0 %v3307
    %3332 = vmatpush.msra.mxu0 %v3306
    %3333 = vmatpush.msra.mxu0 %v3305
    %3334 = vmatpush.msra.mxu0 %v3304
    %3335 = vmatmul.f32.gmra.mxu0 %v3317
    %v3336 = vpop.f32.mrf.mxu0
    %v3337 = vadd.f32 %v3314, %v3336
    %3338 = vdwg.mxu0
    %v3339 = vmul.f32 %v3337, 0.5
    %v3340 = vmul.f32 %v3339, 1.442695
    %v3341 = vpow.pop %v3340
    %v3342 = vld [vmem:[%s10] sm:$0xff]
    %3344 = vrot.lane.b32.xlu0 %v3341, 112
    %v3345 = vpop.permute.xlu0 %3344
    %v3347 = vmul.f32 %v3342, %v3345
    %v3348 = vadd.f32 %v3347, %v3337
    %vm3349 = vcmask 130048
    %3350 = vst.msk [vmem:[%s12] sm:$0xff] %vm3349, %v3348
    %v3351 = vmul.f32 %v3337, %v3337
    %3353 = vrot.lane.b32.xlu0 %v3351, 16
    %v3354 = vpop.permute.xlu0 %3353
    %v3356 = vsub.f32 %v3337, %v3354
    %v3357 = vmul.f32 %v3337, 1.442695
    %v3358 = vpow.pop %v3357
    %v3359 = vsub.f32 %v3356, %v3358
    %v3360 = vadd.f32 %v3359, 1.0
    %3362 = vrot.lane.b32.xlu0 %v3360, 112
    %v3363 = vpop.permute.xlu0 %3362
    %v3365 = vsel %vm3349, %v3363, 0.0
    %3366 = vadd.xlane.f32.xlu0 %v3365
    %v3367 = vpop.xlane.xlu0 %3366
    %v3368 = vlaneseq
    %v3369 = vshrl.u32 %v3368, 7
    %vm3370 = vcmp.lt.s32.totalorder %v3369, 2
    %v3371 = vsel %vm3370, %v3367, 0.0
    %v3372 = vrot.slane %v3371, 4
    %v3373 = vadd.f32 %v3371, %v3372
    %v3374 = vrot.slane %v3373, 2
    %v3375 = vadd.f32 %v3373, %v3374
    %v3376 = vrot.slane %v3375, 1
    %v3377 = vadd.f32 %v3375, %v3376
    %v3378 = vmul.f32 %v3377, -0.25
    %vm3379 = vcmask 0
    %3380 = vst.msk [vmem:[#allocation2] sm:$0x1] %vm3379, %v3378
    // Predicated region
    $region46: #{fwd.4} parent=1 // pred_check
      _
    $region47: #{fwd.4} parent=1 // pred_check_branch
      %3382 = sbr.rel (0) target = $region49
    $region48: #{fwd.4} parent=1 // pred_region
      _
    $region49: #{fwd.4} parent=1 // pred_fallthru
      _
    // Predicated region
    $region50: #{fwd.4} parent=1 // pred_check
      _
    $region51: #{fwd.4} parent=1 // pred_check_branch
      %3384 = sbr.rel (0) target = $region53
    $region52: #{fwd.4} parent=1 // pred_region
      _
    $region53: #{fwd.4} parent=1 // pred_fallthru
      _
    // Predicated region
    $region54: #{fwd.4} parent=1 // pred_check
      _
    $region55: #{fwd.4} parent=1 // pred_check_branch
      %3386 = sbr.rel (0) target = $region57
    $region56: #{fwd.4} parent=1 // pred_region
      %3388 = vsyncadd [#allocation3], 0
      %s3390 = sshll.u32 [#allocation2], 4
      %s3391 = int_to_ptr.vmem [resolvable:$true] %s3390
      %s3392 = sshll.u32 %s13, 4
      %s3393 = int_to_ptr.hbm [resolvable:$true] %s3392
      %3395 = dma.vmem_to_hbm [thread:$0]  %s3391, 16, %s3393, [#allocation3]
    $region57: #{fwd.4} parent=1 // pred_fallthru
      _
    // Predicated region
    $region58: #{fwd.4} parent=1 // pred_check
      _
    $region59: #{fwd.4} parent=1 // pred_check_branch
      %3397 = sbr.rel (0) target = $region61
    $region60: #{fwd.4} parent=1 // pred_region
      _
    $region61: #{fwd.4} parent=1 // pred_fallthru
      _
    // Predicated region
    $region62: #{fwd.4} parent=1 // pred_check
      _
    $region63: #{fwd.4} parent=1 // pred_check_branch
      %3399 = sbr.rel (0) target = $region65
    $region64: #{fwd.4} parent=1 // pred_region
      _
    $region65: #{fwd.4} parent=1 // pred_fallthru
      _
    // Predicated region
    $region66: #{fwd.4} parent=1 // pred_check
      _
    $region67: #{fwd.4} parent=1 // pred_check_branch
      %3401 = sbr.rel (0) target = $region69
    $region68: #{fwd.4} parent=1 // pred_region
      %3403 = dma.done [#allocation3], 16
    $region69: #{fwd.4} parent=1 // pred_fallthru
      _
    %3404 = vsyncpa [#allocation3], 1

</llo_original>
